<compile_context>
chip_gen: v6e
topology: v6e:2x2x1
jax: 0.10.0
libtpu: 0.0.40
codegen_flags: <defaults>
</compile_context>

<pallas_src>
import jax
import jax.numpy as jnp
from jax.experimental import pallas as pl
from jax.experimental.pallas import tpu as pltpu  # noqa: F401  (TPU backend)

# ----- model / test configuration (PyTorch defaults where the module fixes them) -----
S, B = 8, 2        # sequence length, batch
D = 32             # model_dim
H = 4              # num_heads
L = 2              # num_layers
DFF = 2048         # dim_feedforward (nn.TransformerEncoderLayer default)
F = 80             # num_frequency_bins
FPAD = 128         # lane-dense padded output width
HD = D // H        # head dim
BS = B * S         # batch folded into rows
EPS = 1e-5         # LayerNorm eps (PyTorch default)


# ---------------------------------------------------------------------------
# Fused Pallas kernel: all encoder layers + final FC, whole batch in one step
# ---------------------------------------------------------------------------
def _layer_norm_rows(x, w, b):
    mu = jnp.mean(x, axis=-1, keepdims=True)
    var = jnp.mean(jnp.square(x - mu), axis=-1, keepdims=True)
    return (x - mu) * jax.lax.rsqrt(var + EPS) * w + b


def fused_transformer_kernel(x_ref, wqkv_ref, bqkv_ref, wo_ref, vecs_ref,
                             w1_ref, b1_ref, w2_ref, fcw_ref, fcb_ref, out_ref):
    f32 = jnp.float32
    x = x_ref[...].astype(f32)                      # (BS, D), batch folded into rows
    scale = 1.0 / (HD ** 0.5)

    for l in range(L):                              # static unroll over layers
        # ---- fused QKV projection: one lane-wide matmul per layer ----
        qkv = jnp.dot(x, wqkv_ref[l], preferred_element_type=f32) + bqkv_ref[l]  # (BS, 3D)

        # per-layer packed (1, D) vectors
        vecs = vecs_ref[l]                          # (8, D)
        bo, ln1w, ln1b = vecs[0:1, :], vecs[1:2, :], vecs[2:3, :]
        b2, ln2w, ln2b = vecs[3:4, :], vecs[4:5, :], vecs[5:6, :]

        # ---- multi-head self-attention (per-batch row slices, per-head lane slices) ----
        batch_outs = []
        for b in range(B):                          # static unroll; attention must not mix batches
            r0 = b * S
            q_b = qkv[r0:r0 + S, 0:D]               # (S, D)
            k_b = qkv[r0:r0 + S, D:2 * D]
            v_b = qkv[r0:r0 + S, 2 * D:3 * D]
            head_outs = []
            for h in range(H):                      # static unroll over heads
                c0 = h * HD
                qh = q_b[:, c0:c0 + HD]             # (S, HD)
                kh = k_b[:, c0:c0 + HD]
                vh = v_b[:, c0:c0 + HD]
                # scores = qh @ kh.T without materializing a transpose
                s = jax.lax.dot_general(qh, kh, (((1,), (1,)), ((), ())),
                                        preferred_element_type=f32) * scale     # (S, S)
                s = s - jnp.max(s, axis=-1, keepdims=True)
                e = jnp.exp(s)
                p = e * pl.reciprocal(jnp.sum(e, axis=-1, keepdims=True), approx=True)
                head_outs.append(jnp.dot(p, vh, preferred_element_type=f32))    # (S, HD)
            batch_outs.append(jnp.concatenate(head_outs, axis=-1))              # (S, D)
        o_all = jnp.concatenate(batch_outs, axis=0)                             # (BS, D)

        # ---- fused output projection ----
        attn = jnp.dot(o_all, wo_ref[l], preferred_element_type=f32) + bo       # (BS, D)

        # ---- residual + LayerNorm1 (post-norm, PyTorch default) ----
        h1 = _layer_norm_rows(x + attn, ln1w, ln1b)

        # ---- feed-forward: Linear -> ReLU -> Linear (w2 lane-dense, trans-RHS) ----
        ff = jnp.dot(h1, w1_ref[l], preferred_element_type=f32) + b1_ref[l]     # (BS, DFF)
        ff = jnp.maximum(ff, 0.0)
        ff = jax.lax.dot_general(ff, w2_ref[l], (((1,), (1,)), ((), ())),
                                 preferred_element_type=f32) + b2               # (BS, D)

        # ---- residual + LayerNorm2 ----
        x = _layer_norm_rows(h1 + ff, ln2w, ln2b)

    # ---- final nn.Linear(model_dim, num_frequency_bins), lane-dense padded ----
    y = jnp.dot(x, fcw_ref[...], preferred_element_type=f32) + fcb_ref[...]     # (BS, FPAD)
    out_ref[...] = y.astype(out_ref.dtype)


# ---------------------------------------------------------------------------
# Wrapper: weight packing (fused QKV, lane-dense layouts) + single pallas_call
# ---------------------------------------------------------------------------
def pack_params(layers, fc_w, fc_b):
    """Pack weights into x @ W form, fuse QKV, keep w2 lane-dense, pad final FC."""
    wqkv, bqkv, wo, vecs, w1, b1, w2 = [], [], [], [], [], [], []
    zero_d = jnp.zeros((D,), jnp.float32)
    for p in layers:
        in_w = jnp.concatenate([p['wq'], p['wk'], p['wv']], axis=0)      # (3D, D)
        wqkv.append(jnp.transpose(in_w))                                 # (D, 3D)
        bqkv.append(jnp.concatenate([p['bq'], p['bk'], p['bv']]).reshape(1, 3 * D))
        wo.append(jnp.transpose(p['wo']))                                # (D, D)
        vecs.append(jnp.stack([p['bo'], p['ln1w'], p['ln1b'],
                               p['b2'], p['ln2w'], p['ln2b'],
                               zero_d, zero_d]))                         # (8, D)
        w1.append(jnp.transpose(p['w1']))                                # (D, DFF) lane-dense
        b1.append(p['b1'].reshape(1, DFF))
        w2.append(p['w2'])                                               # (D, DFF) PyTorch layout, lane-dense
    fcw_pad = jnp.zeros((D, FPAD), jnp.float32).at[:, :F].set(jnp.transpose(fc_w))
    fcb_pad = jnp.zeros((1, FPAD), jnp.float32).at[0, :F].set(fc_b)
    packed = [jnp.stack(a) for a in (wqkv, bqkv, wo, vecs, w1, b1, w2)]
    packed += [fcw_pad, fcb_pad]
    return packed


@jax.jit
def voice_conversion_forward(x_sbd, *packed):
    # (S, B, D) -> (B, S, D) -> fold batch into rows: (B*S, D)
    x_rows = jnp.transpose(x_sbd, (1, 0, 2)).reshape(BS, D)

    in_specs = [pl.BlockSpec((BS, D), lambda i: (0, 0))]
    for w in packed:
        in_specs.append(pl.BlockSpec(w.shape, lambda i, _n=w.ndim: (0,) * _n))

    out = pl.pallas_call(
        fused_transformer_kernel,
        out_shape=jax.ShapeDtypeStruct((BS, FPAD), jnp.float32),
        grid=(1,),                                   # single step: whole batch fused
        in_specs=in_specs,
        out_specs=pl.BlockSpec((BS, FPAD), lambda i: (0, 0)),
    )(x_rows, *packed)

    # lane-dense kernel output -> slice the real F columns, restore (S, B, F)
    y = out[:, :F].reshape(B, S, F)
    return jnp.transpose(y, (1, 0, 2))


# ---------------------------------------------------------------------------
# Deterministic parameter init (shapes from nn.TransformerEncoderLayer / nn.Linear)
# ---------------------------------------------------------------------------
def init_params(key):
    def nrm(k, shape):
        return jax.random.normal(k, shape, jnp.float32) * 0.05

    layers = []
    for _ in range(L):
        key, *ks = jax.random.split(key, 9)
        in_proj_w = nrm(ks[0], (3 * D, D))           # MultiheadAttention.in_proj_weight
        in_proj_b = nrm(ks[1], (3 * D,))             # MultiheadAttention.in_proj_bias
        p = dict(
            wq=in_proj_w[:D], wk=in_proj_w[D:2 * D], wv=in_proj_w[2 * D:],
            bq=in_proj_b[:D], bk=in_proj_b[D:2 * D], bv=in_proj_b[2 * D:],
            wo=nrm(ks[2], (D, D)), bo=nrm(ks[3], (D,)),          # out_proj
            ln1w=jnp.ones((D,), jnp.float32), ln1b=jnp.zeros((D,), jnp.float32),
            w1=nrm(ks[4], (DFF, D)), b1=nrm(ks[5], (DFF,)),      # linear1
            w2=nrm(ks[6], (D, DFF)), b2=nrm(ks[7], (D,)),        # linear2
            ln2w=jnp.ones((D,), jnp.float32), ln2b=jnp.zeros((D,), jnp.float32),
        )
        layers.append(p)
    key, k1, k2 = jax.random.split(key, 3)
    fc_w = nrm(k1, (F, D))
    fc_b = nrm(k2, (F,))
    return layers, fc_w, fc_b


# ---------------------------------------------------------------------------
# Pure-JAX reference (same math) for a correctness check
# ---------------------------------------------------------------------------
def _layer_norm(x, w, b):
    mu = jnp.mean(x, axis=-1, keepdims=True)
    var = jnp.mean(jnp.square(x - mu), axis=-1, keepdims=True)
    return (x - mu) * jax.lax.rsqrt(var + EPS) * w + b


def ref_forward(x_sbd, layers, fc_w, fc_b):
    x = jnp.transpose(x_sbd, (1, 0, 2))              # (B, S, D)
    for p in layers:
        q = x @ p['wq'].T + p['bq']
        k = x @ p['wk'].T + p['bk']
        v = x @ p['wv'].T + p['bv']
        qh = q.reshape(B, S, H, HD).transpose(0, 2, 1, 3)
        kh = k.reshape(B, S, H, HD).transpose(0, 2, 1, 3)
        vh = v.reshape(B, S, H, HD).transpose(0, 2, 1, 3)
        s = jnp.einsum('bhqd,bhkd->bhqk', qh, kh) / (HD ** 0.5)
        a = jax.nn.softmax(s, axis=-1)
        o = jnp.einsum('bhqk,bhkd->bhqd', a, vh).transpose(0, 2, 1, 3).reshape(B, S, D)
        o = o @ p['wo'].T + p['bo']
        h1 = _layer_norm(x + o, p['ln1w'], p['ln1b'])
        ff = jnp.maximum(h1 @ p['w1'].T + p['b1'], 0.0) @ p['w2'].T + p['b2']
        x = _layer_norm(h1 + ff, p['ln2w'], p['ln2b'])
    y = x @ fc_w.T + fc_b
    return jnp.transpose(y, (1, 0, 2))               # (S, B, F)


# ---------------------------------------------------------------------------
if __name__ == "__main__":
    key = jax.random.PRNGKey(0)
    key, kx, kp = jax.random.split(key, 3)
    x = jax.random.normal(kx, (S, B, D), jnp.float32)    # (seq, batch, model_dim)
    layers, fc_w, fc_b = init_params(kp)
    packed = pack_params(layers, fc_w, fc_b)

    out = voice_conversion_forward(x, *packed)
    out = jax.block_until_ready(out)

    ref = jax.block_until_ready(ref_forward(x, layers, fc_w, fc_b))
    assert out.shape == (S, B, F), out.shape
    assert jnp.allclose(out, ref, atol=1e-3, rtol=1e-3), \
        float(jnp.max(jnp.abs(out - ref)))

    print("KERNEL_OK")
</pallas_src>

<mosaic_0001>
module attributes {stable_mosaic.version = 11 : i64} {
  func.func @fused_transformer_kernel(%arg0: i32, %arg1: memref<16x32xf32, #tpu.memory_space<vmem>>, %arg2: memref<2x32x96xf32, #tpu.memory_space<vmem>>, %arg3: memref<2x1x96xf32, #tpu.memory_space<vmem>>, %arg4: memref<2x32x32xf32, #tpu.memory_space<vmem>>, %arg5: memref<2x8x32xf32, #tpu.memory_space<vmem>>, %arg6: memref<2x32x2048xf32, #tpu.memory_space<vmem>>, %arg7: memref<2x1x2048xf32, #tpu.memory_space<vmem>>, %arg8: memref<2x32x2048xf32, #tpu.memory_space<vmem>>, %arg9: memref<32x128xf32, #tpu.memory_space<vmem>>, %arg10: memref<1x128xf32, #tpu.memory_space<vmem>>, %arg11: memref<16x128xf32, #tpu.memory_space<vmem>>) attributes {dimension_semantics = [#tpu.dimension_semantics<arbitrary>], iteration_bounds = array<i64: 1>, scalar_prefetch = 0 : i64, scratch_operands = 0 : i64, tpu.core_type = #tpu.core_type<tc>, window_params = [{pipeline_mode = #tpu.pipeline_mode<synchronous>, transform_indices = @transform_0, window_bounds = array<i64: 16, 32>}, {pipeline_mode = #tpu.pipeline_mode<synchronous>, transform_indices = @transform_1, window_bounds = array<i64: 2, 32, 96>}, {pipeline_mode = #tpu.pipeline_mode<synchronous>, transform_indices = @transform_2, window_bounds = array<i64: 2, 1, 96>}, {pipeline_mode = #tpu.pipeline_mode<synchronous>, transform_indices = @transform_3, window_bounds = array<i64: 2, 32, 32>}, {pipeline_mode = #tpu.pipeline_mode<synchronous>, transform_indices = @transform_4, window_bounds = array<i64: 2, 8, 32>}, {pipeline_mode = #tpu.pipeline_mode<synchronous>, transform_indices = @transform_5, window_bounds = array<i64: 2, 32, 2048>}, {pipeline_mode = #tpu.pipeline_mode<synchronous>, transform_indices = @transform_6, window_bounds = array<i64: 2, 1, 2048>}, {pipeline_mode = #tpu.pipeline_mode<synchronous>, transform_indices = @transform_7, window_bounds = array<i64: 2, 32, 2048>}, {pipeline_mode = #tpu.pipeline_mode<synchronous>, transform_indices = @transform_8, window_bounds = array<i64: 32, 128>}, {pipeline_mode = #tpu.pipeline_mode<synchronous>, transform_indices = @transform_9, window_bounds = array<i64: 1, 128>}, {pipeline_mode = #tpu.pipeline_mode<synchronous>, transform_indices = @transform_10, window_bounds = array<i64: 16, 128>}]} {
    %c0 = arith.constant 0 : index
    %c0_0 = arith.constant 0 : index
    %0 = vector.load %arg1[%c0, %c0_0] : memref<16x32xf32, #tpu.memory_space<vmem>>, vector<16x32xf32>
    %c0_1 = arith.constant 0 : index
    %c0_2 = arith.constant 0 : index
    %c0_3 = arith.constant 0 : index
    %1 = vector.load %arg2[%c0_1, %c0_2, %c0_3] : memref<2x32x96xf32, #tpu.memory_space<vmem>>, vector<1x32x96xf32>
    %2 = vector.shape_cast %1 : vector<1x32x96xf32> to vector<32x96xf32>
    %cst = arith.constant dense<0.000000e+00> : vector<16x96xf32>
    %3 = tpu.matmul %0, %2, %cst {dimension_numbers = #tpu.dot_dimension_numbers<[1], [0], [0], [1], [0, 0, 1, 1], [], []>} : vector<16x32xf32>, vector<32x96xf32>, vector<16x96xf32> -> vector<16x96xf32>
    %c0_4 = arith.constant 0 : index
    %c0_5 = arith.constant 0 : index
    %c0_6 = arith.constant 0 : index
    %4 = vector.load %arg3[%c0_4, %c0_5, %c0_6] : memref<2x1x96xf32, #tpu.memory_space<vmem>>, vector<1x1x96xf32>
    %5 = vector.shape_cast %4 : vector<1x1x96xf32> to vector<1x96xf32>
    %6 = vector.broadcast %5 : vector<1x96xf32> to vector<16x96xf32>
    %7 = arith.addf %3, %6 : vector<16x96xf32>
    %c0_7 = arith.constant 0 : index
    %c0_8 = arith.constant 0 : index
    %c0_9 = arith.constant 0 : index
    %8 = vector.load %arg5[%c0_7, %c0_8, %c0_9] : memref<2x8x32xf32, #tpu.memory_space<vmem>>, vector<1x8x32xf32>
    %9 = vector.shape_cast %8 : vector<1x8x32xf32> to vector<8x32xf32>
    %10 = vector.extract_strided_slice %9 {offsets = [0, 0], sizes = [1, 32], strides = [1, 1]} : vector<8x32xf32> to vector<1x32xf32>
    %11 = vector.extract_strided_slice %9 {offsets = [1, 0], sizes = [1, 32], strides = [1, 1]} : vector<8x32xf32> to vector<1x32xf32>
    %12 = vector.extract_strided_slice %9 {offsets = [2, 0], sizes = [1, 32], strides = [1, 1]} : vector<8x32xf32> to vector<1x32xf32>
    %13 = vector.extract_strided_slice %9 {offsets = [3, 0], sizes = [1, 32], strides = [1, 1]} : vector<8x32xf32> to vector<1x32xf32>
    %14 = vector.extract_strided_slice %9 {offsets = [4, 0], sizes = [1, 32], strides = [1, 1]} : vector<8x32xf32> to vector<1x32xf32>
    %15 = vector.extract_strided_slice %9 {offsets = [5, 0], sizes = [1, 32], strides = [1, 1]} : vector<8x32xf32> to vector<1x32xf32>
    %16 = vector.extract_strided_slice %7 {offsets = [0, 0], sizes = [8, 32], strides = [1, 1]} : vector<16x96xf32> to vector<8x32xf32>
    %17 = vector.extract_strided_slice %7 {offsets = [0, 32], sizes = [8, 32], strides = [1, 1]} : vector<16x96xf32> to vector<8x32xf32>
    %18 = vector.extract_strided_slice %7 {offsets = [0, 64], sizes = [8, 32], strides = [1, 1]} : vector<16x96xf32> to vector<8x32xf32>
    %19 = vector.extract_strided_slice %16 {offsets = [0, 0], sizes = [8, 8], strides = [1, 1]} : vector<8x32xf32> to vector<8x8xf32>
    %20 = vector.extract_strided_slice %17 {offsets = [0, 0], sizes = [8, 8], strides = [1, 1]} : vector<8x32xf32> to vector<8x8xf32>
    %21 = vector.extract_strided_slice %18 {offsets = [0, 0], sizes = [8, 8], strides = [1, 1]} : vector<8x32xf32> to vector<8x8xf32>
    %cst_10 = arith.constant dense<0.000000e+00> : vector<8x8xf32>
    %22 = tpu.matmul %19, %20, %cst_10 {dimension_numbers = #tpu.dot_dimension_numbers<[1], [1], [0], [0], [0, 0, 1, 0], [], []>} : vector<8x8xf32>, vector<8x8xf32>, vector<8x8xf32> -> vector<8x8xf32>
    %cst_11 = arith.constant 0.353553385 : f32
    %23 = vector.broadcast %cst_11 : f32 to vector<8x8xf32>
    %24 = arith.mulf %22, %23 : vector<8x8xf32>
    %cst_12 = arith.constant dense<0xFF800000> : vector<8xf32>
    %25 = vector.multi_reduction <maximumf>, %24, %cst_12 [1] : vector<8x8xf32> to vector<8xf32>
    %26 = vector.shape_cast %25 : vector<8xf32> to vector<8x1xf32>
    %27 = vector.broadcast %26 : vector<8x1xf32> to vector<8x8xf32>
    %28 = arith.subf %24, %27 : vector<8x8xf32>
    %29 = math.exp %28 : vector<8x8xf32>
    %cst_13 = arith.constant dense<0.000000e+00> : vector<8xf32>
    %30 = vector.multi_reduction <add>, %29, %cst_13 [1] : vector<8x8xf32> to vector<8xf32>
    %31 = vector.shape_cast %30 : vector<8xf32> to vector<8x1xf32>
    %32 = tpu.reciprocal %31 {approx = true} : vector<8x1xf32> -> vector<8x1xf32>
    %33 = vector.broadcast %32 : vector<8x1xf32> to vector<8x8xf32>
    %34 = arith.mulf %29, %33 : vector<8x8xf32>
    %cst_14 = arith.constant dense<0.000000e+00> : vector<8x8xf32>
    %35 = tpu.matmul %34, %21, %cst_14 {dimension_numbers = #tpu.dot_dimension_numbers<[1], [0], [0], [1], [0, 0, 1, 1], [], []>} : vector<8x8xf32>, vector<8x8xf32>, vector<8x8xf32> -> vector<8x8xf32>
    %36 = vector.extract_strided_slice %16 {offsets = [0, 8], sizes = [8, 8], strides = [1, 1]} : vector<8x32xf32> to vector<8x8xf32>
    %37 = vector.extract_strided_slice %17 {offsets = [0, 8], sizes = [8, 8], strides = [1, 1]} : vector<8x32xf32> to vector<8x8xf32>
    %38 = vector.extract_strided_slice %18 {offsets = [0, 8], sizes = [8, 8], strides = [1, 1]} : vector<8x32xf32> to vector<8x8xf32>
    %cst_15 = arith.constant dense<0.000000e+00> : vector<8x8xf32>
    %39 = tpu.matmul %36, %37, %cst_15 {dimension_numbers = #tpu.dot_dimension_numbers<[1], [1], [0], [0], [0, 0, 1, 0], [], []>} : vector<8x8xf32>, vector<8x8xf32>, vector<8x8xf32> -> vector<8x8xf32>
    %cst_16 = arith.constant 0.353553385 : f32
    %40 = vector.broadcast %cst_16 : f32 to vector<8x8xf32>
    %41 = arith.mulf %39, %40 : vector<8x8xf32>
    %cst_17 = arith.constant dense<0xFF800000> : vector<8xf32>
    %42 = vector.multi_reduction <maximumf>, %41, %cst_17 [1] : vector<8x8xf32> to vector<8xf32>
    %43 = vector.shape_cast %42 : vector<8xf32> to vector<8x1xf32>
    %44 = vector.broadcast %43 : vector<8x1xf32> to vector<8x8xf32>
    %45 = arith.subf %41, %44 : vector<8x8xf32>
    %46 = math.exp %45 : vector<8x8xf32>
    %cst_18 = arith.constant dense<0.000000e+00> : vector<8xf32>
    %47 = vector.multi_reduction <add>, %46, %cst_18 [1] : vector<8x8xf32> to vector<8xf32>
    %48 = vector.shape_cast %47 : vector<8xf32> to vector<8x1xf32>
    %49 = tpu.reciprocal %48 {approx = true} : vector<8x1xf32> -> vector<8x1xf32>
    %50 = vector.broadcast %49 : vector<8x1xf32> to vector<8x8xf32>
    %51 = arith.mulf %46, %50 : vector<8x8xf32>
    %cst_19 = arith.constant dense<0.000000e+00> : vector<8x8xf32>
    %52 = tpu.matmul %51, %38, %cst_19 {dimension_numbers = #tpu.dot_dimension_numbers<[1], [0], [0], [1], [0, 0, 1, 1], [], []>} : vector<8x8xf32>, vector<8x8xf32>, vector<8x8xf32> -> vector<8x8xf32>
    %53 = vector.extract_strided_slice %16 {offsets = [0, 16], sizes = [8, 8], strides = [1, 1]} : vector<8x32xf32> to vector<8x8xf32>
    %54 = vector.extract_strided_slice %17 {offsets = [0, 16], sizes = [8, 8], strides = [1, 1]} : vector<8x32xf32> to vector<8x8xf32>
    %55 = vector.extract_strided_slice %18 {offsets = [0, 16], sizes = [8, 8], strides = [1, 1]} : vector<8x32xf32> to vector<8x8xf32>
    %cst_20 = arith.constant dense<0.000000e+00> : vector<8x8xf32>
    %56 = tpu.matmul %53, %54, %cst_20 {dimension_numbers = #tpu.dot_dimension_numbers<[1], [1], [0], [0], [0, 0, 1, 0], [], []>} : vector<8x8xf32>, vector<8x8xf32>, vector<8x8xf32> -> vector<8x8xf32>
    %cst_21 = arith.constant 0.353553385 : f32
    %57 = vector.broadcast %cst_21 : f32 to vector<8x8xf32>
    %58 = arith.mulf %56, %57 : vector<8x8xf32>
    %cst_22 = arith.constant dense<0xFF800000> : vector<8xf32>
    %59 = vector.multi_reduction <maximumf>, %58, %cst_22 [1] : vector<8x8xf32> to vector<8xf32>
    %60 = vector.shape_cast %59 : vector<8xf32> to vector<8x1xf32>
    %61 = vector.broadcast %60 : vector<8x1xf32> to vector<8x8xf32>
    %62 = arith.subf %58, %61 : vector<8x8xf32>
    %63 = math.exp %62 : vector<8x8xf32>
    %cst_23 = arith.constant dense<0.000000e+00> : vector<8xf32>
    %64 = vector.multi_reduction <add>, %63, %cst_23 [1] : vector<8x8xf32> to vector<8xf32>
    %65 = vector.shape_cast %64 : vector<8xf32> to vector<8x1xf32>
    %66 = tpu.reciprocal %65 {approx = true} : vector<8x1xf32> -> vector<8x1xf32>
    %67 = vector.broadcast %66 : vector<8x1xf32> to vector<8x8xf32>
    %68 = arith.mulf %63, %67 : vector<8x8xf32>
    %cst_24 = arith.constant dense<0.000000e+00> : vector<8x8xf32>
    %69 = tpu.matmul %68, %55, %cst_24 {dimension_numbers = #tpu.dot_dimension_numbers<[1], [0], [0], [1], [0, 0, 1, 1], [], []>} : vector<8x8xf32>, vector<8x8xf32>, vector<8x8xf32> -> vector<8x8xf32>
    %70 = vector.extract_strided_slice %16 {offsets = [0, 24], sizes = [8, 8], strides = [1, 1]} : vector<8x32xf32> to vector<8x8xf32>
    %71 = vector.extract_strided_slice %17 {offsets = [0, 24], sizes = [8, 8], strides = [1, 1]} : vector<8x32xf32> to vector<8x8xf32>
    %72 = vector.extract_strided_slice %18 {offsets = [0, 24], sizes = [8, 8], strides = [1, 1]} : vector<8x32xf32> to vector<8x8xf32>
    %cst_25 = arith.constant dense<0.000000e+00> : vector<8x8xf32>
    %73 = tpu.matmul %70, %71, %cst_25 {dimension_numbers = #tpu.dot_dimension_numbers<[1], [1], [0], [0], [0, 0, 1, 0], [], []>} : vector<8x8xf32>, vector<8x8xf32>, vector<8x8xf32> -> vector<8x8xf32>
    %cst_26 = arith.constant 0.353553385 : f32
    %74 = vector.broadcast %cst_26 : f32 to vector<8x8xf32>
    %75 = arith.mulf %73, %74 : vector<8x8xf32>
    %cst_27 = arith.constant dense<0xFF800000> : vector<8xf32>
    %76 = vector.multi_reduction <maximumf>, %75, %cst_27 [1] : vector<8x8xf32> to vector<8xf32>
    %77 = vector.shape_cast %76 : vector<8xf32> to vector<8x1xf32>
    %78 = vector.broadcast %77 : vector<8x1xf32> to vector<8x8xf32>
    %79 = arith.subf %75, %78 : vector<8x8xf32>
    %80 = math.exp %79 : vector<8x8xf32>
    %cst_28 = arith.constant dense<0.000000e+00> : vector<8xf32>
    %81 = vector.multi_reduction <add>, %80, %cst_28 [1] : vector<8x8xf32> to vector<8xf32>
    %82 = vector.shape_cast %81 : vector<8xf32> to vector<8x1xf32>
    %83 = tpu.reciprocal %82 {approx = true} : vector<8x1xf32> -> vector<8x1xf32>
    %84 = vector.broadcast %83 : vector<8x1xf32> to vector<8x8xf32>
    %85 = arith.mulf %80, %84 : vector<8x8xf32>
    %cst_29 = arith.constant dense<0.000000e+00> : vector<8x8xf32>
    %86 = tpu.matmul %85, %72, %cst_29 {dimension_numbers = #tpu.dot_dimension_numbers<[1], [0], [0], [1], [0, 0, 1, 1], [], []>} : vector<8x8xf32>, vector<8x8xf32>, vector<8x8xf32> -> vector<8x8xf32>
    %87 = tpu.concatenate %35, %52, %69, %86 in 1 : vector<8x8xf32>, vector<8x8xf32>, vector<8x8xf32>, vector<8x8xf32> -> vector<8x32xf32>
    %88 = vector.extract_strided_slice %7 {offsets = [8, 0], sizes = [8, 32], strides = [1, 1]} : vector<16x96xf32> to vector<8x32xf32>
    %89 = vector.extract_strided_slice %7 {offsets = [8, 32], sizes = [8, 32], strides = [1, 1]} : vector<16x96xf32> to vector<8x32xf32>
    %90 = vector.extract_strided_slice %7 {offsets = [8, 64], sizes = [8, 32], strides = [1, 1]} : vector<16x96xf32> to vector<8x32xf32>
    %91 = vector.extract_strided_slice %88 {offsets = [0, 0], sizes = [8, 8], strides = [1, 1]} : vector<8x32xf32> to vector<8x8xf32>
    %92 = vector.extract_strided_slice %89 {offsets = [0, 0], sizes = [8, 8], strides = [1, 1]} : vector<8x32xf32> to vector<8x8xf32>
    %93 = vector.extract_strided_slice %90 {offsets = [0, 0], sizes = [8, 8], strides = [1, 1]} : vector<8x32xf32> to vector<8x8xf32>
    %cst_30 = arith.constant dense<0.000000e+00> : vector<8x8xf32>
    %94 = tpu.matmul %91, %92, %cst_30 {dimension_numbers = #tpu.dot_dimension_numbers<[1], [1], [0], [0], [0, 0, 1, 0], [], []>} : vector<8x8xf32>, vector<8x8xf32>, vector<8x8xf32> -> vector<8x8xf32>
    %cst_31 = arith.constant 0.353553385 : f32
    %95 = vector.broadcast %cst_31 : f32 to vector<8x8xf32>
    %96 = arith.mulf %94, %95 : vector<8x8xf32>
    %cst_32 = arith.constant dense<0xFF800000> : vector<8xf32>
    %97 = vector.multi_reduction <maximumf>, %96, %cst_32 [1] : vector<8x8xf32> to vector<8xf32>
    %98 = vector.shape_cast %97 : vector<8xf32> to vector<8x1xf32>
    %99 = vector.broadcast %98 : vector<8x1xf32> to vector<8x8xf32>
    %100 = arith.subf %96, %99 : vector<8x8xf32>
    %101 = math.exp %100 : vector<8x8xf32>
    %cst_33 = arith.constant dense<0.000000e+00> : vector<8xf32>
    %102 = vector.multi_reduction <add>, %101, %cst_33 [1] : vector<8x8xf32> to vector<8xf32>
    %103 = vector.shape_cast %102 : vector<8xf32> to vector<8x1xf32>
    %104 = tpu.reciprocal %103 {approx = true} : vector<8x1xf32> -> vector<8x1xf32>
    %105 = vector.broadcast %104 : vector<8x1xf32> to vector<8x8xf32>
    %106 = arith.mulf %101, %105 : vector<8x8xf32>
    %cst_34 = arith.constant dense<0.000000e+00> : vector<8x8xf32>
    %107 = tpu.matmul %106, %93, %cst_34 {dimension_numbers = #tpu.dot_dimension_numbers<[1], [0], [0], [1], [0, 0, 1, 1], [], []>} : vector<8x8xf32>, vector<8x8xf32>, vector<8x8xf32> -> vector<8x8xf32>
    %108 = vector.extract_strided_slice %88 {offsets = [0, 8], sizes = [8, 8], strides = [1, 1]} : vector<8x32xf32> to vector<8x8xf32>
    %109 = vector.extract_strided_slice %89 {offsets = [0, 8], sizes = [8, 8], strides = [1, 1]} : vector<8x32xf32> to vector<8x8xf32>
    %110 = vector.extract_strided_slice %90 {offsets = [0, 8], sizes = [8, 8], strides = [1, 1]} : vector<8x32xf32> to vector<8x8xf32>
    %cst_35 = arith.constant dense<0.000000e+00> : vector<8x8xf32>
    %111 = tpu.matmul %108, %109, %cst_35 {dimension_numbers = #tpu.dot_dimension_numbers<[1], [1], [0], [0], [0, 0, 1, 0], [], []>} : vector<8x8xf32>, vector<8x8xf32>, vector<8x8xf32> -> vector<8x8xf32>
    %cst_36 = arith.constant 0.353553385 : f32
    %112 = vector.broadcast %cst_36 : f32 to vector<8x8xf32>
    %113 = arith.mulf %111, %112 : vector<8x8xf32>
    %cst_37 = arith.constant dense<0xFF800000> : vector<8xf32>
    %114 = vector.multi_reduction <maximumf>, %113, %cst_37 [1] : vector<8x8xf32> to vector<8xf32>
    %115 = vector.shape_cast %114 : vector<8xf32> to vector<8x1xf32>
    %116 = vector.broadcast %115 : vector<8x1xf32> to vector<8x8xf32>
    %117 = arith.subf %113, %116 : vector<8x8xf32>
    %118 = math.exp %117 : vector<8x8xf32>
    %cst_38 = arith.constant dense<0.000000e+00> : vector<8xf32>
    %119 = vector.multi_reduction <add>, %118, %cst_38 [1] : vector<8x8xf32> to vector<8xf32>
    %120 = vector.shape_cast %119 : vector<8xf32> to vector<8x1xf32>
    %121 = tpu.reciprocal %120 {approx = true} : vector<8x1xf32> -> vector<8x1xf32>
    %122 = vector.broadcast %121 : vector<8x1xf32> to vector<8x8xf32>
    %123 = arith.mulf %118, %122 : vector<8x8xf32>
    %cst_39 = arith.constant dense<0.000000e+00> : vector<8x8xf32>
    %124 = tpu.matmul %123, %110, %cst_39 {dimension_numbers = #tpu.dot_dimension_numbers<[1], [0], [0], [1], [0, 0, 1, 1], [], []>} : vector<8x8xf32>, vector<8x8xf32>, vector<8x8xf32> -> vector<8x8xf32>
    %125 = vector.extract_strided_slice %88 {offsets = [0, 16], sizes = [8, 8], strides = [1, 1]} : vector<8x32xf32> to vector<8x8xf32>
    %126 = vector.extract_strided_slice %89 {offsets = [0, 16], sizes = [8, 8], strides = [1, 1]} : vector<8x32xf32> to vector<8x8xf32>
    %127 = vector.extract_strided_slice %90 {offsets = [0, 16], sizes = [8, 8], strides = [1, 1]} : vector<8x32xf32> to vector<8x8xf32>
    %cst_40 = arith.constant dense<0.000000e+00> : vector<8x8xf32>
    %128 = tpu.matmul %125, %126, %cst_40 {dimension_numbers = #tpu.dot_dimension_numbers<[1], [1], [0], [0], [0, 0, 1, 0], [], []>} : vector<8x8xf32>, vector<8x8xf32>, vector<8x8xf32> -> vector<8x8xf32>
    %cst_41 = arith.constant 0.353553385 : f32
    %129 = vector.broadcast %cst_41 : f32 to vector<8x8xf32>
    %130 = arith.mulf %128, %129 : vector<8x8xf32>
    %cst_42 = arith.constant dense<0xFF800000> : vector<8xf32>
    %131 = vector.multi_reduction <maximumf>, %130, %cst_42 [1] : vector<8x8xf32> to vector<8xf32>
    %132 = vector.shape_cast %131 : vector<8xf32> to vector<8x1xf32>
    %133 = vector.broadcast %132 : vector<8x1xf32> to vector<8x8xf32>
    %134 = arith.subf %130, %133 : vector<8x8xf32>
    %135 = math.exp %134 : vector<8x8xf32>
    %cst_43 = arith.constant dense<0.000000e+00> : vector<8xf32>
    %136 = vector.multi_reduction <add>, %135, %cst_43 [1] : vector<8x8xf32> to vector<8xf32>
    %137 = vector.shape_cast %136 : vector<8xf32> to vector<8x1xf32>
    %138 = tpu.reciprocal %137 {approx = true} : vector<8x1xf32> -> vector<8x1xf32>
    %139 = vector.broadcast %138 : vector<8x1xf32> to vector<8x8xf32>
    %140 = arith.mulf %135, %139 : vector<8x8xf32>
    %cst_44 = arith.constant dense<0.000000e+00> : vector<8x8xf32>
    %141 = tpu.matmul %140, %127, %cst_44 {dimension_numbers = #tpu.dot_dimension_numbers<[1], [0], [0], [1], [0, 0, 1, 1], [], []>} : vector<8x8xf32>, vector<8x8xf32>, vector<8x8xf32> -> vector<8x8xf32>
    %142 = vector.extract_strided_slice %88 {offsets = [0, 24], sizes = [8, 8], strides = [1, 1]} : vector<8x32xf32> to vector<8x8xf32>
    %143 = vector.extract_strided_slice %89 {offsets = [0, 24], sizes = [8, 8], strides = [1, 1]} : vector<8x32xf32> to vector<8x8xf32>
    %144 = vector.extract_strided_slice %90 {offsets = [0, 24], sizes = [8, 8], strides = [1, 1]} : vector<8x32xf32> to vector<8x8xf32>
    %cst_45 = arith.constant dense<0.000000e+00> : vector<8x8xf32>
    %145 = tpu.matmul %142, %143, %cst_45 {dimension_numbers = #tpu.dot_dimension_numbers<[1], [1], [0], [0], [0, 0, 1, 0], [], []>} : vector<8x8xf32>, vector<8x8xf32>, vector<8x8xf32> -> vector<8x8xf32>
    %cst_46 = arith.constant 0.353553385 : f32
    %146 = vector.broadcast %cst_46 : f32 to vector<8x8xf32>
    %147 = arith.mulf %145, %146 : vector<8x8xf32>
    %cst_47 = arith.constant dense<0xFF800000> : vector<8xf32>
    %148 = vector.multi_reduction <maximumf>, %147, %cst_47 [1] : vector<8x8xf32> to vector<8xf32>
    %149 = vector.shape_cast %148 : vector<8xf32> to vector<8x1xf32>
    %150 = vector.broadcast %149 : vector<8x1xf32> to vector<8x8xf32>
    %151 = arith.subf %147, %150 : vector<8x8xf32>
    %152 = math.exp %151 : vector<8x8xf32>
    %cst_48 = arith.constant dense<0.000000e+00> : vector<8xf32>
    %153 = vector.multi_reduction <add>, %152, %cst_48 [1] : vector<8x8xf32> to vector<8xf32>
    %154 = vector.shape_cast %153 : vector<8xf32> to vector<8x1xf32>
    %155 = tpu.reciprocal %154 {approx = true} : vector<8x1xf32> -> vector<8x1xf32>
    %156 = vector.broadcast %155 : vector<8x1xf32> to vector<8x8xf32>
    %157 = arith.mulf %152, %156 : vector<8x8xf32>
    %cst_49 = arith.constant dense<0.000000e+00> : vector<8x8xf32>
    %158 = tpu.matmul %157, %144, %cst_49 {dimension_numbers = #tpu.dot_dimension_numbers<[1], [0], [0], [1], [0, 0, 1, 1], [], []>} : vector<8x8xf32>, vector<8x8xf32>, vector<8x8xf32> -> vector<8x8xf32>
    %159 = tpu.concatenate %107, %124, %141, %158 in 1 : vector<8x8xf32>, vector<8x8xf32>, vector<8x8xf32>, vector<8x8xf32> -> vector<8x32xf32>
    %160 = tpu.concatenate %87, %159 in 0 : vector<8x32xf32>, vector<8x32xf32> -> vector<16x32xf32>
    %c0_50 = arith.constant 0 : index
    %c0_51 = arith.constant 0 : index
    %c0_52 = arith.constant 0 : index
    %161 = vector.load %arg4[%c0_50, %c0_51, %c0_52] : memref<2x32x32xf32, #tpu.memory_space<vmem>>, vector<1x32x32xf32>
    %162 = vector.shape_cast %161 : vector<1x32x32xf32> to vector<32x32xf32>
    %cst_53 = arith.constant dense<0.000000e+00> : vector<16x32xf32>
    %163 = tpu.matmul %160, %162, %cst_53 {dimension_numbers = #tpu.dot_dimension_numbers<[1], [0], [0], [1], [0, 0, 1, 1], [], []>} : vector<16x32xf32>, vector<32x32xf32>, vector<16x32xf32> -> vector<16x32xf32>
    %164 = vector.broadcast %10 : vector<1x32xf32> to vector<16x32xf32>
    %165 = arith.addf %163, %164 : vector<16x32xf32>
    %166 = arith.addf %0, %165 : vector<16x32xf32>
    %cst_54 = arith.constant dense<0.000000e+00> : vector<16xf32>
    %167 = vector.multi_reduction <add>, %166, %cst_54 [1] : vector<16x32xf32> to vector<16xf32>
    %168 = vector.shape_cast %167 : vector<16xf32> to vector<16x1xf32>
    %cst_55 = arith.constant 3.200000e+01 : f32
    %169 = vector.broadcast %cst_55 : f32 to vector<16x1xf32>
    %170 = arith.divf %168, %169 : vector<16x1xf32>
    %171 = vector.broadcast %170 : vector<16x1xf32> to vector<16x32xf32>
    %172 = arith.subf %166, %171 : vector<16x32xf32>
    %173 = arith.mulf %172, %172 : vector<16x32xf32>
    %cst_56 = arith.constant dense<0.000000e+00> : vector<16xf32>
    %174 = vector.multi_reduction <add>, %173, %cst_56 [1] : vector<16x32xf32> to vector<16xf32>
    %175 = vector.shape_cast %174 : vector<16xf32> to vector<16x1xf32>
    %cst_57 = arith.constant 3.200000e+01 : f32
    %176 = vector.broadcast %cst_57 : f32 to vector<16x1xf32>
    %177 = arith.divf %175, %176 : vector<16x1xf32>
    %178 = vector.broadcast %170 : vector<16x1xf32> to vector<16x32xf32>
    %179 = arith.subf %166, %178 : vector<16x32xf32>
    %cst_58 = arith.constant 9.99999974E-6 : f32
    %180 = vector.broadcast %cst_58 : f32 to vector<16x1xf32>
    %181 = arith.addf %177, %180 : vector<16x1xf32>
    %182 = math.rsqrt %181 : vector<16x1xf32>
    %183 = vector.broadcast %182 : vector<16x1xf32> to vector<16x32xf32>
    %184 = arith.mulf %179, %183 : vector<16x32xf32>
    %185 = vector.broadcast %11 : vector<1x32xf32> to vector<16x32xf32>
    %186 = arith.mulf %184, %185 : vector<16x32xf32>
    %187 = vector.broadcast %12 : vector<1x32xf32> to vector<16x32xf32>
    %188 = arith.addf %186, %187 : vector<16x32xf32>
    %c0_59 = arith.constant 0 : index
    %c0_60 = arith.constant 0 : index
    %c0_61 = arith.constant 0 : index
    %189 = vector.load %arg6[%c0_59, %c0_60, %c0_61] : memref<2x32x2048xf32, #tpu.memory_space<vmem>>, vector<1x32x2048xf32>
    %190 = vector.shape_cast %189 : vector<1x32x2048xf32> to vector<32x2048xf32>
    %cst_62 = arith.constant dense<0.000000e+00> : vector<16x2048xf32>
    %191 = tpu.matmul %188, %190, %cst_62 {dimension_numbers = #tpu.dot_dimension_numbers<[1], [0], [0], [1], [0, 0, 1, 1], [], []>} : vector<16x32xf32>, vector<32x2048xf32>, vector<16x2048xf32> -> vector<16x2048xf32>
    %c0_63 = arith.constant 0 : index
    %c0_64 = arith.constant 0 : index
    %c0_65 = arith.constant 0 : index
    %192 = vector.load %arg7[%c0_63, %c0_64, %c0_65] : memref<2x1x2048xf32, #tpu.memory_space<vmem>>, vector<1x1x2048xf32>
    %193 = vector.shape_cast %192 : vector<1x1x2048xf32> to vector<1x2048xf32>
    %194 = vector.broadcast %193 : vector<1x2048xf32> to vector<16x2048xf32>
    %195 = arith.addf %191, %194 : vector<16x2048xf32>
    %cst_66 = arith.constant 0.000000e+00 : f32
    %196 = vector.broadcast %cst_66 : f32 to vector<16x2048xf32>
    %197 = arith.maximumf %195, %196 : vector<16x2048xf32>
    %c0_67 = arith.constant 0 : index
    %c0_68 = arith.constant 0 : index
    %c0_69 = arith.constant 0 : index
    %198 = vector.load %arg8[%c0_67, %c0_68, %c0_69] : memref<2x32x2048xf32, #tpu.memory_space<vmem>>, vector<1x32x2048xf32>
    %199 = vector.shape_cast %198 : vector<1x32x2048xf32> to vector<32x2048xf32>
    %cst_70 = arith.constant dense<0.000000e+00> : vector<16x32xf32>
    %200 = tpu.matmul %197, %199, %cst_70 {dimension_numbers = #tpu.dot_dimension_numbers<[1], [1], [0], [0], [0, 0, 1, 0], [], []>} : vector<16x2048xf32>, vector<32x2048xf32>, vector<16x32xf32> -> vector<16x32xf32>
    %201 = vector.broadcast %13 : vector<1x32xf32> to vector<16x32xf32>
    %202 = arith.addf %200, %201 : vector<16x32xf32>
    %203 = arith.addf %188, %202 : vector<16x32xf32>
    %cst_71 = arith.constant dense<0.000000e+00> : vector<16xf32>
    %204 = vector.multi_reduction <add>, %203, %cst_71 [1] : vector<16x32xf32> to vector<16xf32>
    %205 = vector.shape_cast %204 : vector<16xf32> to vector<16x1xf32>
    %cst_72 = arith.constant 3.200000e+01 : f32
    %206 = vector.broadcast %cst_72 : f32 to vector<16x1xf32>
    %207 = arith.divf %205, %206 : vector<16x1xf32>
    %208 = vector.broadcast %207 : vector<16x1xf32> to vector<16x32xf32>
    %209 = arith.subf %203, %208 : vector<16x32xf32>
    %210 = arith.mulf %209, %209 : vector<16x32xf32>
    %cst_73 = arith.constant dense<0.000000e+00> : vector<16xf32>
    %211 = vector.multi_reduction <add>, %210, %cst_73 [1] : vector<16x32xf32> to vector<16xf32>
    %212 = vector.shape_cast %211 : vector<16xf32> to vector<16x1xf32>
    %cst_74 = arith.constant 3.200000e+01 : f32
    %213 = vector.broadcast %cst_74 : f32 to vector<16x1xf32>
    %214 = arith.divf %212, %213 : vector<16x1xf32>
    %215 = vector.broadcast %207 : vector<16x1xf32> to vector<16x32xf32>
    %216 = arith.subf %203, %215 : vector<16x32xf32>
    %cst_75 = arith.constant 9.99999974E-6 : f32
    %217 = vector.broadcast %cst_75 : f32 to vector<16x1xf32>
    %218 = arith.addf %214, %217 : vector<16x1xf32>
    %219 = math.rsqrt %218 : vector<16x1xf32>
    %220 = vector.broadcast %219 : vector<16x1xf32> to vector<16x32xf32>
    %221 = arith.mulf %216, %220 : vector<16x32xf32>
    %222 = vector.broadcast %14 : vector<1x32xf32> to vector<16x32xf32>
    %223 = arith.mulf %221, %222 : vector<16x32xf32>
    %224 = vector.broadcast %15 : vector<1x32xf32> to vector<16x32xf32>
    %225 = arith.addf %223, %224 : vector<16x32xf32>
    %c1 = arith.constant 1 : index
    %c0_76 = arith.constant 0 : index
    %c0_77 = arith.constant 0 : index
    %226 = vector.load %arg2[%c1, %c0_76, %c0_77] : memref<2x32x96xf32, #tpu.memory_space<vmem>>, vector<1x32x96xf32>
    %227 = vector.shape_cast %226 : vector<1x32x96xf32> to vector<32x96xf32>
    %cst_78 = arith.constant dense<0.000000e+00> : vector<16x96xf32>
    %228 = tpu.matmul %225, %227, %cst_78 {dimension_numbers = #tpu.dot_dimension_numbers<[1], [0], [0], [1], [0, 0, 1, 1], [], []>} : vector<16x32xf32>, vector<32x96xf32>, vector<16x96xf32> -> vector<16x96xf32>
    %c1_79 = arith.constant 1 : index
    %c0_80 = arith.constant 0 : index
    %c0_81 = arith.constant 0 : index
    %229 = vector.load %arg3[%c1_79, %c0_80, %c0_81] : memref<2x1x96xf32, #tpu.memory_space<vmem>>, vector<1x1x96xf32>
    %230 = vector.shape_cast %229 : vector<1x1x96xf32> to vector<1x96xf32>
    %231 = vector.broadcast %230 : vector<1x96xf32> to vector<16x96xf32>
    %232 = arith.addf %228, %231 : vector<16x96xf32>
    %c1_82 = arith.constant 1 : index
    %c0_83 = arith.constant 0 : index
    %c0_84 = arith.constant 0 : index
    %233 = vector.load %arg5[%c1_82, %c0_83, %c0_84] : memref<2x8x32xf32, #tpu.memory_space<vmem>>, vector<1x8x32xf32>
    %234 = vector.shape_cast %233 : vector<1x8x32xf32> to vector<8x32xf32>
    %235 = vector.extract_strided_slice %234 {offsets = [0, 0], sizes = [1, 32], strides = [1, 1]} : vector<8x32xf32> to vector<1x32xf32>
    %236 = vector.extract_strided_slice %234 {offsets = [1, 0], sizes = [1, 32], strides = [1, 1]} : vector<8x32xf32> to vector<1x32xf32>
    %237 = vector.extract_strided_slice %234 {offsets = [2, 0], sizes = [1, 32], strides = [1, 1]} : vector<8x32xf32> to vector<1x32xf32>
    %238 = vector.extract_strided_slice %234 {offsets = [3, 0], sizes = [1, 32], strides = [1, 1]} : vector<8x32xf32> to vector<1x32xf32>
    %239 = vector.extract_strided_slice %234 {offsets = [4, 0], sizes = [1, 32], strides = [1, 1]} : vector<8x32xf32> to vector<1x32xf32>
    %240 = vector.extract_strided_slice %234 {offsets = [5, 0], sizes = [1, 32], strides = [1, 1]} : vector<8x32xf32> to vector<1x32xf32>
    %241 = vector.extract_strided_slice %232 {offsets = [0, 0], sizes = [8, 32], strides = [1, 1]} : vector<16x96xf32> to vector<8x32xf32>
    %242 = vector.extract_strided_slice %232 {offsets = [0, 32], sizes = [8, 32], strides = [1, 1]} : vector<16x96xf32> to vector<8x32xf32>
    %243 = vector.extract_strided_slice %232 {offsets = [0, 64], sizes = [8, 32], strides = [1, 1]} : vector<16x96xf32> to vector<8x32xf32>
    %244 = vector.extract_strided_slice %241 {offsets = [0, 0], sizes = [8, 8], strides = [1, 1]} : vector<8x32xf32> to vector<8x8xf32>
    %245 = vector.extract_strided_slice %242 {offsets = [0, 0], sizes = [8, 8], strides = [1, 1]} : vector<8x32xf32> to vector<8x8xf32>
    %246 = vector.extract_strided_slice %243 {offsets = [0, 0], sizes = [8, 8], strides = [1, 1]} : vector<8x32xf32> to vector<8x8xf32>
    %cst_85 = arith.constant dense<0.000000e+00> : vector<8x8xf32>
    %247 = tpu.matmul %244, %245, %cst_85 {dimension_numbers = #tpu.dot_dimension_numbers<[1], [1], [0], [0], [0, 0, 1, 0], [], []>} : vector<8x8xf32>, vector<8x8xf32>, vector<8x8xf32> -> vector<8x8xf32>
    %cst_86 = arith.constant 0.353553385 : f32
    %248 = vector.broadcast %cst_86 : f32 to vector<8x8xf32>
    %249 = arith.mulf %247, %248 : vector<8x8xf32>
    %cst_87 = arith.constant dense<0xFF800000> : vector<8xf32>
    %250 = vector.multi_reduction <maximumf>, %249, %cst_87 [1] : vector<8x8xf32> to vector<8xf32>
    %251 = vector.shape_cast %250 : vector<8xf32> to vector<8x1xf32>
    %252 = vector.broadcast %251 : vector<8x1xf32> to vector<8x8xf32>
    %253 = arith.subf %249, %252 : vector<8x8xf32>
    %254 = math.exp %253 : vector<8x8xf32>
    %cst_88 = arith.constant dense<0.000000e+00> : vector<8xf32>
    %255 = vector.multi_reduction <add>, %254, %cst_88 [1] : vector<8x8xf32> to vector<8xf32>
    %256 = vector.shape_cast %255 : vector<8xf32> to vector<8x1xf32>
    %257 = tpu.reciprocal %256 {approx = true} : vector<8x1xf32> -> vector<8x1xf32>
    %258 = vector.broadcast %257 : vector<8x1xf32> to vector<8x8xf32>
    %259 = arith.mulf %254, %258 : vector<8x8xf32>
    %cst_89 = arith.constant dense<0.000000e+00> : vector<8x8xf32>
    %260 = tpu.matmul %259, %246, %cst_89 {dimension_numbers = #tpu.dot_dimension_numbers<[1], [0], [0], [1], [0, 0, 1, 1], [], []>} : vector<8x8xf32>, vector<8x8xf32>, vector<8x8xf32> -> vector<8x8xf32>
    %261 = vector.extract_strided_slice %241 {offsets = [0, 8], sizes = [8, 8], strides = [1, 1]} : vector<8x32xf32> to vector<8x8xf32>
    %262 = vector.extract_strided_slice %242 {offsets = [0, 8], sizes = [8, 8], strides = [1, 1]} : vector<8x32xf32> to vector<8x8xf32>
    %263 = vector.extract_strided_slice %243 {offsets = [0, 8], sizes = [8, 8], strides = [1, 1]} : vector<8x32xf32> to vector<8x8xf32>
    %cst_90 = arith.constant dense<0.000000e+00> : vector<8x8xf32>
    %264 = tpu.matmul %261, %262, %cst_90 {dimension_numbers = #tpu.dot_dimension_numbers<[1], [1], [0], [0], [0, 0, 1, 0], [], []>} : vector<8x8xf32>, vector<8x8xf32>, vector<8x8xf32> -> vector<8x8xf32>
    %cst_91 = arith.constant 0.353553385 : f32
    %265 = vector.broadcast %cst_91 : f32 to vector<8x8xf32>
    %266 = arith.mulf %264, %265 : vector<8x8xf32>
    %cst_92 = arith.constant dense<0xFF800000> : vector<8xf32>
    %267 = vector.multi_reduction <maximumf>, %266, %cst_92 [1] : vector<8x8xf32> to vector<8xf32>
    %268 = vector.shape_cast %267 : vector<8xf32> to vector<8x1xf32>
    %269 = vector.broadcast %268 : vector<8x1xf32> to vector<8x8xf32>
    %270 = arith.subf %266, %269 : vector<8x8xf32>
    %271 = math.exp %270 : vector<8x8xf32>
    %cst_93 = arith.constant dense<0.000000e+00> : vector<8xf32>
    %272 = vector.multi_reduction <add>, %271, %cst_93 [1] : vector<8x8xf32> to vector<8xf32>
    %273 = vector.shape_cast %272 : vector<8xf32> to vector<8x1xf32>
    %274 = tpu.reciprocal %273 {approx = true} : vector<8x1xf32> -> vector<8x1xf32>
    %275 = vector.broadcast %274 : vector<8x1xf32> to vector<8x8xf32>
    %276 = arith.mulf %271, %275 : vector<8x8xf32>
    %cst_94 = arith.constant dense<0.000000e+00> : vector<8x8xf32>
    %277 = tpu.matmul %276, %263, %cst_94 {dimension_numbers = #tpu.dot_dimension_numbers<[1], [0], [0], [1], [0, 0, 1, 1], [], []>} : vector<8x8xf32>, vector<8x8xf32>, vector<8x8xf32> -> vector<8x8xf32>
    %278 = vector.extract_strided_slice %241 {offsets = [0, 16], sizes = [8, 8], strides = [1, 1]} : vector<8x32xf32> to vector<8x8xf32>
    %279 = vector.extract_strided_slice %242 {offsets = [0, 16], sizes = [8, 8], strides = [1, 1]} : vector<8x32xf32> to vector<8x8xf32>
    %280 = vector.extract_strided_slice %243 {offsets = [0, 16], sizes = [8, 8], strides = [1, 1]} : vector<8x32xf32> to vector<8x8xf32>
    %cst_95 = arith.constant dense<0.000000e+00> : vector<8x8xf32>
    %281 = tpu.matmul %278, %279, %cst_95 {dimension_numbers = #tpu.dot_dimension_numbers<[1], [1], [0], [0], [0, 0, 1, 0], [], []>} : vector<8x8xf32>, vector<8x8xf32>, vector<8x8xf32> -> vector<8x8xf32>
    %cst_96 = arith.constant 0.353553385 : f32
    %282 = vector.broadcast %cst_96 : f32 to vector<8x8xf32>
    %283 = arith.mulf %281, %282 : vector<8x8xf32>
    %cst_97 = arith.constant dense<0xFF800000> : vector<8xf32>
    %284 = vector.multi_reduction <maximumf>, %283, %cst_97 [1] : vector<8x8xf32> to vector<8xf32>
    %285 = vector.shape_cast %284 : vector<8xf32> to vector<8x1xf32>
    %286 = vector.broadcast %285 : vector<8x1xf32> to vector<8x8xf32>
    %287 = arith.subf %283, %286 : vector<8x8xf32>
    %288 = math.exp %287 : vector<8x8xf32>
    %cst_98 = arith.constant dense<0.000000e+00> : vector<8xf32>
    %289 = vector.multi_reduction <add>, %288, %cst_98 [1] : vector<8x8xf32> to vector<8xf32>
    %290 = vector.shape_cast %289 : vector<8xf32> to vector<8x1xf32>
    %291 = tpu.reciprocal %290 {approx = true} : vector<8x1xf32> -> vector<8x1xf32>
    %292 = vector.broadcast %291 : vector<8x1xf32> to vector<8x8xf32>
    %293 = arith.mulf %288, %292 : vector<8x8xf32>
    %cst_99 = arith.constant dense<0.000000e+00> : vector<8x8xf32>
    %294 = tpu.matmul %293, %280, %cst_99 {dimension_numbers = #tpu.dot_dimension_numbers<[1], [0], [0], [1], [0, 0, 1, 1], [], []>} : vector<8x8xf32>, vector<8x8xf32>, vector<8x8xf32> -> vector<8x8xf32>
    %295 = vector.extract_strided_slice %241 {offsets = [0, 24], sizes = [8, 8], strides = [1, 1]} : vector<8x32xf32> to vector<8x8xf32>
    %296 = vector.extract_strided_slice %242 {offsets = [0, 24], sizes = [8, 8], strides = [1, 1]} : vector<8x32xf32> to vector<8x8xf32>
    %297 = vector.extract_strided_slice %243 {offsets = [0, 24], sizes = [8, 8], strides = [1, 1]} : vector<8x32xf32> to vector<8x8xf32>
    %cst_100 = arith.constant dense<0.000000e+00> : vector<8x8xf32>
    %298 = tpu.matmul %295, %296, %cst_100 {dimension_numbers = #tpu.dot_dimension_numbers<[1], [1], [0], [0], [0, 0, 1, 0], [], []>} : vector<8x8xf32>, vector<8x8xf32>, vector<8x8xf32> -> vector<8x8xf32>
    %cst_101 = arith.constant 0.353553385 : f32
    %299 = vector.broadcast %cst_101 : f32 to vector<8x8xf32>
    %300 = arith.mulf %298, %299 : vector<8x8xf32>
    %cst_102 = arith.constant dense<0xFF800000> : vector<8xf32>
    %301 = vector.multi_reduction <maximumf>, %300, %cst_102 [1] : vector<8x8xf32> to vector<8xf32>
    %302 = vector.shape_cast %301 : vector<8xf32> to vector<8x1xf32>
    %303 = vector.broadcast %302 : vector<8x1xf32> to vector<8x8xf32>
    %304 = arith.subf %300, %303 : vector<8x8xf32>
    %305 = math.exp %304 : vector<8x8xf32>
    %cst_103 = arith.constant dense<0.000000e+00> : vector<8xf32>
    %306 = vector.multi_reduction <add>, %305, %cst_103 [1] : vector<8x8xf32> to vector<8xf32>
    %307 = vector.shape_cast %306 : vector<8xf32> to vector<8x1xf32>
    %308 = tpu.reciprocal %307 {approx = true} : vector<8x1xf32> -> vector<8x1xf32>
    %309 = vector.broadcast %308 : vector<8x1xf32> to vector<8x8xf32>
    %310 = arith.mulf %305, %309 : vector<8x8xf32>
    %cst_104 = arith.constant dense<0.000000e+00> : vector<8x8xf32>
    %311 = tpu.matmul %310, %297, %cst_104 {dimension_numbers = #tpu.dot_dimension_numbers<[1], [0], [0], [1], [0, 0, 1, 1], [], []>} : vector<8x8xf32>, vector<8x8xf32>, vector<8x8xf32> -> vector<8x8xf32>
    %312 = tpu.concatenate %260, %277, %294, %311 in 1 : vector<8x8xf32>, vector<8x8xf32>, vector<8x8xf32>, vector<8x8xf32> -> vector<8x32xf32>
    %313 = vector.extract_strided_slice %232 {offsets = [8, 0], sizes = [8, 32], strides = [1, 1]} : vector<16x96xf32> to vector<8x32xf32>
    %314 = vector.extract_strided_slice %232 {offsets = [8, 32], sizes = [8, 32], strides = [1, 1]} : vector<16x96xf32> to vector<8x32xf32>
    %315 = vector.extract_strided_slice %232 {offsets = [8, 64], sizes = [8, 32], strides = [1, 1]} : vector<16x96xf32> to vector<8x32xf32>
    %316 = vector.extract_strided_slice %313 {offsets = [0, 0], sizes = [8, 8], strides = [1, 1]} : vector<8x32xf32> to vector<8x8xf32>
    %317 = vector.extract_strided_slice %314 {offsets = [0, 0], sizes = [8, 8], strides = [1, 1]} : vector<8x32xf32> to vector<8x8xf32>
    %318 = vector.extract_strided_slice %315 {offsets = [0, 0], sizes = [8, 8], strides = [1, 1]} : vector<8x32xf32> to vector<8x8xf32>
    %cst_105 = arith.constant dense<0.000000e+00> : vector<8x8xf32>
    %319 = tpu.matmul %316, %317, %cst_105 {dimension_numbers = #tpu.dot_dimension_numbers<[1], [1], [0], [0], [0, 0, 1, 0], [], []>} : vector<8x8xf32>, vector<8x8xf32>, vector<8x8xf32> -> vector<8x8xf32>
    %cst_106 = arith.constant 0.353553385 : f32
    %320 = vector.broadcast %cst_106 : f32 to vector<8x8xf32>
    %321 = arith.mulf %319, %320 : vector<8x8xf32>
    %cst_107 = arith.constant dense<0xFF800000> : vector<8xf32>
    %322 = vector.multi_reduction <maximumf>, %321, %cst_107 [1] : vector<8x8xf32> to vector<8xf32>
    %323 = vector.shape_cast %322 : vector<8xf32> to vector<8x1xf32>
    %324 = vector.broadcast %323 : vector<8x1xf32> to vector<8x8xf32>
    %325 = arith.subf %321, %324 : vector<8x8xf32>
    %326 = math.exp %325 : vector<8x8xf32>
    %cst_108 = arith.constant dense<0.000000e+00> : vector<8xf32>
    %327 = vector.multi_reduction <add>, %326, %cst_108 [1] : vector<8x8xf32> to vector<8xf32>
    %328 = vector.shape_cast %327 : vector<8xf32> to vector<8x1xf32>
    %329 = tpu.reciprocal %328 {approx = true} : vector<8x1xf32> -> vector<8x1xf32>
    %330 = vector.broadcast %329 : vector<8x1xf32> to vector<8x8xf32>
    %331 = arith.mulf %326, %330 : vector<8x8xf32>
    %cst_109 = arith.constant dense<0.000000e+00> : vector<8x8xf32>
    %332 = tpu.matmul %331, %318, %cst_109 {dimension_numbers = #tpu.dot_dimension_numbers<[1], [0], [0], [1], [0, 0, 1, 1], [], []>} : vector<8x8xf32>, vector<8x8xf32>, vector<8x8xf32> -> vector<8x8xf32>
    %333 = vector.extract_strided_slice %313 {offsets = [0, 8], sizes = [8, 8], strides = [1, 1]} : vector<8x32xf32> to vector<8x8xf32>
    %334 = vector.extract_strided_slice %314 {offsets = [0, 8], sizes = [8, 8], strides = [1, 1]} : vector<8x32xf32> to vector<8x8xf32>
    %335 = vector.extract_strided_slice %315 {offsets = [0, 8], sizes = [8, 8], strides = [1, 1]} : vector<8x32xf32> to vector<8x8xf32>
    %cst_110 = arith.constant dense<0.000000e+00> : vector<8x8xf32>
    %336 = tpu.matmul %333, %334, %cst_110 {dimension_numbers = #tpu.dot_dimension_numbers<[1], [1], [0], [0], [0, 0, 1, 0], [], []>} : vector<8x8xf32>, vector<8x8xf32>, vector<8x8xf32> -> vector<8x8xf32>
    %cst_111 = arith.constant 0.353553385 : f32
    %337 = vector.broadcast %cst_111 : f32 to vector<8x8xf32>
    %338 = arith.mulf %336, %337 : vector<8x8xf32>
    %cst_112 = arith.constant dense<0xFF800000> : vector<8xf32>
    %339 = vector.multi_reduction <maximumf>, %338, %cst_112 [1] : vector<8x8xf32> to vector<8xf32>
    %340 = vector.shape_cast %339 : vector<8xf32> to vector<8x1xf32>
    %341 = vector.broadcast %340 : vector<8x1xf32> to vector<8x8xf32>
    %342 = arith.subf %338, %341 : vector<8x8xf32>
    %343 = math.exp %342 : vector<8x8xf32>
    %cst_113 = arith.constant dense<0.000000e+00> : vector<8xf32>
    %344 = vector.multi_reduction <add>, %343, %cst_113 [1] : vector<8x8xf32> to vector<8xf32>
    %345 = vector.shape_cast %344 : vector<8xf32> to vector<8x1xf32>
    %346 = tpu.reciprocal %345 {approx = true} : vector<8x1xf32> -> vector<8x1xf32>
    %347 = vector.broadcast %346 : vector<8x1xf32> to vector<8x8xf32>
    %348 = arith.mulf %343, %347 : vector<8x8xf32>
    %cst_114 = arith.constant dense<0.000000e+00> : vector<8x8xf32>
    %349 = tpu.matmul %348, %335, %cst_114 {dimension_numbers = #tpu.dot_dimension_numbers<[1], [0], [0], [1], [0, 0, 1, 1], [], []>} : vector<8x8xf32>, vector<8x8xf32>, vector<8x8xf32> -> vector<8x8xf32>
    %350 = vector.extract_strided_slice %313 {offsets = [0, 16], sizes = [8, 8], strides = [1, 1]} : vector<8x32xf32> to vector<8x8xf32>
    %351 = vector.extract_strided_slice %314 {offsets = [0, 16], sizes = [8, 8], strides = [1, 1]} : vector<8x32xf32> to vector<8x8xf32>
    %352 = vector.extract_strided_slice %315 {offsets = [0, 16], sizes = [8, 8], strides = [1, 1]} : vector<8x32xf32> to vector<8x8xf32>
    %cst_115 = arith.constant dense<0.000000e+00> : vector<8x8xf32>
    %353 = tpu.matmul %350, %351, %cst_115 {dimension_numbers = #tpu.dot_dimension_numbers<[1], [1], [0], [0], [0, 0, 1, 0], [], []>} : vector<8x8xf32>, vector<8x8xf32>, vector<8x8xf32> -> vector<8x8xf32>
    %cst_116 = arith.constant 0.353553385 : f32
    %354 = vector.broadcast %cst_116 : f32 to vector<8x8xf32>
    %355 = arith.mulf %353, %354 : vector<8x8xf32>
    %cst_117 = arith.constant dense<0xFF800000> : vector<8xf32>
    %356 = vector.multi_reduction <maximumf>, %355, %cst_117 [1] : vector<8x8xf32> to vector<8xf32>
    %357 = vector.shape_cast %356 : vector<8xf32> to vector<8x1xf32>
    %358 = vector.broadcast %357 : vector<8x1xf32> to vector<8x8xf32>
    %359 = arith.subf %355, %358 : vector<8x8xf32>
    %360 = math.exp %359 : vector<8x8xf32>
    %cst_118 = arith.constant dense<0.000000e+00> : vector<8xf32>
    %361 = vector.multi_reduction <add>, %360, %cst_118 [1] : vector<8x8xf32> to vector<8xf32>
    %362 = vector.shape_cast %361 : vector<8xf32> to vector<8x1xf32>
    %363 = tpu.reciprocal %362 {approx = true} : vector<8x1xf32> -> vector<8x1xf32>
    %364 = vector.broadcast %363 : vector<8x1xf32> to vector<8x8xf32>
    %365 = arith.mulf %360, %364 : vector<8x8xf32>
    %cst_119 = arith.constant dense<0.000000e+00> : vector<8x8xf32>
    %366 = tpu.matmul %365, %352, %cst_119 {dimension_numbers = #tpu.dot_dimension_numbers<[1], [0], [0], [1], [0, 0, 1, 1], [], []>} : vector<8x8xf32>, vector<8x8xf32>, vector<8x8xf32> -> vector<8x8xf32>
    %367 = vector.extract_strided_slice %313 {offsets = [0, 24], sizes = [8, 8], strides = [1, 1]} : vector<8x32xf32> to vector<8x8xf32>
    %368 = vector.extract_strided_slice %314 {offsets = [0, 24], sizes = [8, 8], strides = [1, 1]} : vector<8x32xf32> to vector<8x8xf32>
    %369 = vector.extract_strided_slice %315 {offsets = [0, 24], sizes = [8, 8], strides = [1, 1]} : vector<8x32xf32> to vector<8x8xf32>
    %cst_120 = arith.constant dense<0.000000e+00> : vector<8x8xf32>
    %370 = tpu.matmul %367, %368, %cst_120 {dimension_numbers = #tpu.dot_dimension_numbers<[1], [1], [0], [0], [0, 0, 1, 0], [], []>} : vector<8x8xf32>, vector<8x8xf32>, vector<8x8xf32> -> vector<8x8xf32>
    %cst_121 = arith.constant 0.353553385 : f32
    %371 = vector.broadcast %cst_121 : f32 to vector<8x8xf32>
    %372 = arith.mulf %370, %371 : vector<8x8xf32>
    %cst_122 = arith.constant dense<0xFF800000> : vector<8xf32>
    %373 = vector.multi_reduction <maximumf>, %372, %cst_122 [1] : vector<8x8xf32> to vector<8xf32>
    %374 = vector.shape_cast %373 : vector<8xf32> to vector<8x1xf32>
    %375 = vector.broadcast %374 : vector<8x1xf32> to vector<8x8xf32>
    %376 = arith.subf %372, %375 : vector<8x8xf32>
    %377 = math.exp %376 : vector<8x8xf32>
    %cst_123 = arith.constant dense<0.000000e+00> : vector<8xf32>
    %378 = vector.multi_reduction <add>, %377, %cst_123 [1] : vector<8x8xf32> to vector<8xf32>
    %379 = vector.shape_cast %378 : vector<8xf32> to vector<8x1xf32>
    %380 = tpu.reciprocal %379 {approx = true} : vector<8x1xf32> -> vector<8x1xf32>
    %381 = vector.broadcast %380 : vector<8x1xf32> to vector<8x8xf32>
    %382 = arith.mulf %377, %381 : vector<8x8xf32>
    %cst_124 = arith.constant dense<0.000000e+00> : vector<8x8xf32>
    %383 = tpu.matmul %382, %369, %cst_124 {dimension_numbers = #tpu.dot_dimension_numbers<[1], [0], [0], [1], [0, 0, 1, 1], [], []>} : vector<8x8xf32>, vector<8x8xf32>, vector<8x8xf32> -> vector<8x8xf32>
    %384 = tpu.concatenate %332, %349, %366, %383 in 1 : vector<8x8xf32>, vector<8x8xf32>, vector<8x8xf32>, vector<8x8xf32> -> vector<8x32xf32>
    %385 = tpu.concatenate %312, %384 in 0 : vector<8x32xf32>, vector<8x32xf32> -> vector<16x32xf32>
    %c1_125 = arith.constant 1 : index
    %c0_126 = arith.constant 0 : index
    %c0_127 = arith.constant 0 : index
    %386 = vector.load %arg4[%c1_125, %c0_126, %c0_127] : memref<2x32x32xf32, #tpu.memory_space<vmem>>, vector<1x32x32xf32>
    %387 = vector.shape_cast %386 : vector<1x32x32xf32> to vector<32x32xf32>
    %cst_128 = arith.constant dense<0.000000e+00> : vector<16x32xf32>
    %388 = tpu.matmul %385, %387, %cst_128 {dimension_numbers = #tpu.dot_dimension_numbers<[1], [0], [0], [1], [0, 0, 1, 1], [], []>} : vector<16x32xf32>, vector<32x32xf32>, vector<16x32xf32> -> vector<16x32xf32>
    %389 = vector.broadcast %235 : vector<1x32xf32> to vector<16x32xf32>
    %390 = arith.addf %388, %389 : vector<16x32xf32>
    %391 = arith.addf %225, %390 : vector<16x32xf32>
    %cst_129 = arith.constant dense<0.000000e+00> : vector<16xf32>
    %392 = vector.multi_reduction <add>, %391, %cst_129 [1] : vector<16x32xf32> to vector<16xf32>
    %393 = vector.shape_cast %392 : vector<16xf32> to vector<16x1xf32>
    %cst_130 = arith.constant 3.200000e+01 : f32
    %394 = vector.broadcast %cst_130 : f32 to vector<16x1xf32>
    %395 = arith.divf %393, %394 : vector<16x1xf32>
    %396 = vector.broadcast %395 : vector<16x1xf32> to vector<16x32xf32>
    %397 = arith.subf %391, %396 : vector<16x32xf32>
    %398 = arith.mulf %397, %397 : vector<16x32xf32>
    %cst_131 = arith.constant dense<0.000000e+00> : vector<16xf32>
    %399 = vector.multi_reduction <add>, %398, %cst_131 [1] : vector<16x32xf32> to vector<16xf32>
    %400 = vector.shape_cast %399 : vector<16xf32> to vector<16x1xf32>
    %cst_132 = arith.constant 3.200000e+01 : f32
    %401 = vector.broadcast %cst_132 : f32 to vector<16x1xf32>
    %402 = arith.divf %400, %401 : vector<16x1xf32>
    %403 = vector.broadcast %395 : vector<16x1xf32> to vector<16x32xf32>
    %404 = arith.subf %391, %403 : vector<16x32xf32>
    %cst_133 = arith.constant 9.99999974E-6 : f32
    %405 = vector.broadcast %cst_133 : f32 to vector<16x1xf32>
    %406 = arith.addf %402, %405 : vector<16x1xf32>
    %407 = math.rsqrt %406 : vector<16x1xf32>
    %408 = vector.broadcast %407 : vector<16x1xf32> to vector<16x32xf32>
    %409 = arith.mulf %404, %408 : vector<16x32xf32>
    %410 = vector.broadcast %236 : vector<1x32xf32> to vector<16x32xf32>
    %411 = arith.mulf %409, %410 : vector<16x32xf32>
    %412 = vector.broadcast %237 : vector<1x32xf32> to vector<16x32xf32>
    %413 = arith.addf %411, %412 : vector<16x32xf32>
    %c1_134 = arith.constant 1 : index
    %c0_135 = arith.constant 0 : index
    %c0_136 = arith.constant 0 : index
    %414 = vector.load %arg6[%c1_134, %c0_135, %c0_136] : memref<2x32x2048xf32, #tpu.memory_space<vmem>>, vector<1x32x2048xf32>
    %415 = vector.shape_cast %414 : vector<1x32x2048xf32> to vector<32x2048xf32>
    %cst_137 = arith.constant dense<0.000000e+00> : vector<16x2048xf32>
    %416 = tpu.matmul %413, %415, %cst_137 {dimension_numbers = #tpu.dot_dimension_numbers<[1], [0], [0], [1], [0, 0, 1, 1], [], []>} : vector<16x32xf32>, vector<32x2048xf32>, vector<16x2048xf32> -> vector<16x2048xf32>
    %c1_138 = arith.constant 1 : index
    %c0_139 = arith.constant 0 : index
    %c0_140 = arith.constant 0 : index
    %417 = vector.load %arg7[%c1_138, %c0_139, %c0_140] : memref<2x1x2048xf32, #tpu.memory_space<vmem>>, vector<1x1x2048xf32>
    %418 = vector.shape_cast %417 : vector<1x1x2048xf32> to vector<1x2048xf32>
    %419 = vector.broadcast %418 : vector<1x2048xf32> to vector<16x2048xf32>
    %420 = arith.addf %416, %419 : vector<16x2048xf32>
    %cst_141 = arith.constant 0.000000e+00 : f32
    %421 = vector.broadcast %cst_141 : f32 to vector<16x2048xf32>
    %422 = arith.maximumf %420, %421 : vector<16x2048xf32>
    %c1_142 = arith.constant 1 : index
    %c0_143 = arith.constant 0 : index
    %c0_144 = arith.constant 0 : index
    %423 = vector.load %arg8[%c1_142, %c0_143, %c0_144] : memref<2x32x2048xf32, #tpu.memory_space<vmem>>, vector<1x32x2048xf32>
    %424 = vector.shape_cast %423 : vector<1x32x2048xf32> to vector<32x2048xf32>
    %cst_145 = arith.constant dense<0.000000e+00> : vector<16x32xf32>
    %425 = tpu.matmul %422, %424, %cst_145 {dimension_numbers = #tpu.dot_dimension_numbers<[1], [1], [0], [0], [0, 0, 1, 0], [], []>} : vector<16x2048xf32>, vector<32x2048xf32>, vector<16x32xf32> -> vector<16x32xf32>
    %426 = vector.broadcast %238 : vector<1x32xf32> to vector<16x32xf32>
    %427 = arith.addf %425, %426 : vector<16x32xf32>
    %428 = arith.addf %413, %427 : vector<16x32xf32>
    %cst_146 = arith.constant dense<0.000000e+00> : vector<16xf32>
    %429 = vector.multi_reduction <add>, %428, %cst_146 [1] : vector<16x32xf32> to vector<16xf32>
    %430 = vector.shape_cast %429 : vector<16xf32> to vector<16x1xf32>
    %cst_147 = arith.constant 3.200000e+01 : f32
    %431 = vector.broadcast %cst_147 : f32 to vector<16x1xf32>
    %432 = arith.divf %430, %431 : vector<16x1xf32>
    %433 = vector.broadcast %432 : vector<16x1xf32> to vector<16x32xf32>
    %434 = arith.subf %428, %433 : vector<16x32xf32>
    %435 = arith.mulf %434, %434 : vector<16x32xf32>
    %cst_148 = arith.constant dense<0.000000e+00> : vector<16xf32>
    %436 = vector.multi_reduction <add>, %435, %cst_148 [1] : vector<16x32xf32> to vector<16xf32>
    %437 = vector.shape_cast %436 : vector<16xf32> to vector<16x1xf32>
    %cst_149 = arith.constant 3.200000e+01 : f32
    %438 = vector.broadcast %cst_149 : f32 to vector<16x1xf32>
    %439 = arith.divf %437, %438 : vector<16x1xf32>
    %440 = vector.broadcast %432 : vector<16x1xf32> to vector<16x32xf32>
    %441 = arith.subf %428, %440 : vector<16x32xf32>
    %cst_150 = arith.constant 9.99999974E-6 : f32
    %442 = vector.broadcast %cst_150 : f32 to vector<16x1xf32>
    %443 = arith.addf %439, %442 : vector<16x1xf32>
    %444 = math.rsqrt %443 : vector<16x1xf32>
    %445 = vector.broadcast %444 : vector<16x1xf32> to vector<16x32xf32>
    %446 = arith.mulf %441, %445 : vector<16x32xf32>
    %447 = vector.broadcast %239 : vector<1x32xf32> to vector<16x32xf32>
    %448 = arith.mulf %446, %447 : vector<16x32xf32>
    %449 = vector.broadcast %240 : vector<1x32xf32> to vector<16x32xf32>
    %450 = arith.addf %448, %449 : vector<16x32xf32>
    %c0_151 = arith.constant 0 : index
    %c0_152 = arith.constant 0 : index
    %451 = vector.load %arg9[%c0_151, %c0_152] : memref<32x128xf32, #tpu.memory_space<vmem>>, vector<32x128xf32>
    %cst_153 = arith.constant dense<0.000000e+00> : vector<16x128xf32>
    %452 = tpu.matmul %450, %451, %cst_153 {dimension_numbers = #tpu.dot_dimension_numbers<[1], [0], [0], [1], [0, 0, 1, 1], [], []>} : vector<16x32xf32>, vector<32x128xf32>, vector<16x128xf32> -> vector<16x128xf32>
    %c0_154 = arith.constant 0 : index
    %c0_155 = arith.constant 0 : index
    %453 = vector.load %arg10[%c0_154, %c0_155] : memref<1x128xf32, #tpu.memory_space<vmem>>, vector<1x128xf32>
    %454 = vector.broadcast %453 : vector<1x128xf32> to vector<16x128xf32>
    %455 = arith.addf %452, %454 : vector<16x128xf32>
    %c0_156 = arith.constant 0 : index
    %c0_157 = arith.constant 0 : index
    %456 = vector.load %arg11[%c0_156, %c0_157] : memref<16x128xf32, #tpu.memory_space<vmem>>, vector<16x128xf32>
    tpu.vector_store %arg11[%c0_156, %c0_157], %455 {strides = array<i32>} : memref<16x128xf32, #tpu.memory_space<vmem>>, vector<16x128xf32>,
    return
  }
  func.func @transform_0(%arg0: i32) -> (i32, i32) {
    %c0_i32 = arith.constant 0 : i32
    %c0_i32_0 = arith.constant 0 : i32
    %c0_i32_1 = arith.constant 0 : i32
    return %c0_i32, %c0_i32_0 : i32, i32
  }
  func.func @transform_1(%arg0: i32) -> (i32, i32, i32) {
    %c0_i32 = arith.constant 0 : i32
    %c0_i32_0 = arith.constant 0 : i32
    %c0_i32_1 = arith.constant 0 : i32
    %c0_i32_2 = arith.constant 0 : i32
    return %c0_i32, %c0_i32_0, %c0_i32_1 : i32, i32, i32
  }
  func.func @transform_2(%arg0: i32) -> (i32, i32, i32) {
    %c0_i32 = arith.constant 0 : i32
    %c0_i32_0 = arith.constant 0 : i32
    %c0_i32_1 = arith.constant 0 : i32
    %c0_i32_2 = arith.constant 0 : i32
    return %c0_i32, %c0_i32_0, %c0_i32_1 : i32, i32, i32
  }
  func.func @transform_3(%arg0: i32) -> (i32, i32, i32) {
    %c0_i32 = arith.constant 0 : i32
    %c0_i32_0 = arith.constant 0 : i32
    %c0_i32_1 = arith.constant 0 : i32
    %c0_i32_2 = arith.constant 0 : i32
    return %c0_i32, %c0_i32_0, %c0_i32_1 : i32, i32, i32
  }
  func.func @transform_4(%arg0: i32) -> (i32, i32, i32) {
    %c0_i32 = arith.constant 0 : i32
    %c0_i32_0 = arith.constant 0 : i32
    %c0_i32_1 = arith.constant 0 : i32
    %c0_i32_2 = arith.constant 0 : i32
    return %c0_i32, %c0_i32_0, %c0_i32_1 : i32, i32, i32
  }
  func.func @transform_5(%arg0: i32) -> (i32, i32, i32) {
    %c0_i32 = arith.constant 0 : i32
    %c0_i32_0 = arith.constant 0 : i32
    %c0_i32_1 = arith.constant 0 : i32
    %c0_i32_2 = arith.constant 0 : i32
    return %c0_i32, %c0_i32_0, %c0_i32_1 : i32, i32, i32
  }
  func.func @transform_6(%arg0: i32) -> (i32, i32, i32) {
    %c0_i32 = arith.constant 0 : i32
    %c0_i32_0 = arith.constant 0 : i32
    %c0_i32_1 = arith.constant 0 : i32
    %c0_i32_2 = arith.constant 0 : i32
    return %c0_i32, %c0_i32_0, %c0_i32_1 : i32, i32, i32
  }
  func.func @transform_7(%arg0: i32) -> (i32, i32, i32) {
    %c0_i32 = arith.constant 0 : i32
    %c0_i32_0 = arith.constant 0 : i32
    %c0_i32_1 = arith.constant 0 : i32
    %c0_i32_2 = arith.constant 0 : i32
    return %c0_i32, %c0_i32_0, %c0_i32_1 : i32, i32, i32
  }
  func.func @transform_8(%arg0: i32) -> (i32, i32) {
    %c0_i32 = arith.constant 0 : i32
    %c0_i32_0 = arith.constant 0 : i32
    %c0_i32_1 = arith.constant 0 : i32
    return %c0_i32, %c0_i32_0 : i32, i32
  }
  func.func @transform_9(%arg0: i32) -> (i32, i32) {
    %c0_i32 = arith.constant 0 : i32
    %c0_i32_0 = arith.constant 0 : i32
    %c0_i32_1 = arith.constant 0 : i32
    return %c0_i32, %c0_i32_0 : i32, i32
  }
  func.func @transform_10(%arg0: i32) -> (i32, i32) {
    %c0_i32 = arith.constant 0 : i32
    %c0_i32_0 = arith.constant 0 : i32
    %c0_i32_1 = arith.constant 0 : i32
    return %c0_i32, %c0_i32_0 : i32, i32
  }
}

</mosaic_0001>

<llo_original>
// kernel: voice_conversion_forward.1
$region0: #{voice_conversion_forward.1}
  #allocation0 [shape = 'u32[]', space=smem, size = 0x4, offset = 0x4, fixed_abs, tag = 'smem constant byte address 0x4 - core index']
  #allocation1 [shape = 'u32[144,128]{1,0:T(1,128)}', space=vmem, size = 0x12000, scoped, tag = 'internal scratch']
  %s0 = inlined_call_operand.vmem [shape: f32[16,32], index: 0, kind: input, shape index: {}]
  %s1 = inlined_call_operand.hbm [shape: f32[2,32,96], index: 1, kind: input, shape index: {}]
  %s2 = inlined_call_operand.vmem [shape: f32[2,1,96], index: 2, kind: input, shape index: {}]
  %s3 = inlined_call_operand.hbm [shape: f32[2,32,32], index: 3, kind: input, shape index: {}]
  %s4 = inlined_call_operand.hbm [shape: f32[2,8,32], index: 4, kind: input, shape index: {}]
  %s5 = inlined_call_operand.hbm [shape: f32[2,32,2048], index: 5, kind: input, shape index: {}]
  %s6 = inlined_call_operand.vmem [shape: f32[2,1,2048], index: 6, kind: input, shape index: {}]
  %s7 = inlined_call_operand.hbm [shape: f32[2,32,2048], index: 7, kind: input, shape index: {}]
  %s8 = inlined_call_operand.hbm [shape: f32[32,128], index: 8, kind: input, shape index: {}]
  %s9 = inlined_call_operand.vmem [shape: f32[1,128], index: 9, kind: input, shape index: {}]
  %s10 = inlined_call_operand.vmem [shape: f32[16,128], index: 10, kind: output, shape index: {}]
  %s11 = sld [smem:[#allocation0]]
  $region74: #{voice_conversion_forward.1} parent=0
    _
  %s13 = ssub.s32 1, %s11
  %s14 = scalar_select 0, %s13, %s11
  $region1: #{voice_conversion_forward.1} parent=0
    #allocation2 [shape = 'u8[32768]{0}', space=vmem, size = 0x8000, scoped, tag = 'input window, operand 1, single buffered']
    #allocation3 [shape = 's32[1]{0}', space=sflag, size = 0x4, scoped, tag = 'scoped memory for voice_conversion_forward.1']
    #allocation4 [shape = 'u8[32768]{0}', space=vmem, size = 0x8000, scoped, tag = 'input window, operand 3, single buffered']
    #allocation5 [shape = 's32[1]{0}', space=sflag, size = 0x4, scoped, tag = 'scoped memory for voice_conversion_forward.1']
    #allocation6 [shape = 'u8[8192]{0}', space=vmem, size = 0x2000, scoped, tag = 'input window, operand 4, single buffered']
    #allocation7 [shape = 'u8[524288]{0}', space=vmem, size = 0x80000, scoped, tag = 'input window, operand 5, single buffered']
    #allocation8 [shape = 's32[1]{0}', space=sflag, size = 0x4, scoped, tag = 'scoped memory for voice_conversion_forward.1']
    #allocation9 [shape = 'u8[524288]{0}', space=vmem, size = 0x80000, scoped, tag = 'input window, operand 7, single buffered']
    #allocation10 [shape = 'u8[16384]{0}', space=vmem, size = 0x4000, scoped, tag = 'input window, operand 8, single buffered']
    #allocation11 [shape = 's32[1]{0}', space=sflag, size = 0x4, scoped, tag = 'scoped memory for voice_conversion_forward.1']
    %15 = vsyncpa [#allocation3], 0
    %16 = vsyncpa [#allocation5], 0
    %17 = vsyncpa [#allocation8], 0
    %18 = vsyncpa [#allocation11], 0
    // Predicated region
    $region2: #{voice_conversion_forward.1} parent=1 // pred_check
      _
    $region3: #{voice_conversion_forward.1} parent=1 // pred_check_branch
      %20 = sbr.rel (0) target = $region5
    $region4: #{voice_conversion_forward.1} parent=1 // pred_region
      _
    $region5: #{voice_conversion_forward.1} parent=1 // pred_fallthru
      _
    // Predicated region
    $region6: #{voice_conversion_forward.1} parent=1 // pred_check
      _
    $region7: #{voice_conversion_forward.1} parent=1 // pred_check_branch
      %22 = sbr.rel (0) target = $region9
    $region8: #{voice_conversion_forward.1} parent=1 // pred_region
      %s24 = ssub.s32 1024, 1024
      %25 = vsyncadd [#allocation3], %s24
      %s26 = sshll.u32 [#allocation2], 4
      %s27 = int_to_ptr.vmem [resolvable:$true] %s26
      %32 = dma.hbm_to_vmem [thread:$0]  %s1, 1024, %s27, [#allocation3], 128, 128, 8
    $region9: #{voice_conversion_forward.1} parent=1 // pred_fallthru
      _
    // Predicated region
    $region10: #{voice_conversion_forward.1} parent=1 // pred_check
      _
    $region11: #{voice_conversion_forward.1} parent=1 // pred_check_branch
      %34 = sbr.rel (0) target = $region13
    $region12: #{voice_conversion_forward.1} parent=1 // pred_region
      _
    $region13: #{voice_conversion_forward.1} parent=1 // pred_fallthru
      _
    // Predicated region
    $region14: #{voice_conversion_forward.1} parent=1 // pred_check
      _
    $region15: #{voice_conversion_forward.1} parent=1 // pred_check_branch
      %36 = sbr.rel (0) target = $region17
    $region16: #{voice_conversion_forward.1} parent=1 // pred_region
      %s38 = ssub.s32 1024, 1024
      %39 = vsyncadd [#allocation5], %s38
      %s40 = sshll.u32 [#allocation4], 4
      %s41 = int_to_ptr.vmem [resolvable:$true] %s40
      %46 = dma.hbm_to_vmem [thread:$0]  %s3, 1024, %s41, [#allocation5], 128, 128, 8
    $region17: #{voice_conversion_forward.1} parent=1 // pred_fallthru
      _
    // Predicated region
    $region18: #{voice_conversion_forward.1} parent=1 // pred_check
      _
    $region19: #{voice_conversion_forward.1} parent=1 // pred_check_branch
      %48 = sbr.rel (0) target = $region21
    $region20: #{voice_conversion_forward.1} parent=1 // pred_region
      %s50 = ssub.s32 256, 256
      %51 = vsyncadd [#allocation5], %s50
      %s52 = sshll.u32 [#allocation6], 4
      %s53 = int_to_ptr.vmem [resolvable:$true] %s52
      %58 = dma.hbm_to_vmem [thread:$0]  %s4, 256, %s53, [#allocation5], 128, 128, 8
    $region21: #{voice_conversion_forward.1} parent=1 // pred_fallthru
      _
    // Predicated region
    $region22: #{voice_conversion_forward.1} parent=1 // pred_check
      _
    $region23: #{voice_conversion_forward.1} parent=1 // pred_check_branch
      %60 = sbr.rel (0) target = $region25
    $region24: #{voice_conversion_forward.1} parent=1 // pred_region
      %s62 = ssub.s32 16384, 16384
      %63 = vsyncadd [#allocation8], %s62
      %s64 = sshll.u32 [#allocation7], 4
      %s65 = int_to_ptr.vmem [resolvable:$true] %s64
      %70 = dma.hbm_to_vmem [thread:$0]  %s5, 16384, %s65, [#allocation8], 2048, 2048, 128
    $region25: #{voice_conversion_forward.1} parent=1 // pred_fallthru
      _
    // Predicated region
    $region26: #{voice_conversion_forward.1} parent=1 // pred_check
      _
    $region27: #{voice_conversion_forward.1} parent=1 // pred_check_branch
      %72 = sbr.rel (0) target = $region29
    $region28: #{voice_conversion_forward.1} parent=1 // pred_region
      _
    $region29: #{voice_conversion_forward.1} parent=1 // pred_fallthru
      _
    // Predicated region
    $region30: #{voice_conversion_forward.1} parent=1 // pred_check
      _
    $region31: #{voice_conversion_forward.1} parent=1 // pred_check_branch
      %74 = sbr.rel (0) target = $region33
    $region32: #{voice_conversion_forward.1} parent=1 // pred_region
      %s76 = ssub.s32 16384, 16384
      %77 = vsyncadd [#allocation8], %s76
      %s78 = sshll.u32 [#allocation9], 4
      %s79 = int_to_ptr.vmem [resolvable:$true] %s78
      %84 = dma.hbm_to_vmem [thread:$0]  %s7, 16384, %s79, [#allocation8], 2048, 2048, 128
    $region33: #{voice_conversion_forward.1} parent=1 // pred_fallthru
      _
    // Predicated region
    $region34: #{voice_conversion_forward.1} parent=1 // pred_check
      _
    $region35: #{voice_conversion_forward.1} parent=1 // pred_check_branch
      %86 = sbr.rel (0) target = $region37
    $region36: #{voice_conversion_forward.1} parent=1 // pred_region
      %s88 = ssub.s32 512, 512
      %89 = vsyncadd [#allocation11], %s88
      %s90 = sshll.u32 [#allocation10], 4
      %s91 = int_to_ptr.vmem [resolvable:$true] %s90
      %96 = dma.hbm_to_vmem [thread:$0]  %s8, 512, %s91, [#allocation11], 128, 128, 8
    $region37: #{voice_conversion_forward.1} parent=1 // pred_fallthru
      _
    // Predicated region
    $region38: #{voice_conversion_forward.1} parent=1 // pred_check
      _
    $region39: #{voice_conversion_forward.1} parent=1 // pred_check_branch
      %98 = sbr.rel (0) target = $region41
    $region40: #{voice_conversion_forward.1} parent=1 // pred_region
      _
    $region41: #{voice_conversion_forward.1} parent=1 // pred_fallthru
      _
    // Predicated region
    $region42: #{voice_conversion_forward.1} parent=1 // pred_check
      _
    $region43: #{voice_conversion_forward.1} parent=1 // pred_check_branch
      %100 = sbr.rel (0) target = $region45
    $region44: #{voice_conversion_forward.1} parent=1 // pred_region
      %101 = dma.done [#allocation3], 1024
    $region45: #{voice_conversion_forward.1} parent=1 // pred_fallthru
      _
    // Predicated region
    $region46: #{voice_conversion_forward.1} parent=1 // pred_check
      _
    $region47: #{voice_conversion_forward.1} parent=1 // pred_check_branch
      %103 = sbr.rel (0) target = $region49
    $region48: #{voice_conversion_forward.1} parent=1 // pred_region
      %104 = dma.done [#allocation5], 1024
    $region49: #{voice_conversion_forward.1} parent=1 // pred_fallthru
      _
    // Predicated region
    $region50: #{voice_conversion_forward.1} parent=1 // pred_check
      _
    $region51: #{voice_conversion_forward.1} parent=1 // pred_check_branch
      %106 = sbr.rel (0) target = $region53
    $region52: #{voice_conversion_forward.1} parent=1 // pred_region
      %107 = dma.done [#allocation5], 256
    $region53: #{voice_conversion_forward.1} parent=1 // pred_fallthru
      _
    // Predicated region
    $region54: #{voice_conversion_forward.1} parent=1 // pred_check
      _
    $region55: #{voice_conversion_forward.1} parent=1 // pred_check_branch
      %109 = sbr.rel (0) target = $region57
    $region56: #{voice_conversion_forward.1} parent=1 // pred_region
      %110 = dma.done [#allocation8], 16384
    $region57: #{voice_conversion_forward.1} parent=1 // pred_fallthru
      _
    // Predicated region
    $region58: #{voice_conversion_forward.1} parent=1 // pred_check
      _
    $region59: #{voice_conversion_forward.1} parent=1 // pred_check_branch
      %112 = sbr.rel (0) target = $region61
    $region60: #{voice_conversion_forward.1} parent=1 // pred_region
      %113 = dma.done [#allocation8], 16384
    $region61: #{voice_conversion_forward.1} parent=1 // pred_fallthru
      _
    // Predicated region
    $region62: #{voice_conversion_forward.1} parent=1 // pred_check
      _
    $region63: #{voice_conversion_forward.1} parent=1 // pred_check_branch
      %115 = sbr.rel (0) target = $region65
    $region64: #{voice_conversion_forward.1} parent=1 // pred_region
      %116 = dma.done [#allocation11], 512
    $region65: #{voice_conversion_forward.1} parent=1 // pred_fallthru
      _
    %v117 = vld [vmem:[%s0] sm:$0xff]
    %v118 = vld [vmem:[%s0 + $0x8] sm:$0xff]
    %v119 = vld [vmem:[#allocation2] sm:$0xff]
    %v120 = vld [vmem:[#allocation2 + $0x8] sm:$0xff]
    %v121 = vld [vmem:[#allocation2 + $0x10] sm:$0xff]
    %v122 = vld [vmem:[#allocation2 + $0x18] sm:$0xff]
    %v123 = vld [vmem:[%s2] sm:$0x1]
    %v125 = vlaneseq
    %v126 = vshrl.u32 %v125, 7
    %v127 = vsub.s32 0, %v126
    %v128 = vrot.slane %v123, %v127
    %vm130 = vcmask 261120
    %v132 = vsel %vm130, %v117, 0
    %v135 = vsel %vm130, %v118, 0
    %137 = vmatprep.subr.mxu0 0.0
    %138 = vmatpush1.msra.mxu0 0.0
    %139 = vmatprep.subr.mxu0 0.0
    %140 = vmatpush1.msra.mxu0 0.0
    %141 = vmatprep.subr.mxu0 0.0
    %142 = vmatpush1.msra.mxu0 0.0
    %143 = vmatprep.subr.mxu0 0.0
    %144 = vmatpush1.msra.mxu0 0.0
    %145 = vmatprep.subr.mxu0 0.0
    %146 = vmatpush1.msra.mxu0 0.0
    %147 = vmatprep.subr.mxu0 0.0
    %148 = vmatpush1.msra.mxu0 0.0
    %149 = vmatprep.subr.mxu0 0.0
    %150 = vmatpush1.msra.mxu0 0.0
    %151 = vmatprep.subr.mxu0 0.0
    %152 = vmatpush1.msra.mxu0 0.0
    %153 = vmatprep.subr.mxu0 0.0
    %154 = vmatpush1.msra.mxu0 0.0
    %155 = vmatprep.subr.mxu0 0.0
    %156 = vmatpush1.msra.mxu0 0.0
    %157 = vmatprep.subr.mxu0 0.0
    %158 = vmatpush1.msra.mxu0 0.0
    %159 = vmatprep.subr.mxu0 0.0
    %160 = vmatpush1.msra.mxu0 0.0
    %161 = vmatprep.subr.mxu0 0.0
    %162 = vmatpush1.msra.mxu0 %v122
    %163 = vmatprep.subr.mxu0 0.0
    %164 = vmatpush1.msra.mxu0 %v121
    %165 = vmatprep.subr.mxu0 0.0
    %166 = vmatpush1.msra.mxu0 %v120
    %167 = vmatprep.subr.mxu0 0.0
    %168 = vmatpush1.msra.mxu0 %v119
    %169 = vmatprep.subr.mxu0 0.0
    %170 = vmatpush2.msra.mxu0 0.0
    %171 = vmatprep.subr.mxu0 0.0
    %172 = vmatpush2.msra.mxu0 0.0
    %173 = vmatprep.subr.mxu0 0.0
    %174 = vmatpush2.msra.mxu0 0.0
    %175 = vmatprep.subr.mxu0 0.0
    %176 = vmatpush2.msra.mxu0 0.0
    %177 = vmatprep.subr.mxu0 0.0
    %178 = vmatpush2.msra.mxu0 0.0
    %179 = vmatprep.subr.mxu0 0.0
    %180 = vmatpush2.msra.mxu0 0.0
    %181 = vmatprep.subr.mxu0 0.0
    %182 = vmatpush2.msra.mxu0 0.0
    %183 = vmatprep.subr.mxu0 0.0
    %184 = vmatpush2.msra.mxu0 0.0
    %185 = vmatprep.subr.mxu0 0.0
    %186 = vmatpush2.msra.mxu0 0.0
    %187 = vmatprep.subr.mxu0 0.0
    %188 = vmatpush2.msra.mxu0 0.0
    %189 = vmatprep.subr.mxu0 0.0
    %190 = vmatpush2.msra.mxu0 0.0
    %191 = vmatprep.subr.mxu0 0.0
    %192 = vmatpush2.msra.mxu0 0.0
    %193 = vmatprep.subr.mxu0 0.0
    %194 = vmatpush2.msra.mxu0 0.0
    %195 = vmatprep.subr.mxu0 0.0
    %196 = vmatpush2.msra.mxu0 0.0
    %197 = vmatprep.subr.mxu0 0.0
    %198 = vmatpush2.msra.mxu0 0.0
    %199 = vmatprep.subr.mxu0 0.0
    %200 = vmatpush2.msra.mxu0 0.0
    %201 = vmatprep.mubr.f32.mxu0 0.0
    %202 = vmatmul.mubr.f32.gmra.mxu0 %v132
    %v203 = vpop.f32.mrf.mxu0
    %v204 = vadd.f32 %v128, %v203
    %v205 = vpop.f32.mrf.mxu0
    %206 = vmatprep.mubr.f32.mxu0 0.0
    %207 = vmatmul.mubr.f32.gmra.mxu0 %v135
    %v208 = vpop.f32.mrf.mxu0
    %v209 = vadd.f32 %v128, %v208
    %v210 = vpop.f32.mrf.mxu0
    %211 = vdwg.mxu0
    %v212 = vld [vmem:[#allocation6] sm:$0xff]
    %214 = vrot.lane.b32.xlu0 %v204, 96
    %v215 = vpop.permute.xlu0 %214
    %vm216 = vcmask 64512
    %v217 = vsel %vm216, %v204, 0
    %v219 = vsel %vm216, %v215, 0
    %221 = vmatprep.subr.mxu0 0.0
    %222 = vmatpush1.xpose.msra.mxu0 0.0
    %223 = vmatprep.subr.mxu0 0.0
    %224 = vmatpush1.xpose.msra.mxu0 0.0
    %225 = vmatprep.subr.mxu0 0.0
    %226 = vmatpush1.xpose.msra.mxu0 0.0
    %227 = vmatprep.subr.mxu0 0.0
    %228 = vmatpush1.xpose.msra.mxu0 0.0
    %229 = vmatprep.subr.mxu0 0.0
    %230 = vmatpush1.xpose.msra.mxu0 0.0
    %231 = vmatprep.subr.mxu0 0.0
    %232 = vmatpush1.xpose.msra.mxu0 0.0
    %233 = vmatprep.subr.mxu0 0.0
    %234 = vmatpush1.xpose.msra.mxu0 0.0
    %235 = vmatprep.subr.mxu0 0.0
    %236 = vmatpush1.xpose.msra.mxu0 0.0
    %237 = vmatprep.subr.mxu0 0.0
    %238 = vmatpush1.xpose.msra.mxu0 0.0
    %239 = vmatprep.subr.mxu0 0.0
    %240 = vmatpush1.xpose.msra.mxu0 0.0
    %241 = vmatprep.subr.mxu0 0.0
    %242 = vmatpush1.xpose.msra.mxu0 0.0
    %243 = vmatprep.subr.mxu0 0.0
    %244 = vmatpush1.xpose.msra.mxu0 0.0
    %245 = vmatprep.subr.mxu0 0.0
    %246 = vmatpush1.xpose.msra.mxu0 0.0
    %247 = vmatprep.subr.mxu0 0.0
    %248 = vmatpush1.xpose.msra.mxu0 0.0
    %249 = vmatprep.subr.mxu0 0.0
    %250 = vmatpush1.xpose.msra.mxu0 0.0
    %251 = vmatprep.subr.mxu0 0.0
    %252 = vmatpush1.xpose.msra.mxu0 %v219
    %253 = vmatprep.subr.mxu0 0.0
    %254 = vmatpush2.xpose.msra.mxu0 0.0
    %255 = vmatprep.subr.mxu0 0.0
    %256 = vmatpush2.xpose.msra.mxu0 0.0
    %257 = vmatprep.subr.mxu0 0.0
    %258 = vmatpush2.xpose.msra.mxu0 0.0
    %259 = vmatprep.subr.mxu0 0.0
    %260 = vmatpush2.xpose.msra.mxu0 0.0
    %261 = vmatprep.subr.mxu0 0.0
    %262 = vmatpush2.xpose.msra.mxu0 0.0
    %263 = vmatprep.subr.mxu0 0.0
    %264 = vmatpush2.xpose.msra.mxu0 0.0
    %265 = vmatprep.subr.mxu0 0.0
    %266 = vmatpush2.xpose.msra.mxu0 0.0
    %267 = vmatprep.subr.mxu0 0.0
    %268 = vmatpush2.xpose.msra.mxu0 0.0
    %269 = vmatprep.subr.mxu0 0.0
    %270 = vmatpush2.xpose.msra.mxu0 0.0
    %271 = vmatprep.subr.mxu0 0.0
    %272 = vmatpush2.xpose.msra.mxu0 0.0
    %273 = vmatprep.subr.mxu0 0.0
    %274 = vmatpush2.xpose.msra.mxu0 0.0
    %275 = vmatprep.subr.mxu0 0.0
    %276 = vmatpush2.xpose.msra.mxu0 0.0
    %277 = vmatprep.subr.mxu0 0.0
    %278 = vmatpush2.xpose.msra.mxu0 0.0
    %279 = vmatprep.subr.mxu0 0.0
    %280 = vmatpush2.xpose.msra.mxu0 0.0
    %281 = vmatprep.subr.mxu0 0.0
    %282 = vmatpush2.xpose.msra.mxu0 0.0
    %283 = vmatprep.subr.mxu0 0.0
    %284 = vmatpush2.xpose.msra.mxu0 0.0
    %285 = vmatprep.mubr.f32.mxu0 0.0
    %286 = vmatmul.mubr.f32.gmra.mxu0 %v217
    %v287 = vpop.f32.mrf.mxu0
    %v288 = vadd.f32 0.0, %v287
    %v289 = vpop.f32.mrf.mxu0
    %290 = vdwg.mxu0
    %v291 = vmul.f32 %v288, 0.35355338
    %v292 = vsel %vm216, %v291, -inf
    %293 = vmax.xlane.f32.xlu0 %v292
    %v294 = vpop.xlane.xlu0 %293
    %v295 = vsub.f32 %v291, %v294
    %v296 = vmul.f32 %v295, 1.442695
    %v297 = vpow.pop %v296
    %v298 = vsel %vm216, %v297, 0.0
    %299 = vadd.xlane.f32.xlu0 %v298
    %v300 = vpop.xlane.xlu0 %299
    %v301 = vrcp.pop %v300
    %v302 = vmul.f32 %v297, %v301
    %303 = vrot.lane.b32.xlu0 %v204, 64
    %v304 = vpop.permute.xlu0 %303
    %v307 = vsel %vm216, %v302, 0
    %309 = vmatprep.subr.mxu0 0.0
    %310 = vmatpush1.msra.mxu0 0.0
    %311 = vmatprep.subr.mxu0 0.0
    %312 = vmatpush1.msra.mxu0 0.0
    %313 = vmatprep.subr.mxu0 0.0
    %314 = vmatpush1.msra.mxu0 0.0
    %315 = vmatprep.subr.mxu0 0.0
    %316 = vmatpush1.msra.mxu0 0.0
    %317 = vmatprep.subr.mxu0 0.0
    %318 = vmatpush1.msra.mxu0 0.0
    %319 = vmatprep.subr.mxu0 0.0
    %320 = vmatpush1.msra.mxu0 0.0
    %321 = vmatprep.subr.mxu0 0.0
    %322 = vmatpush1.msra.mxu0 0.0
    %323 = vmatprep.subr.mxu0 0.0
    %324 = vmatpush1.msra.mxu0 0.0
    %325 = vmatprep.subr.mxu0 0.0
    %326 = vmatpush1.msra.mxu0 0.0
    %327 = vmatprep.subr.mxu0 0.0
    %328 = vmatpush1.msra.mxu0 0.0
    %329 = vmatprep.subr.mxu0 0.0
    %330 = vmatpush1.msra.mxu0 0.0
    %331 = vmatprep.subr.mxu0 0.0
    %332 = vmatpush1.msra.mxu0 0.0
    %333 = vmatprep.subr.mxu0 0.0
    %334 = vmatpush1.msra.mxu0 0.0
    %335 = vmatprep.subr.mxu0 0.0
    %336 = vmatpush1.msra.mxu0 0.0
    %337 = vmatprep.subr.mxu0 0.0
    %338 = vmatpush1.msra.mxu0 0.0
    %339 = vmatprep.subr.mxu0 0.0
    %340 = vmatpush1.msra.mxu0 %v304
    %341 = vmatprep.subr.mxu0 0.0
    %342 = vmatpush2.msra.mxu0 0.0
    %343 = vmatprep.subr.mxu0 0.0
    %344 = vmatpush2.msra.mxu0 0.0
    %345 = vmatprep.subr.mxu0 0.0
    %346 = vmatpush2.msra.mxu0 0.0
    %347 = vmatprep.subr.mxu0 0.0
    %348 = vmatpush2.msra.mxu0 0.0
    %349 = vmatprep.subr.mxu0 0.0
    %350 = vmatpush2.msra.mxu0 0.0
    %351 = vmatprep.subr.mxu0 0.0
    %352 = vmatpush2.msra.mxu0 0.0
    %353 = vmatprep.subr.mxu0 0.0
    %354 = vmatpush2.msra.mxu0 0.0
    %355 = vmatprep.subr.mxu0 0.0
    %356 = vmatpush2.msra.mxu0 0.0
    %357 = vmatprep.subr.mxu0 0.0
    %358 = vmatpush2.msra.mxu0 0.0
    %359 = vmatprep.subr.mxu0 0.0
    %360 = vmatpush2.msra.mxu0 0.0
    %361 = vmatprep.subr.mxu0 0.0
    %362 = vmatpush2.msra.mxu0 0.0
    %363 = vmatprep.subr.mxu0 0.0
    %364 = vmatpush2.msra.mxu0 0.0
    %365 = vmatprep.subr.mxu0 0.0
    %366 = vmatpush2.msra.mxu0 0.0
    %367 = vmatprep.subr.mxu0 0.0
    %368 = vmatpush2.msra.mxu0 0.0
    %369 = vmatprep.subr.mxu0 0.0
    %370 = vmatpush2.msra.mxu0 0.0
    %371 = vmatprep.subr.mxu0 0.0
    %372 = vmatpush2.msra.mxu0 0.0
    %373 = vmatprep.mubr.f32.mxu0 0.0
    %374 = vmatmul.mubr.f32.gmra.mxu0 %v307
    %v375 = vpop.f32.mrf.mxu0
    %v376 = vadd.f32 0.0, %v375
    %v377 = vpop.f32.mrf.mxu0
    %378 = vdwg.mxu0
    %379 = vrot.lane.b32.xlu0 %v204, 120
    %v380 = vpop.permute.xlu0 %379
    %381 = vrot.lane.b32.xlu0 %v204, 88
    %v382 = vpop.permute.xlu0 %381
    %v383 = vsel %vm216, %v380, 0
    %v385 = vsel %vm216, %v382, 0
    %387 = vmatprep.subr.mxu0 0.0
    %388 = vmatpush1.xpose.msra.mxu0 0.0
    %389 = vmatprep.subr.mxu0 0.0
    %390 = vmatpush1.xpose.msra.mxu0 0.0
    %391 = vmatprep.subr.mxu0 0.0
    %392 = vmatpush1.xpose.msra.mxu0 0.0
    %393 = vmatprep.subr.mxu0 0.0
    %394 = vmatpush1.xpose.msra.mxu0 0.0
    %395 = vmatprep.subr.mxu0 0.0
    %396 = vmatpush1.xpose.msra.mxu0 0.0
    %397 = vmatprep.subr.mxu0 0.0
    %398 = vmatpush1.xpose.msra.mxu0 0.0
    %399 = vmatprep.subr.mxu0 0.0
    %400 = vmatpush1.xpose.msra.mxu0 0.0
    %401 = vmatprep.subr.mxu0 0.0
    %402 = vmatpush1.xpose.msra.mxu0 0.0
    %403 = vmatprep.subr.mxu0 0.0
    %404 = vmatpush1.xpose.msra.mxu0 0.0
    %405 = vmatprep.subr.mxu0 0.0
    %406 = vmatpush1.xpose.msra.mxu0 0.0
    %407 = vmatprep.subr.mxu0 0.0
    %408 = vmatpush1.xpose.msra.mxu0 0.0
    %409 = vmatprep.subr.mxu0 0.0
    %410 = vmatpush1.xpose.msra.mxu0 0.0
    %411 = vmatprep.subr.mxu0 0.0
    %412 = vmatpush1.xpose.msra.mxu0 0.0
    %413 = vmatprep.subr.mxu0 0.0
    %414 = vmatpush1.xpose.msra.mxu0 0.0
    %415 = vmatprep.subr.mxu0 0.0
    %416 = vmatpush1.xpose.msra.mxu0 0.0
    %417 = vmatprep.subr.mxu0 0.0
    %418 = vmatpush1.xpose.msra.mxu0 %v385
    %419 = vmatprep.subr.mxu0 0.0
    %420 = vmatpush2.xpose.msra.mxu0 0.0
    %421 = vmatprep.subr.mxu0 0.0
    %422 = vmatpush2.xpose.msra.mxu0 0.0
    %423 = vmatprep.subr.mxu0 0.0
    %424 = vmatpush2.xpose.msra.mxu0 0.0
    %425 = vmatprep.subr.mxu0 0.0
    %426 = vmatpush2.xpose.msra.mxu0 0.0
    %427 = vmatprep.subr.mxu0 0.0
    %428 = vmatpush2.xpose.msra.mxu0 0.0
    %429 = vmatprep.subr.mxu0 0.0
    %430 = vmatpush2.xpose.msra.mxu0 0.0
    %431 = vmatprep.subr.mxu0 0.0
    %432 = vmatpush2.xpose.msra.mxu0 0.0
    %433 = vmatprep.subr.mxu0 0.0
    %434 = vmatpush2.xpose.msra.mxu0 0.0
    %435 = vmatprep.subr.mxu0 0.0
    %436 = vmatpush2.xpose.msra.mxu0 0.0
    %437 = vmatprep.subr.mxu0 0.0
    %438 = vmatpush2.xpose.msra.mxu0 0.0
    %439 = vmatprep.subr.mxu0 0.0
    %440 = vmatpush2.xpose.msra.mxu0 0.0
    %441 = vmatprep.subr.mxu0 0.0
    %442 = vmatpush2.xpose.msra.mxu0 0.0
    %443 = vmatprep.subr.mxu0 0.0
    %444 = vmatpush2.xpose.msra.mxu0 0.0
    %445 = vmatprep.subr.mxu0 0.0
    %446 = vmatpush2.xpose.msra.mxu0 0.0
    %447 = vmatprep.subr.mxu0 0.0
    %448 = vmatpush2.xpose.msra.mxu0 0.0
    %449 = vmatprep.subr.mxu0 0.0
    %450 = vmatpush2.xpose.msra.mxu0 0.0
    %451 = vmatprep.mubr.f32.mxu0 0.0
    %452 = vmatmul.mubr.f32.gmra.mxu0 %v383
    %v453 = vpop.f32.mrf.mxu0
    %v454 = vadd.f32 0.0, %v453
    %v455 = vpop.f32.mrf.mxu0
    %456 = vdwg.mxu0
    %v457 = vmul.f32 %v454, 0.35355338
    %v458 = vsel %vm216, %v457, -inf
    %459 = vmax.xlane.f32.xlu0 %v458
    %v460 = vpop.xlane.xlu0 %459
    %v461 = vsub.f32 %v457, %v460
    %v462 = vmul.f32 %v461, 1.442695
    %v463 = vpow.pop %v462
    %v464 = vsel %vm216, %v463, 0.0
    %465 = vadd.xlane.f32.xlu0 %v464
    %v466 = vpop.xlane.xlu0 %465
    %v467 = vrcp.pop %v466
    %v468 = vmul.f32 %v463, %v467
    %469 = vrot.lane.b32.xlu0 %v204, 56
    %v470 = vpop.permute.xlu0 %469
    %v473 = vsel %vm216, %v468, 0
    %475 = vmatprep.subr.mxu0 0.0
    %476 = vmatpush1.msra.mxu0 0.0
    %477 = vmatprep.subr.mxu0 0.0
    %478 = vmatpush1.msra.mxu0 0.0
    %479 = vmatprep.subr.mxu0 0.0
    %480 = vmatpush1.msra.mxu0 0.0
    %481 = vmatprep.subr.mxu0 0.0
    %482 = vmatpush1.msra.mxu0 0.0
    %483 = vmatprep.subr.mxu0 0.0
    %484 = vmatpush1.msra.mxu0 0.0
    %485 = vmatprep.subr.mxu0 0.0
    %486 = vmatpush1.msra.mxu0 0.0
    %487 = vmatprep.subr.mxu0 0.0
    %488 = vmatpush1.msra.mxu0 0.0
    %489 = vmatprep.subr.mxu0 0.0
    %490 = vmatpush1.msra.mxu0 0.0
    %491 = vmatprep.subr.mxu0 0.0
    %492 = vmatpush1.msra.mxu0 0.0
    %493 = vmatprep.subr.mxu0 0.0
    %494 = vmatpush1.msra.mxu0 0.0
    %495 = vmatprep.subr.mxu0 0.0
    %496 = vmatpush1.msra.mxu0 0.0
    %497 = vmatprep.subr.mxu0 0.0
    %498 = vmatpush1.msra.mxu0 0.0
    %499 = vmatprep.subr.mxu0 0.0
    %500 = vmatpush1.msra.mxu0 0.0
    %501 = vmatprep.subr.mxu0 0.0
    %502 = vmatpush1.msra.mxu0 0.0
    %503 = vmatprep.subr.mxu0 0.0
    %504 = vmatpush1.msra.mxu0 0.0
    %505 = vmatprep.subr.mxu0 0.0
    %506 = vmatpush1.msra.mxu0 %v470
    %507 = vmatprep.subr.mxu0 0.0
    %508 = vmatpush2.msra.mxu0 0.0
    %509 = vmatprep.subr.mxu0 0.0
    %510 = vmatpush2.msra.mxu0 0.0
    %511 = vmatprep.subr.mxu0 0.0
    %512 = vmatpush2.msra.mxu0 0.0
    %513 = vmatprep.subr.mxu0 0.0
    %514 = vmatpush2.msra.mxu0 0.0
    %515 = vmatprep.subr.mxu0 0.0
    %516 = vmatpush2.msra.mxu0 0.0
    %517 = vmatprep.subr.mxu0 0.0
    %518 = vmatpush2.msra.mxu0 0.0
    %519 = vmatprep.subr.mxu0 0.0
    %520 = vmatpush2.msra.mxu0 0.0
    %521 = vmatprep.subr.mxu0 0.0
    %522 = vmatpush2.msra.mxu0 0.0
    %523 = vmatprep.subr.mxu0 0.0
    %524 = vmatpush2.msra.mxu0 0.0
    %525 = vmatprep.subr.mxu0 0.0
    %526 = vmatpush2.msra.mxu0 0.0
    %527 = vmatprep.subr.mxu0 0.0
    %528 = vmatpush2.msra.mxu0 0.0
    %529 = vmatprep.subr.mxu0 0.0
    %530 = vmatpush2.msra.mxu0 0.0
    %531 = vmatprep.subr.mxu0 0.0
    %532 = vmatpush2.msra.mxu0 0.0
    %533 = vmatprep.subr.mxu0 0.0
    %534 = vmatpush2.msra.mxu0 0.0
    %535 = vmatprep.subr.mxu0 0.0
    %536 = vmatpush2.msra.mxu0 0.0
    %537 = vmatprep.subr.mxu0 0.0
    %538 = vmatpush2.msra.mxu0 0.0
    %539 = vmatprep.mubr.f32.mxu0 0.0
    %540 = vmatmul.mubr.f32.gmra.mxu0 %v473
    %v541 = vpop.f32.mrf.mxu0
    %v542 = vadd.f32 0.0, %v541
    %v543 = vpop.f32.mrf.mxu0
    %544 = vdwg.mxu0
    %545 = vrot.lane.b32.xlu0 %v204, 112
    %v546 = vpop.permute.xlu0 %545
    %547 = vrot.lane.b32.xlu0 %v204, 80
    %v548 = vpop.permute.xlu0 %547
    %v549 = vsel %vm216, %v546, 0
    %v551 = vsel %vm216, %v548, 0
    %553 = vmatprep.subr.mxu0 0.0
    %554 = vmatpush1.xpose.msra.mxu0 0.0
    %555 = vmatprep.subr.mxu0 0.0
    %556 = vmatpush1.xpose.msra.mxu0 0.0
    %557 = vmatprep.subr.mxu0 0.0
    %558 = vmatpush1.xpose.msra.mxu0 0.0
    %559 = vmatprep.subr.mxu0 0.0
    %560 = vmatpush1.xpose.msra.mxu0 0.0
    %561 = vmatprep.subr.mxu0 0.0
    %562 = vmatpush1.xpose.msra.mxu0 0.0
    %563 = vmatprep.subr.mxu0 0.0
    %564 = vmatpush1.xpose.msra.mxu0 0.0
    %565 = vmatprep.subr.mxu0 0.0
    %566 = vmatpush1.xpose.msra.mxu0 0.0
    %567 = vmatprep.subr.mxu0 0.0
    %568 = vmatpush1.xpose.msra.mxu0 0.0
    %569 = vmatprep.subr.mxu0 0.0
    %570 = vmatpush1.xpose.msra.mxu0 0.0
    %571 = vmatprep.subr.mxu0 0.0
    %572 = vmatpush1.xpose.msra.mxu0 0.0
    %573 = vmatprep.subr.mxu0 0.0
    %574 = vmatpush1.xpose.msra.mxu0 0.0
    %575 = vmatprep.subr.mxu0 0.0
    %576 = vmatpush1.xpose.msra.mxu0 0.0
    %577 = vmatprep.subr.mxu0 0.0
    %578 = vmatpush1.xpose.msra.mxu0 0.0
    %579 = vmatprep.subr.mxu0 0.0
    %580 = vmatpush1.xpose.msra.mxu0 0.0
    %581 = vmatprep.subr.mxu0 0.0
    %582 = vmatpush1.xpose.msra.mxu0 0.0
    %583 = vmatprep.subr.mxu0 0.0
    %584 = vmatpush1.xpose.msra.mxu0 %v551
    %585 = vmatprep.subr.mxu0 0.0
    %586 = vmatpush2.xpose.msra.mxu0 0.0
    %587 = vmatprep.subr.mxu0 0.0
    %588 = vmatpush2.xpose.msra.mxu0 0.0
    %589 = vmatprep.subr.mxu0 0.0
    %590 = vmatpush2.xpose.msra.mxu0 0.0
    %591 = vmatprep.subr.mxu0 0.0
    %592 = vmatpush2.xpose.msra.mxu0 0.0
    %593 = vmatprep.subr.mxu0 0.0
    %594 = vmatpush2.xpose.msra.mxu0 0.0
    %595 = vmatprep.subr.mxu0 0.0
    %596 = vmatpush2.xpose.msra.mxu0 0.0
    %597 = vmatprep.subr.mxu0 0.0
    %598 = vmatpush2.xpose.msra.mxu0 0.0
    %599 = vmatprep.subr.mxu0 0.0
    %600 = vmatpush2.xpose.msra.mxu0 0.0
    %601 = vmatprep.subr.mxu0 0.0
    %602 = vmatpush2.xpose.msra.mxu0 0.0
    %603 = vmatprep.subr.mxu0 0.0
    %604 = vmatpush2.xpose.msra.mxu0 0.0
    %605 = vmatprep.subr.mxu0 0.0
    %606 = vmatpush2.xpose.msra.mxu0 0.0
    %607 = vmatprep.subr.mxu0 0.0
    %608 = vmatpush2.xpose.msra.mxu0 0.0
    %609 = vmatprep.subr.mxu0 0.0
    %610 = vmatpush2.xpose.msra.mxu0 0.0
    %611 = vmatprep.subr.mxu0 0.0
    %612 = vmatpush2.xpose.msra.mxu0 0.0
    %613 = vmatprep.subr.mxu0 0.0
    %614 = vmatpush2.xpose.msra.mxu0 0.0
    %615 = vmatprep.subr.mxu0 0.0
    %616 = vmatpush2.xpose.msra.mxu0 0.0
    %617 = vmatprep.mubr.f32.mxu0 0.0
    %618 = vmatmul.mubr.f32.gmra.mxu0 %v549
    %v619 = vpop.f32.mrf.mxu0
    %v620 = vadd.f32 0.0, %v619
    %v621 = vpop.f32.mrf.mxu0
    %622 = vdwg.mxu0
    %v623 = vmul.f32 %v620, 0.35355338
    %v624 = vsel %vm216, %v623, -inf
    %625 = vmax.xlane.f32.xlu0 %v624
    %v626 = vpop.xlane.xlu0 %625
    %v627 = vsub.f32 %v623, %v626
    %v628 = vmul.f32 %v627, 1.442695
    %v629 = vpow.pop %v628
    %v630 = vsel %vm216, %v629, 0.0
    %631 = vadd.xlane.f32.xlu0 %v630
    %v632 = vpop.xlane.xlu0 %631
    %v633 = vrcp.pop %v632
    %v634 = vmul.f32 %v629, %v633
    %635 = vrot.lane.b32.xlu0 %v204, 48
    %v636 = vpop.permute.xlu0 %635
    %v639 = vsel %vm216, %v634, 0
    %641 = vmatprep.subr.mxu0 0.0
    %642 = vmatpush1.msra.mxu0 0.0
    %643 = vmatprep.subr.mxu0 0.0
    %644 = vmatpush1.msra.mxu0 0.0
    %645 = vmatprep.subr.mxu0 0.0
    %646 = vmatpush1.msra.mxu0 0.0
    %647 = vmatprep.subr.mxu0 0.0
    %648 = vmatpush1.msra.mxu0 0.0
    %649 = vmatprep.subr.mxu0 0.0
    %650 = vmatpush1.msra.mxu0 0.0
    %651 = vmatprep.subr.mxu0 0.0
    %652 = vmatpush1.msra.mxu0 0.0
    %653 = vmatprep.subr.mxu0 0.0
    %654 = vmatpush1.msra.mxu0 0.0
    %655 = vmatprep.subr.mxu0 0.0
    %656 = vmatpush1.msra.mxu0 0.0
    %657 = vmatprep.subr.mxu0 0.0
    %658 = vmatpush1.msra.mxu0 0.0
    %659 = vmatprep.subr.mxu0 0.0
    %660 = vmatpush1.msra.mxu0 0.0
    %661 = vmatprep.subr.mxu0 0.0
    %662 = vmatpush1.msra.mxu0 0.0
    %663 = vmatprep.subr.mxu0 0.0
    %664 = vmatpush1.msra.mxu0 0.0
    %665 = vmatprep.subr.mxu0 0.0
    %666 = vmatpush1.msra.mxu0 0.0
    %667 = vmatprep.subr.mxu0 0.0
    %668 = vmatpush1.msra.mxu0 0.0
    %669 = vmatprep.subr.mxu0 0.0
    %670 = vmatpush1.msra.mxu0 0.0
    %671 = vmatprep.subr.mxu0 0.0
    %672 = vmatpush1.msra.mxu0 %v636
    %673 = vmatprep.subr.mxu0 0.0
    %674 = vmatpush2.msra.mxu0 0.0
    %675 = vmatprep.subr.mxu0 0.0
    %676 = vmatpush2.msra.mxu0 0.0
    %677 = vmatprep.subr.mxu0 0.0
    %678 = vmatpush2.msra.mxu0 0.0
    %679 = vmatprep.subr.mxu0 0.0
    %680 = vmatpush2.msra.mxu0 0.0
    %681 = vmatprep.subr.mxu0 0.0
    %682 = vmatpush2.msra.mxu0 0.0
    %683 = vmatprep.subr.mxu0 0.0
    %684 = vmatpush2.msra.mxu0 0.0
    %685 = vmatprep.subr.mxu0 0.0
    %686 = vmatpush2.msra.mxu0 0.0
    %687 = vmatprep.subr.mxu0 0.0
    %688 = vmatpush2.msra.mxu0 0.0
    %689 = vmatprep.subr.mxu0 0.0
    %690 = vmatpush2.msra.mxu0 0.0
    %691 = vmatprep.subr.mxu0 0.0
    %692 = vmatpush2.msra.mxu0 0.0
    %693 = vmatprep.subr.mxu0 0.0
    %694 = vmatpush2.msra.mxu0 0.0
    %695 = vmatprep.subr.mxu0 0.0
    %696 = vmatpush2.msra.mxu0 0.0
    %697 = vmatprep.subr.mxu0 0.0
    %698 = vmatpush2.msra.mxu0 0.0
    %699 = vmatprep.subr.mxu0 0.0
    %700 = vmatpush2.msra.mxu0 0.0
    %701 = vmatprep.subr.mxu0 0.0
    %702 = vmatpush2.msra.mxu0 0.0
    %703 = vmatprep.subr.mxu0 0.0
    %704 = vmatpush2.msra.mxu0 0.0
    %705 = vmatprep.mubr.f32.mxu0 0.0
    %706 = vmatmul.mubr.f32.gmra.mxu0 %v639
    %v707 = vpop.f32.mrf.mxu0
    %v708 = vadd.f32 0.0, %v707
    %v709 = vpop.f32.mrf.mxu0
    %710 = vdwg.mxu0
    %711 = vrot.lane.b32.xlu0 %v204, 104
    %v712 = vpop.permute.xlu0 %711
    %713 = vrot.lane.b32.xlu0 %v204, 72
    %v714 = vpop.permute.xlu0 %713
    %v715 = vsel %vm216, %v712, 0
    %v717 = vsel %vm216, %v714, 0
    %719 = vmatprep.subr.mxu0 0.0
    %720 = vmatpush1.xpose.msra.mxu0 0.0
    %721 = vmatprep.subr.mxu0 0.0
    %722 = vmatpush1.xpose.msra.mxu0 0.0
    %723 = vmatprep.subr.mxu0 0.0
    %724 = vmatpush1.xpose.msra.mxu0 0.0
    %725 = vmatprep.subr.mxu0 0.0
    %726 = vmatpush1.xpose.msra.mxu0 0.0
    %727 = vmatprep.subr.mxu0 0.0
    %728 = vmatpush1.xpose.msra.mxu0 0.0
    %729 = vmatprep.subr.mxu0 0.0
    %730 = vmatpush1.xpose.msra.mxu0 0.0
    %731 = vmatprep.subr.mxu0 0.0
    %732 = vmatpush1.xpose.msra.mxu0 0.0
    %733 = vmatprep.subr.mxu0 0.0
    %734 = vmatpush1.xpose.msra.mxu0 0.0
    %735 = vmatprep.subr.mxu0 0.0
    %736 = vmatpush1.xpose.msra.mxu0 0.0
    %737 = vmatprep.subr.mxu0 0.0
    %738 = vmatpush1.xpose.msra.mxu0 0.0
    %739 = vmatprep.subr.mxu0 0.0
    %740 = vmatpush1.xpose.msra.mxu0 0.0
    %741 = vmatprep.subr.mxu0 0.0
    %742 = vmatpush1.xpose.msra.mxu0 0.0
    %743 = vmatprep.subr.mxu0 0.0
    %744 = vmatpush1.xpose.msra.mxu0 0.0
    %745 = vmatprep.subr.mxu0 0.0
    %746 = vmatpush1.xpose.msra.mxu0 0.0
    %747 = vmatprep.subr.mxu0 0.0
    %748 = vmatpush1.xpose.msra.mxu0 0.0
    %749 = vmatprep.subr.mxu0 0.0
    %750 = vmatpush1.xpose.msra.mxu0 %v717
    %751 = vmatprep.subr.mxu0 0.0
    %752 = vmatpush2.xpose.msra.mxu0 0.0
    %753 = vmatprep.subr.mxu0 0.0
    %754 = vmatpush2.xpose.msra.mxu0 0.0
    %755 = vmatprep.subr.mxu0 0.0
    %756 = vmatpush2.xpose.msra.mxu0 0.0
    %757 = vmatprep.subr.mxu0 0.0
    %758 = vmatpush2.xpose.msra.mxu0 0.0
    %759 = vmatprep.subr.mxu0 0.0
    %760 = vmatpush2.xpose.msra.mxu0 0.0
    %761 = vmatprep.subr.mxu0 0.0
    %762 = vmatpush2.xpose.msra.mxu0 0.0
    %763 = vmatprep.subr.mxu0 0.0
    %764 = vmatpush2.xpose.msra.mxu0 0.0
    %765 = vmatprep.subr.mxu0 0.0
    %766 = vmatpush2.xpose.msra.mxu0 0.0
    %767 = vmatprep.subr.mxu0 0.0
    %768 = vmatpush2.xpose.msra.mxu0 0.0
    %769 = vmatprep.subr.mxu0 0.0
    %770 = vmatpush2.xpose.msra.mxu0 0.0
    %771 = vmatprep.subr.mxu0 0.0
    %772 = vmatpush2.xpose.msra.mxu0 0.0
    %773 = vmatprep.subr.mxu0 0.0
    %774 = vmatpush2.xpose.msra.mxu0 0.0
    %775 = vmatprep.subr.mxu0 0.0
    %776 = vmatpush2.xpose.msra.mxu0 0.0
    %777 = vmatprep.subr.mxu0 0.0
    %778 = vmatpush2.xpose.msra.mxu0 0.0
    %779 = vmatprep.subr.mxu0 0.0
    %780 = vmatpush2.xpose.msra.mxu0 0.0
    %781 = vmatprep.subr.mxu0 0.0
    %782 = vmatpush2.xpose.msra.mxu0 0.0
    %783 = vmatprep.mubr.f32.mxu0 0.0
    %784 = vmatmul.mubr.f32.gmra.mxu0 %v715
    %v785 = vpop.f32.mrf.mxu0
    %v786 = vadd.f32 0.0, %v785
    %v787 = vpop.f32.mrf.mxu0
    %788 = vdwg.mxu0
    %v789 = vmul.f32 %v786, 0.35355338
    %v790 = vsel %vm216, %v789, -inf
    %791 = vmax.xlane.f32.xlu0 %v790
    %v792 = vpop.xlane.xlu0 %791
    %v793 = vsub.f32 %v789, %v792
    %v794 = vmul.f32 %v793, 1.442695
    %v795 = vpow.pop %v794
    %v796 = vsel %vm216, %v795, 0.0
    %797 = vadd.xlane.f32.xlu0 %v796
    %v798 = vpop.xlane.xlu0 %797
    %v799 = vrcp.pop %v798
    %v800 = vmul.f32 %v795, %v799
    %801 = vrot.lane.b32.xlu0 %v204, 40
    %v802 = vpop.permute.xlu0 %801
    %v805 = vsel %vm216, %v800, 0
    %807 = vmatprep.subr.mxu0 0.0
    %808 = vmatpush1.msra.mxu0 0.0
    %809 = vmatprep.subr.mxu0 0.0
    %810 = vmatpush1.msra.mxu0 0.0
    %811 = vmatprep.subr.mxu0 0.0
    %812 = vmatpush1.msra.mxu0 0.0
    %813 = vmatprep.subr.mxu0 0.0
    %814 = vmatpush1.msra.mxu0 0.0
    %815 = vmatprep.subr.mxu0 0.0
    %816 = vmatpush1.msra.mxu0 0.0
    %817 = vmatprep.subr.mxu0 0.0
    %818 = vmatpush1.msra.mxu0 0.0
    %819 = vmatprep.subr.mxu0 0.0
    %820 = vmatpush1.msra.mxu0 0.0
    %821 = vmatprep.subr.mxu0 0.0
    %822 = vmatpush1.msra.mxu0 0.0
    %823 = vmatprep.subr.mxu0 0.0
    %824 = vmatpush1.msra.mxu0 0.0
    %825 = vmatprep.subr.mxu0 0.0
    %826 = vmatpush1.msra.mxu0 0.0
    %827 = vmatprep.subr.mxu0 0.0
    %828 = vmatpush1.msra.mxu0 0.0
    %829 = vmatprep.subr.mxu0 0.0
    %830 = vmatpush1.msra.mxu0 0.0
    %831 = vmatprep.subr.mxu0 0.0
    %832 = vmatpush1.msra.mxu0 0.0
    %833 = vmatprep.subr.mxu0 0.0
    %834 = vmatpush1.msra.mxu0 0.0
    %835 = vmatprep.subr.mxu0 0.0
    %836 = vmatpush1.msra.mxu0 0.0
    %837 = vmatprep.subr.mxu0 0.0
    %838 = vmatpush1.msra.mxu0 %v802
    %839 = vmatprep.subr.mxu0 0.0
    %840 = vmatpush2.msra.mxu0 0.0
    %841 = vmatprep.subr.mxu0 0.0
    %842 = vmatpush2.msra.mxu0 0.0
    %843 = vmatprep.subr.mxu0 0.0
    %844 = vmatpush2.msra.mxu0 0.0
    %845 = vmatprep.subr.mxu0 0.0
    %846 = vmatpush2.msra.mxu0 0.0
    %847 = vmatprep.subr.mxu0 0.0
    %848 = vmatpush2.msra.mxu0 0.0
    %849 = vmatprep.subr.mxu0 0.0
    %850 = vmatpush2.msra.mxu0 0.0
    %851 = vmatprep.subr.mxu0 0.0
    %852 = vmatpush2.msra.mxu0 0.0
    %853 = vmatprep.subr.mxu0 0.0
    %854 = vmatpush2.msra.mxu0 0.0
    %855 = vmatprep.subr.mxu0 0.0
    %856 = vmatpush2.msra.mxu0 0.0
    %857 = vmatprep.subr.mxu0 0.0
    %858 = vmatpush2.msra.mxu0 0.0
    %859 = vmatprep.subr.mxu0 0.0
    %860 = vmatpush2.msra.mxu0 0.0
    %861 = vmatprep.subr.mxu0 0.0
    %862 = vmatpush2.msra.mxu0 0.0
    %863 = vmatprep.subr.mxu0 0.0
    %864 = vmatpush2.msra.mxu0 0.0
    %865 = vmatprep.subr.mxu0 0.0
    %866 = vmatpush2.msra.mxu0 0.0
    %867 = vmatprep.subr.mxu0 0.0
    %868 = vmatpush2.msra.mxu0 0.0
    %869 = vmatprep.subr.mxu0 0.0
    %870 = vmatpush2.msra.mxu0 0.0
    %871 = vmatprep.mubr.f32.mxu0 0.0
    %872 = vmatmul.mubr.f32.gmra.mxu0 %v805
    %v873 = vpop.f32.mrf.mxu0
    %v874 = vadd.f32 0.0, %v873
    %v875 = vpop.f32.mrf.mxu0
    %876 = vdwg.mxu0
    %878 = vrot.lane.b32.xlu0 %v542, 8
    %v879 = vpop.permute.xlu0 %878
    %882 = vrot.lane.b32.xlu0 %v708, 16
    %v883 = vpop.permute.xlu0 %882
    %886 = vrot.lane.b32.xlu0 %v874, 24
    %v887 = vpop.permute.xlu0 %886
    %v889 = vsel %vm216, %v376, %v879
    %vm890 = vcmask 130048
    %v891 = vsel %vm890, %v889, %v883
    %vm892 = vcmask 195584
    %v893 = vsel %vm892, %v891, %v887
    %895 = vrot.lane.b32.xlu0 %v209, 96
    %v896 = vpop.permute.xlu0 %895
    %v897 = vsel %vm216, %v209, 0
    %v899 = vsel %vm216, %v896, 0
    %901 = vmatprep.subr.mxu0 0.0
    %902 = vmatpush1.xpose.msra.mxu0 0.0
    %903 = vmatprep.subr.mxu0 0.0
    %904 = vmatpush1.xpose.msra.mxu0 0.0
    %905 = vmatprep.subr.mxu0 0.0
    %906 = vmatpush1.xpose.msra.mxu0 0.0
    %907 = vmatprep.subr.mxu0 0.0
    %908 = vmatpush1.xpose.msra.mxu0 0.0
    %909 = vmatprep.subr.mxu0 0.0
    %910 = vmatpush1.xpose.msra.mxu0 0.0
    %911 = vmatprep.subr.mxu0 0.0
    %912 = vmatpush1.xpose.msra.mxu0 0.0
    %913 = vmatprep.subr.mxu0 0.0
    %914 = vmatpush1.xpose.msra.mxu0 0.0
    %915 = vmatprep.subr.mxu0 0.0
    %916 = vmatpush1.xpose.msra.mxu0 0.0
    %917 = vmatprep.subr.mxu0 0.0
    %918 = vmatpush1.xpose.msra.mxu0 0.0
    %919 = vmatprep.subr.mxu0 0.0
    %920 = vmatpush1.xpose.msra.mxu0 0.0
    %921 = vmatprep.subr.mxu0 0.0
    %922 = vmatpush1.xpose.msra.mxu0 0.0
    %923 = vmatprep.subr.mxu0 0.0
    %924 = vmatpush1.xpose.msra.mxu0 0.0
    %925 = vmatprep.subr.mxu0 0.0
    %926 = vmatpush1.xpose.msra.mxu0 0.0
    %927 = vmatprep.subr.mxu0 0.0
    %928 = vmatpush1.xpose.msra.mxu0 0.0
    %929 = vmatprep.subr.mxu0 0.0
    %930 = vmatpush1.xpose.msra.mxu0 0.0
    %931 = vmatprep.subr.mxu0 0.0
    %932 = vmatpush1.xpose.msra.mxu0 %v899
    %933 = vmatprep.subr.mxu0 0.0
    %934 = vmatpush2.xpose.msra.mxu0 0.0
    %935 = vmatprep.subr.mxu0 0.0
    %936 = vmatpush2.xpose.msra.mxu0 0.0
    %937 = vmatprep.subr.mxu0 0.0
    %938 = vmatpush2.xpose.msra.mxu0 0.0
    %939 = vmatprep.subr.mxu0 0.0
    %940 = vmatpush2.xpose.msra.mxu0 0.0
    %941 = vmatprep.subr.mxu0 0.0
    %942 = vmatpush2.xpose.msra.mxu0 0.0
    %943 = vmatprep.subr.mxu0 0.0
    %944 = vmatpush2.xpose.msra.mxu0 0.0
    %945 = vmatprep.subr.mxu0 0.0
    %946 = vmatpush2.xpose.msra.mxu0 0.0
    %947 = vmatprep.subr.mxu0 0.0
    %948 = vmatpush2.xpose.msra.mxu0 0.0
    %949 = vmatprep.subr.mxu0 0.0
    %950 = vmatpush2.xpose.msra.mxu0 0.0
    %951 = vmatprep.subr.mxu0 0.0
    %952 = vmatpush2.xpose.msra.mxu0 0.0
    %953 = vmatprep.subr.mxu0 0.0
    %954 = vmatpush2.xpose.msra.mxu0 0.0
    %955 = vmatprep.subr.mxu0 0.0
    %956 = vmatpush2.xpose.msra.mxu0 0.0
    %957 = vmatprep.subr.mxu0 0.0
    %958 = vmatpush2.xpose.msra.mxu0 0.0
    %959 = vmatprep.subr.mxu0 0.0
    %960 = vmatpush2.xpose.msra.mxu0 0.0
    %961 = vmatprep.subr.mxu0 0.0
    %962 = vmatpush2.xpose.msra.mxu0 0.0
    %963 = vmatprep.subr.mxu0 0.0
    %964 = vmatpush2.xpose.msra.mxu0 0.0
    %965 = vmatprep.mubr.f32.mxu0 0.0
    %966 = vmatmul.mubr.f32.gmra.mxu0 %v897
    %v967 = vpop.f32.mrf.mxu0
    %v968 = vadd.f32 0.0, %v967
    %v969 = vpop.f32.mrf.mxu0
    %970 = vdwg.mxu0
    %v971 = vmul.f32 %v968, 0.35355338
    %v972 = vsel %vm216, %v971, -inf
    %973 = vmax.xlane.f32.xlu0 %v972
    %v974 = vpop.xlane.xlu0 %973
    %v975 = vsub.f32 %v971, %v974
    %v976 = vmul.f32 %v975, 1.442695
    %v977 = vpow.pop %v976
    %v978 = vsel %vm216, %v977, 0.0
    %979 = vadd.xlane.f32.xlu0 %v978
    %v980 = vpop.xlane.xlu0 %979
    %v981 = vrcp.pop %v980
    %v982 = vmul.f32 %v977, %v981
    %983 = vrot.lane.b32.xlu0 %v209, 64
    %v984 = vpop.permute.xlu0 %983
    %v987 = vsel %vm216, %v982, 0
    %989 = vmatprep.subr.mxu0 0.0
    %990 = vmatpush1.msra.mxu0 0.0
    %991 = vmatprep.subr.mxu0 0.0
    %992 = vmatpush1.msra.mxu0 0.0
    %993 = vmatprep.subr.mxu0 0.0
    %994 = vmatpush1.msra.mxu0 0.0
    %995 = vmatprep.subr.mxu0 0.0
    %996 = vmatpush1.msra.mxu0 0.0
    %997 = vmatprep.subr.mxu0 0.0
    %998 = vmatpush1.msra.mxu0 0.0
    %999 = vmatprep.subr.mxu0 0.0
    %1000 = vmatpush1.msra.mxu0 0.0
    %1001 = vmatprep.subr.mxu0 0.0
    %1002 = vmatpush1.msra.mxu0 0.0
    %1003 = vmatprep.subr.mxu0 0.0
    %1004 = vmatpush1.msra.mxu0 0.0
    %1005 = vmatprep.subr.mxu0 0.0
    %1006 = vmatpush1.msra.mxu0 0.0
    %1007 = vmatprep.subr.mxu0 0.0
    %1008 = vmatpush1.msra.mxu0 0.0
    %1009 = vmatprep.subr.mxu0 0.0
    %1010 = vmatpush1.msra.mxu0 0.0
    %1011 = vmatprep.subr.mxu0 0.0
    %1012 = vmatpush1.msra.mxu0 0.0
    %1013 = vmatprep.subr.mxu0 0.0
    %1014 = vmatpush1.msra.mxu0 0.0
    %1015 = vmatprep.subr.mxu0 0.0
    %1016 = vmatpush1.msra.mxu0 0.0
    %1017 = vmatprep.subr.mxu0 0.0
    %1018 = vmatpush1.msra.mxu0 0.0
    %1019 = vmatprep.subr.mxu0 0.0
    %1020 = vmatpush1.msra.mxu0 %v984
    %1021 = vmatprep.subr.mxu0 0.0
    %1022 = vmatpush2.msra.mxu0 0.0
    %1023 = vmatprep.subr.mxu0 0.0
    %1024 = vmatpush2.msra.mxu0 0.0
    %1025 = vmatprep.subr.mxu0 0.0
    %1026 = vmatpush2.msra.mxu0 0.0
    %1027 = vmatprep.subr.mxu0 0.0
    %1028 = vmatpush2.msra.mxu0 0.0
    %1029 = vmatprep.subr.mxu0 0.0
    %1030 = vmatpush2.msra.mxu0 0.0
    %1031 = vmatprep.subr.mxu0 0.0
    %1032 = vmatpush2.msra.mxu0 0.0
    %1033 = vmatprep.subr.mxu0 0.0
    %1034 = vmatpush2.msra.mxu0 0.0
    %1035 = vmatprep.subr.mxu0 0.0
    %1036 = vmatpush2.msra.mxu0 0.0
    %1037 = vmatprep.subr.mxu0 0.0
    %1038 = vmatpush2.msra.mxu0 0.0
    %1039 = vmatprep.subr.mxu0 0.0
    %1040 = vmatpush2.msra.mxu0 0.0
    %1041 = vmatprep.subr.mxu0 0.0
    %1042 = vmatpush2.msra.mxu0 0.0
    %1043 = vmatprep.subr.mxu0 0.0
    %1044 = vmatpush2.msra.mxu0 0.0
    %1045 = vmatprep.subr.mxu0 0.0
    %1046 = vmatpush2.msra.mxu0 0.0
    %1047 = vmatprep.subr.mxu0 0.0
    %1048 = vmatpush2.msra.mxu0 0.0
    %1049 = vmatprep.subr.mxu0 0.0
    %1050 = vmatpush2.msra.mxu0 0.0
    %1051 = vmatprep.subr.mxu0 0.0
    %1052 = vmatpush2.msra.mxu0 0.0
    %1053 = vmatprep.mubr.f32.mxu0 0.0
    %1054 = vmatmul.mubr.f32.gmra.mxu0 %v987
    %v1055 = vpop.f32.mrf.mxu0
    %v1056 = vadd.f32 0.0, %v1055
    %v1057 = vpop.f32.mrf.mxu0
    %1058 = vdwg.mxu0
    %1059 = vrot.lane.b32.xlu0 %v209, 120
    %v1060 = vpop.permute.xlu0 %1059
    %1061 = vrot.lane.b32.xlu0 %v209, 88
    %v1062 = vpop.permute.xlu0 %1061
    %v1063 = vsel %vm216, %v1060, 0
    %v1065 = vsel %vm216, %v1062, 0
    %1067 = vmatprep.subr.mxu0 0.0
    %1068 = vmatpush1.xpose.msra.mxu0 0.0
    %1069 = vmatprep.subr.mxu0 0.0
    %1070 = vmatpush1.xpose.msra.mxu0 0.0
    %1071 = vmatprep.subr.mxu0 0.0
    %1072 = vmatpush1.xpose.msra.mxu0 0.0
    %1073 = vmatprep.subr.mxu0 0.0
    %1074 = vmatpush1.xpose.msra.mxu0 0.0
    %1075 = vmatprep.subr.mxu0 0.0
    %1076 = vmatpush1.xpose.msra.mxu0 0.0
    %1077 = vmatprep.subr.mxu0 0.0
    %1078 = vmatpush1.xpose.msra.mxu0 0.0
    %1079 = vmatprep.subr.mxu0 0.0
    %1080 = vmatpush1.xpose.msra.mxu0 0.0
    %1081 = vmatprep.subr.mxu0 0.0
    %1082 = vmatpush1.xpose.msra.mxu0 0.0
    %1083 = vmatprep.subr.mxu0 0.0
    %1084 = vmatpush1.xpose.msra.mxu0 0.0
    %1085 = vmatprep.subr.mxu0 0.0
    %1086 = vmatpush1.xpose.msra.mxu0 0.0
    %1087 = vmatprep.subr.mxu0 0.0
    %1088 = vmatpush1.xpose.msra.mxu0 0.0
    %1089 = vmatprep.subr.mxu0 0.0
    %1090 = vmatpush1.xpose.msra.mxu0 0.0
    %1091 = vmatprep.subr.mxu0 0.0
    %1092 = vmatpush1.xpose.msra.mxu0 0.0
    %1093 = vmatprep.subr.mxu0 0.0
    %1094 = vmatpush1.xpose.msra.mxu0 0.0
    %1095 = vmatprep.subr.mxu0 0.0
    %1096 = vmatpush1.xpose.msra.mxu0 0.0
    %1097 = vmatprep.subr.mxu0 0.0
    %1098 = vmatpush1.xpose.msra.mxu0 %v1065
    %1099 = vmatprep.subr.mxu0 0.0
    %1100 = vmatpush2.xpose.msra.mxu0 0.0
    %1101 = vmatprep.subr.mxu0 0.0
    %1102 = vmatpush2.xpose.msra.mxu0 0.0
    %1103 = vmatprep.subr.mxu0 0.0
    %1104 = vmatpush2.xpose.msra.mxu0 0.0
    %1105 = vmatprep.subr.mxu0 0.0
    %1106 = vmatpush2.xpose.msra.mxu0 0.0
    %1107 = vmatprep.subr.mxu0 0.0
    %1108 = vmatpush2.xpose.msra.mxu0 0.0
    %1109 = vmatprep.subr.mxu0 0.0
    %1110 = vmatpush2.xpose.msra.mxu0 0.0
    %1111 = vmatprep.subr.mxu0 0.0
    %1112 = vmatpush2.xpose.msra.mxu0 0.0
    %1113 = vmatprep.subr.mxu0 0.0
    %1114 = vmatpush2.xpose.msra.mxu0 0.0
    %1115 = vmatprep.subr.mxu0 0.0
    %1116 = vmatpush2.xpose.msra.mxu0 0.0
    %1117 = vmatprep.subr.mxu0 0.0
    %1118 = vmatpush2.xpose.msra.mxu0 0.0
    %1119 = vmatprep.subr.mxu0 0.0
    %1120 = vmatpush2.xpose.msra.mxu0 0.0
    %1121 = vmatprep.subr.mxu0 0.0
    %1122 = vmatpush2.xpose.msra.mxu0 0.0
    %1123 = vmatprep.subr.mxu0 0.0
    %1124 = vmatpush2.xpose.msra.mxu0 0.0
    %1125 = vmatprep.subr.mxu0 0.0
    %1126 = vmatpush2.xpose.msra.mxu0 0.0
    %1127 = vmatprep.subr.mxu0 0.0
    %1128 = vmatpush2.xpose.msra.mxu0 0.0
    %1129 = vmatprep.subr.mxu0 0.0
    %1130 = vmatpush2.xpose.msra.mxu0 0.0
    %1131 = vmatprep.mubr.f32.mxu0 0.0
    %1132 = vmatmul.mubr.f32.gmra.mxu0 %v1063
    %v1133 = vpop.f32.mrf.mxu0
    %v1134 = vadd.f32 0.0, %v1133
    %v1135 = vpop.f32.mrf.mxu0
    %1136 = vdwg.mxu0
    %v1137 = vmul.f32 %v1134, 0.35355338
    %v1138 = vsel %vm216, %v1137, -inf
    %1139 = vmax.xlane.f32.xlu0 %v1138
    %v1140 = vpop.xlane.xlu0 %1139
    %v1141 = vsub.f32 %v1137, %v1140
    %v1142 = vmul.f32 %v1141, 1.442695
    %v1143 = vpow.pop %v1142
    %v1144 = vsel %vm216, %v1143, 0.0
    %1145 = vadd.xlane.f32.xlu0 %v1144
    %v1146 = vpop.xlane.xlu0 %1145
    %v1147 = vrcp.pop %v1146
    %v1148 = vmul.f32 %v1143, %v1147
    %1149 = vrot.lane.b32.xlu0 %v209, 56
    %v1150 = vpop.permute.xlu0 %1149
    %v1153 = vsel %vm216, %v1148, 0
    %1155 = vmatprep.subr.mxu0 0.0
    %1156 = vmatpush1.msra.mxu0 0.0
    %1157 = vmatprep.subr.mxu0 0.0
    %1158 = vmatpush1.msra.mxu0 0.0
    %1159 = vmatprep.subr.mxu0 0.0
    %1160 = vmatpush1.msra.mxu0 0.0
    %1161 = vmatprep.subr.mxu0 0.0
    %1162 = vmatpush1.msra.mxu0 0.0
    %1163 = vmatprep.subr.mxu0 0.0
    %1164 = vmatpush1.msra.mxu0 0.0
    %1165 = vmatprep.subr.mxu0 0.0
    %1166 = vmatpush1.msra.mxu0 0.0
    %1167 = vmatprep.subr.mxu0 0.0
    %1168 = vmatpush1.msra.mxu0 0.0
    %1169 = vmatprep.subr.mxu0 0.0
    %1170 = vmatpush1.msra.mxu0 0.0
    %1171 = vmatprep.subr.mxu0 0.0
    %1172 = vmatpush1.msra.mxu0 0.0
    %1173 = vmatprep.subr.mxu0 0.0
    %1174 = vmatpush1.msra.mxu0 0.0
    %1175 = vmatprep.subr.mxu0 0.0
    %1176 = vmatpush1.msra.mxu0 0.0
    %1177 = vmatprep.subr.mxu0 0.0
    %1178 = vmatpush1.msra.mxu0 0.0
    %1179 = vmatprep.subr.mxu0 0.0
    %1180 = vmatpush1.msra.mxu0 0.0
    %1181 = vmatprep.subr.mxu0 0.0
    %1182 = vmatpush1.msra.mxu0 0.0
    %1183 = vmatprep.subr.mxu0 0.0
    %1184 = vmatpush1.msra.mxu0 0.0
    %1185 = vmatprep.subr.mxu0 0.0
    %1186 = vmatpush1.msra.mxu0 %v1150
    %1187 = vmatprep.subr.mxu0 0.0
    %1188 = vmatpush2.msra.mxu0 0.0
    %1189 = vmatprep.subr.mxu0 0.0
    %1190 = vmatpush2.msra.mxu0 0.0
    %1191 = vmatprep.subr.mxu0 0.0
    %1192 = vmatpush2.msra.mxu0 0.0
    %1193 = vmatprep.subr.mxu0 0.0
    %1194 = vmatpush2.msra.mxu0 0.0
    %1195 = vmatprep.subr.mxu0 0.0
    %1196 = vmatpush2.msra.mxu0 0.0
    %1197 = vmatprep.subr.mxu0 0.0
    %1198 = vmatpush2.msra.mxu0 0.0
    %1199 = vmatprep.subr.mxu0 0.0
    %1200 = vmatpush2.msra.mxu0 0.0
    %1201 = vmatprep.subr.mxu0 0.0
    %1202 = vmatpush2.msra.mxu0 0.0
    %1203 = vmatprep.subr.mxu0 0.0
    %1204 = vmatpush2.msra.mxu0 0.0
    %1205 = vmatprep.subr.mxu0 0.0
    %1206 = vmatpush2.msra.mxu0 0.0
    %1207 = vmatprep.subr.mxu0 0.0
    %1208 = vmatpush2.msra.mxu0 0.0
    %1209 = vmatprep.subr.mxu0 0.0
    %1210 = vmatpush2.msra.mxu0 0.0
    %1211 = vmatprep.subr.mxu0 0.0
    %1212 = vmatpush2.msra.mxu0 0.0
    %1213 = vmatprep.subr.mxu0 0.0
    %1214 = vmatpush2.msra.mxu0 0.0
    %1215 = vmatprep.subr.mxu0 0.0
    %1216 = vmatpush2.msra.mxu0 0.0
    %1217 = vmatprep.subr.mxu0 0.0
    %1218 = vmatpush2.msra.mxu0 0.0
    %1219 = vmatprep.mubr.f32.mxu0 0.0
    %1220 = vmatmul.mubr.f32.gmra.mxu0 %v1153
    %v1221 = vpop.f32.mrf.mxu0
    %v1222 = vadd.f32 0.0, %v1221
    %v1223 = vpop.f32.mrf.mxu0
    %1224 = vdwg.mxu0
    %1225 = vrot.lane.b32.xlu0 %v209, 112
    %v1226 = vpop.permute.xlu0 %1225
    %1227 = vrot.lane.b32.xlu0 %v209, 80
    %v1228 = vpop.permute.xlu0 %1227
    %v1229 = vsel %vm216, %v1226, 0
    %v1231 = vsel %vm216, %v1228, 0
    %1233 = vmatprep.subr.mxu0 0.0
    %1234 = vmatpush1.xpose.msra.mxu0 0.0
    %1235 = vmatprep.subr.mxu0 0.0
    %1236 = vmatpush1.xpose.msra.mxu0 0.0
    %1237 = vmatprep.subr.mxu0 0.0
    %1238 = vmatpush1.xpose.msra.mxu0 0.0
    %1239 = vmatprep.subr.mxu0 0.0
    %1240 = vmatpush1.xpose.msra.mxu0 0.0
    %1241 = vmatprep.subr.mxu0 0.0
    %1242 = vmatpush1.xpose.msra.mxu0 0.0
    %1243 = vmatprep.subr.mxu0 0.0
    %1244 = vmatpush1.xpose.msra.mxu0 0.0
    %1245 = vmatprep.subr.mxu0 0.0
    %1246 = vmatpush1.xpose.msra.mxu0 0.0
    %1247 = vmatprep.subr.mxu0 0.0
    %1248 = vmatpush1.xpose.msra.mxu0 0.0
    %1249 = vmatprep.subr.mxu0 0.0
    %1250 = vmatpush1.xpose.msra.mxu0 0.0
    %1251 = vmatprep.subr.mxu0 0.0
    %1252 = vmatpush1.xpose.msra.mxu0 0.0
    %1253 = vmatprep.subr.mxu0 0.0
    %1254 = vmatpush1.xpose.msra.mxu0 0.0
    %1255 = vmatprep.subr.mxu0 0.0
    %1256 = vmatpush1.xpose.msra.mxu0 0.0
    %1257 = vmatprep.subr.mxu0 0.0
    %1258 = vmatpush1.xpose.msra.mxu0 0.0
    %1259 = vmatprep.subr.mxu0 0.0
    %1260 = vmatpush1.xpose.msra.mxu0 0.0
    %1261 = vmatprep.subr.mxu0 0.0
    %1262 = vmatpush1.xpose.msra.mxu0 0.0
    %1263 = vmatprep.subr.mxu0 0.0
    %1264 = vmatpush1.xpose.msra.mxu0 %v1231
    %1265 = vmatprep.subr.mxu0 0.0
    %1266 = vmatpush2.xpose.msra.mxu0 0.0
    %1267 = vmatprep.subr.mxu0 0.0
    %1268 = vmatpush2.xpose.msra.mxu0 0.0
    %1269 = vmatprep.subr.mxu0 0.0
    %1270 = vmatpush2.xpose.msra.mxu0 0.0
    %1271 = vmatprep.subr.mxu0 0.0
    %1272 = vmatpush2.xpose.msra.mxu0 0.0
    %1273 = vmatprep.subr.mxu0 0.0
    %1274 = vmatpush2.xpose.msra.mxu0 0.0
    %1275 = vmatprep.subr.mxu0 0.0
    %1276 = vmatpush2.xpose.msra.mxu0 0.0
    %1277 = vmatprep.subr.mxu0 0.0
    %1278 = vmatpush2.xpose.msra.mxu0 0.0
    %1279 = vmatprep.subr.mxu0 0.0
    %1280 = vmatpush2.xpose.msra.mxu0 0.0
    %1281 = vmatprep.subr.mxu0 0.0
    %1282 = vmatpush2.xpose.msra.mxu0 0.0
    %1283 = vmatprep.subr.mxu0 0.0
    %1284 = vmatpush2.xpose.msra.mxu0 0.0
    %1285 = vmatprep.subr.mxu0 0.0
    %1286 = vmatpush2.xpose.msra.mxu0 0.0
    %1287 = vmatprep.subr.mxu0 0.0
    %1288 = vmatpush2.xpose.msra.mxu0 0.0
    %1289 = vmatprep.subr.mxu0 0.0
    %1290 = vmatpush2.xpose.msra.mxu0 0.0
    %1291 = vmatprep.subr.mxu0 0.0
    %1292 = vmatpush2.xpose.msra.mxu0 0.0
    %1293 = vmatprep.subr.mxu0 0.0
    %1294 = vmatpush2.xpose.msra.mxu0 0.0
    %1295 = vmatprep.subr.mxu0 0.0
    %1296 = vmatpush2.xpose.msra.mxu0 0.0
    %1297 = vmatprep.mubr.f32.mxu0 0.0
    %1298 = vmatmul.mubr.f32.gmra.mxu0 %v1229
    %v1299 = vpop.f32.mrf.mxu0
    %v1300 = vadd.f32 0.0, %v1299
    %v1301 = vpop.f32.mrf.mxu0
    %1302 = vdwg.mxu0
    %v1303 = vmul.f32 %v1300, 0.35355338
    %v1304 = vsel %vm216, %v1303, -inf
    %1305 = vmax.xlane.f32.xlu0 %v1304
    %v1306 = vpop.xlane.xlu0 %1305
    %v1307 = vsub.f32 %v1303, %v1306
    %v1308 = vmul.f32 %v1307, 1.442695
    %v1309 = vpow.pop %v1308
    %v1310 = vsel %vm216, %v1309, 0.0
    %1311 = vadd.xlane.f32.xlu0 %v1310
    %v1312 = vpop.xlane.xlu0 %1311
    %v1313 = vrcp.pop %v1312
    %v1314 = vmul.f32 %v1309, %v1313
    %1315 = vrot.lane.b32.xlu0 %v209, 48
    %v1316 = vpop.permute.xlu0 %1315
    %v1319 = vsel %vm216, %v1314, 0
    %1321 = vmatprep.subr.mxu0 0.0
    %1322 = vmatpush1.msra.mxu0 0.0
    %1323 = vmatprep.subr.mxu0 0.0
    %1324 = vmatpush1.msra.mxu0 0.0
    %1325 = vmatprep.subr.mxu0 0.0
    %1326 = vmatpush1.msra.mxu0 0.0
    %1327 = vmatprep.subr.mxu0 0.0
    %1328 = vmatpush1.msra.mxu0 0.0
    %1329 = vmatprep.subr.mxu0 0.0
    %1330 = vmatpush1.msra.mxu0 0.0
    %1331 = vmatprep.subr.mxu0 0.0
    %1332 = vmatpush1.msra.mxu0 0.0
    %1333 = vmatprep.subr.mxu0 0.0
    %1334 = vmatpush1.msra.mxu0 0.0
    %1335 = vmatprep.subr.mxu0 0.0
    %1336 = vmatpush1.msra.mxu0 0.0
    %1337 = vmatprep.subr.mxu0 0.0
    %1338 = vmatpush1.msra.mxu0 0.0
    %1339 = vmatprep.subr.mxu0 0.0
    %1340 = vmatpush1.msra.mxu0 0.0
    %1341 = vmatprep.subr.mxu0 0.0
    %1342 = vmatpush1.msra.mxu0 0.0
    %1343 = vmatprep.subr.mxu0 0.0
    %1344 = vmatpush1.msra.mxu0 0.0
    %1345 = vmatprep.subr.mxu0 0.0
    %1346 = vmatpush1.msra.mxu0 0.0
    %1347 = vmatprep.subr.mxu0 0.0
    %1348 = vmatpush1.msra.mxu0 0.0
    %1349 = vmatprep.subr.mxu0 0.0
    %1350 = vmatpush1.msra.mxu0 0.0
    %1351 = vmatprep.subr.mxu0 0.0
    %1352 = vmatpush1.msra.mxu0 %v1316
    %1353 = vmatprep.subr.mxu0 0.0
    %1354 = vmatpush2.msra.mxu0 0.0
    %1355 = vmatprep.subr.mxu0 0.0
    %1356 = vmatpush2.msra.mxu0 0.0
    %1357 = vmatprep.subr.mxu0 0.0
    %1358 = vmatpush2.msra.mxu0 0.0
    %1359 = vmatprep.subr.mxu0 0.0
    %1360 = vmatpush2.msra.mxu0 0.0
    %1361 = vmatprep.subr.mxu0 0.0
    %1362 = vmatpush2.msra.mxu0 0.0
    %1363 = vmatprep.subr.mxu0 0.0
    %1364 = vmatpush2.msra.mxu0 0.0
    %1365 = vmatprep.subr.mxu0 0.0
    %1366 = vmatpush2.msra.mxu0 0.0
    %1367 = vmatprep.subr.mxu0 0.0
    %1368 = vmatpush2.msra.mxu0 0.0
    %1369 = vmatprep.subr.mxu0 0.0
    %1370 = vmatpush2.msra.mxu0 0.0
    %1371 = vmatprep.subr.mxu0 0.0
    %1372 = vmatpush2.msra.mxu0 0.0
    %1373 = vmatprep.subr.mxu0 0.0
    %1374 = vmatpush2.msra.mxu0 0.0
    %1375 = vmatprep.subr.mxu0 0.0
    %1376 = vmatpush2.msra.mxu0 0.0
    %1377 = vmatprep.subr.mxu0 0.0
    %1378 = vmatpush2.msra.mxu0 0.0
    %1379 = vmatprep.subr.mxu0 0.0
    %1380 = vmatpush2.msra.mxu0 0.0
    %1381 = vmatprep.subr.mxu0 0.0
    %1382 = vmatpush2.msra.mxu0 0.0
    %1383 = vmatprep.subr.mxu0 0.0
    %1384 = vmatpush2.msra.mxu0 0.0
    %1385 = vmatprep.mubr.f32.mxu0 0.0
    %1386 = vmatmul.mubr.f32.gmra.mxu0 %v1319
    %v1387 = vpop.f32.mrf.mxu0
    %v1388 = vadd.f32 0.0, %v1387
    %v1389 = vpop.f32.mrf.mxu0
    %1390 = vdwg.mxu0
    %1391 = vrot.lane.b32.xlu0 %v209, 104
    %v1392 = vpop.permute.xlu0 %1391
    %1393 = vrot.lane.b32.xlu0 %v209, 72
    %v1394 = vpop.permute.xlu0 %1393
    %v1395 = vsel %vm216, %v1392, 0
    %v1397 = vsel %vm216, %v1394, 0
    %1399 = vmatprep.subr.mxu0 0.0
    %1400 = vmatpush1.xpose.msra.mxu0 0.0
    %1401 = vmatprep.subr.mxu0 0.0
    %1402 = vmatpush1.xpose.msra.mxu0 0.0
    %1403 = vmatprep.subr.mxu0 0.0
    %1404 = vmatpush1.xpose.msra.mxu0 0.0
    %1405 = vmatprep.subr.mxu0 0.0
    %1406 = vmatpush1.xpose.msra.mxu0 0.0
    %1407 = vmatprep.subr.mxu0 0.0
    %1408 = vmatpush1.xpose.msra.mxu0 0.0
    %1409 = vmatprep.subr.mxu0 0.0
    %1410 = vmatpush1.xpose.msra.mxu0 0.0
    %1411 = vmatprep.subr.mxu0 0.0
    %1412 = vmatpush1.xpose.msra.mxu0 0.0
    %1413 = vmatprep.subr.mxu0 0.0
    %1414 = vmatpush1.xpose.msra.mxu0 0.0
    %1415 = vmatprep.subr.mxu0 0.0
    %1416 = vmatpush1.xpose.msra.mxu0 0.0
    %1417 = vmatprep.subr.mxu0 0.0
    %1418 = vmatpush1.xpose.msra.mxu0 0.0
    %1419 = vmatprep.subr.mxu0 0.0
    %1420 = vmatpush1.xpose.msra.mxu0 0.0
    %1421 = vmatprep.subr.mxu0 0.0
    %1422 = vmatpush1.xpose.msra.mxu0 0.0
    %1423 = vmatprep.subr.mxu0 0.0
    %1424 = vmatpush1.xpose.msra.mxu0 0.0
    %1425 = vmatprep.subr.mxu0 0.0
    %1426 = vmatpush1.xpose.msra.mxu0 0.0
    %1427 = vmatprep.subr.mxu0 0.0
    %1428 = vmatpush1.xpose.msra.mxu0 0.0
    %1429 = vmatprep.subr.mxu0 0.0
    %1430 = vmatpush1.xpose.msra.mxu0 %v1397
    %1431 = vmatprep.subr.mxu0 0.0
    %1432 = vmatpush2.xpose.msra.mxu0 0.0
    %1433 = vmatprep.subr.mxu0 0.0
    %1434 = vmatpush2.xpose.msra.mxu0 0.0
    %1435 = vmatprep.subr.mxu0 0.0
    %1436 = vmatpush2.xpose.msra.mxu0 0.0
    %1437 = vmatprep.subr.mxu0 0.0
    %1438 = vmatpush2.xpose.msra.mxu0 0.0
    %1439 = vmatprep.subr.mxu0 0.0
    %1440 = vmatpush2.xpose.msra.mxu0 0.0
    %1441 = vmatprep.subr.mxu0 0.0
    %1442 = vmatpush2.xpose.msra.mxu0 0.0
    %1443 = vmatprep.subr.mxu0 0.0
    %1444 = vmatpush2.xpose.msra.mxu0 0.0
    %1445 = vmatprep.subr.mxu0 0.0
    %1446 = vmatpush2.xpose.msra.mxu0 0.0
    %1447 = vmatprep.subr.mxu0 0.0
    %1448 = vmatpush2.xpose.msra.mxu0 0.0
    %1449 = vmatprep.subr.mxu0 0.0
    %1450 = vmatpush2.xpose.msra.mxu0 0.0
    %1451 = vmatprep.subr.mxu0 0.0
    %1452 = vmatpush2.xpose.msra.mxu0 0.0
    %1453 = vmatprep.subr.mxu0 0.0
    %1454 = vmatpush2.xpose.msra.mxu0 0.0
    %1455 = vmatprep.subr.mxu0 0.0
    %1456 = vmatpush2.xpose.msra.mxu0 0.0
    %1457 = vmatprep.subr.mxu0 0.0
    %1458 = vmatpush2.xpose.msra.mxu0 0.0
    %1459 = vmatprep.subr.mxu0 0.0
    %1460 = vmatpush2.xpose.msra.mxu0 0.0
    %1461 = vmatprep.subr.mxu0 0.0
    %1462 = vmatpush2.xpose.msra.mxu0 0.0
    %1463 = vmatprep.mubr.f32.mxu0 0.0
    %1464 = vmatmul.mubr.f32.gmra.mxu0 %v1395
    %v1465 = vpop.f32.mrf.mxu0
    %v1466 = vadd.f32 0.0, %v1465
    %v1467 = vpop.f32.mrf.mxu0
    %1468 = vdwg.mxu0
    %v1469 = vmul.f32 %v1466, 0.35355338
    %v1470 = vsel %vm216, %v1469, -inf
    %1471 = vmax.xlane.f32.xlu0 %v1470
    %v1472 = vpop.xlane.xlu0 %1471
    %v1473 = vsub.f32 %v1469, %v1472
    %v1474 = vmul.f32 %v1473, 1.442695
    %v1475 = vpow.pop %v1474
    %v1476 = vsel %vm216, %v1475, 0.0
    %1477 = vadd.xlane.f32.xlu0 %v1476
    %v1478 = vpop.xlane.xlu0 %1477
    %v1479 = vrcp.pop %v1478
    %v1480 = vmul.f32 %v1475, %v1479
    %1481 = vrot.lane.b32.xlu0 %v209, 40
    %v1482 = vpop.permute.xlu0 %1481
    %v1485 = vsel %vm216, %v1480, 0
    %1487 = vmatprep.subr.mxu0 0.0
    %1488 = vmatpush1.msra.mxu0 0.0
    %1489 = vmatprep.subr.mxu0 0.0
    %1490 = vmatpush1.msra.mxu0 0.0
    %1491 = vmatprep.subr.mxu0 0.0
    %1492 = vmatpush1.msra.mxu0 0.0
    %1493 = vmatprep.subr.mxu0 0.0
    %1494 = vmatpush1.msra.mxu0 0.0
    %1495 = vmatprep.subr.mxu0 0.0
    %1496 = vmatpush1.msra.mxu0 0.0
    %1497 = vmatprep.subr.mxu0 0.0
    %1498 = vmatpush1.msra.mxu0 0.0
    %1499 = vmatprep.subr.mxu0 0.0
    %1500 = vmatpush1.msra.mxu0 0.0
    %1501 = vmatprep.subr.mxu0 0.0
    %1502 = vmatpush1.msra.mxu0 0.0
    %1503 = vmatprep.subr.mxu0 0.0
    %1504 = vmatpush1.msra.mxu0 0.0
    %1505 = vmatprep.subr.mxu0 0.0
    %1506 = vmatpush1.msra.mxu0 0.0
    %1507 = vmatprep.subr.mxu0 0.0
    %1508 = vmatpush1.msra.mxu0 0.0
    %1509 = vmatprep.subr.mxu0 0.0
    %1510 = vmatpush1.msra.mxu0 0.0
    %1511 = vmatprep.subr.mxu0 0.0
    %1512 = vmatpush1.msra.mxu0 0.0
    %1513 = vmatprep.subr.mxu0 0.0
    %1514 = vmatpush1.msra.mxu0 0.0
    %1515 = vmatprep.subr.mxu0 0.0
    %1516 = vmatpush1.msra.mxu0 0.0
    %1517 = vmatprep.subr.mxu0 0.0
    %1518 = vmatpush1.msra.mxu0 %v1482
    %1519 = vmatprep.subr.mxu0 0.0
    %1520 = vmatpush2.msra.mxu0 0.0
    %1521 = vmatprep.subr.mxu0 0.0
    %1522 = vmatpush2.msra.mxu0 0.0
    %1523 = vmatprep.subr.mxu0 0.0
    %1524 = vmatpush2.msra.mxu0 0.0
    %1525 = vmatprep.subr.mxu0 0.0
    %1526 = vmatpush2.msra.mxu0 0.0
    %1527 = vmatprep.subr.mxu0 0.0
    %1528 = vmatpush2.msra.mxu0 0.0
    %1529 = vmatprep.subr.mxu0 0.0
    %1530 = vmatpush2.msra.mxu0 0.0
    %1531 = vmatprep.subr.mxu0 0.0
    %1532 = vmatpush2.msra.mxu0 0.0
    %1533 = vmatprep.subr.mxu0 0.0
    %1534 = vmatpush2.msra.mxu0 0.0
    %1535 = vmatprep.subr.mxu0 0.0
    %1536 = vmatpush2.msra.mxu0 0.0
    %1537 = vmatprep.subr.mxu0 0.0
    %1538 = vmatpush2.msra.mxu0 0.0
    %1539 = vmatprep.subr.mxu0 0.0
    %1540 = vmatpush2.msra.mxu0 0.0
    %1541 = vmatprep.subr.mxu0 0.0
    %1542 = vmatpush2.msra.mxu0 0.0
    %1543 = vmatprep.subr.mxu0 0.0
    %1544 = vmatpush2.msra.mxu0 0.0
    %1545 = vmatprep.subr.mxu0 0.0
    %1546 = vmatpush2.msra.mxu0 0.0
    %1547 = vmatprep.subr.mxu0 0.0
    %1548 = vmatpush2.msra.mxu0 0.0
    %1549 = vmatprep.subr.mxu0 0.0
    %1550 = vmatpush2.msra.mxu0 0.0
    %1551 = vmatprep.mubr.f32.mxu0 0.0
    %1552 = vmatmul.mubr.f32.gmra.mxu0 %v1485
    %v1553 = vpop.f32.mrf.mxu0
    %v1554 = vadd.f32 0.0, %v1553
    %v1555 = vpop.f32.mrf.mxu0
    %1556 = vdwg.mxu0
    %1558 = vrot.lane.b32.xlu0 %v1222, 8
    %v1559 = vpop.permute.xlu0 %1558
    %1562 = vrot.lane.b32.xlu0 %v1388, 16
    %v1563 = vpop.permute.xlu0 %1562
    %1566 = vrot.lane.b32.xlu0 %v1554, 24
    %v1567 = vpop.permute.xlu0 %1566
    %v1569 = vsel %vm216, %v1056, %v1559
    %v1570 = vsel %vm890, %v1569, %v1563
    %v1571 = vsel %vm892, %v1570, %v1567
    %v1572 = vld [vmem:[#allocation4] sm:$0xff]
    %v1573 = vld [vmem:[#allocation4 + $0x8] sm:$0xff]
    %v1574 = vld [vmem:[#allocation4 + $0x10] sm:$0xff]
    %v1575 = vld [vmem:[#allocation4 + $0x18] sm:$0xff]
    %v1576 = vlaneseq
    %v1577 = vshrl.u32 %v1576, 7
    %v1578 = vsub.s32 0, %v1577
    %v1579 = vrot.slane %v212, %v1578
    %v1581 = vsel %vm130, %v893, 0
    %v1584 = vsel %vm130, %v1571, 0
    %1586 = vmatprep.subr.mxu0 0.0
    %1587 = vmatpush1.msra.mxu0 0.0
    %1588 = vmatprep.subr.mxu0 0.0
    %1589 = vmatpush1.msra.mxu0 0.0
    %1590 = vmatprep.subr.mxu0 0.0
    %1591 = vmatpush1.msra.mxu0 0.0
    %1592 = vmatprep.subr.mxu0 0.0
    %1593 = vmatpush1.msra.mxu0 0.0
    %1594 = vmatprep.subr.mxu0 0.0
    %1595 = vmatpush1.msra.mxu0 0.0
    %1596 = vmatprep.subr.mxu0 0.0
    %1597 = vmatpush1.msra.mxu0 0.0
    %1598 = vmatprep.subr.mxu0 0.0
    %1599 = vmatpush1.msra.mxu0 0.0
    %1600 = vmatprep.subr.mxu0 0.0
    %1601 = vmatpush1.msra.mxu0 0.0
    %1602 = vmatprep.subr.mxu0 0.0
    %1603 = vmatpush1.msra.mxu0 0.0
    %1604 = vmatprep.subr.mxu0 0.0
    %1605 = vmatpush1.msra.mxu0 0.0
    %1606 = vmatprep.subr.mxu0 0.0
    %1607 = vmatpush1.msra.mxu0 0.0
    %1608 = vmatprep.subr.mxu0 0.0
    %1609 = vmatpush1.msra.mxu0 0.0
    %1610 = vmatprep.subr.mxu0 0.0
    %1611 = vmatpush1.msra.mxu0 %v1575
    %1612 = vmatprep.subr.mxu0 0.0
    %1613 = vmatpush1.msra.mxu0 %v1574
    %1614 = vmatprep.subr.mxu0 0.0
    %1615 = vmatpush1.msra.mxu0 %v1573
    %1616 = vmatprep.subr.mxu0 0.0
    %1617 = vmatpush1.msra.mxu0 %v1572
    %1618 = vmatprep.subr.mxu0 0.0
    %1619 = vmatpush2.msra.mxu0 0.0
    %1620 = vmatprep.subr.mxu0 0.0
    %1621 = vmatpush2.msra.mxu0 0.0
    %1622 = vmatprep.subr.mxu0 0.0
    %1623 = vmatpush2.msra.mxu0 0.0
    %1624 = vmatprep.subr.mxu0 0.0
    %1625 = vmatpush2.msra.mxu0 0.0
    %1626 = vmatprep.subr.mxu0 0.0
    %1627 = vmatpush2.msra.mxu0 0.0
    %1628 = vmatprep.subr.mxu0 0.0
    %1629 = vmatpush2.msra.mxu0 0.0
    %1630 = vmatprep.subr.mxu0 0.0
    %1631 = vmatpush2.msra.mxu0 0.0
    %1632 = vmatprep.subr.mxu0 0.0
    %1633 = vmatpush2.msra.mxu0 0.0
    %1634 = vmatprep.subr.mxu0 0.0
    %1635 = vmatpush2.msra.mxu0 0.0
    %1636 = vmatprep.subr.mxu0 0.0
    %1637 = vmatpush2.msra.mxu0 0.0
    %1638 = vmatprep.subr.mxu0 0.0
    %1639 = vmatpush2.msra.mxu0 0.0
    %1640 = vmatprep.subr.mxu0 0.0
    %1641 = vmatpush2.msra.mxu0 0.0
    %1642 = vmatprep.subr.mxu0 0.0
    %1643 = vmatpush2.msra.mxu0 0.0
    %1644 = vmatprep.subr.mxu0 0.0
    %1645 = vmatpush2.msra.mxu0 0.0
    %1646 = vmatprep.subr.mxu0 0.0
    %1647 = vmatpush2.msra.mxu0 0.0
    %1648 = vmatprep.subr.mxu0 0.0
    %1649 = vmatpush2.msra.mxu0 0.0
    %1650 = vmatprep.mubr.f32.mxu0 0.0
    %1651 = vmatmul.mubr.f32.gmra.mxu0 %v1581
    %v1652 = vpop.f32.mrf.mxu0
    %v1653 = vadd.f32 %v1579, %v1652
    %v1654 = vpop.f32.mrf.mxu0
    %1655 = vmatprep.mubr.f32.mxu0 0.0
    %1656 = vmatmul.mubr.f32.gmra.mxu0 %v1584
    %v1657 = vpop.f32.mrf.mxu0
    %v1658 = vadd.f32 %v1579, %v1657
    %v1659 = vpop.f32.mrf.mxu0
    %1660 = vdwg.mxu0
    %v1661 = vadd.f32 %v117, %v1653
    %v1662 = vadd.f32 %v118, %v1658
    %v1663 = vsel %vm130, %v1661, 0.0
    %1664 = vadd.xlane.f32.xlu0 %v1663
    %v1665 = vpop.xlane.xlu0 %1664
    %v1666 = vsel %vm130, %v1662, 0.0
    %1667 = vadd.xlane.f32.xlu0 %v1666
    %v1668 = vpop.xlane.xlu0 %1667
    %v1669 = vrcp.pop 32.0
    %v1670 = vmul.f32 %v1665, %v1669
    %v1671 = vmul.f32 %v1668, %v1669
    %v1672 = vsub.f32 %v1661, %v1670
    %v1673 = vsub.f32 %v1662, %v1671
    %v1674 = vmul.f32 %v1672, %v1672
    %v1675 = vmul.f32 %v1673, %v1673
    %v1676 = vsel %vm130, %v1674, 0.0
    %1677 = vadd.xlane.f32.xlu0 %v1676
    %v1678 = vpop.xlane.xlu0 %1677
    %v1679 = vsel %vm130, %v1675, 0.0
    %1680 = vadd.xlane.f32.xlu0 %v1679
    %v1681 = vpop.xlane.xlu0 %1680
    %v1682 = vmul.f32 %v1678, %v1669
    %v1683 = vmul.f32 %v1681, %v1669
    %v1684 = vadd.f32 %v1682, 1e-05
    %v1685 = vadd.f32 %v1683, 1e-05
    %v1686 = vrsqrt.pop %v1684
    %v1687 = vrsqrt.pop %v1685
    %v1688 = vmul.f32 %v1672, %v1686
    %v1689 = vmul.f32 %v1673, %v1687
    %v1690 = vlaneseq
    %v1691 = vshrl.u32 %v1690, 7
    %v1692 = vsub.s32 1, %v1691
    %v1693 = vrot.slane %v212, %v1692
    %v1694 = vmul.f32 %v1688, %v1693
    %v1695 = vmul.f32 %v1689, %v1693
    %v1696 = vlaneseq
    %v1697 = vshrl.u32 %v1696, 7
    %v1698 = vsub.s32 2, %v1697
    %v1699 = vrot.slane %v212, %v1698
    %v1700 = vadd.f32 %v1694, %v1699
    %v1701 = vadd.f32 %v1695, %v1699
    %v1702 = vld [vmem:[#allocation7] sm:$0xff]
    %v1703 = vld [vmem:[#allocation7 + $0x8] sm:$0xff]
    %v1704 = vld [vmem:[#allocation7 + $0x10] sm:$0xff]
    %v1705 = vld [vmem:[#allocation7 + $0x18] sm:$0xff]
    %v1706 = vld [vmem:[#allocation7 + $0x20] sm:$0xff]
    %v1707 = vld [vmem:[#allocation7 + $0x28] sm:$0xff]
    %v1708 = vld [vmem:[#allocation7 + $0x30] sm:$0xff]
    %v1709 = vld [vmem:[#allocation7 + $0x38] sm:$0xff]
    %v1710 = vld [vmem:[#allocation7 + $0x40] sm:$0xff]
    %v1711 = vld [vmem:[#allocation7 + $0x48] sm:$0xff]
    %v1712 = vld [vmem:[#allocation7 + $0x50] sm:$0xff]
    %v1713 = vld [vmem:[#allocation7 + $0x58] sm:$0xff]
    %v1714 = vld [vmem:[#allocation7 + $0x60] sm:$0xff]
    %v1715 = vld [vmem:[#allocation7 + $0x68] sm:$0xff]
    %v1716 = vld [vmem:[#allocation7 + $0x70] sm:$0xff]
    %v1717 = vld [vmem:[#allocation7 + $0x78] sm:$0xff]
    %v1718 = vld [vmem:[#allocation7 + $0x80] sm:$0xff]
    %v1719 = vld [vmem:[#allocation7 + $0x88] sm:$0xff]
    %v1720 = vld [vmem:[#allocation7 + $0x90] sm:$0xff]
    %v1721 = vld [vmem:[#allocation7 + $0x98] sm:$0xff]
    %v1722 = vld [vmem:[#allocation7 + $0xa0] sm:$0xff]
    %v1723 = vld [vmem:[#allocation7 + $0xa8] sm:$0xff]
    %v1724 = vld [vmem:[#allocation7 + $0xb0] sm:$0xff]
    %v1725 = vld [vmem:[#allocation7 + $0xb8] sm:$0xff]
    %v1726 = vld [vmem:[#allocation7 + $0xc0] sm:$0xff]
    %v1727 = vld [vmem:[#allocation7 + $0xc8] sm:$0xff]
    %v1728 = vld [vmem:[#allocation7 + $0xd0] sm:$0xff]
    %v1729 = vld [vmem:[#allocation7 + $0xd8] sm:$0xff]
    %v1730 = vld [vmem:[#allocation7 + $0xe0] sm:$0xff]
    %v1731 = vld [vmem:[#allocation7 + $0xe8] sm:$0xff]
    %v1732 = vld [vmem:[#allocation7 + $0xf0] sm:$0xff]
    %v1733 = vld [vmem:[#allocation7 + $0xf8] sm:$0xff]
    %v1734 = vld [vmem:[#allocation7 + $0x100] sm:$0xff]
    %v1735 = vld [vmem:[#allocation7 + $0x108] sm:$0xff]
    %v1736 = vld [vmem:[#allocation7 + $0x110] sm:$0xff]
    %v1737 = vld [vmem:[#allocation7 + $0x118] sm:$0xff]
    %v1738 = vld [vmem:[#allocation7 + $0x120] sm:$0xff]
    %v1739 = vld [vmem:[#allocation7 + $0x128] sm:$0xff]
    %v1740 = vld [vmem:[#allocation7 + $0x130] sm:$0xff]
    %v1741 = vld [vmem:[#allocation7 + $0x138] sm:$0xff]
    %v1742 = vld [vmem:[#allocation7 + $0x140] sm:$0xff]
    %v1743 = vld [vmem:[#allocation7 + $0x148] sm:$0xff]
    %v1744 = vld [vmem:[#allocation7 + $0x150] sm:$0xff]
    %v1745 = vld [vmem:[#allocation7 + $0x158] sm:$0xff]
    %v1746 = vld [vmem:[#allocation7 + $0x160] sm:$0xff]
    %v1747 = vld [vmem:[#allocation7 + $0x168] sm:$0xff]
    %v1748 = vld [vmem:[#allocation7 + $0x170] sm:$0xff]
    %v1749 = vld [vmem:[#allocation7 + $0x178] sm:$0xff]
    %v1750 = vld [vmem:[#allocation7 + $0x180] sm:$0xff]
    %v1751 = vld [vmem:[#allocation7 + $0x188] sm:$0xff]
    %v1752 = vld [vmem:[#allocation7 + $0x190] sm:$0xff]
    %v1753 = vld [vmem:[#allocation7 + $0x198] sm:$0xff]
    %v1754 = vld [vmem:[#allocation7 + $0x1a0] sm:$0xff]
    %v1755 = vld [vmem:[#allocation7 + $0x1a8] sm:$0xff]
    %v1756 = vld [vmem:[#allocation7 + $0x1b0] sm:$0xff]
    %v1757 = vld [vmem:[#allocation7 + $0x1b8] sm:$0xff]
    %v1758 = vld [vmem:[#allocation7 + $0x1c0] sm:$0xff]
    %v1759 = vld [vmem:[#allocation7 + $0x1c8] sm:$0xff]
    %v1760 = vld [vmem:[#allocation7 + $0x1d0] sm:$0xff]
    %v1761 = vld [vmem:[#allocation7 + $0x1d8] sm:$0xff]
    %v1762 = vld [vmem:[#allocation7 + $0x1e0] sm:$0xff]
    %v1763 = vld [vmem:[#allocation7 + $0x1e8] sm:$0xff]
    %v1764 = vld [vmem:[#allocation7 + $0x1f0] sm:$0xff]
    %v1765 = vld [vmem:[#allocation7 + $0x1f8] sm:$0xff]
    %v1766 = vld [vmem:[%s6] sm:$0xff]
    %v1767 = vld [vmem:[%s6 + $0x8] sm:$0xff]
    %v1770 = vlaneseq
    %v1771 = vshrl.u32 %v1770, 7
    %v1772 = vsub.s32 0, %v1771
    %v1773 = vrot.slane %v1766, %v1772
    %v1774 = vlaneseq
    %v1775 = vshrl.u32 %v1774, 7
    %v1776 = vsub.s32 1, %v1775
    %v1777 = vrot.slane %v1766, %v1776
    %v1778 = vlaneseq
    %v1779 = vshrl.u32 %v1778, 7
    %v1780 = vsub.s32 2, %v1779
    %v1781 = vrot.slane %v1766, %v1780
    %v1782 = vlaneseq
    %v1783 = vshrl.u32 %v1782, 7
    %v1784 = vsub.s32 3, %v1783
    %v1785 = vrot.slane %v1766, %v1784
    %v1786 = vlaneseq
    %v1787 = vshrl.u32 %v1786, 7
    %v1788 = vsub.s32 4, %v1787
    %v1789 = vrot.slane %v1766, %v1788
    %v1790 = vlaneseq
    %v1791 = vshrl.u32 %v1790, 7
    %v1792 = vsub.s32 5, %v1791
    %v1793 = vrot.slane %v1766, %v1792
    %v1794 = vlaneseq
    %v1795 = vshrl.u32 %v1794, 7
    %v1796 = vsub.s32 6, %v1795
    %v1797 = vrot.slane %v1766, %v1796
    %v1798 = vlaneseq
    %v1799 = vshrl.u32 %v1798, 7
    %v1800 = vsub.s32 7, %v1799
    %v1801 = vrot.slane %v1766, %v1800
    %v1802 = vlaneseq
    %v1803 = vshrl.u32 %v1802, 7
    %v1804 = vsub.s32 0, %v1803
    %v1805 = vrot.slane %v1767, %v1804
    %v1806 = vlaneseq
    %v1807 = vshrl.u32 %v1806, 7
    %v1808 = vsub.s32 1, %v1807
    %v1809 = vrot.slane %v1767, %v1808
    %v1810 = vlaneseq
    %v1811 = vshrl.u32 %v1810, 7
    %v1812 = vsub.s32 2, %v1811
    %v1813 = vrot.slane %v1767, %v1812
    %v1814 = vlaneseq
    %v1815 = vshrl.u32 %v1814, 7
    %v1816 = vsub.s32 3, %v1815
    %v1817 = vrot.slane %v1767, %v1816
    %v1818 = vlaneseq
    %v1819 = vshrl.u32 %v1818, 7
    %v1820 = vsub.s32 4, %v1819
    %v1821 = vrot.slane %v1767, %v1820
    %v1822 = vlaneseq
    %v1823 = vshrl.u32 %v1822, 7
    %v1824 = vsub.s32 5, %v1823
    %v1825 = vrot.slane %v1767, %v1824
    %v1826 = vlaneseq
    %v1827 = vshrl.u32 %v1826, 7
    %v1828 = vsub.s32 6, %v1827
    %v1829 = vrot.slane %v1767, %v1828
    %v1830 = vlaneseq
    %v1831 = vshrl.u32 %v1830, 7
    %v1832 = vsub.s32 7, %v1831
    %v1833 = vrot.slane %v1767, %v1832
    %v1851 = vsel %vm130, %v1700, 0
    %v1854 = vsel %vm130, %v1701, 0
    %1856 = vmatprep.subr.mxu0 0.0
    %1857 = vmatpush1.msra.mxu0 0.0
    %1858 = vmatprep.subr.mxu0 0.0
    %1859 = vmatpush1.msra.mxu0 0.0
    %1860 = vmatprep.subr.mxu0 0.0
    %1861 = vmatpush1.msra.mxu0 0.0
    %1862 = vmatprep.subr.mxu0 0.0
    %1863 = vmatpush1.msra.mxu0 0.0
    %1864 = vmatprep.subr.mxu0 0.0
    %1865 = vmatpush1.msra.mxu0 0.0
    %1866 = vmatprep.subr.mxu0 0.0
    %1867 = vmatpush1.msra.mxu0 0.0
    %1868 = vmatprep.subr.mxu0 0.0
    %1869 = vmatpush1.msra.mxu0 0.0
    %1870 = vmatprep.subr.mxu0 0.0
    %1871 = vmatpush1.msra.mxu0 0.0
    %1872 = vmatprep.subr.mxu0 0.0
    %1873 = vmatpush1.msra.mxu0 0.0
    %1874 = vmatprep.subr.mxu0 0.0
    %1875 = vmatpush1.msra.mxu0 0.0
    %1876 = vmatprep.subr.mxu0 0.0
    %1877 = vmatpush1.msra.mxu0 0.0
    %1878 = vmatprep.subr.mxu0 0.0
    %1879 = vmatpush1.msra.mxu0 0.0
    %1880 = vmatprep.subr.mxu0 %v1751
    %1881 = vmatpush1.msra.mxu0 %v1750
    %1882 = vmatprep.subr.mxu0 %v1735
    %1883 = vmatpush1.msra.mxu0 %v1734
    %1884 = vmatprep.subr.mxu0 %v1719
    %1885 = vmatpush1.msra.mxu0 %v1718
    %1886 = vmatprep.subr.mxu0 %v1703
    %1887 = vmatpush1.msra.mxu0 %v1702
    %1888 = vmatprep.subr.mxu0 0.0
    %1889 = vmatpush2.msra.mxu0 0.0
    %1890 = vmatprep.subr.mxu0 0.0
    %1891 = vmatpush2.msra.mxu0 0.0
    %1892 = vmatprep.subr.mxu0 0.0
    %1893 = vmatpush2.msra.mxu0 0.0
    %1894 = vmatprep.subr.mxu0 0.0
    %1895 = vmatpush2.msra.mxu0 0.0
    %1896 = vmatprep.subr.mxu0 0.0
    %1897 = vmatpush2.msra.mxu0 0.0
    %1898 = vmatprep.subr.mxu0 0.0
    %1899 = vmatpush2.msra.mxu0 0.0
    %1900 = vmatprep.subr.mxu0 0.0
    %1901 = vmatpush2.msra.mxu0 0.0
    %1902 = vmatprep.subr.mxu0 0.0
    %1903 = vmatpush2.msra.mxu0 0.0
    %1904 = vmatprep.subr.mxu0 0.0
    %1905 = vmatpush2.msra.mxu0 0.0
    %1906 = vmatprep.subr.mxu0 0.0
    %1907 = vmatpush2.msra.mxu0 0.0
    %1908 = vmatprep.subr.mxu0 0.0
    %1909 = vmatpush2.msra.mxu0 0.0
    %1910 = vmatprep.subr.mxu0 0.0
    %1911 = vmatpush2.msra.mxu0 0.0
    %1912 = vmatprep.subr.mxu0 0.0
    %1913 = vmatpush2.msra.mxu0 0.0
    %1914 = vmatprep.subr.mxu0 0.0
    %1915 = vmatpush2.msra.mxu0 0.0
    %1916 = vmatprep.subr.mxu0 0.0
    %1917 = vmatpush2.msra.mxu0 0.0
    %1918 = vmatprep.subr.mxu0 0.0
    %1919 = vmatpush2.msra.mxu0 0.0
    %1920 = vmatprep.mubr.f32.mxu0 0.0
    %1921 = vmatmul.mubr.f32.gmra.mxu0 %v1851
    %v1922 = vpop.f32.mrf.mxu0
    %v1923 = vadd.f32 %v1773, %v1922
    %v1924 = vpop.f32.mrf.mxu0
    %v1925 = vadd.f32 %v1777, %v1924
    %1926 = vmatprep.mubr.f32.mxu0 0.0
    %1927 = vmatmul.mubr.f32.gmra.mxu0 %v1854
    %v1928 = vpop.f32.mrf.mxu0
    %v1929 = vadd.f32 %v1773, %v1928
    %v1930 = vpop.f32.mrf.mxu0
    %v1931 = vadd.f32 %v1777, %v1930
    %1932 = vdwg.mxu0
    %1933 = vmatprep.subr.mxu0 0.0
    %1934 = vmatpush1.msra.mxu0 0.0
    %1935 = vmatprep.subr.mxu0 0.0
    %1936 = vmatpush1.msra.mxu0 0.0
    %1937 = vmatprep.subr.mxu0 0.0
    %1938 = vmatpush1.msra.mxu0 0.0
    %1939 = vmatprep.subr.mxu0 0.0
    %1940 = vmatpush1.msra.mxu0 0.0
    %1941 = vmatprep.subr.mxu0 0.0
    %1942 = vmatpush1.msra.mxu0 0.0
    %1943 = vmatprep.subr.mxu0 0.0
    %1944 = vmatpush1.msra.mxu0 0.0
    %1945 = vmatprep.subr.mxu0 0.0
    %1946 = vmatpush1.msra.mxu0 0.0
    %1947 = vmatprep.subr.mxu0 0.0
    %1948 = vmatpush1.msra.mxu0 0.0
    %1949 = vmatprep.subr.mxu0 0.0
    %1950 = vmatpush1.msra.mxu0 0.0
    %1951 = vmatprep.subr.mxu0 0.0
    %1952 = vmatpush1.msra.mxu0 0.0
    %1953 = vmatprep.subr.mxu0 0.0
    %1954 = vmatpush1.msra.mxu0 0.0
    %1955 = vmatprep.subr.mxu0 0.0
    %1956 = vmatpush1.msra.mxu0 0.0
    %1957 = vmatprep.subr.mxu0 %v1753
    %1958 = vmatpush1.msra.mxu0 %v1752
    %1959 = vmatprep.subr.mxu0 %v1737
    %1960 = vmatpush1.msra.mxu0 %v1736
    %1961 = vmatprep.subr.mxu0 %v1721
    %1962 = vmatpush1.msra.mxu0 %v1720
    %1963 = vmatprep.subr.mxu0 %v1705
    %1964 = vmatpush1.msra.mxu0 %v1704
    %1965 = vmatprep.subr.mxu0 0.0
    %1966 = vmatpush2.msra.mxu0 0.0
    %1967 = vmatprep.subr.mxu0 0.0
    %1968 = vmatpush2.msra.mxu0 0.0
    %1969 = vmatprep.subr.mxu0 0.0
    %1970 = vmatpush2.msra.mxu0 0.0
    %1971 = vmatprep.subr.mxu0 0.0
    %1972 = vmatpush2.msra.mxu0 0.0
    %1973 = vmatprep.subr.mxu0 0.0
    %1974 = vmatpush2.msra.mxu0 0.0
    %1975 = vmatprep.subr.mxu0 0.0
    %1976 = vmatpush2.msra.mxu0 0.0
    %1977 = vmatprep.subr.mxu0 0.0
    %1978 = vmatpush2.msra.mxu0 0.0
    %1979 = vmatprep.subr.mxu0 0.0
    %1980 = vmatpush2.msra.mxu0 0.0
    %1981 = vmatprep.subr.mxu0 0.0
    %1982 = vmatpush2.msra.mxu0 0.0
    %1983 = vmatprep.subr.mxu0 0.0
    %1984 = vmatpush2.msra.mxu0 0.0
    %1985 = vmatprep.subr.mxu0 0.0
    %1986 = vmatpush2.msra.mxu0 0.0
    %1987 = vmatprep.subr.mxu0 0.0
    %1988 = vmatpush2.msra.mxu0 0.0
    %1989 = vmatprep.subr.mxu0 0.0
    %1990 = vmatpush2.msra.mxu0 0.0
    %1991 = vmatprep.subr.mxu0 0.0
    %1992 = vmatpush2.msra.mxu0 0.0
    %1993 = vmatprep.subr.mxu0 0.0
    %1994 = vmatpush2.msra.mxu0 0.0
    %1995 = vmatprep.subr.mxu0 0.0
    %1996 = vmatpush2.msra.mxu0 0.0
    %1997 = vmatprep.mubr.f32.mxu0 0.0
    %1998 = vmatmul.mubr.f32.gmra.mxu0 %v1851
    %v1999 = vpop.f32.mrf.mxu0
    %v2000 = vadd.f32 %v1781, %v1999
    %v2001 = vpop.f32.mrf.mxu0
    %v2002 = vadd.f32 %v1785, %v2001
    %2003 = vmatprep.mubr.f32.mxu0 0.0
    %2004 = vmatmul.mubr.f32.gmra.mxu0 %v1854
    %v2005 = vpop.f32.mrf.mxu0
    %v2006 = vadd.f32 %v1781, %v2005
    %v2007 = vpop.f32.mrf.mxu0
    %v2008 = vadd.f32 %v1785, %v2007
    %2009 = vdwg.mxu0
    %2010 = vmatprep.subr.mxu0 0.0
    %2011 = vmatpush1.msra.mxu0 0.0
    %2012 = vmatprep.subr.mxu0 0.0
    %2013 = vmatpush1.msra.mxu0 0.0
    %2014 = vmatprep.subr.mxu0 0.0
    %2015 = vmatpush1.msra.mxu0 0.0
    %2016 = vmatprep.subr.mxu0 0.0
    %2017 = vmatpush1.msra.mxu0 0.0
    %2018 = vmatprep.subr.mxu0 0.0
    %2019 = vmatpush1.msra.mxu0 0.0
    %2020 = vmatprep.subr.mxu0 0.0
    %2021 = vmatpush1.msra.mxu0 0.0
    %2022 = vmatprep.subr.mxu0 0.0
    %2023 = vmatpush1.msra.mxu0 0.0
    %2024 = vmatprep.subr.mxu0 0.0
    %2025 = vmatpush1.msra.mxu0 0.0
    %2026 = vmatprep.subr.mxu0 0.0
    %2027 = vmatpush1.msra.mxu0 0.0
    %2028 = vmatprep.subr.mxu0 0.0
    %2029 = vmatpush1.msra.mxu0 0.0
    %2030 = vmatprep.subr.mxu0 0.0
    %2031 = vmatpush1.msra.mxu0 0.0
    %2032 = vmatprep.subr.mxu0 0.0
    %2033 = vmatpush1.msra.mxu0 0.0
    %2034 = vmatprep.subr.mxu0 %v1755
    %2035 = vmatpush1.msra.mxu0 %v1754
    %2036 = vmatprep.subr.mxu0 %v1739
    %2037 = vmatpush1.msra.mxu0 %v1738
    %2038 = vmatprep.subr.mxu0 %v1723
    %2039 = vmatpush1.msra.mxu0 %v1722
    %2040 = vmatprep.subr.mxu0 %v1707
    %2041 = vmatpush1.msra.mxu0 %v1706
    %2042 = vmatprep.subr.mxu0 0.0
    %2043 = vmatpush2.msra.mxu0 0.0
    %2044 = vmatprep.subr.mxu0 0.0
    %2045 = vmatpush2.msra.mxu0 0.0
    %2046 = vmatprep.subr.mxu0 0.0
    %2047 = vmatpush2.msra.mxu0 0.0
    %2048 = vmatprep.subr.mxu0 0.0
    %2049 = vmatpush2.msra.mxu0 0.0
    %2050 = vmatprep.subr.mxu0 0.0
    %2051 = vmatpush2.msra.mxu0 0.0
    %2052 = vmatprep.subr.mxu0 0.0
    %2053 = vmatpush2.msra.mxu0 0.0
    %2054 = vmatprep.subr.mxu0 0.0
    %2055 = vmatpush2.msra.mxu0 0.0
    %2056 = vmatprep.subr.mxu0 0.0
    %2057 = vmatpush2.msra.mxu0 0.0
    %2058 = vmatprep.subr.mxu0 0.0
    %2059 = vmatpush2.msra.mxu0 0.0
    %2060 = vmatprep.subr.mxu0 0.0
    %2061 = vmatpush2.msra.mxu0 0.0
    %2062 = vmatprep.subr.mxu0 0.0
    %2063 = vmatpush2.msra.mxu0 0.0
    %2064 = vmatprep.subr.mxu0 0.0
    %2065 = vmatpush2.msra.mxu0 0.0
    %2066 = vmatprep.subr.mxu0 0.0
    %2067 = vmatpush2.msra.mxu0 0.0
    %2068 = vmatprep.subr.mxu0 0.0
    %2069 = vmatpush2.msra.mxu0 0.0
    %2070 = vmatprep.subr.mxu0 0.0
    %2071 = vmatpush2.msra.mxu0 0.0
    %2072 = vmatprep.subr.mxu0 0.0
    %2073 = vmatpush2.msra.mxu0 0.0
    %2074 = vmatprep.mubr.f32.mxu0 0.0
    %2075 = vmatmul.mubr.f32.gmra.mxu0 %v1851
    %v2076 = vpop.f32.mrf.mxu0
    %v2077 = vadd.f32 %v1789, %v2076
    %v2078 = vpop.f32.mrf.mxu0
    %v2079 = vadd.f32 %v1793, %v2078
    %2080 = vmatprep.mubr.f32.mxu0 0.0
    %2081 = vmatmul.mubr.f32.gmra.mxu0 %v1854
    %v2082 = vpop.f32.mrf.mxu0
    %v2083 = vadd.f32 %v1789, %v2082
    %v2084 = vpop.f32.mrf.mxu0
    %v2085 = vadd.f32 %v1793, %v2084
    %2086 = vdwg.mxu0
    %2087 = vmatprep.subr.mxu0 0.0
    %2088 = vmatpush1.msra.mxu0 0.0
    %2089 = vmatprep.subr.mxu0 0.0
    %2090 = vmatpush1.msra.mxu0 0.0
    %2091 = vmatprep.subr.mxu0 0.0
    %2092 = vmatpush1.msra.mxu0 0.0
    %2093 = vmatprep.subr.mxu0 0.0
    %2094 = vmatpush1.msra.mxu0 0.0
    %2095 = vmatprep.subr.mxu0 0.0
    %2096 = vmatpush1.msra.mxu0 0.0
    %2097 = vmatprep.subr.mxu0 0.0
    %2098 = vmatpush1.msra.mxu0 0.0
    %2099 = vmatprep.subr.mxu0 0.0
    %2100 = vmatpush1.msra.mxu0 0.0
    %2101 = vmatprep.subr.mxu0 0.0
    %2102 = vmatpush1.msra.mxu0 0.0
    %2103 = vmatprep.subr.mxu0 0.0
    %2104 = vmatpush1.msra.mxu0 0.0
    %2105 = vmatprep.subr.mxu0 0.0
    %2106 = vmatpush1.msra.mxu0 0.0
    %2107 = vmatprep.subr.mxu0 0.0
    %2108 = vmatpush1.msra.mxu0 0.0
    %2109 = vmatprep.subr.mxu0 0.0
    %2110 = vmatpush1.msra.mxu0 0.0
    %2111 = vmatprep.subr.mxu0 %v1757
    %2112 = vmatpush1.msra.mxu0 %v1756
    %2113 = vmatprep.subr.mxu0 %v1741
    %2114 = vmatpush1.msra.mxu0 %v1740
    %2115 = vmatprep.subr.mxu0 %v1725
    %2116 = vmatpush1.msra.mxu0 %v1724
    %2117 = vmatprep.subr.mxu0 %v1709
    %2118 = vmatpush1.msra.mxu0 %v1708
    %2119 = vmatprep.subr.mxu0 0.0
    %2120 = vmatpush2.msra.mxu0 0.0
    %2121 = vmatprep.subr.mxu0 0.0
    %2122 = vmatpush2.msra.mxu0 0.0
    %2123 = vmatprep.subr.mxu0 0.0
    %2124 = vmatpush2.msra.mxu0 0.0
    %2125 = vmatprep.subr.mxu0 0.0
    %2126 = vmatpush2.msra.mxu0 0.0
    %2127 = vmatprep.subr.mxu0 0.0
    %2128 = vmatpush2.msra.mxu0 0.0
    %2129 = vmatprep.subr.mxu0 0.0
    %2130 = vmatpush2.msra.mxu0 0.0
    %2131 = vmatprep.subr.mxu0 0.0
    %2132 = vmatpush2.msra.mxu0 0.0
    %2133 = vmatprep.subr.mxu0 0.0
    %2134 = vmatpush2.msra.mxu0 0.0
    %2135 = vmatprep.subr.mxu0 0.0
    %2136 = vmatpush2.msra.mxu0 0.0
    %2137 = vmatprep.subr.mxu0 0.0
    %2138 = vmatpush2.msra.mxu0 0.0
    %2139 = vmatprep.subr.mxu0 0.0
    %2140 = vmatpush2.msra.mxu0 0.0
    %2141 = vmatprep.subr.mxu0 0.0
    %2142 = vmatpush2.msra.mxu0 0.0
    %2143 = vmatprep.subr.mxu0 0.0
    %2144 = vmatpush2.msra.mxu0 0.0
    %2145 = vmatprep.subr.mxu0 0.0
    %2146 = vmatpush2.msra.mxu0 0.0
    %2147 = vmatprep.subr.mxu0 0.0
    %2148 = vmatpush2.msra.mxu0 0.0
    %2149 = vmatprep.subr.mxu0 0.0
    %2150 = vmatpush2.msra.mxu0 0.0
    %2151 = vmatprep.mubr.f32.mxu0 0.0
    %2152 = vmatmul.mubr.f32.gmra.mxu0 %v1851
    %v2153 = vpop.f32.mrf.mxu0
    %v2154 = vadd.f32 %v1797, %v2153
    %v2155 = vpop.f32.mrf.mxu0
    %v2156 = vadd.f32 %v1801, %v2155
    %2157 = vmatprep.mubr.f32.mxu0 0.0
    %2158 = vmatmul.mubr.f32.gmra.mxu0 %v1854
    %v2159 = vpop.f32.mrf.mxu0
    %v2160 = vadd.f32 %v1797, %v2159
    %v2161 = vpop.f32.mrf.mxu0
    %v2162 = vadd.f32 %v1801, %v2161
    %2163 = vdwg.mxu0
    %2164 = vmatprep.subr.mxu0 0.0
    %2165 = vmatpush1.msra.mxu0 0.0
    %2166 = vmatprep.subr.mxu0 0.0
    %2167 = vmatpush1.msra.mxu0 0.0
    %2168 = vmatprep.subr.mxu0 0.0
    %2169 = vmatpush1.msra.mxu0 0.0
    %2170 = vmatprep.subr.mxu0 0.0
    %2171 = vmatpush1.msra.mxu0 0.0
    %2172 = vmatprep.subr.mxu0 0.0
    %2173 = vmatpush1.msra.mxu0 0.0
    %2174 = vmatprep.subr.mxu0 0.0
    %2175 = vmatpush1.msra.mxu0 0.0
    %2176 = vmatprep.subr.mxu0 0.0
    %2177 = vmatpush1.msra.mxu0 0.0
    %2178 = vmatprep.subr.mxu0 0.0
    %2179 = vmatpush1.msra.mxu0 0.0
    %2180 = vmatprep.subr.mxu0 0.0
    %2181 = vmatpush1.msra.mxu0 0.0
    %2182 = vmatprep.subr.mxu0 0.0
    %2183 = vmatpush1.msra.mxu0 0.0
    %2184 = vmatprep.subr.mxu0 0.0
    %2185 = vmatpush1.msra.mxu0 0.0
    %2186 = vmatprep.subr.mxu0 0.0
    %2187 = vmatpush1.msra.mxu0 0.0
    %2188 = vmatprep.subr.mxu0 %v1759
    %2189 = vmatpush1.msra.mxu0 %v1758
    %2190 = vmatprep.subr.mxu0 %v1743
    %2191 = vmatpush1.msra.mxu0 %v1742
    %2192 = vmatprep.subr.mxu0 %v1727
    %2193 = vmatpush1.msra.mxu0 %v1726
    %2194 = vmatprep.subr.mxu0 %v1711
    %2195 = vmatpush1.msra.mxu0 %v1710
    %2196 = vmatprep.subr.mxu0 0.0
    %2197 = vmatpush2.msra.mxu0 0.0
    %2198 = vmatprep.subr.mxu0 0.0
    %2199 = vmatpush2.msra.mxu0 0.0
    %2200 = vmatprep.subr.mxu0 0.0
    %2201 = vmatpush2.msra.mxu0 0.0
    %2202 = vmatprep.subr.mxu0 0.0
    %2203 = vmatpush2.msra.mxu0 0.0
    %2204 = vmatprep.subr.mxu0 0.0
    %2205 = vmatpush2.msra.mxu0 0.0
    %2206 = vmatprep.subr.mxu0 0.0
    %2207 = vmatpush2.msra.mxu0 0.0
    %2208 = vmatprep.subr.mxu0 0.0
    %2209 = vmatpush2.msra.mxu0 0.0
    %2210 = vmatprep.subr.mxu0 0.0
    %2211 = vmatpush2.msra.mxu0 0.0
    %2212 = vmatprep.subr.mxu0 0.0
    %2213 = vmatpush2.msra.mxu0 0.0
    %2214 = vmatprep.subr.mxu0 0.0
    %2215 = vmatpush2.msra.mxu0 0.0
    %2216 = vmatprep.subr.mxu0 0.0
    %2217 = vmatpush2.msra.mxu0 0.0
    %2218 = vmatprep.subr.mxu0 0.0
    %2219 = vmatpush2.msra.mxu0 0.0
    %2220 = vmatprep.subr.mxu0 0.0
    %2221 = vmatpush2.msra.mxu0 0.0
    %2222 = vmatprep.subr.mxu0 0.0
    %2223 = vmatpush2.msra.mxu0 0.0
    %2224 = vmatprep.subr.mxu0 0.0
    %2225 = vmatpush2.msra.mxu0 0.0
    %2226 = vmatprep.subr.mxu0 0.0
    %2227 = vmatpush2.msra.mxu0 0.0
    %2228 = vmatprep.mubr.f32.mxu0 0.0
    %2229 = vmatmul.mubr.f32.gmra.mxu0 %v1851
    %v2230 = vpop.f32.mrf.mxu0
    %v2231 = vadd.f32 %v1805, %v2230
    %v2232 = vpop.f32.mrf.mxu0
    %v2233 = vadd.f32 %v1809, %v2232
    %2234 = vmatprep.mubr.f32.mxu0 0.0
    %2235 = vmatmul.mubr.f32.gmra.mxu0 %v1854
    %v2236 = vpop.f32.mrf.mxu0
    %v2237 = vadd.f32 %v1805, %v2236
    %v2238 = vpop.f32.mrf.mxu0
    %v2239 = vadd.f32 %v1809, %v2238
    %2240 = vdwg.mxu0
    %2241 = vmatprep.subr.mxu0 0.0
    %2242 = vmatpush1.msra.mxu0 0.0
    %2243 = vmatprep.subr.mxu0 0.0
    %2244 = vmatpush1.msra.mxu0 0.0
    %2245 = vmatprep.subr.mxu0 0.0
    %2246 = vmatpush1.msra.mxu0 0.0
    %2247 = vmatprep.subr.mxu0 0.0
    %2248 = vmatpush1.msra.mxu0 0.0
    %2249 = vmatprep.subr.mxu0 0.0
    %2250 = vmatpush1.msra.mxu0 0.0
    %2251 = vmatprep.subr.mxu0 0.0
    %2252 = vmatpush1.msra.mxu0 0.0
    %2253 = vmatprep.subr.mxu0 0.0
    %2254 = vmatpush1.msra.mxu0 0.0
    %2255 = vmatprep.subr.mxu0 0.0
    %2256 = vmatpush1.msra.mxu0 0.0
    %2257 = vmatprep.subr.mxu0 0.0
    %2258 = vmatpush1.msra.mxu0 0.0
    %2259 = vmatprep.subr.mxu0 0.0
    %2260 = vmatpush1.msra.mxu0 0.0
    %2261 = vmatprep.subr.mxu0 0.0
    %2262 = vmatpush1.msra.mxu0 0.0
    %2263 = vmatprep.subr.mxu0 0.0
    %2264 = vmatpush1.msra.mxu0 0.0
    %2265 = vmatprep.subr.mxu0 %v1761
    %2266 = vmatpush1.msra.mxu0 %v1760
    %2267 = vmatprep.subr.mxu0 %v1745
    %2268 = vmatpush1.msra.mxu0 %v1744
    %2269 = vmatprep.subr.mxu0 %v1729
    %2270 = vmatpush1.msra.mxu0 %v1728
    %2271 = vmatprep.subr.mxu0 %v1713
    %2272 = vmatpush1.msra.mxu0 %v1712
    %2273 = vmatprep.subr.mxu0 0.0
    %2274 = vmatpush2.msra.mxu0 0.0
    %2275 = vmatprep.subr.mxu0 0.0
    %2276 = vmatpush2.msra.mxu0 0.0
    %2277 = vmatprep.subr.mxu0 0.0
    %2278 = vmatpush2.msra.mxu0 0.0
    %2279 = vmatprep.subr.mxu0 0.0
    %2280 = vmatpush2.msra.mxu0 0.0
    %2281 = vmatprep.subr.mxu0 0.0
    %2282 = vmatpush2.msra.mxu0 0.0
    %2283 = vmatprep.subr.mxu0 0.0
    %2284 = vmatpush2.msra.mxu0 0.0
    %2285 = vmatprep.subr.mxu0 0.0
    %2286 = vmatpush2.msra.mxu0 0.0
    %2287 = vmatprep.subr.mxu0 0.0
    %2288 = vmatpush2.msra.mxu0 0.0
    %2289 = vmatprep.subr.mxu0 0.0
    %2290 = vmatpush2.msra.mxu0 0.0
    %2291 = vmatprep.subr.mxu0 0.0
    %2292 = vmatpush2.msra.mxu0 0.0
    %2293 = vmatprep.subr.mxu0 0.0
    %2294 = vmatpush2.msra.mxu0 0.0
    %2295 = vmatprep.subr.mxu0 0.0
    %2296 = vmatpush2.msra.mxu0 0.0
    %2297 = vmatprep.subr.mxu0 0.0
    %2298 = vmatpush2.msra.mxu0 0.0
    %2299 = vmatprep.subr.mxu0 0.0
    %2300 = vmatpush2.msra.mxu0 0.0
    %2301 = vmatprep.subr.mxu0 0.0
    %2302 = vmatpush2.msra.mxu0 0.0
    %2303 = vmatprep.subr.mxu0 0.0
    %2304 = vmatpush2.msra.mxu0 0.0
    %2305 = vmatprep.mubr.f32.mxu0 0.0
    %2306 = vmatmul.mubr.f32.gmra.mxu0 %v1851
    %v2307 = vpop.f32.mrf.mxu0
    %v2308 = vadd.f32 %v1813, %v2307
    %v2309 = vpop.f32.mrf.mxu0
    %v2310 = vadd.f32 %v1817, %v2309
    %2311 = vmatprep.mubr.f32.mxu0 0.0
    %2312 = vmatmul.mubr.f32.gmra.mxu0 %v1854
    %v2313 = vpop.f32.mrf.mxu0
    %v2314 = vadd.f32 %v1813, %v2313
    %v2315 = vpop.f32.mrf.mxu0
    %v2316 = vadd.f32 %v1817, %v2315
    %2317 = vdwg.mxu0
    %2318 = vmatprep.subr.mxu0 0.0
    %2319 = vmatpush1.msra.mxu0 0.0
    %2320 = vmatprep.subr.mxu0 0.0
    %2321 = vmatpush1.msra.mxu0 0.0
    %2322 = vmatprep.subr.mxu0 0.0
    %2323 = vmatpush1.msra.mxu0 0.0
    %2324 = vmatprep.subr.mxu0 0.0
    %2325 = vmatpush1.msra.mxu0 0.0
    %2326 = vmatprep.subr.mxu0 0.0
    %2327 = vmatpush1.msra.mxu0 0.0
    %2328 = vmatprep.subr.mxu0 0.0
    %2329 = vmatpush1.msra.mxu0 0.0
    %2330 = vmatprep.subr.mxu0 0.0
    %2331 = vmatpush1.msra.mxu0 0.0
    %2332 = vmatprep.subr.mxu0 0.0
    %2333 = vmatpush1.msra.mxu0 0.0
    %2334 = vmatprep.subr.mxu0 0.0
    %2335 = vmatpush1.msra.mxu0 0.0
    %2336 = vmatprep.subr.mxu0 0.0
    %2337 = vmatpush1.msra.mxu0 0.0
    %2338 = vmatprep.subr.mxu0 0.0
    %2339 = vmatpush1.msra.mxu0 0.0
    %2340 = vmatprep.subr.mxu0 0.0
    %2341 = vmatpush1.msra.mxu0 0.0
    %2342 = vmatprep.subr.mxu0 %v1763
    %2343 = vmatpush1.msra.mxu0 %v1762
    %2344 = vmatprep.subr.mxu0 %v1747
    %2345 = vmatpush1.msra.mxu0 %v1746
    %2346 = vmatprep.subr.mxu0 %v1731
    %2347 = vmatpush1.msra.mxu0 %v1730
    %2348 = vmatprep.subr.mxu0 %v1715
    %2349 = vmatpush1.msra.mxu0 %v1714
    %2350 = vmatprep.subr.mxu0 0.0
    %2351 = vmatpush2.msra.mxu0 0.0
    %2352 = vmatprep.subr.mxu0 0.0
    %2353 = vmatpush2.msra.mxu0 0.0
    %2354 = vmatprep.subr.mxu0 0.0
    %2355 = vmatpush2.msra.mxu0 0.0
    %2356 = vmatprep.subr.mxu0 0.0
    %2357 = vmatpush2.msra.mxu0 0.0
    %2358 = vmatprep.subr.mxu0 0.0
    %2359 = vmatpush2.msra.mxu0 0.0
    %2360 = vmatprep.subr.mxu0 0.0
    %2361 = vmatpush2.msra.mxu0 0.0
    %2362 = vmatprep.subr.mxu0 0.0
    %2363 = vmatpush2.msra.mxu0 0.0
    %2364 = vmatprep.subr.mxu0 0.0
    %2365 = vmatpush2.msra.mxu0 0.0
    %2366 = vmatprep.subr.mxu0 0.0
    %2367 = vmatpush2.msra.mxu0 0.0
    %2368 = vmatprep.subr.mxu0 0.0
    %2369 = vmatpush2.msra.mxu0 0.0
    %2370 = vmatprep.subr.mxu0 0.0
    %2371 = vmatpush2.msra.mxu0 0.0
    %2372 = vmatprep.subr.mxu0 0.0
    %2373 = vmatpush2.msra.mxu0 0.0
    %2374 = vmatprep.subr.mxu0 0.0
    %2375 = vmatpush2.msra.mxu0 0.0
    %2376 = vmatprep.subr.mxu0 0.0
    %2377 = vmatpush2.msra.mxu0 0.0
    %2378 = vmatprep.subr.mxu0 0.0
    %2379 = vmatpush2.msra.mxu0 0.0
    %2380 = vmatprep.subr.mxu0 0.0
    %2381 = vmatpush2.msra.mxu0 0.0
    %2382 = vmatprep.mubr.f32.mxu0 0.0
    %2383 = vmatmul.mubr.f32.gmra.mxu0 %v1851
    %v2384 = vpop.f32.mrf.mxu0
    %v2385 = vadd.f32 %v1821, %v2384
    %v2386 = vpop.f32.mrf.mxu0
    %v2387 = vadd.f32 %v1825, %v2386
    %2388 = vmatprep.mubr.f32.mxu0 0.0
    %2389 = vmatmul.mubr.f32.gmra.mxu0 %v1854
    %v2390 = vpop.f32.mrf.mxu0
    %v2391 = vadd.f32 %v1821, %v2390
    %v2392 = vpop.f32.mrf.mxu0
    %v2393 = vadd.f32 %v1825, %v2392
    %2394 = vdwg.mxu0
    %2395 = vmatprep.subr.mxu0 0.0
    %2396 = vmatpush1.msra.mxu0 0.0
    %2397 = vmatprep.subr.mxu0 0.0
    %2398 = vmatpush1.msra.mxu0 0.0
    %2399 = vmatprep.subr.mxu0 0.0
    %2400 = vmatpush1.msra.mxu0 0.0
    %2401 = vmatprep.subr.mxu0 0.0
    %2402 = vmatpush1.msra.mxu0 0.0
    %2403 = vmatprep.subr.mxu0 0.0
    %2404 = vmatpush1.msra.mxu0 0.0
    %2405 = vmatprep.subr.mxu0 0.0
    %2406 = vmatpush1.msra.mxu0 0.0
    %2407 = vmatprep.subr.mxu0 0.0
    %2408 = vmatpush1.msra.mxu0 0.0
    %2409 = vmatprep.subr.mxu0 0.0
    %2410 = vmatpush1.msra.mxu0 0.0
    %2411 = vmatprep.subr.mxu0 0.0
    %2412 = vmatpush1.msra.mxu0 0.0
    %2413 = vmatprep.subr.mxu0 0.0
    %2414 = vmatpush1.msra.mxu0 0.0
    %2415 = vmatprep.subr.mxu0 0.0
    %2416 = vmatpush1.msra.mxu0 0.0
    %2417 = vmatprep.subr.mxu0 0.0
    %2418 = vmatpush1.msra.mxu0 0.0
    %2419 = vmatprep.subr.mxu0 %v1765
    %2420 = vmatpush1.msra.mxu0 %v1764
    %2421 = vmatprep.subr.mxu0 %v1749
    %2422 = vmatpush1.msra.mxu0 %v1748
    %2423 = vmatprep.subr.mxu0 %v1733
    %2424 = vmatpush1.msra.mxu0 %v1732
    %2425 = vmatprep.subr.mxu0 %v1717
    %2426 = vmatpush1.msra.mxu0 %v1716
    %2427 = vmatprep.subr.mxu0 0.0
    %2428 = vmatpush2.msra.mxu0 0.0
    %2429 = vmatprep.subr.mxu0 0.0
    %2430 = vmatpush2.msra.mxu0 0.0
    %2431 = vmatprep.subr.mxu0 0.0
    %2432 = vmatpush2.msra.mxu0 0.0
    %2433 = vmatprep.subr.mxu0 0.0
    %2434 = vmatpush2.msra.mxu0 0.0
    %2435 = vmatprep.subr.mxu0 0.0
    %2436 = vmatpush2.msra.mxu0 0.0
    %2437 = vmatprep.subr.mxu0 0.0
    %2438 = vmatpush2.msra.mxu0 0.0
    %2439 = vmatprep.subr.mxu0 0.0
    %2440 = vmatpush2.msra.mxu0 0.0
    %2441 = vmatprep.subr.mxu0 0.0
    %2442 = vmatpush2.msra.mxu0 0.0
    %2443 = vmatprep.subr.mxu0 0.0
    %2444 = vmatpush2.msra.mxu0 0.0
    %2445 = vmatprep.subr.mxu0 0.0
    %2446 = vmatpush2.msra.mxu0 0.0
    %2447 = vmatprep.subr.mxu0 0.0
    %2448 = vmatpush2.msra.mxu0 0.0
    %2449 = vmatprep.subr.mxu0 0.0
    %2450 = vmatpush2.msra.mxu0 0.0
    %2451 = vmatprep.subr.mxu0 0.0
    %2452 = vmatpush2.msra.mxu0 0.0
    %2453 = vmatprep.subr.mxu0 0.0
    %2454 = vmatpush2.msra.mxu0 0.0
    %2455 = vmatprep.subr.mxu0 0.0
    %2456 = vmatpush2.msra.mxu0 0.0
    %2457 = vmatprep.subr.mxu0 0.0
    %2458 = vmatpush2.msra.mxu0 0.0
    %2459 = vmatprep.mubr.f32.mxu0 0.0
    %2460 = vmatmul.mubr.f32.gmra.mxu0 %v1851
    %v2461 = vpop.f32.mrf.mxu0
    %v2462 = vadd.f32 %v1829, %v2461
    %v2463 = vpop.f32.mrf.mxu0
    %v2464 = vadd.f32 %v1833, %v2463
    %2465 = vmatprep.mubr.f32.mxu0 0.0
    %2466 = vmatmul.mubr.f32.gmra.mxu0 %v1854
    %v2467 = vpop.f32.mrf.mxu0
    %v2468 = vadd.f32 %v1829, %v2467
    %v2469 = vpop.f32.mrf.mxu0
    %v2470 = vadd.f32 %v1833, %v2469
    %2471 = vdwg.mxu0
    %v2472 = vmax.f32 %v1923, 0.0
    %v2473 = vmax.f32 %v1925, 0.0
    %v2474 = vmax.f32 %v2000, 0.0
    %v2475 = vmax.f32 %v2002, 0.0
    %v2476 = vmax.f32 %v2077, 0.0
    %v2477 = vmax.f32 %v2079, 0.0
    %v2478 = vmax.f32 %v2154, 0.0
    %v2479 = vmax.f32 %v2156, 0.0
    %v2480 = vmax.f32 %v2231, 0.0
    %v2481 = vmax.f32 %v2233, 0.0
    %v2482 = vmax.f32 %v2308, 0.0
    %v2483 = vmax.f32 %v2310, 0.0
    %v2484 = vmax.f32 %v2385, 0.0
    %v2485 = vmax.f32 %v2387, 0.0
    %v2486 = vmax.f32 %v2462, 0.0
    %v2487 = vmax.f32 %v2464, 0.0
    %v2488 = vmax.f32 %v1929, 0.0
    %v2489 = vmax.f32 %v1931, 0.0
    %v2490 = vmax.f32 %v2006, 0.0
    %v2491 = vmax.f32 %v2008, 0.0
    %v2492 = vmax.f32 %v2083, 0.0
    %v2493 = vmax.f32 %v2085, 0.0
    %v2494 = vmax.f32 %v2160, 0.0
    %v2495 = vmax.f32 %v2162, 0.0
    %v2496 = vmax.f32 %v2237, 0.0
    %v2497 = vmax.f32 %v2239, 0.0
    %v2498 = vmax.f32 %v2314, 0.0
    %v2499 = vmax.f32 %v2316, 0.0
    %v2500 = vmax.f32 %v2391, 0.0
    %v2501 = vmax.f32 %v2393, 0.0
    %v2502 = vmax.f32 %v2468, 0.0
    %v2503 = vmax.f32 %v2470, 0.0
    %v2504 = vld [vmem:[#allocation9] sm:$0xff]
    %v2505 = vld [vmem:[#allocation9 + $0x8] sm:$0xff]
    %v2506 = vld [vmem:[#allocation9 + $0x10] sm:$0xff]
    %v2507 = vld [vmem:[#allocation9 + $0x18] sm:$0xff]
    %v2508 = vld [vmem:[#allocation9 + $0x20] sm:$0xff]
    %v2509 = vld [vmem:[#allocation9 + $0x28] sm:$0xff]
    %v2510 = vld [vmem:[#allocation9 + $0x30] sm:$0xff]
    %v2511 = vld [vmem:[#allocation9 + $0x38] sm:$0xff]
    %v2512 = vld [vmem:[#allocation9 + $0x40] sm:$0xff]
    %v2513 = vld [vmem:[#allocation9 + $0x48] sm:$0xff]
    %v2514 = vld [vmem:[#allocation9 + $0x50] sm:$0xff]
    %v2515 = vld [vmem:[#allocation9 + $0x58] sm:$0xff]
    %v2516 = vld [vmem:[#allocation9 + $0x60] sm:$0xff]
    %v2517 = vld [vmem:[#allocation9 + $0x68] sm:$0xff]
    %v2518 = vld [vmem:[#allocation9 + $0x70] sm:$0xff]
    %v2519 = vld [vmem:[#allocation9 + $0x78] sm:$0xff]
    %v2520 = vld [vmem:[#allocation9 + $0x80] sm:$0xff]
    %v2521 = vld [vmem:[#allocation9 + $0x88] sm:$0xff]
    %v2522 = vld [vmem:[#allocation9 + $0x90] sm:$0xff]
    %v2523 = vld [vmem:[#allocation9 + $0x98] sm:$0xff]
    %v2524 = vld [vmem:[#allocation9 + $0xa0] sm:$0xff]
    %v2525 = vld [vmem:[#allocation9 + $0xa8] sm:$0xff]
    %v2526 = vld [vmem:[#allocation9 + $0xb0] sm:$0xff]
    %v2527 = vld [vmem:[#allocation9 + $0xb8] sm:$0xff]
    %v2528 = vld [vmem:[#allocation9 + $0xc0] sm:$0xff]
    %v2529 = vld [vmem:[#allocation9 + $0xc8] sm:$0xff]
    %v2530 = vld [vmem:[#allocation9 + $0xd0] sm:$0xff]
    %v2531 = vld [vmem:[#allocation9 + $0xd8] sm:$0xff]
    %v2532 = vld [vmem:[#allocation9 + $0xe0] sm:$0xff]
    %v2533 = vld [vmem:[#allocation9 + $0xe8] sm:$0xff]
    %v2534 = vld [vmem:[#allocation9 + $0xf0] sm:$0xff]
    %v2535 = vld [vmem:[#allocation9 + $0xf8] sm:$0xff]
    %v2536 = vld [vmem:[#allocation9 + $0x100] sm:$0xff]
    %v2537 = vld [vmem:[#allocation9 + $0x108] sm:$0xff]
    %v2538 = vld [vmem:[#allocation9 + $0x110] sm:$0xff]
    %v2539 = vld [vmem:[#allocation9 + $0x118] sm:$0xff]
    %v2540 = vld [vmem:[#allocation9 + $0x120] sm:$0xff]
    %v2541 = vld [vmem:[#allocation9 + $0x128] sm:$0xff]
    %v2542 = vld [vmem:[#allocation9 + $0x130] sm:$0xff]
    %v2543 = vld [vmem:[#allocation9 + $0x138] sm:$0xff]
    %v2544 = vld [vmem:[#allocation9 + $0x140] sm:$0xff]
    %v2545 = vld [vmem:[#allocation9 + $0x148] sm:$0xff]
    %v2546 = vld [vmem:[#allocation9 + $0x150] sm:$0xff]
    %v2547 = vld [vmem:[#allocation9 + $0x158] sm:$0xff]
    %v2548 = vld [vmem:[#allocation9 + $0x160] sm:$0xff]
    %v2549 = vld [vmem:[#allocation9 + $0x168] sm:$0xff]
    %v2550 = vld [vmem:[#allocation9 + $0x170] sm:$0xff]
    %v2551 = vld [vmem:[#allocation9 + $0x178] sm:$0xff]
    %v2552 = vld [vmem:[#allocation9 + $0x180] sm:$0xff]
    %v2553 = vld [vmem:[#allocation9 + $0x188] sm:$0xff]
    %v2554 = vld [vmem:[#allocation9 + $0x190] sm:$0xff]
    %v2555 = vld [vmem:[#allocation9 + $0x198] sm:$0xff]
    %v2556 = vld [vmem:[#allocation9 + $0x1a0] sm:$0xff]
    %v2557 = vld [vmem:[#allocation9 + $0x1a8] sm:$0xff]
    %v2558 = vld [vmem:[#allocation9 + $0x1b0] sm:$0xff]
    %v2559 = vld [vmem:[#allocation9 + $0x1b8] sm:$0xff]
    %v2560 = vld [vmem:[#allocation9 + $0x1c0] sm:$0xff]
    %v2561 = vld [vmem:[#allocation9 + $0x1c8] sm:$0xff]
    %v2562 = vld [vmem:[#allocation9 + $0x1d0] sm:$0xff]
    %v2563 = vld [vmem:[#allocation9 + $0x1d8] sm:$0xff]
    %v2564 = vld [vmem:[#allocation9 + $0x1e0] sm:$0xff]
    %v2565 = vld [vmem:[#allocation9 + $0x1e8] sm:$0xff]
    %v2566 = vld [vmem:[#allocation9 + $0x1f0] sm:$0xff]
    %v2567 = vld [vmem:[#allocation9 + $0x1f8] sm:$0xff]
    %v2568 = vlaneseq
    %v2569 = vshrl.u32 %v2568, 7
    %v2570 = vsub.s32 3, %v2569
    %v2571 = vrot.slane %v212, %v2570
    %2572 = vmatprep.subr.mxu0 0.0
    %2573 = vmatpush1.xpose.msra.mxu0 0.0
    %2574 = vmatprep.subr.mxu0 0.0
    %2575 = vmatpush1.xpose.msra.mxu0 0.0
    %2576 = vmatprep.subr.mxu0 0.0
    %2577 = vmatpush1.xpose.msra.mxu0 0.0
    %2578 = vmatprep.subr.mxu0 0.0
    %2579 = vmatpush1.xpose.msra.mxu0 0.0
    %2580 = vmatprep.subr.mxu0 0.0
    %2581 = vmatpush1.xpose.msra.mxu0 0.0
    %2582 = vmatprep.subr.mxu0 0.0
    %2583 = vmatpush1.xpose.msra.mxu0 0.0
    %2584 = vmatprep.subr.mxu0 0.0
    %2585 = vmatpush1.xpose.msra.mxu0 0.0
    %2586 = vmatprep.subr.mxu0 0.0
    %2587 = vmatpush1.xpose.msra.mxu0 0.0
    %2588 = vmatprep.subr.mxu0 0.0
    %2589 = vmatpush1.xpose.msra.mxu0 0.0
    %2590 = vmatprep.subr.mxu0 0.0
    %2591 = vmatpush1.xpose.msra.mxu0 0.0
    %2592 = vmatprep.subr.mxu0 0.0
    %2593 = vmatpush1.xpose.msra.mxu0 0.0
    %2594 = vmatprep.subr.mxu0 0.0
    %2595 = vmatpush1.xpose.msra.mxu0 0.0
    %2596 = vmatprep.subr.mxu0 %v2553
    %2597 = vmatpush1.xpose.msra.mxu0 %v2552
    %2598 = vmatprep.subr.mxu0 %v2537
    %2599 = vmatpush1.xpose.msra.mxu0 %v2536
    %2600 = vmatprep.subr.mxu0 %v2521
    %2601 = vmatpush1.xpose.msra.mxu0 %v2520
    %2602 = vmatprep.subr.mxu0 %v2505
    %2603 = vmatpush1.xpose.msra.mxu0 %v2504
    %2604 = vmatprep.subr.mxu0 0.0
    %2605 = vmatpush2.xpose.msra.mxu0 0.0
    %2606 = vmatprep.subr.mxu0 0.0
    %2607 = vmatpush2.xpose.msra.mxu0 0.0
    %2608 = vmatprep.subr.mxu0 0.0
    %2609 = vmatpush2.xpose.msra.mxu0 0.0
    %2610 = vmatprep.subr.mxu0 0.0
    %2611 = vmatpush2.xpose.msra.mxu0 0.0
    %2612 = vmatprep.subr.mxu0 0.0
    %2613 = vmatpush2.xpose.msra.mxu0 0.0
    %2614 = vmatprep.subr.mxu0 0.0
    %2615 = vmatpush2.xpose.msra.mxu0 0.0
    %2616 = vmatprep.subr.mxu0 0.0
    %2617 = vmatpush2.xpose.msra.mxu0 0.0
    %2618 = vmatprep.subr.mxu0 0.0
    %2619 = vmatpush2.xpose.msra.mxu0 0.0
    %2620 = vmatprep.subr.mxu0 0.0
    %2621 = vmatpush2.xpose.msra.mxu0 0.0
    %2622 = vmatprep.subr.mxu0 0.0
    %2623 = vmatpush2.xpose.msra.mxu0 0.0
    %2624 = vmatprep.subr.mxu0 0.0
    %2625 = vmatpush2.xpose.msra.mxu0 0.0
    %2626 = vmatprep.subr.mxu0 0.0
    %2627 = vmatpush2.xpose.msra.mxu0 0.0
    %2628 = vmatprep.subr.mxu0 0.0
    %2629 = vmatpush2.xpose.msra.mxu0 0.0
    %2630 = vmatprep.subr.mxu0 0.0
    %2631 = vmatpush2.xpose.msra.mxu0 0.0
    %2632 = vmatprep.subr.mxu0 0.0
    %2633 = vmatpush2.xpose.msra.mxu0 0.0
    %2634 = vmatprep.subr.mxu0 0.0
    %2635 = vmatpush2.xpose.msra.mxu0 0.0
    %2636 = vmatprep.mubr.f32.mxu0 %v2473
    %2637 = vmatmul.mubr.f32.gmra.mxu0 %v2472
    %v2638 = vpop.f32.mrf.mxu0
    %v2639 = vadd.f32 %v2571, %v2638
    %v2640 = vpop.f32.mrf.mxu0
    %2641 = vmatprep.mubr.f32.mxu0 %v2489
    %2642 = vmatmul.mubr.f32.gmra.mxu0 %v2488
    %v2643 = vpop.f32.mrf.mxu0
    %v2644 = vadd.f32 %v2571, %v2643
    %v2645 = vpop.f32.mrf.mxu0
    %2646 = vdwg.mxu0
    %2647 = vmatprep.subr.mxu0 0.0
    %2648 = vmatpush1.xpose.msra.mxu0 0.0
    %2649 = vmatprep.subr.mxu0 0.0
    %2650 = vmatpush1.xpose.msra.mxu0 0.0
    %2651 = vmatprep.subr.mxu0 0.0
    %2652 = vmatpush1.xpose.msra.mxu0 0.0
    %2653 = vmatprep.subr.mxu0 0.0
    %2654 = vmatpush1.xpose.msra.mxu0 0.0
    %2655 = vmatprep.subr.mxu0 0.0
    %2656 = vmatpush1.xpose.msra.mxu0 0.0
    %2657 = vmatprep.subr.mxu0 0.0
    %2658 = vmatpush1.xpose.msra.mxu0 0.0
    %2659 = vmatprep.subr.mxu0 0.0
    %2660 = vmatpush1.xpose.msra.mxu0 0.0
    %2661 = vmatprep.subr.mxu0 0.0
    %2662 = vmatpush1.xpose.msra.mxu0 0.0
    %2663 = vmatprep.subr.mxu0 0.0
    %2664 = vmatpush1.xpose.msra.mxu0 0.0
    %2665 = vmatprep.subr.mxu0 0.0
    %2666 = vmatpush1.xpose.msra.mxu0 0.0
    %2667 = vmatprep.subr.mxu0 0.0
    %2668 = vmatpush1.xpose.msra.mxu0 0.0
    %2669 = vmatprep.subr.mxu0 0.0
    %2670 = vmatpush1.xpose.msra.mxu0 0.0
    %2671 = vmatprep.subr.mxu0 %v2555
    %2672 = vmatpush1.xpose.msra.mxu0 %v2554
    %2673 = vmatprep.subr.mxu0 %v2539
    %2674 = vmatpush1.xpose.msra.mxu0 %v2538
    %2675 = vmatprep.subr.mxu0 %v2523
    %2676 = vmatpush1.xpose.msra.mxu0 %v2522
    %2677 = vmatprep.subr.mxu0 %v2507
    %2678 = vmatpush1.xpose.msra.mxu0 %v2506
    %2679 = vmatprep.subr.mxu0 0.0
    %2680 = vmatpush2.xpose.msra.mxu0 0.0
    %2681 = vmatprep.subr.mxu0 0.0
    %2682 = vmatpush2.xpose.msra.mxu0 0.0
    %2683 = vmatprep.subr.mxu0 0.0
    %2684 = vmatpush2.xpose.msra.mxu0 0.0
    %2685 = vmatprep.subr.mxu0 0.0
    %2686 = vmatpush2.xpose.msra.mxu0 0.0
    %2687 = vmatprep.subr.mxu0 0.0
    %2688 = vmatpush2.xpose.msra.mxu0 0.0
    %2689 = vmatprep.subr.mxu0 0.0
    %2690 = vmatpush2.xpose.msra.mxu0 0.0
    %2691 = vmatprep.subr.mxu0 0.0
    %2692 = vmatpush2.xpose.msra.mxu0 0.0
    %2693 = vmatprep.subr.mxu0 0.0
    %2694 = vmatpush2.xpose.msra.mxu0 0.0
    %2695 = vmatprep.subr.mxu0 0.0
    %2696 = vmatpush2.xpose.msra.mxu0 0.0
    %2697 = vmatprep.subr.mxu0 0.0
    %2698 = vmatpush2.xpose.msra.mxu0 0.0
    %2699 = vmatprep.subr.mxu0 0.0
    %2700 = vmatpush2.xpose.msra.mxu0 0.0
    %2701 = vmatprep.subr.mxu0 0.0
    %2702 = vmatpush2.xpose.msra.mxu0 0.0
    %2703 = vmatprep.subr.mxu0 0.0
    %2704 = vmatpush2.xpose.msra.mxu0 0.0
    %2705 = vmatprep.subr.mxu0 0.0
    %2706 = vmatpush2.xpose.msra.mxu0 0.0
    %2707 = vmatprep.subr.mxu0 0.0
    %2708 = vmatpush2.xpose.msra.mxu0 0.0
    %2709 = vmatprep.subr.mxu0 0.0
    %2710 = vmatpush2.xpose.msra.mxu0 0.0
    %2711 = vmatprep.mubr.f32.mxu0 %v2475
    %2712 = vmatmul.mubr.f32.gmra.mxu0 %v2474
    %v2713 = vpop.f32.mrf.mxu0
    %v2714 = vadd.f32 %v2639, %v2713
    %v2715 = vpop.f32.mrf.mxu0
    %2716 = vmatprep.mubr.f32.mxu0 %v2491
    %2717 = vmatmul.mubr.f32.gmra.mxu0 %v2490
    %v2718 = vpop.f32.mrf.mxu0
    %v2719 = vadd.f32 %v2644, %v2718
    %v2720 = vpop.f32.mrf.mxu0
    %2721 = vdwg.mxu0
    %2722 = vmatprep.subr.mxu0 0.0
    %2723 = vmatpush1.xpose.msra.mxu0 0.0
    %2724 = vmatprep.subr.mxu0 0.0
    %2725 = vmatpush1.xpose.msra.mxu0 0.0
    %2726 = vmatprep.subr.mxu0 0.0
    %2727 = vmatpush1.xpose.msra.mxu0 0.0
    %2728 = vmatprep.subr.mxu0 0.0
    %2729 = vmatpush1.xpose.msra.mxu0 0.0
    %2730 = vmatprep.subr.mxu0 0.0
    %2731 = vmatpush1.xpose.msra.mxu0 0.0
    %2732 = vmatprep.subr.mxu0 0.0
    %2733 = vmatpush1.xpose.msra.mxu0 0.0
    %2734 = vmatprep.subr.mxu0 0.0
    %2735 = vmatpush1.xpose.msra.mxu0 0.0
    %2736 = vmatprep.subr.mxu0 0.0
    %2737 = vmatpush1.xpose.msra.mxu0 0.0
    %2738 = vmatprep.subr.mxu0 0.0
    %2739 = vmatpush1.xpose.msra.mxu0 0.0
    %2740 = vmatprep.subr.mxu0 0.0
    %2741 = vmatpush1.xpose.msra.mxu0 0.0
    %2742 = vmatprep.subr.mxu0 0.0
    %2743 = vmatpush1.xpose.msra.mxu0 0.0
    %2744 = vmatprep.subr.mxu0 0.0
    %2745 = vmatpush1.xpose.msra.mxu0 0.0
    %2746 = vmatprep.subr.mxu0 %v2557
    %2747 = vmatpush1.xpose.msra.mxu0 %v2556
    %2748 = vmatprep.subr.mxu0 %v2541
    %2749 = vmatpush1.xpose.msra.mxu0 %v2540
    %2750 = vmatprep.subr.mxu0 %v2525
    %2751 = vmatpush1.xpose.msra.mxu0 %v2524
    %2752 = vmatprep.subr.mxu0 %v2509
    %2753 = vmatpush1.xpose.msra.mxu0 %v2508
    %2754 = vmatprep.subr.mxu0 0.0
    %2755 = vmatpush2.xpose.msra.mxu0 0.0
    %2756 = vmatprep.subr.mxu0 0.0
    %2757 = vmatpush2.xpose.msra.mxu0 0.0
    %2758 = vmatprep.subr.mxu0 0.0
    %2759 = vmatpush2.xpose.msra.mxu0 0.0
    %2760 = vmatprep.subr.mxu0 0.0
    %2761 = vmatpush2.xpose.msra.mxu0 0.0
    %2762 = vmatprep.subr.mxu0 0.0
    %2763 = vmatpush2.xpose.msra.mxu0 0.0
    %2764 = vmatprep.subr.mxu0 0.0
    %2765 = vmatpush2.xpose.msra.mxu0 0.0
    %2766 = vmatprep.subr.mxu0 0.0
    %2767 = vmatpush2.xpose.msra.mxu0 0.0
    %2768 = vmatprep.subr.mxu0 0.0
    %2769 = vmatpush2.xpose.msra.mxu0 0.0
    %2770 = vmatprep.subr.mxu0 0.0
    %2771 = vmatpush2.xpose.msra.mxu0 0.0
    %2772 = vmatprep.subr.mxu0 0.0
    %2773 = vmatpush2.xpose.msra.mxu0 0.0
    %2774 = vmatprep.subr.mxu0 0.0
    %2775 = vmatpush2.xpose.msra.mxu0 0.0
    %2776 = vmatprep.subr.mxu0 0.0
    %2777 = vmatpush2.xpose.msra.mxu0 0.0
    %2778 = vmatprep.subr.mxu0 0.0
    %2779 = vmatpush2.xpose.msra.mxu0 0.0
    %2780 = vmatprep.subr.mxu0 0.0
    %2781 = vmatpush2.xpose.msra.mxu0 0.0
    %2782 = vmatprep.subr.mxu0 0.0
    %2783 = vmatpush2.xpose.msra.mxu0 0.0
    %2784 = vmatprep.subr.mxu0 0.0
    %2785 = vmatpush2.xpose.msra.mxu0 0.0
    %2786 = vmatprep.mubr.f32.mxu0 %v2477
    %2787 = vmatmul.mubr.f32.gmra.mxu0 %v2476
    %v2788 = vpop.f32.mrf.mxu0
    %v2789 = vadd.f32 %v2714, %v2788
    %v2790 = vpop.f32.mrf.mxu0
    %2791 = vmatprep.mubr.f32.mxu0 %v2493
    %2792 = vmatmul.mubr.f32.gmra.mxu0 %v2492
    %v2793 = vpop.f32.mrf.mxu0
    %v2794 = vadd.f32 %v2719, %v2793
    %v2795 = vpop.f32.mrf.mxu0
    %2796 = vdwg.mxu0
    %2797 = vmatprep.subr.mxu0 0.0
    %2798 = vmatpush1.xpose.msra.mxu0 0.0
    %2799 = vmatprep.subr.mxu0 0.0
    %2800 = vmatpush1.xpose.msra.mxu0 0.0
    %2801 = vmatprep.subr.mxu0 0.0
    %2802 = vmatpush1.xpose.msra.mxu0 0.0
    %2803 = vmatprep.subr.mxu0 0.0
    %2804 = vmatpush1.xpose.msra.mxu0 0.0
    %2805 = vmatprep.subr.mxu0 0.0
    %2806 = vmatpush1.xpose.msra.mxu0 0.0
    %2807 = vmatprep.subr.mxu0 0.0
    %2808 = vmatpush1.xpose.msra.mxu0 0.0
    %2809 = vmatprep.subr.mxu0 0.0
    %2810 = vmatpush1.xpose.msra.mxu0 0.0
    %2811 = vmatprep.subr.mxu0 0.0
    %2812 = vmatpush1.xpose.msra.mxu0 0.0
    %2813 = vmatprep.subr.mxu0 0.0
    %2814 = vmatpush1.xpose.msra.mxu0 0.0
    %2815 = vmatprep.subr.mxu0 0.0
    %2816 = vmatpush1.xpose.msra.mxu0 0.0
    %2817 = vmatprep.subr.mxu0 0.0
    %2818 = vmatpush1.xpose.msra.mxu0 0.0
    %2819 = vmatprep.subr.mxu0 0.0
    %2820 = vmatpush1.xpose.msra.mxu0 0.0
    %2821 = vmatprep.subr.mxu0 %v2559
    %2822 = vmatpush1.xpose.msra.mxu0 %v2558
    %2823 = vmatprep.subr.mxu0 %v2543
    %2824 = vmatpush1.xpose.msra.mxu0 %v2542
    %2825 = vmatprep.subr.mxu0 %v2527
    %2826 = vmatpush1.xpose.msra.mxu0 %v2526
    %2827 = vmatprep.subr.mxu0 %v2511
    %2828 = vmatpush1.xpose.msra.mxu0 %v2510
    %2829 = vmatprep.subr.mxu0 0.0
    %2830 = vmatpush2.xpose.msra.mxu0 0.0
    %2831 = vmatprep.subr.mxu0 0.0
    %2832 = vmatpush2.xpose.msra.mxu0 0.0
    %2833 = vmatprep.subr.mxu0 0.0
    %2834 = vmatpush2.xpose.msra.mxu0 0.0
    %2835 = vmatprep.subr.mxu0 0.0
    %2836 = vmatpush2.xpose.msra.mxu0 0.0
    %2837 = vmatprep.subr.mxu0 0.0
    %2838 = vmatpush2.xpose.msra.mxu0 0.0
    %2839 = vmatprep.subr.mxu0 0.0
    %2840 = vmatpush2.xpose.msra.mxu0 0.0
    %2841 = vmatprep.subr.mxu0 0.0
    %2842 = vmatpush2.xpose.msra.mxu0 0.0
    %2843 = vmatprep.subr.mxu0 0.0
    %2844 = vmatpush2.xpose.msra.mxu0 0.0
    %2845 = vmatprep.subr.mxu0 0.0
    %2846 = vmatpush2.xpose.msra.mxu0 0.0
    %2847 = vmatprep.subr.mxu0 0.0
    %2848 = vmatpush2.xpose.msra.mxu0 0.0
    %2849 = vmatprep.subr.mxu0 0.0
    %2850 = vmatpush2.xpose.msra.mxu0 0.0
    %2851 = vmatprep.subr.mxu0 0.0
    %2852 = vmatpush2.xpose.msra.mxu0 0.0
    %2853 = vmatprep.subr.mxu0 0.0
    %2854 = vmatpush2.xpose.msra.mxu0 0.0
    %2855 = vmatprep.subr.mxu0 0.0
    %2856 = vmatpush2.xpose.msra.mxu0 0.0
    %2857 = vmatprep.subr.mxu0 0.0
    %2858 = vmatpush2.xpose.msra.mxu0 0.0
    %2859 = vmatprep.subr.mxu0 0.0
    %2860 = vmatpush2.xpose.msra.mxu0 0.0
    %2861 = vmatprep.mubr.f32.mxu0 %v2479
    %2862 = vmatmul.mubr.f32.gmra.mxu0 %v2478
    %v2863 = vpop.f32.mrf.mxu0
    %v2864 = vadd.f32 %v2789, %v2863
    %v2865 = vpop.f32.mrf.mxu0
    %2866 = vmatprep.mubr.f32.mxu0 %v2495
    %2867 = vmatmul.mubr.f32.gmra.mxu0 %v2494
    %v2868 = vpop.f32.mrf.mxu0
    %v2869 = vadd.f32 %v2794, %v2868
    %v2870 = vpop.f32.mrf.mxu0
    %2871 = vdwg.mxu0
    %2872 = vmatprep.subr.mxu0 0.0
    %2873 = vmatpush1.xpose.msra.mxu0 0.0
    %2874 = vmatprep.subr.mxu0 0.0
    %2875 = vmatpush1.xpose.msra.mxu0 0.0
    %2876 = vmatprep.subr.mxu0 0.0
    %2877 = vmatpush1.xpose.msra.mxu0 0.0
    %2878 = vmatprep.subr.mxu0 0.0
    %2879 = vmatpush1.xpose.msra.mxu0 0.0
    %2880 = vmatprep.subr.mxu0 0.0
    %2881 = vmatpush1.xpose.msra.mxu0 0.0
    %2882 = vmatprep.subr.mxu0 0.0
    %2883 = vmatpush1.xpose.msra.mxu0 0.0
    %2884 = vmatprep.subr.mxu0 0.0
    %2885 = vmatpush1.xpose.msra.mxu0 0.0
    %2886 = vmatprep.subr.mxu0 0.0
    %2887 = vmatpush1.xpose.msra.mxu0 0.0
    %2888 = vmatprep.subr.mxu0 0.0
    %2889 = vmatpush1.xpose.msra.mxu0 0.0
    %2890 = vmatprep.subr.mxu0 0.0
    %2891 = vmatpush1.xpose.msra.mxu0 0.0
    %2892 = vmatprep.subr.mxu0 0.0
    %2893 = vmatpush1.xpose.msra.mxu0 0.0
    %2894 = vmatprep.subr.mxu0 0.0
    %2895 = vmatpush1.xpose.msra.mxu0 0.0
    %2896 = vmatprep.subr.mxu0 %v2561
    %2897 = vmatpush1.xpose.msra.mxu0 %v2560
    %2898 = vmatprep.subr.mxu0 %v2545
    %2899 = vmatpush1.xpose.msra.mxu0 %v2544
    %2900 = vmatprep.subr.mxu0 %v2529
    %2901 = vmatpush1.xpose.msra.mxu0 %v2528
    %2902 = vmatprep.subr.mxu0 %v2513
    %2903 = vmatpush1.xpose.msra.mxu0 %v2512
    %2904 = vmatprep.subr.mxu0 0.0
    %2905 = vmatpush2.xpose.msra.mxu0 0.0
    %2906 = vmatprep.subr.mxu0 0.0
    %2907 = vmatpush2.xpose.msra.mxu0 0.0
    %2908 = vmatprep.subr.mxu0 0.0
    %2909 = vmatpush2.xpose.msra.mxu0 0.0
    %2910 = vmatprep.subr.mxu0 0.0
    %2911 = vmatpush2.xpose.msra.mxu0 0.0
    %2912 = vmatprep.subr.mxu0 0.0
    %2913 = vmatpush2.xpose.msra.mxu0 0.0
    %2914 = vmatprep.subr.mxu0 0.0
    %2915 = vmatpush2.xpose.msra.mxu0 0.0
    %2916 = vmatprep.subr.mxu0 0.0
    %2917 = vmatpush2.xpose.msra.mxu0 0.0
    %2918 = vmatprep.subr.mxu0 0.0
    %2919 = vmatpush2.xpose.msra.mxu0 0.0
    %2920 = vmatprep.subr.mxu0 0.0
    %2921 = vmatpush2.xpose.msra.mxu0 0.0
    %2922 = vmatprep.subr.mxu0 0.0
    %2923 = vmatpush2.xpose.msra.mxu0 0.0
    %2924 = vmatprep.subr.mxu0 0.0
    %2925 = vmatpush2.xpose.msra.mxu0 0.0
    %2926 = vmatprep.subr.mxu0 0.0
    %2927 = vmatpush2.xpose.msra.mxu0 0.0
    %2928 = vmatprep.subr.mxu0 0.0
    %2929 = vmatpush2.xpose.msra.mxu0 0.0
    %2930 = vmatprep.subr.mxu0 0.0
    %2931 = vmatpush2.xpose.msra.mxu0 0.0
    %2932 = vmatprep.subr.mxu0 0.0
    %2933 = vmatpush2.xpose.msra.mxu0 0.0
    %2934 = vmatprep.subr.mxu0 0.0
    %2935 = vmatpush2.xpose.msra.mxu0 0.0
    %2936 = vmatprep.mubr.f32.mxu0 %v2481
    %2937 = vmatmul.mubr.f32.gmra.mxu0 %v2480
    %v2938 = vpop.f32.mrf.mxu0
    %v2939 = vadd.f32 %v2864, %v2938
    %v2940 = vpop.f32.mrf.mxu0
    %2941 = vmatprep.mubr.f32.mxu0 %v2497
    %2942 = vmatmul.mubr.f32.gmra.mxu0 %v2496
    %v2943 = vpop.f32.mrf.mxu0
    %v2944 = vadd.f32 %v2869, %v2943
    %v2945 = vpop.f32.mrf.mxu0
    %2946 = vdwg.mxu0
    %2947 = vmatprep.subr.mxu0 0.0
    %2948 = vmatpush1.xpose.msra.mxu0 0.0
    %2949 = vmatprep.subr.mxu0 0.0
    %2950 = vmatpush1.xpose.msra.mxu0 0.0
    %2951 = vmatprep.subr.mxu0 0.0
    %2952 = vmatpush1.xpose.msra.mxu0 0.0
    %2953 = vmatprep.subr.mxu0 0.0
    %2954 = vmatpush1.xpose.msra.mxu0 0.0
    %2955 = vmatprep.subr.mxu0 0.0
    %2956 = vmatpush1.xpose.msra.mxu0 0.0
    %2957 = vmatprep.subr.mxu0 0.0
    %2958 = vmatpush1.xpose.msra.mxu0 0.0
    %2959 = vmatprep.subr.mxu0 0.0
    %2960 = vmatpush1.xpose.msra.mxu0 0.0
    %2961 = vmatprep.subr.mxu0 0.0
    %2962 = vmatpush1.xpose.msra.mxu0 0.0
    %2963 = vmatprep.subr.mxu0 0.0
    %2964 = vmatpush1.xpose.msra.mxu0 0.0
    %2965 = vmatprep.subr.mxu0 0.0
    %2966 = vmatpush1.xpose.msra.mxu0 0.0
    %2967 = vmatprep.subr.mxu0 0.0
    %2968 = vmatpush1.xpose.msra.mxu0 0.0
    %2969 = vmatprep.subr.mxu0 0.0
    %2970 = vmatpush1.xpose.msra.mxu0 0.0
    %2971 = vmatprep.subr.mxu0 %v2563
    %2972 = vmatpush1.xpose.msra.mxu0 %v2562
    %2973 = vmatprep.subr.mxu0 %v2547
    %2974 = vmatpush1.xpose.msra.mxu0 %v2546
    %2975 = vmatprep.subr.mxu0 %v2531
    %2976 = vmatpush1.xpose.msra.mxu0 %v2530
    %2977 = vmatprep.subr.mxu0 %v2515
    %2978 = vmatpush1.xpose.msra.mxu0 %v2514
    %2979 = vmatprep.subr.mxu0 0.0
    %2980 = vmatpush2.xpose.msra.mxu0 0.0
    %2981 = vmatprep.subr.mxu0 0.0
    %2982 = vmatpush2.xpose.msra.mxu0 0.0
    %2983 = vmatprep.subr.mxu0 0.0
    %2984 = vmatpush2.xpose.msra.mxu0 0.0
    %2985 = vmatprep.subr.mxu0 0.0
    %2986 = vmatpush2.xpose.msra.mxu0 0.0
    %2987 = vmatprep.subr.mxu0 0.0
    %2988 = vmatpush2.xpose.msra.mxu0 0.0
    %2989 = vmatprep.subr.mxu0 0.0
    %2990 = vmatpush2.xpose.msra.mxu0 0.0
    %2991 = vmatprep.subr.mxu0 0.0
    %2992 = vmatpush2.xpose.msra.mxu0 0.0
    %2993 = vmatprep.subr.mxu0 0.0
    %2994 = vmatpush2.xpose.msra.mxu0 0.0
    %2995 = vmatprep.subr.mxu0 0.0
    %2996 = vmatpush2.xpose.msra.mxu0 0.0
    %2997 = vmatprep.subr.mxu0 0.0
    %2998 = vmatpush2.xpose.msra.mxu0 0.0
    %2999 = vmatprep.subr.mxu0 0.0
    %3000 = vmatpush2.xpose.msra.mxu0 0.0
    %3001 = vmatprep.subr.mxu0 0.0
    %3002 = vmatpush2.xpose.msra.mxu0 0.0
    %3003 = vmatprep.subr.mxu0 0.0
    %3004 = vmatpush2.xpose.msra.mxu0 0.0
    %3005 = vmatprep.subr.mxu0 0.0
    %3006 = vmatpush2.xpose.msra.mxu0 0.0
    %3007 = vmatprep.subr.mxu0 0.0
    %3008 = vmatpush2.xpose.msra.mxu0 0.0
    %3009 = vmatprep.subr.mxu0 0.0
    %3010 = vmatpush2.xpose.msra.mxu0 0.0
    %3011 = vmatprep.mubr.f32.mxu0 %v2483
    %3012 = vmatmul.mubr.f32.gmra.mxu0 %v2482
    %v3013 = vpop.f32.mrf.mxu0
    %v3014 = vadd.f32 %v2939, %v3013
    %v3015 = vpop.f32.mrf.mxu0
    %3016 = vmatprep.mubr.f32.mxu0 %v2499
    %3017 = vmatmul.mubr.f32.gmra.mxu0 %v2498
    %v3018 = vpop.f32.mrf.mxu0
    %v3019 = vadd.f32 %v2944, %v3018
    %v3020 = vpop.f32.mrf.mxu0
    %3021 = vdwg.mxu0
    %3022 = vmatprep.subr.mxu0 0.0
    %3023 = vmatpush1.xpose.msra.mxu0 0.0
    %3024 = vmatprep.subr.mxu0 0.0
    %3025 = vmatpush1.xpose.msra.mxu0 0.0
    %3026 = vmatprep.subr.mxu0 0.0
    %3027 = vmatpush1.xpose.msra.mxu0 0.0
    %3028 = vmatprep.subr.mxu0 0.0
    %3029 = vmatpush1.xpose.msra.mxu0 0.0
    %3030 = vmatprep.subr.mxu0 0.0
    %3031 = vmatpush1.xpose.msra.mxu0 0.0
    %3032 = vmatprep.subr.mxu0 0.0
    %3033 = vmatpush1.xpose.msra.mxu0 0.0
    %3034 = vmatprep.subr.mxu0 0.0
    %3035 = vmatpush1.xpose.msra.mxu0 0.0
    %3036 = vmatprep.subr.mxu0 0.0
    %3037 = vmatpush1.xpose.msra.mxu0 0.0
    %3038 = vmatprep.subr.mxu0 0.0
    %3039 = vmatpush1.xpose.msra.mxu0 0.0
    %3040 = vmatprep.subr.mxu0 0.0
    %3041 = vmatpush1.xpose.msra.mxu0 0.0
    %3042 = vmatprep.subr.mxu0 0.0
    %3043 = vmatpush1.xpose.msra.mxu0 0.0
    %3044 = vmatprep.subr.mxu0 0.0
    %3045 = vmatpush1.xpose.msra.mxu0 0.0
    %3046 = vmatprep.subr.mxu0 %v2565
    %3047 = vmatpush1.xpose.msra.mxu0 %v2564
    %3048 = vmatprep.subr.mxu0 %v2549
    %3049 = vmatpush1.xpose.msra.mxu0 %v2548
    %3050 = vmatprep.subr.mxu0 %v2533
    %3051 = vmatpush1.xpose.msra.mxu0 %v2532
    %3052 = vmatprep.subr.mxu0 %v2517
    %3053 = vmatpush1.xpose.msra.mxu0 %v2516
    %3054 = vmatprep.subr.mxu0 0.0
    %3055 = vmatpush2.xpose.msra.mxu0 0.0
    %3056 = vmatprep.subr.mxu0 0.0
    %3057 = vmatpush2.xpose.msra.mxu0 0.0
    %3058 = vmatprep.subr.mxu0 0.0
    %3059 = vmatpush2.xpose.msra.mxu0 0.0
    %3060 = vmatprep.subr.mxu0 0.0
    %3061 = vmatpush2.xpose.msra.mxu0 0.0
    %3062 = vmatprep.subr.mxu0 0.0
    %3063 = vmatpush2.xpose.msra.mxu0 0.0
    %3064 = vmatprep.subr.mxu0 0.0
    %3065 = vmatpush2.xpose.msra.mxu0 0.0
    %3066 = vmatprep.subr.mxu0 0.0
    %3067 = vmatpush2.xpose.msra.mxu0 0.0
    %3068 = vmatprep.subr.mxu0 0.0
    %3069 = vmatpush2.xpose.msra.mxu0 0.0
    %3070 = vmatprep.subr.mxu0 0.0
    %3071 = vmatpush2.xpose.msra.mxu0 0.0
    %3072 = vmatprep.subr.mxu0 0.0
    %3073 = vmatpush2.xpose.msra.mxu0 0.0
    %3074 = vmatprep.subr.mxu0 0.0
    %3075 = vmatpush2.xpose.msra.mxu0 0.0
    %3076 = vmatprep.subr.mxu0 0.0
    %3077 = vmatpush2.xpose.msra.mxu0 0.0
    %3078 = vmatprep.subr.mxu0 0.0
    %3079 = vmatpush2.xpose.msra.mxu0 0.0
    %3080 = vmatprep.subr.mxu0 0.0
    %3081 = vmatpush2.xpose.msra.mxu0 0.0
    %3082 = vmatprep.subr.mxu0 0.0
    %3083 = vmatpush2.xpose.msra.mxu0 0.0
    %3084 = vmatprep.subr.mxu0 0.0
    %3085 = vmatpush2.xpose.msra.mxu0 0.0
    %3086 = vmatprep.mubr.f32.mxu0 %v2485
    %3087 = vmatmul.mubr.f32.gmra.mxu0 %v2484
    %v3088 = vpop.f32.mrf.mxu0
    %v3089 = vadd.f32 %v3014, %v3088
    %v3090 = vpop.f32.mrf.mxu0
    %3091 = vmatprep.mubr.f32.mxu0 %v2501
    %3092 = vmatmul.mubr.f32.gmra.mxu0 %v2500
    %v3093 = vpop.f32.mrf.mxu0
    %v3094 = vadd.f32 %v3019, %v3093
    %v3095 = vpop.f32.mrf.mxu0
    %3096 = vdwg.mxu0
    %3097 = vmatprep.subr.mxu0 0.0
    %3098 = vmatpush1.xpose.msra.mxu0 0.0
    %3099 = vmatprep.subr.mxu0 0.0
    %3100 = vmatpush1.xpose.msra.mxu0 0.0
    %3101 = vmatprep.subr.mxu0 0.0
    %3102 = vmatpush1.xpose.msra.mxu0 0.0
    %3103 = vmatprep.subr.mxu0 0.0
    %3104 = vmatpush1.xpose.msra.mxu0 0.0
    %3105 = vmatprep.subr.mxu0 0.0
    %3106 = vmatpush1.xpose.msra.mxu0 0.0
    %3107 = vmatprep.subr.mxu0 0.0
    %3108 = vmatpush1.xpose.msra.mxu0 0.0
    %3109 = vmatprep.subr.mxu0 0.0
    %3110 = vmatpush1.xpose.msra.mxu0 0.0
    %3111 = vmatprep.subr.mxu0 0.0
    %3112 = vmatpush1.xpose.msra.mxu0 0.0
    %3113 = vmatprep.subr.mxu0 0.0
    %3114 = vmatpush1.xpose.msra.mxu0 0.0
    %3115 = vmatprep.subr.mxu0 0.0
    %3116 = vmatpush1.xpose.msra.mxu0 0.0
    %3117 = vmatprep.subr.mxu0 0.0
    %3118 = vmatpush1.xpose.msra.mxu0 0.0
    %3119 = vmatprep.subr.mxu0 0.0
    %3120 = vmatpush1.xpose.msra.mxu0 0.0
    %3121 = vmatprep.subr.mxu0 %v2567
    %3122 = vmatpush1.xpose.msra.mxu0 %v2566
    %3123 = vmatprep.subr.mxu0 %v2551
    %3124 = vmatpush1.xpose.msra.mxu0 %v2550
    %3125 = vmatprep.subr.mxu0 %v2535
    %3126 = vmatpush1.xpose.msra.mxu0 %v2534
    %3127 = vmatprep.subr.mxu0 %v2519
    %3128 = vmatpush1.xpose.msra.mxu0 %v2518
    %3129 = vmatprep.subr.mxu0 0.0
    %3130 = vmatpush2.xpose.msra.mxu0 0.0
    %3131 = vmatprep.subr.mxu0 0.0
    %3132 = vmatpush2.xpose.msra.mxu0 0.0
    %3133 = vmatprep.subr.mxu0 0.0
    %3134 = vmatpush2.xpose.msra.mxu0 0.0
    %3135 = vmatprep.subr.mxu0 0.0
    %3136 = vmatpush2.xpose.msra.mxu0 0.0
    %3137 = vmatprep.subr.mxu0 0.0
    %3138 = vmatpush2.xpose.msra.mxu0 0.0
    %3139 = vmatprep.subr.mxu0 0.0
    %3140 = vmatpush2.xpose.msra.mxu0 0.0
    %3141 = vmatprep.subr.mxu0 0.0
    %3142 = vmatpush2.xpose.msra.mxu0 0.0
    %3143 = vmatprep.subr.mxu0 0.0
    %3144 = vmatpush2.xpose.msra.mxu0 0.0
    %3145 = vmatprep.subr.mxu0 0.0
    %3146 = vmatpush2.xpose.msra.mxu0 0.0
    %3147 = vmatprep.subr.mxu0 0.0
    %3148 = vmatpush2.xpose.msra.mxu0 0.0
    %3149 = vmatprep.subr.mxu0 0.0
    %3150 = vmatpush2.xpose.msra.mxu0 0.0
    %3151 = vmatprep.subr.mxu0 0.0
    %3152 = vmatpush2.xpose.msra.mxu0 0.0
    %3153 = vmatprep.subr.mxu0 0.0
    %3154 = vmatpush2.xpose.msra.mxu0 0.0
    %3155 = vmatprep.subr.mxu0 0.0
    %3156 = vmatpush2.xpose.msra.mxu0 0.0
    %3157 = vmatprep.subr.mxu0 0.0
    %3158 = vmatpush2.xpose.msra.mxu0 0.0
    %3159 = vmatprep.subr.mxu0 0.0
    %3160 = vmatpush2.xpose.msra.mxu0 0.0
    %3161 = vmatprep.mubr.f32.mxu0 %v2487
    %3162 = vmatmul.mubr.f32.gmra.mxu0 %v2486
    %v3163 = vpop.f32.mrf.mxu0
    %v3164 = vadd.f32 %v3089, %v3163
    %v3165 = vpop.f32.mrf.mxu0
    %3166 = vmatprep.mubr.f32.mxu0 %v2503
    %3167 = vmatmul.mubr.f32.gmra.mxu0 %v2502
    %v3168 = vpop.f32.mrf.mxu0
    %v3169 = vadd.f32 %v3094, %v3168
    %v3170 = vpop.f32.mrf.mxu0
    %3171 = vdwg.mxu0
    %v3172 = vadd.f32 %v1700, %v3164
    %v3173 = vadd.f32 %v1701, %v3169
    %v3174 = vsel %vm130, %v3172, 0.0
    %3175 = vadd.xlane.f32.xlu0 %v3174
    %v3176 = vpop.xlane.xlu0 %3175
    %v3177 = vsel %vm130, %v3173, 0.0
    %3178 = vadd.xlane.f32.xlu0 %v3177
    %v3179 = vpop.xlane.xlu0 %3178
    %v3180 = vmul.f32 %v3176, %v1669
    %v3181 = vmul.f32 %v3179, %v1669
    %v3182 = vsub.f32 %v3172, %v3180
    %v3183 = vsub.f32 %v3173, %v3181
    %v3184 = vmul.f32 %v3182, %v3182
    %v3185 = vmul.f32 %v3183, %v3183
    %v3186 = vsel %vm130, %v3184, 0.0
    %3187 = vadd.xlane.f32.xlu0 %v3186
    %v3188 = vpop.xlane.xlu0 %3187
    %v3189 = vsel %vm130, %v3185, 0.0
    %3190 = vadd.xlane.f32.xlu0 %v3189
    %v3191 = vpop.xlane.xlu0 %3190
    %v3192 = vmul.f32 %v3188, %v1669
    %v3193 = vmul.f32 %v3191, %v1669
    %v3194 = vadd.f32 %v3192, 1e-05
    %v3195 = vadd.f32 %v3193, 1e-05
    %v3196 = vrsqrt.pop %v3194
    %v3197 = vrsqrt.pop %v3195
    %v3198 = vmul.f32 %v3182, %v3196
    %v3199 = vmul.f32 %v3183, %v3197
    %v3200 = vlaneseq
    %v3201 = vshrl.u32 %v3200, 7
    %v3202 = vsub.s32 4, %v3201
    %v3203 = vrot.slane %v212, %v3202
    %v3204 = vmul.f32 %v3198, %v3203
    %v3205 = vmul.f32 %v3199, %v3203
    %v3206 = vlaneseq
    %v3207 = vshrl.u32 %v3206, 7
    %v3208 = vsub.s32 5, %v3207
    %v3209 = vrot.slane %v212, %v3208
    %v3210 = vadd.f32 %v3204, %v3209
    %v3211 = vadd.f32 %v3205, %v3209
    %s3212 = scalar_lea.vmem [#allocation2], 32
    %v3213 = vld [vmem:[%s3212] sm:$0xff]
    %v3214 = vld [vmem:[%s3212 + $0x8] sm:$0xff]
    %v3215 = vld [vmem:[%s3212 + $0x10] sm:$0xff]
    %v3216 = vld [vmem:[%s3212 + $0x18] sm:$0xff]
    %s3217 = scalar_lea.vmem %s2, 1
    %v3218 = vld [vmem:[%s3217] sm:$0x1]
    %v3220 = vlaneseq
    %v3221 = vshrl.u32 %v3220, 7
    %v3222 = vsub.s32 0, %v3221
    %v3223 = vrot.slane %v3218, %v3222
    %v3226 = vsel %vm130, %v3210, 0
    %v3229 = vsel %vm130, %v3211, 0
    %3231 = vmatprep.subr.mxu0 0.0
    %3232 = vmatpush1.msra.mxu0 0.0
    %3233 = vmatprep.subr.mxu0 0.0
    %3234 = vmatpush1.msra.mxu0 0.0
    %3235 = vmatprep.subr.mxu0 0.0
    %3236 = vmatpush1.msra.mxu0 0.0
    %3237 = vmatprep.subr.mxu0 0.0
    %3238 = vmatpush1.msra.mxu0 0.0
    %3239 = vmatprep.subr.mxu0 0.0
    %3240 = vmatpush1.msra.mxu0 0.0
    %3241 = vmatprep.subr.mxu0 0.0
    %3242 = vmatpush1.msra.mxu0 0.0
    %3243 = vmatprep.subr.mxu0 0.0
    %3244 = vmatpush1.msra.mxu0 0.0
    %3245 = vmatprep.subr.mxu0 0.0
    %3246 = vmatpush1.msra.mxu0 0.0
    %3247 = vmatprep.subr.mxu0 0.0
    %3248 = vmatpush1.msra.mxu0 0.0
    %3249 = vmatprep.subr.mxu0 0.0
    %3250 = vmatpush1.msra.mxu0 0.0
    %3251 = vmatprep.subr.mxu0 0.0
    %3252 = vmatpush1.msra.mxu0 0.0
    %3253 = vmatprep.subr.mxu0 0.0
    %3254 = vmatpush1.msra.mxu0 0.0
    %3255 = vmatprep.subr.mxu0 0.0
    %3256 = vmatpush1.msra.mxu0 %v3216
    %3257 = vmatprep.subr.mxu0 0.0
    %3258 = vmatpush1.msra.mxu0 %v3215
    %3259 = vmatprep.subr.mxu0 0.0
    %3260 = vmatpush1.msra.mxu0 %v3214
    %3261 = vmatprep.subr.mxu0 0.0
    %3262 = vmatpush1.msra.mxu0 %v3213
    %3263 = vmatprep.subr.mxu0 0.0
    %3264 = vmatpush2.msra.mxu0 0.0
    %3265 = vmatprep.subr.mxu0 0.0
    %3266 = vmatpush2.msra.mxu0 0.0
    %3267 = vmatprep.subr.mxu0 0.0
    %3268 = vmatpush2.msra.mxu0 0.0
    %3269 = vmatprep.subr.mxu0 0.0
    %3270 = vmatpush2.msra.mxu0 0.0
    %3271 = vmatprep.subr.mxu0 0.0
    %3272 = vmatpush2.msra.mxu0 0.0
    %3273 = vmatprep.subr.mxu0 0.0
    %3274 = vmatpush2.msra.mxu0 0.0
    %3275 = vmatprep.subr.mxu0 0.0
    %3276 = vmatpush2.msra.mxu0 0.0
    %3277 = vmatprep.subr.mxu0 0.0
    %3278 = vmatpush2.msra.mxu0 0.0
    %3279 = vmatprep.subr.mxu0 0.0
    %3280 = vmatpush2.msra.mxu0 0.0
    %3281 = vmatprep.subr.mxu0 0.0
    %3282 = vmatpush2.msra.mxu0 0.0
    %3283 = vmatprep.subr.mxu0 0.0
    %3284 = vmatpush2.msra.mxu0 0.0
    %3285 = vmatprep.subr.mxu0 0.0
    %3286 = vmatpush2.msra.mxu0 0.0
    %3287 = vmatprep.subr.mxu0 0.0
    %3288 = vmatpush2.msra.mxu0 0.0
    %3289 = vmatprep.subr.mxu0 0.0
    %3290 = vmatpush2.msra.mxu0 0.0
    %3291 = vmatprep.subr.mxu0 0.0
    %3292 = vmatpush2.msra.mxu0 0.0
    %3293 = vmatprep.subr.mxu0 0.0
    %3294 = vmatpush2.msra.mxu0 0.0
    %3295 = vmatprep.mubr.f32.mxu0 0.0
    %3296 = vmatmul.mubr.f32.gmra.mxu0 %v3226
    %v3297 = vpop.f32.mrf.mxu0
    %v3298 = vadd.f32 %v3223, %v3297
    %v3299 = vpop.f32.mrf.mxu0
    %3300 = vmatprep.mubr.f32.mxu0 0.0
    %3301 = vmatmul.mubr.f32.gmra.mxu0 %v3229
    %v3302 = vpop.f32.mrf.mxu0
    %v3303 = vadd.f32 %v3223, %v3302
    %v3304 = vpop.f32.mrf.mxu0
    %3305 = vdwg.mxu0
    %s3306 = scalar_lea.vmem [#allocation6], 8
    %v3307 = vld [vmem:[%s3306] sm:$0xff]
    %3309 = vrot.lane.b32.xlu0 %v3298, 96
    %v3310 = vpop.permute.xlu0 %3309
    %v3311 = vsel %vm216, %v3298, 0
    %v3313 = vsel %vm216, %v3310, 0
    %3315 = vmatprep.subr.mxu0 0.0
    %3316 = vmatpush1.xpose.msra.mxu0 0.0
    %3317 = vmatprep.subr.mxu0 0.0
    %3318 = vmatpush1.xpose.msra.mxu0 0.0
    %3319 = vmatprep.subr.mxu0 0.0
    %3320 = vmatpush1.xpose.msra.mxu0 0.0
    %3321 = vmatprep.subr.mxu0 0.0
    %3322 = vmatpush1.xpose.msra.mxu0 0.0
    %3323 = vmatprep.subr.mxu0 0.0
    %3324 = vmatpush1.xpose.msra.mxu0 0.0
    %3325 = vmatprep.subr.mxu0 0.0
    %3326 = vmatpush1.xpose.msra.mxu0 0.0
    %3327 = vmatprep.subr.mxu0 0.0
    %3328 = vmatpush1.xpose.msra.mxu0 0.0
    %3329 = vmatprep.subr.mxu0 0.0
    %3330 = vmatpush1.xpose.msra.mxu0 0.0
    %3331 = vmatprep.subr.mxu0 0.0
    %3332 = vmatpush1.xpose.msra.mxu0 0.0
    %3333 = vmatprep.subr.mxu0 0.0
    %3334 = vmatpush1.xpose.msra.mxu0 0.0
    %3335 = vmatprep.subr.mxu0 0.0
    %3336 = vmatpush1.xpose.msra.mxu0 0.0
    %3337 = vmatprep.subr.mxu0 0.0
    %3338 = vmatpush1.xpose.msra.mxu0 0.0
    %3339 = vmatprep.subr.mxu0 0.0
    %3340 = vmatpush1.xpose.msra.mxu0 0.0
    %3341 = vmatprep.subr.mxu0 0.0
    %3342 = vmatpush1.xpose.msra.mxu0 0.0
    %3343 = vmatprep.subr.mxu0 0.0
    %3344 = vmatpush1.xpose.msra.mxu0 0.0
    %3345 = vmatprep.subr.mxu0 0.0
    %3346 = vmatpush1.xpose.msra.mxu0 %v3313
    %3347 = vmatprep.subr.mxu0 0.0
    %3348 = vmatpush2.xpose.msra.mxu0 0.0
    %3349 = vmatprep.subr.mxu0 0.0
    %3350 = vmatpush2.xpose.msra.mxu0 0.0
    %3351 = vmatprep.subr.mxu0 0.0
    %3352 = vmatpush2.xpose.msra.mxu0 0.0
    %3353 = vmatprep.subr.mxu0 0.0
    %3354 = vmatpush2.xpose.msra.mxu0 0.0
    %3355 = vmatprep.subr.mxu0 0.0
    %3356 = vmatpush2.xpose.msra.mxu0 0.0
    %3357 = vmatprep.subr.mxu0 0.0
    %3358 = vmatpush2.xpose.msra.mxu0 0.0
    %3359 = vmatprep.subr.mxu0 0.0
    %3360 = vmatpush2.xpose.msra.mxu0 0.0
    %3361 = vmatprep.subr.mxu0 0.0
    %3362 = vmatpush2.xpose.msra.mxu0 0.0
    %3363 = vmatprep.subr.mxu0 0.0
    %3364 = vmatpush2.xpose.msra.mxu0 0.0
    %3365 = vmatprep.subr.mxu0 0.0
    %3366 = vmatpush2.xpose.msra.mxu0 0.0
    %3367 = vmatprep.subr.mxu0 0.0
    %3368 = vmatpush2.xpose.msra.mxu0 0.0
    %3369 = vmatprep.subr.mxu0 0.0
    %3370 = vmatpush2.xpose.msra.mxu0 0.0
    %3371 = vmatprep.subr.mxu0 0.0
    %3372 = vmatpush2.xpose.msra.mxu0 0.0
    %3373 = vmatprep.subr.mxu0 0.0
    %3374 = vmatpush2.xpose.msra.mxu0 0.0
    %3375 = vmatprep.subr.mxu0 0.0
    %3376 = vmatpush2.xpose.msra.mxu0 0.0
    %3377 = vmatprep.subr.mxu0 0.0
    %3378 = vmatpush2.xpose.msra.mxu0 0.0
    %3379 = vmatprep.mubr.f32.mxu0 0.0
    %3380 = vmatmul.mubr.f32.gmra.mxu0 %v3311
    %v3381 = vpop.f32.mrf.mxu0
    %v3382 = vadd.f32 0.0, %v3381
    %v3383 = vpop.f32.mrf.mxu0
    %3384 = vdwg.mxu0
    %v3385 = vmul.f32 %v3382, 0.35355338
    %v3386 = vsel %vm216, %v3385, -inf
    %3387 = vmax.xlane.f32.xlu0 %v3386
    %v3388 = vpop.xlane.xlu0 %3387
    %v3389 = vsub.f32 %v3385, %v3388
    %v3390 = vmul.f32 %v3389, 1.442695
    %v3391 = vpow.pop %v3390
    %v3392 = vsel %vm216, %v3391, 0.0
    %3393 = vadd.xlane.f32.xlu0 %v3392
    %v3394 = vpop.xlane.xlu0 %3393
    %v3395 = vrcp.pop %v3394
    %v3396 = vmul.f32 %v3391, %v3395
    %3397 = vrot.lane.b32.xlu0 %v3298, 64
    %v3398 = vpop.permute.xlu0 %3397
    %v3401 = vsel %vm216, %v3396, 0
    %3403 = vmatprep.subr.mxu0 0.0
    %3404 = vmatpush1.msra.mxu0 0.0
    %3405 = vmatprep.subr.mxu0 0.0
    %3406 = vmatpush1.msra.mxu0 0.0
    %3407 = vmatprep.subr.mxu0 0.0
    %3408 = vmatpush1.msra.mxu0 0.0
    %3409 = vmatprep.subr.mxu0 0.0
    %3410 = vmatpush1.msra.mxu0 0.0
    %3411 = vmatprep.subr.mxu0 0.0
    %3412 = vmatpush1.msra.mxu0 0.0
    %3413 = vmatprep.subr.mxu0 0.0
    %3414 = vmatpush1.msra.mxu0 0.0
    %3415 = vmatprep.subr.mxu0 0.0
    %3416 = vmatpush1.msra.mxu0 0.0
    %3417 = vmatprep.subr.mxu0 0.0
    %3418 = vmatpush1.msra.mxu0 0.0
    %3419 = vmatprep.subr.mxu0 0.0
    %3420 = vmatpush1.msra.mxu0 0.0
    %3421 = vmatprep.subr.mxu0 0.0
    %3422 = vmatpush1.msra.mxu0 0.0
    %3423 = vmatprep.subr.mxu0 0.0
    %3424 = vmatpush1.msra.mxu0 0.0
    %3425 = vmatprep.subr.mxu0 0.0
    %3426 = vmatpush1.msra.mxu0 0.0
    %3427 = vmatprep.subr.mxu0 0.0
    %3428 = vmatpush1.msra.mxu0 0.0
    %3429 = vmatprep.subr.mxu0 0.0
    %3430 = vmatpush1.msra.mxu0 0.0
    %3431 = vmatprep.subr.mxu0 0.0
    %3432 = vmatpush1.msra.mxu0 0.0
    %3433 = vmatprep.subr.mxu0 0.0
    %3434 = vmatpush1.msra.mxu0 %v3398
    %3435 = vmatprep.subr.mxu0 0.0
    %3436 = vmatpush2.msra.mxu0 0.0
    %3437 = vmatprep.subr.mxu0 0.0
    %3438 = vmatpush2.msra.mxu0 0.0
    %3439 = vmatprep.subr.mxu0 0.0
    %3440 = vmatpush2.msra.mxu0 0.0
    %3441 = vmatprep.subr.mxu0 0.0
    %3442 = vmatpush2.msra.mxu0 0.0
    %3443 = vmatprep.subr.mxu0 0.0
    %3444 = vmatpush2.msra.mxu0 0.0
    %3445 = vmatprep.subr.mxu0 0.0
    %3446 = vmatpush2.msra.mxu0 0.0
    %3447 = vmatprep.subr.mxu0 0.0
    %3448 = vmatpush2.msra.mxu0 0.0
    %3449 = vmatprep.subr.mxu0 0.0
    %3450 = vmatpush2.msra.mxu0 0.0
    %3451 = vmatprep.subr.mxu0 0.0
    %3452 = vmatpush2.msra.mxu0 0.0
    %3453 = vmatprep.subr.mxu0 0.0
    %3454 = vmatpush2.msra.mxu0 0.0
    %3455 = vmatprep.subr.mxu0 0.0
    %3456 = vmatpush2.msra.mxu0 0.0
    %3457 = vmatprep.subr.mxu0 0.0
    %3458 = vmatpush2.msra.mxu0 0.0
    %3459 = vmatprep.subr.mxu0 0.0
    %3460 = vmatpush2.msra.mxu0 0.0
    %3461 = vmatprep.subr.mxu0 0.0
    %3462 = vmatpush2.msra.mxu0 0.0
    %3463 = vmatprep.subr.mxu0 0.0
    %3464 = vmatpush2.msra.mxu0 0.0
    %3465 = vmatprep.subr.mxu0 0.0
    %3466 = vmatpush2.msra.mxu0 0.0
    %3467 = vmatprep.mubr.f32.mxu0 0.0
    %3468 = vmatmul.mubr.f32.gmra.mxu0 %v3401
    %v3469 = vpop.f32.mrf.mxu0
    %v3470 = vadd.f32 0.0, %v3469
    %v3471 = vpop.f32.mrf.mxu0
    %3472 = vdwg.mxu0
    %3473 = vrot.lane.b32.xlu0 %v3298, 120
    %v3474 = vpop.permute.xlu0 %3473
    %3475 = vrot.lane.b32.xlu0 %v3298, 88
    %v3476 = vpop.permute.xlu0 %3475
    %v3477 = vsel %vm216, %v3474, 0
    %v3479 = vsel %vm216, %v3476, 0
    %3481 = vmatprep.subr.mxu0 0.0
    %3482 = vmatpush1.xpose.msra.mxu0 0.0
    %3483 = vmatprep.subr.mxu0 0.0
    %3484 = vmatpush1.xpose.msra.mxu0 0.0
    %3485 = vmatprep.subr.mxu0 0.0
    %3486 = vmatpush1.xpose.msra.mxu0 0.0
    %3487 = vmatprep.subr.mxu0 0.0
    %3488 = vmatpush1.xpose.msra.mxu0 0.0
    %3489 = vmatprep.subr.mxu0 0.0
    %3490 = vmatpush1.xpose.msra.mxu0 0.0
    %3491 = vmatprep.subr.mxu0 0.0
    %3492 = vmatpush1.xpose.msra.mxu0 0.0
    %3493 = vmatprep.subr.mxu0 0.0
    %3494 = vmatpush1.xpose.msra.mxu0 0.0
    %3495 = vmatprep.subr.mxu0 0.0
    %3496 = vmatpush1.xpose.msra.mxu0 0.0
    %3497 = vmatprep.subr.mxu0 0.0
    %3498 = vmatpush1.xpose.msra.mxu0 0.0
    %3499 = vmatprep.subr.mxu0 0.0
    %3500 = vmatpush1.xpose.msra.mxu0 0.0
    %3501 = vmatprep.subr.mxu0 0.0
    %3502 = vmatpush1.xpose.msra.mxu0 0.0
    %3503 = vmatprep.subr.mxu0 0.0
    %3504 = vmatpush1.xpose.msra.mxu0 0.0
    %3505 = vmatprep.subr.mxu0 0.0
    %3506 = vmatpush1.xpose.msra.mxu0 0.0
    %3507 = vmatprep.subr.mxu0 0.0
    %3508 = vmatpush1.xpose.msra.mxu0 0.0
    %3509 = vmatprep.subr.mxu0 0.0
    %3510 = vmatpush1.xpose.msra.mxu0 0.0
    %3511 = vmatprep.subr.mxu0 0.0
    %3512 = vmatpush1.xpose.msra.mxu0 %v3479
    %3513 = vmatprep.subr.mxu0 0.0
    %3514 = vmatpush2.xpose.msra.mxu0 0.0
    %3515 = vmatprep.subr.mxu0 0.0
    %3516 = vmatpush2.xpose.msra.mxu0 0.0
    %3517 = vmatprep.subr.mxu0 0.0
    %3518 = vmatpush2.xpose.msra.mxu0 0.0
    %3519 = vmatprep.subr.mxu0 0.0
    %3520 = vmatpush2.xpose.msra.mxu0 0.0
    %3521 = vmatprep.subr.mxu0 0.0
    %3522 = vmatpush2.xpose.msra.mxu0 0.0
    %3523 = vmatprep.subr.mxu0 0.0
    %3524 = vmatpush2.xpose.msra.mxu0 0.0
    %3525 = vmatprep.subr.mxu0 0.0
    %3526 = vmatpush2.xpose.msra.mxu0 0.0
    %3527 = vmatprep.subr.mxu0 0.0
    %3528 = vmatpush2.xpose.msra.mxu0 0.0
    %3529 = vmatprep.subr.mxu0 0.0
    %3530 = vmatpush2.xpose.msra.mxu0 0.0
    %3531 = vmatprep.subr.mxu0 0.0
    %3532 = vmatpush2.xpose.msra.mxu0 0.0
    %3533 = vmatprep.subr.mxu0 0.0
    %3534 = vmatpush2.xpose.msra.mxu0 0.0
    %3535 = vmatprep.subr.mxu0 0.0
    %3536 = vmatpush2.xpose.msra.mxu0 0.0
    %3537 = vmatprep.subr.mxu0 0.0
    %3538 = vmatpush2.xpose.msra.mxu0 0.0
    %3539 = vmatprep.subr.mxu0 0.0
    %3540 = vmatpush2.xpose.msra.mxu0 0.0
    %3541 = vmatprep.subr.mxu0 0.0
    %3542 = vmatpush2.xpose.msra.mxu0 0.0
    %3543 = vmatprep.subr.mxu0 0.0
    %3544 = vmatpush2.xpose.msra.mxu0 0.0
    %3545 = vmatprep.mubr.f32.mxu0 0.0
    %3546 = vmatmul.mubr.f32.gmra.mxu0 %v3477
    %v3547 = vpop.f32.mrf.mxu0
    %v3548 = vadd.f32 0.0, %v3547
    %v3549 = vpop.f32.mrf.mxu0
    %3550 = vdwg.mxu0
    %v3551 = vmul.f32 %v3548, 0.35355338
    %v3552 = vsel %vm216, %v3551, -inf
    %3553 = vmax.xlane.f32.xlu0 %v3552
    %v3554 = vpop.xlane.xlu0 %3553
    %v3555 = vsub.f32 %v3551, %v3554
    %v3556 = vmul.f32 %v3555, 1.442695
    %v3557 = vpow.pop %v3556
    %v3558 = vsel %vm216, %v3557, 0.0
    %3559 = vadd.xlane.f32.xlu0 %v3558
    %v3560 = vpop.xlane.xlu0 %3559
    %v3561 = vrcp.pop %v3560
    %v3562 = vmul.f32 %v3557, %v3561
    %3563 = vrot.lane.b32.xlu0 %v3298, 56
    %v3564 = vpop.permute.xlu0 %3563
    %v3567 = vsel %vm216, %v3562, 0
    %3569 = vmatprep.subr.mxu0 0.0
    %3570 = vmatpush1.msra.mxu0 0.0
    %3571 = vmatprep.subr.mxu0 0.0
    %3572 = vmatpush1.msra.mxu0 0.0
    %3573 = vmatprep.subr.mxu0 0.0
    %3574 = vmatpush1.msra.mxu0 0.0
    %3575 = vmatprep.subr.mxu0 0.0
    %3576 = vmatpush1.msra.mxu0 0.0
    %3577 = vmatprep.subr.mxu0 0.0
    %3578 = vmatpush1.msra.mxu0 0.0
    %3579 = vmatprep.subr.mxu0 0.0
    %3580 = vmatpush1.msra.mxu0 0.0
    %3581 = vmatprep.subr.mxu0 0.0
    %3582 = vmatpush1.msra.mxu0 0.0
    %3583 = vmatprep.subr.mxu0 0.0
    %3584 = vmatpush1.msra.mxu0 0.0
    %3585 = vmatprep.subr.mxu0 0.0
    %3586 = vmatpush1.msra.mxu0 0.0
    %3587 = vmatprep.subr.mxu0 0.0
    %3588 = vmatpush1.msra.mxu0 0.0
    %3589 = vmatprep.subr.mxu0 0.0
    %3590 = vmatpush1.msra.mxu0 0.0
    %3591 = vmatprep.subr.mxu0 0.0
    %3592 = vmatpush1.msra.mxu0 0.0
    %3593 = vmatprep.subr.mxu0 0.0
    %3594 = vmatpush1.msra.mxu0 0.0
    %3595 = vmatprep.subr.mxu0 0.0
    %3596 = vmatpush1.msra.mxu0 0.0
    %3597 = vmatprep.subr.mxu0 0.0
    %3598 = vmatpush1.msra.mxu0 0.0
    %3599 = vmatprep.subr.mxu0 0.0
    %3600 = vmatpush1.msra.mxu0 %v3564
    %3601 = vmatprep.subr.mxu0 0.0
    %3602 = vmatpush2.msra.mxu0 0.0
    %3603 = vmatprep.subr.mxu0 0.0
    %3604 = vmatpush2.msra.mxu0 0.0
    %3605 = vmatprep.subr.mxu0 0.0
    %3606 = vmatpush2.msra.mxu0 0.0
    %3607 = vmatprep.subr.mxu0 0.0
    %3608 = vmatpush2.msra.mxu0 0.0
    %3609 = vmatprep.subr.mxu0 0.0
    %3610 = vmatpush2.msra.mxu0 0.0
    %3611 = vmatprep.subr.mxu0 0.0
    %3612 = vmatpush2.msra.mxu0 0.0
    %3613 = vmatprep.subr.mxu0 0.0
    %3614 = vmatpush2.msra.mxu0 0.0
    %3615 = vmatprep.subr.mxu0 0.0
    %3616 = vmatpush2.msra.mxu0 0.0
    %3617 = vmatprep.subr.mxu0 0.0
    %3618 = vmatpush2.msra.mxu0 0.0
    %3619 = vmatprep.subr.mxu0 0.0
    %3620 = vmatpush2.msra.mxu0 0.0
    %3621 = vmatprep.subr.mxu0 0.0
    %3622 = vmatpush2.msra.mxu0 0.0
    %3623 = vmatprep.subr.mxu0 0.0
    %3624 = vmatpush2.msra.mxu0 0.0
    %3625 = vmatprep.subr.mxu0 0.0
    %3626 = vmatpush2.msra.mxu0 0.0
    %3627 = vmatprep.subr.mxu0 0.0
    %3628 = vmatpush2.msra.mxu0 0.0
    %3629 = vmatprep.subr.mxu0 0.0
    %3630 = vmatpush2.msra.mxu0 0.0
    %3631 = vmatprep.subr.mxu0 0.0
    %3632 = vmatpush2.msra.mxu0 0.0
    %3633 = vmatprep.mubr.f32.mxu0 0.0
    %3634 = vmatmul.mubr.f32.gmra.mxu0 %v3567
    %v3635 = vpop.f32.mrf.mxu0
    %v3636 = vadd.f32 0.0, %v3635
    %v3637 = vpop.f32.mrf.mxu0
    %3638 = vdwg.mxu0
    %3639 = vrot.lane.b32.xlu0 %v3298, 112
    %v3640 = vpop.permute.xlu0 %3639
    %3641 = vrot.lane.b32.xlu0 %v3298, 80
    %v3642 = vpop.permute.xlu0 %3641
    %v3643 = vsel %vm216, %v3640, 0
    %v3645 = vsel %vm216, %v3642, 0
    %3647 = vmatprep.subr.mxu0 0.0
    %3648 = vmatpush1.xpose.msra.mxu0 0.0
    %3649 = vmatprep.subr.mxu0 0.0
    %3650 = vmatpush1.xpose.msra.mxu0 0.0
    %3651 = vmatprep.subr.mxu0 0.0
    %3652 = vmatpush1.xpose.msra.mxu0 0.0
    %3653 = vmatprep.subr.mxu0 0.0
    %3654 = vmatpush1.xpose.msra.mxu0 0.0
    %3655 = vmatprep.subr.mxu0 0.0
    %3656 = vmatpush1.xpose.msra.mxu0 0.0
    %3657 = vmatprep.subr.mxu0 0.0
    %3658 = vmatpush1.xpose.msra.mxu0 0.0
    %3659 = vmatprep.subr.mxu0 0.0
    %3660 = vmatpush1.xpose.msra.mxu0 0.0
    %3661 = vmatprep.subr.mxu0 0.0
    %3662 = vmatpush1.xpose.msra.mxu0 0.0
    %3663 = vmatprep.subr.mxu0 0.0
    %3664 = vmatpush1.xpose.msra.mxu0 0.0
    %3665 = vmatprep.subr.mxu0 0.0
    %3666 = vmatpush1.xpose.msra.mxu0 0.0
    %3667 = vmatprep.subr.mxu0 0.0
    %3668 = vmatpush1.xpose.msra.mxu0 0.0
    %3669 = vmatprep.subr.mxu0 0.0
    %3670 = vmatpush1.xpose.msra.mxu0 0.0
    %3671 = vmatprep.subr.mxu0 0.0
    %3672 = vmatpush1.xpose.msra.mxu0 0.0
    %3673 = vmatprep.subr.mxu0 0.0
    %3674 = vmatpush1.xpose.msra.mxu0 0.0
    %3675 = vmatprep.subr.mxu0 0.0
    %3676 = vmatpush1.xpose.msra.mxu0 0.0
    %3677 = vmatprep.subr.mxu0 0.0
    %3678 = vmatpush1.xpose.msra.mxu0 %v3645
    %3679 = vmatprep.subr.mxu0 0.0
    %3680 = vmatpush2.xpose.msra.mxu0 0.0
    %3681 = vmatprep.subr.mxu0 0.0
    %3682 = vmatpush2.xpose.msra.mxu0 0.0
    %3683 = vmatprep.subr.mxu0 0.0
    %3684 = vmatpush2.xpose.msra.mxu0 0.0
    %3685 = vmatprep.subr.mxu0 0.0
    %3686 = vmatpush2.xpose.msra.mxu0 0.0
    %3687 = vmatprep.subr.mxu0 0.0
    %3688 = vmatpush2.xpose.msra.mxu0 0.0
    %3689 = vmatprep.subr.mxu0 0.0
    %3690 = vmatpush2.xpose.msra.mxu0 0.0
    %3691 = vmatprep.subr.mxu0 0.0
    %3692 = vmatpush2.xpose.msra.mxu0 0.0
    %3693 = vmatprep.subr.mxu0 0.0
    %3694 = vmatpush2.xpose.msra.mxu0 0.0
    %3695 = vmatprep.subr.mxu0 0.0
    %3696 = vmatpush2.xpose.msra.mxu0 0.0
    %3697 = vmatprep.subr.mxu0 0.0
    %3698 = vmatpush2.xpose.msra.mxu0 0.0
    %3699 = vmatprep.subr.mxu0 0.0
    %3700 = vmatpush2.xpose.msra.mxu0 0.0
    %3701 = vmatprep.subr.mxu0 0.0
    %3702 = vmatpush2.xpose.msra.mxu0 0.0
    %3703 = vmatprep.subr.mxu0 0.0
    %3704 = vmatpush2.xpose.msra.mxu0 0.0
    %3705 = vmatprep.subr.mxu0 0.0
    %3706 = vmatpush2.xpose.msra.mxu0 0.0
    %3707 = vmatprep.subr.mxu0 0.0
    %3708 = vmatpush2.xpose.msra.mxu0 0.0
    %3709 = vmatprep.subr.mxu0 0.0
    %3710 = vmatpush2.xpose.msra.mxu0 0.0
    %3711 = vmatprep.mubr.f32.mxu0 0.0
    %3712 = vmatmul.mubr.f32.gmra.mxu0 %v3643
    %v3713 = vpop.f32.mrf.mxu0
    %v3714 = vadd.f32 0.0, %v3713
    %v3715 = vpop.f32.mrf.mxu0
    %3716 = vdwg.mxu0
    %v3717 = vmul.f32 %v3714, 0.35355338
    %v3718 = vsel %vm216, %v3717, -inf
    %3719 = vmax.xlane.f32.xlu0 %v3718
    %v3720 = vpop.xlane.xlu0 %3719
    %v3721 = vsub.f32 %v3717, %v3720
    %v3722 = vmul.f32 %v3721, 1.442695
    %v3723 = vpow.pop %v3722
    %v3724 = vsel %vm216, %v3723, 0.0
    %3725 = vadd.xlane.f32.xlu0 %v3724
    %v3726 = vpop.xlane.xlu0 %3725
    %v3727 = vrcp.pop %v3726
    %v3728 = vmul.f32 %v3723, %v3727
    %3729 = vrot.lane.b32.xlu0 %v3298, 48
    %v3730 = vpop.permute.xlu0 %3729
    %v3733 = vsel %vm216, %v3728, 0
    %3735 = vmatprep.subr.mxu0 0.0
    %3736 = vmatpush1.msra.mxu0 0.0
    %3737 = vmatprep.subr.mxu0 0.0
    %3738 = vmatpush1.msra.mxu0 0.0
    %3739 = vmatprep.subr.mxu0 0.0
    %3740 = vmatpush1.msra.mxu0 0.0
    %3741 = vmatprep.subr.mxu0 0.0
    %3742 = vmatpush1.msra.mxu0 0.0
    %3743 = vmatprep.subr.mxu0 0.0
    %3744 = vmatpush1.msra.mxu0 0.0
    %3745 = vmatprep.subr.mxu0 0.0
    %3746 = vmatpush1.msra.mxu0 0.0
    %3747 = vmatprep.subr.mxu0 0.0
    %3748 = vmatpush1.msra.mxu0 0.0
    %3749 = vmatprep.subr.mxu0 0.0
    %3750 = vmatpush1.msra.mxu0 0.0
    %3751 = vmatprep.subr.mxu0 0.0
    %3752 = vmatpush1.msra.mxu0 0.0
    %3753 = vmatprep.subr.mxu0 0.0
    %3754 = vmatpush1.msra.mxu0 0.0
    %3755 = vmatprep.subr.mxu0 0.0
    %3756 = vmatpush1.msra.mxu0 0.0
    %3757 = vmatprep.subr.mxu0 0.0
    %3758 = vmatpush1.msra.mxu0 0.0
    %3759 = vmatprep.subr.mxu0 0.0
    %3760 = vmatpush1.msra.mxu0 0.0
    %3761 = vmatprep.subr.mxu0 0.0
    %3762 = vmatpush1.msra.mxu0 0.0
    %3763 = vmatprep.subr.mxu0 0.0
    %3764 = vmatpush1.msra.mxu0 0.0
    %3765 = vmatprep.subr.mxu0 0.0
    %3766 = vmatpush1.msra.mxu0 %v3730
    %3767 = vmatprep.subr.mxu0 0.0
    %3768 = vmatpush2.msra.mxu0 0.0
    %3769 = vmatprep.subr.mxu0 0.0
    %3770 = vmatpush2.msra.mxu0 0.0
    %3771 = vmatprep.subr.mxu0 0.0
    %3772 = vmatpush2.msra.mxu0 0.0
    %3773 = vmatprep.subr.mxu0 0.0
    %3774 = vmatpush2.msra.mxu0 0.0
    %3775 = vmatprep.subr.mxu0 0.0
    %3776 = vmatpush2.msra.mxu0 0.0
    %3777 = vmatprep.subr.mxu0 0.0
    %3778 = vmatpush2.msra.mxu0 0.0
    %3779 = vmatprep.subr.mxu0 0.0
    %3780 = vmatpush2.msra.mxu0 0.0
    %3781 = vmatprep.subr.mxu0 0.0
    %3782 = vmatpush2.msra.mxu0 0.0
    %3783 = vmatprep.subr.mxu0 0.0
    %3784 = vmatpush2.msra.mxu0 0.0
    %3785 = vmatprep.subr.mxu0 0.0
    %3786 = vmatpush2.msra.mxu0 0.0
    %3787 = vmatprep.subr.mxu0 0.0
    %3788 = vmatpush2.msra.mxu0 0.0
    %3789 = vmatprep.subr.mxu0 0.0
    %3790 = vmatpush2.msra.mxu0 0.0
    %3791 = vmatprep.subr.mxu0 0.0
    %3792 = vmatpush2.msra.mxu0 0.0
    %3793 = vmatprep.subr.mxu0 0.0
    %3794 = vmatpush2.msra.mxu0 0.0
    %3795 = vmatprep.subr.mxu0 0.0
    %3796 = vmatpush2.msra.mxu0 0.0
    %3797 = vmatprep.subr.mxu0 0.0
    %3798 = vmatpush2.msra.mxu0 0.0
    %3799 = vmatprep.mubr.f32.mxu0 0.0
    %3800 = vmatmul.mubr.f32.gmra.mxu0 %v3733
    %v3801 = vpop.f32.mrf.mxu0
    %v3802 = vadd.f32 0.0, %v3801
    %v3803 = vpop.f32.mrf.mxu0
    %3804 = vdwg.mxu0
    %3805 = vrot.lane.b32.xlu0 %v3298, 104
    %v3806 = vpop.permute.xlu0 %3805
    %3807 = vrot.lane.b32.xlu0 %v3298, 72
    %v3808 = vpop.permute.xlu0 %3807
    %v3809 = vsel %vm216, %v3806, 0
    %v3811 = vsel %vm216, %v3808, 0
    %3813 = vmatprep.subr.mxu0 0.0
    %3814 = vmatpush1.xpose.msra.mxu0 0.0
    %3815 = vmatprep.subr.mxu0 0.0
    %3816 = vmatpush1.xpose.msra.mxu0 0.0
    %3817 = vmatprep.subr.mxu0 0.0
    %3818 = vmatpush1.xpose.msra.mxu0 0.0
    %3819 = vmatprep.subr.mxu0 0.0
    %3820 = vmatpush1.xpose.msra.mxu0 0.0
    %3821 = vmatprep.subr.mxu0 0.0
    %3822 = vmatpush1.xpose.msra.mxu0 0.0
    %3823 = vmatprep.subr.mxu0 0.0
    %3824 = vmatpush1.xpose.msra.mxu0 0.0
    %3825 = vmatprep.subr.mxu0 0.0
    %3826 = vmatpush1.xpose.msra.mxu0 0.0
    %3827 = vmatprep.subr.mxu0 0.0
    %3828 = vmatpush1.xpose.msra.mxu0 0.0
    %3829 = vmatprep.subr.mxu0 0.0
    %3830 = vmatpush1.xpose.msra.mxu0 0.0
    %3831 = vmatprep.subr.mxu0 0.0
    %3832 = vmatpush1.xpose.msra.mxu0 0.0
    %3833 = vmatprep.subr.mxu0 0.0
    %3834 = vmatpush1.xpose.msra.mxu0 0.0
    %3835 = vmatprep.subr.mxu0 0.0
    %3836 = vmatpush1.xpose.msra.mxu0 0.0
    %3837 = vmatprep.subr.mxu0 0.0
    %3838 = vmatpush1.xpose.msra.mxu0 0.0
    %3839 = vmatprep.subr.mxu0 0.0
    %3840 = vmatpush1.xpose.msra.mxu0 0.0
    %3841 = vmatprep.subr.mxu0 0.0
    %3842 = vmatpush1.xpose.msra.mxu0 0.0
    %3843 = vmatprep.subr.mxu0 0.0
    %3844 = vmatpush1.xpose.msra.mxu0 %v3811
    %3845 = vmatprep.subr.mxu0 0.0
    %3846 = vmatpush2.xpose.msra.mxu0 0.0
    %3847 = vmatprep.subr.mxu0 0.0
    %3848 = vmatpush2.xpose.msra.mxu0 0.0
    %3849 = vmatprep.subr.mxu0 0.0
    %3850 = vmatpush2.xpose.msra.mxu0 0.0
    %3851 = vmatprep.subr.mxu0 0.0
    %3852 = vmatpush2.xpose.msra.mxu0 0.0
    %3853 = vmatprep.subr.mxu0 0.0
    %3854 = vmatpush2.xpose.msra.mxu0 0.0
    %3855 = vmatprep.subr.mxu0 0.0
    %3856 = vmatpush2.xpose.msra.mxu0 0.0
    %3857 = vmatprep.subr.mxu0 0.0
    %3858 = vmatpush2.xpose.msra.mxu0 0.0
    %3859 = vmatprep.subr.mxu0 0.0
    %3860 = vmatpush2.xpose.msra.mxu0 0.0
    %3861 = vmatprep.subr.mxu0 0.0
    %3862 = vmatpush2.xpose.msra.mxu0 0.0
    %3863 = vmatprep.subr.mxu0 0.0
    %3864 = vmatpush2.xpose.msra.mxu0 0.0
    %3865 = vmatprep.subr.mxu0 0.0
    %3866 = vmatpush2.xpose.msra.mxu0 0.0
    %3867 = vmatprep.subr.mxu0 0.0
    %3868 = vmatpush2.xpose.msra.mxu0 0.0
    %3869 = vmatprep.subr.mxu0 0.0
    %3870 = vmatpush2.xpose.msra.mxu0 0.0
    %3871 = vmatprep.subr.mxu0 0.0
    %3872 = vmatpush2.xpose.msra.mxu0 0.0
    %3873 = vmatprep.subr.mxu0 0.0
    %3874 = vmatpush2.xpose.msra.mxu0 0.0
    %3875 = vmatprep.subr.mxu0 0.0
    %3876 = vmatpush2.xpose.msra.mxu0 0.0
    %3877 = vmatprep.mubr.f32.mxu0 0.0
    %3878 = vmatmul.mubr.f32.gmra.mxu0 %v3809
    %v3879 = vpop.f32.mrf.mxu0
    %v3880 = vadd.f32 0.0, %v3879
    %v3881 = vpop.f32.mrf.mxu0
    %3882 = vdwg.mxu0
    %v3883 = vmul.f32 %v3880, 0.35355338
    %v3884 = vsel %vm216, %v3883, -inf
    %3885 = vmax.xlane.f32.xlu0 %v3884
    %v3886 = vpop.xlane.xlu0 %3885
    %v3887 = vsub.f32 %v3883, %v3886
    %v3888 = vmul.f32 %v3887, 1.442695
    %v3889 = vpow.pop %v3888
    %v3890 = vsel %vm216, %v3889, 0.0
    %3891 = vadd.xlane.f32.xlu0 %v3890
    %v3892 = vpop.xlane.xlu0 %3891
    %v3893 = vrcp.pop %v3892
    %v3894 = vmul.f32 %v3889, %v3893
    %3895 = vrot.lane.b32.xlu0 %v3298, 40
    %v3896 = vpop.permute.xlu0 %3895
    %v3899 = vsel %vm216, %v3894, 0
    %3901 = vmatprep.subr.mxu0 0.0
    %3902 = vmatpush1.msra.mxu0 0.0
    %3903 = vmatprep.subr.mxu0 0.0
    %3904 = vmatpush1.msra.mxu0 0.0
    %3905 = vmatprep.subr.mxu0 0.0
    %3906 = vmatpush1.msra.mxu0 0.0
    %3907 = vmatprep.subr.mxu0 0.0
    %3908 = vmatpush1.msra.mxu0 0.0
    %3909 = vmatprep.subr.mxu0 0.0
    %3910 = vmatpush1.msra.mxu0 0.0
    %3911 = vmatprep.subr.mxu0 0.0
    %3912 = vmatpush1.msra.mxu0 0.0
    %3913 = vmatprep.subr.mxu0 0.0
    %3914 = vmatpush1.msra.mxu0 0.0
    %3915 = vmatprep.subr.mxu0 0.0
    %3916 = vmatpush1.msra.mxu0 0.0
    %3917 = vmatprep.subr.mxu0 0.0
    %3918 = vmatpush1.msra.mxu0 0.0
    %3919 = vmatprep.subr.mxu0 0.0
    %3920 = vmatpush1.msra.mxu0 0.0
    %3921 = vmatprep.subr.mxu0 0.0
    %3922 = vmatpush1.msra.mxu0 0.0
    %3923 = vmatprep.subr.mxu0 0.0
    %3924 = vmatpush1.msra.mxu0 0.0
    %3925 = vmatprep.subr.mxu0 0.0
    %3926 = vmatpush1.msra.mxu0 0.0
    %3927 = vmatprep.subr.mxu0 0.0
    %3928 = vmatpush1.msra.mxu0 0.0
    %3929 = vmatprep.subr.mxu0 0.0
    %3930 = vmatpush1.msra.mxu0 0.0
    %3931 = vmatprep.subr.mxu0 0.0
    %3932 = vmatpush1.msra.mxu0 %v3896
    %3933 = vmatprep.subr.mxu0 0.0
    %3934 = vmatpush2.msra.mxu0 0.0
    %3935 = vmatprep.subr.mxu0 0.0
    %3936 = vmatpush2.msra.mxu0 0.0
    %3937 = vmatprep.subr.mxu0 0.0
    %3938 = vmatpush2.msra.mxu0 0.0
    %3939 = vmatprep.subr.mxu0 0.0
    %3940 = vmatpush2.msra.mxu0 0.0
    %3941 = vmatprep.subr.mxu0 0.0
    %3942 = vmatpush2.msra.mxu0 0.0
    %3943 = vmatprep.subr.mxu0 0.0
    %3944 = vmatpush2.msra.mxu0 0.0
    %3945 = vmatprep.subr.mxu0 0.0
    %3946 = vmatpush2.msra.mxu0 0.0
    %3947 = vmatprep.subr.mxu0 0.0
    %3948 = vmatpush2.msra.mxu0 0.0
    %3949 = vmatprep.subr.mxu0 0.0
    %3950 = vmatpush2.msra.mxu0 0.0
    %3951 = vmatprep.subr.mxu0 0.0
    %3952 = vmatpush2.msra.mxu0 0.0
    %3953 = vmatprep.subr.mxu0 0.0
    %3954 = vmatpush2.msra.mxu0 0.0
    %3955 = vmatprep.subr.mxu0 0.0
    %3956 = vmatpush2.msra.mxu0 0.0
    %3957 = vmatprep.subr.mxu0 0.0
    %3958 = vmatpush2.msra.mxu0 0.0
    %3959 = vmatprep.subr.mxu0 0.0
    %3960 = vmatpush2.msra.mxu0 0.0
    %3961 = vmatprep.subr.mxu0 0.0
    %3962 = vmatpush2.msra.mxu0 0.0
    %3963 = vmatprep.subr.mxu0 0.0
    %3964 = vmatpush2.msra.mxu0 0.0
    %3965 = vmatprep.mubr.f32.mxu0 0.0
    %3966 = vmatmul.mubr.f32.gmra.mxu0 %v3899
    %v3967 = vpop.f32.mrf.mxu0
    %v3968 = vadd.f32 0.0, %v3967
    %v3969 = vpop.f32.mrf.mxu0
    %3970 = vdwg.mxu0
    %3972 = vrot.lane.b32.xlu0 %v3636, 8
    %v3973 = vpop.permute.xlu0 %3972
    %3976 = vrot.lane.b32.xlu0 %v3802, 16
    %v3977 = vpop.permute.xlu0 %3976
    %3980 = vrot.lane.b32.xlu0 %v3968, 24
    %v3981 = vpop.permute.xlu0 %3980
    %v3983 = vsel %vm216, %v3470, %v3973
    %v3984 = vsel %vm890, %v3983, %v3977
    %v3985 = vsel %vm892, %v3984, %v3981
    %3987 = vrot.lane.b32.xlu0 %v3303, 96
    %v3988 = vpop.permute.xlu0 %3987
    %v3989 = vsel %vm216, %v3303, 0
    %v3991 = vsel %vm216, %v3988, 0
    %3993 = vmatprep.subr.mxu0 0.0
    %3994 = vmatpush1.xpose.msra.mxu0 0.0
    %3995 = vmatprep.subr.mxu0 0.0
    %3996 = vmatpush1.xpose.msra.mxu0 0.0
    %3997 = vmatprep.subr.mxu0 0.0
    %3998 = vmatpush1.xpose.msra.mxu0 0.0
    %3999 = vmatprep.subr.mxu0 0.0
    %4000 = vmatpush1.xpose.msra.mxu0 0.0
    %4001 = vmatprep.subr.mxu0 0.0
    %4002 = vmatpush1.xpose.msra.mxu0 0.0
    %4003 = vmatprep.subr.mxu0 0.0
    %4004 = vmatpush1.xpose.msra.mxu0 0.0
    %4005 = vmatprep.subr.mxu0 0.0
    %4006 = vmatpush1.xpose.msra.mxu0 0.0
    %4007 = vmatprep.subr.mxu0 0.0
    %4008 = vmatpush1.xpose.msra.mxu0 0.0
    %4009 = vmatprep.subr.mxu0 0.0
    %4010 = vmatpush1.xpose.msra.mxu0 0.0
    %4011 = vmatprep.subr.mxu0 0.0
    %4012 = vmatpush1.xpose.msra.mxu0 0.0
    %4013 = vmatprep.subr.mxu0 0.0
    %4014 = vmatpush1.xpose.msra.mxu0 0.0
    %4015 = vmatprep.subr.mxu0 0.0
    %4016 = vmatpush1.xpose.msra.mxu0 0.0
    %4017 = vmatprep.subr.mxu0 0.0
    %4018 = vmatpush1.xpose.msra.mxu0 0.0
    %4019 = vmatprep.subr.mxu0 0.0
    %4020 = vmatpush1.xpose.msra.mxu0 0.0
    %4021 = vmatprep.subr.mxu0 0.0
    %4022 = vmatpush1.xpose.msra.mxu0 0.0
    %4023 = vmatprep.subr.mxu0 0.0
    %4024 = vmatpush1.xpose.msra.mxu0 %v3991
    %4025 = vmatprep.subr.mxu0 0.0
    %4026 = vmatpush2.xpose.msra.mxu0 0.0
    %4027 = vmatprep.subr.mxu0 0.0
    %4028 = vmatpush2.xpose.msra.mxu0 0.0
    %4029 = vmatprep.subr.mxu0 0.0
    %4030 = vmatpush2.xpose.msra.mxu0 0.0
    %4031 = vmatprep.subr.mxu0 0.0
    %4032 = vmatpush2.xpose.msra.mxu0 0.0
    %4033 = vmatprep.subr.mxu0 0.0
    %4034 = vmatpush2.xpose.msra.mxu0 0.0
    %4035 = vmatprep.subr.mxu0 0.0
    %4036 = vmatpush2.xpose.msra.mxu0 0.0
    %4037 = vmatprep.subr.mxu0 0.0
    %4038 = vmatpush2.xpose.msra.mxu0 0.0
    %4039 = vmatprep.subr.mxu0 0.0
    %4040 = vmatpush2.xpose.msra.mxu0 0.0
    %4041 = vmatprep.subr.mxu0 0.0
    %4042 = vmatpush2.xpose.msra.mxu0 0.0
    %4043 = vmatprep.subr.mxu0 0.0
    %4044 = vmatpush2.xpose.msra.mxu0 0.0
    %4045 = vmatprep.subr.mxu0 0.0
    %4046 = vmatpush2.xpose.msra.mxu0 0.0
    %4047 = vmatprep.subr.mxu0 0.0
    %4048 = vmatpush2.xpose.msra.mxu0 0.0
    %4049 = vmatprep.subr.mxu0 0.0
    %4050 = vmatpush2.xpose.msra.mxu0 0.0
    %4051 = vmatprep.subr.mxu0 0.0
    %4052 = vmatpush2.xpose.msra.mxu0 0.0
    %4053 = vmatprep.subr.mxu0 0.0
    %4054 = vmatpush2.xpose.msra.mxu0 0.0
    %4055 = vmatprep.subr.mxu0 0.0
    %4056 = vmatpush2.xpose.msra.mxu0 0.0
    %4057 = vmatprep.mubr.f32.mxu0 0.0
    %4058 = vmatmul.mubr.f32.gmra.mxu0 %v3989
    %v4059 = vpop.f32.mrf.mxu0
    %v4060 = vadd.f32 0.0, %v4059
    %v4061 = vpop.f32.mrf.mxu0
    %4062 = vdwg.mxu0
    %v4063 = vmul.f32 %v4060, 0.35355338
    %v4064 = vsel %vm216, %v4063, -inf
    %4065 = vmax.xlane.f32.xlu0 %v4064
    %v4066 = vpop.xlane.xlu0 %4065
    %v4067 = vsub.f32 %v4063, %v4066
    %v4068 = vmul.f32 %v4067, 1.442695
    %v4069 = vpow.pop %v4068
    %v4070 = vsel %vm216, %v4069, 0.0
    %4071 = vadd.xlane.f32.xlu0 %v4070
    %v4072 = vpop.xlane.xlu0 %4071
    %v4073 = vrcp.pop %v4072
    %v4074 = vmul.f32 %v4069, %v4073
    %4075 = vrot.lane.b32.xlu0 %v3303, 64
    %v4076 = vpop.permute.xlu0 %4075
    %v4079 = vsel %vm216, %v4074, 0
    %4081 = vmatprep.subr.mxu0 0.0
    %4082 = vmatpush1.msra.mxu0 0.0
    %4083 = vmatprep.subr.mxu0 0.0
    %4084 = vmatpush1.msra.mxu0 0.0
    %4085 = vmatprep.subr.mxu0 0.0
    %4086 = vmatpush1.msra.mxu0 0.0
    %4087 = vmatprep.subr.mxu0 0.0
    %4088 = vmatpush1.msra.mxu0 0.0
    %4089 = vmatprep.subr.mxu0 0.0
    %4090 = vmatpush1.msra.mxu0 0.0
    %4091 = vmatprep.subr.mxu0 0.0
    %4092 = vmatpush1.msra.mxu0 0.0
    %4093 = vmatprep.subr.mxu0 0.0
    %4094 = vmatpush1.msra.mxu0 0.0
    %4095 = vmatprep.subr.mxu0 0.0
    %4096 = vmatpush1.msra.mxu0 0.0
    %4097 = vmatprep.subr.mxu0 0.0
    %4098 = vmatpush1.msra.mxu0 0.0
    %4099 = vmatprep.subr.mxu0 0.0
    %4100 = vmatpush1.msra.mxu0 0.0
    %4101 = vmatprep.subr.mxu0 0.0
    %4102 = vmatpush1.msra.mxu0 0.0
    %4103 = vmatprep.subr.mxu0 0.0
    %4104 = vmatpush1.msra.mxu0 0.0
    %4105 = vmatprep.subr.mxu0 0.0
    %4106 = vmatpush1.msra.mxu0 0.0
    %4107 = vmatprep.subr.mxu0 0.0
    %4108 = vmatpush1.msra.mxu0 0.0
    %4109 = vmatprep.subr.mxu0 0.0
    %4110 = vmatpush1.msra.mxu0 0.0
    %4111 = vmatprep.subr.mxu0 0.0
    %4112 = vmatpush1.msra.mxu0 %v4076
    %4113 = vmatprep.subr.mxu0 0.0
    %4114 = vmatpush2.msra.mxu0 0.0
    %4115 = vmatprep.subr.mxu0 0.0
    %4116 = vmatpush2.msra.mxu0 0.0
    %4117 = vmatprep.subr.mxu0 0.0
    %4118 = vmatpush2.msra.mxu0 0.0
    %4119 = vmatprep.subr.mxu0 0.0
    %4120 = vmatpush2.msra.mxu0 0.0
    %4121 = vmatprep.subr.mxu0 0.0
    %4122 = vmatpush2.msra.mxu0 0.0
    %4123 = vmatprep.subr.mxu0 0.0
    %4124 = vmatpush2.msra.mxu0 0.0
    %4125 = vmatprep.subr.mxu0 0.0
    %4126 = vmatpush2.msra.mxu0 0.0
    %4127 = vmatprep.subr.mxu0 0.0
    %4128 = vmatpush2.msra.mxu0 0.0
    %4129 = vmatprep.subr.mxu0 0.0
    %4130 = vmatpush2.msra.mxu0 0.0
    %4131 = vmatprep.subr.mxu0 0.0
    %4132 = vmatpush2.msra.mxu0 0.0
    %4133 = vmatprep.subr.mxu0 0.0
    %4134 = vmatpush2.msra.mxu0 0.0
    %4135 = vmatprep.subr.mxu0 0.0
    %4136 = vmatpush2.msra.mxu0 0.0
    %4137 = vmatprep.subr.mxu0 0.0
    %4138 = vmatpush2.msra.mxu0 0.0
    %4139 = vmatprep.subr.mxu0 0.0
    %4140 = vmatpush2.msra.mxu0 0.0
    %4141 = vmatprep.subr.mxu0 0.0
    %4142 = vmatpush2.msra.mxu0 0.0
    %4143 = vmatprep.subr.mxu0 0.0
    %4144 = vmatpush2.msra.mxu0 0.0
    %4145 = vmatprep.mubr.f32.mxu0 0.0
    %4146 = vmatmul.mubr.f32.gmra.mxu0 %v4079
    %v4147 = vpop.f32.mrf.mxu0
    %v4148 = vadd.f32 0.0, %v4147
    %v4149 = vpop.f32.mrf.mxu0
    %4150 = vdwg.mxu0
    %4151 = vrot.lane.b32.xlu0 %v3303, 120
    %v4152 = vpop.permute.xlu0 %4151
    %4153 = vrot.lane.b32.xlu0 %v3303, 88
    %v4154 = vpop.permute.xlu0 %4153
    %v4155 = vsel %vm216, %v4152, 0
    %v4157 = vsel %vm216, %v4154, 0
    %4159 = vmatprep.subr.mxu0 0.0
    %4160 = vmatpush1.xpose.msra.mxu0 0.0
    %4161 = vmatprep.subr.mxu0 0.0
    %4162 = vmatpush1.xpose.msra.mxu0 0.0
    %4163 = vmatprep.subr.mxu0 0.0
    %4164 = vmatpush1.xpose.msra.mxu0 0.0
    %4165 = vmatprep.subr.mxu0 0.0
    %4166 = vmatpush1.xpose.msra.mxu0 0.0
    %4167 = vmatprep.subr.mxu0 0.0
    %4168 = vmatpush1.xpose.msra.mxu0 0.0
    %4169 = vmatprep.subr.mxu0 0.0
    %4170 = vmatpush1.xpose.msra.mxu0 0.0
    %4171 = vmatprep.subr.mxu0 0.0
    %4172 = vmatpush1.xpose.msra.mxu0 0.0
    %4173 = vmatprep.subr.mxu0 0.0
    %4174 = vmatpush1.xpose.msra.mxu0 0.0
    %4175 = vmatprep.subr.mxu0 0.0
    %4176 = vmatpush1.xpose.msra.mxu0 0.0
    %4177 = vmatprep.subr.mxu0 0.0
    %4178 = vmatpush1.xpose.msra.mxu0 0.0
    %4179 = vmatprep.subr.mxu0 0.0
    %4180 = vmatpush1.xpose.msra.mxu0 0.0
    %4181 = vmatprep.subr.mxu0 0.0
    %4182 = vmatpush1.xpose.msra.mxu0 0.0
    %4183 = vmatprep.subr.mxu0 0.0
    %4184 = vmatpush1.xpose.msra.mxu0 0.0
    %4185 = vmatprep.subr.mxu0 0.0
    %4186 = vmatpush1.xpose.msra.mxu0 0.0
    %4187 = vmatprep.subr.mxu0 0.0
    %4188 = vmatpush1.xpose.msra.mxu0 0.0
    %4189 = vmatprep.subr.mxu0 0.0
    %4190 = vmatpush1.xpose.msra.mxu0 %v4157
    %4191 = vmatprep.subr.mxu0 0.0
    %4192 = vmatpush2.xpose.msra.mxu0 0.0
    %4193 = vmatprep.subr.mxu0 0.0
    %4194 = vmatpush2.xpose.msra.mxu0 0.0
    %4195 = vmatprep.subr.mxu0 0.0
    %4196 = vmatpush2.xpose.msra.mxu0 0.0
    %4197 = vmatprep.subr.mxu0 0.0
    %4198 = vmatpush2.xpose.msra.mxu0 0.0
    %4199 = vmatprep.subr.mxu0 0.0
    %4200 = vmatpush2.xpose.msra.mxu0 0.0
    %4201 = vmatprep.subr.mxu0 0.0
    %4202 = vmatpush2.xpose.msra.mxu0 0.0
    %4203 = vmatprep.subr.mxu0 0.0
    %4204 = vmatpush2.xpose.msra.mxu0 0.0
    %4205 = vmatprep.subr.mxu0 0.0
    %4206 = vmatpush2.xpose.msra.mxu0 0.0
    %4207 = vmatprep.subr.mxu0 0.0
    %4208 = vmatpush2.xpose.msra.mxu0 0.0
    %4209 = vmatprep.subr.mxu0 0.0
    %4210 = vmatpush2.xpose.msra.mxu0 0.0
    %4211 = vmatprep.subr.mxu0 0.0
    %4212 = vmatpush2.xpose.msra.mxu0 0.0
    %4213 = vmatprep.subr.mxu0 0.0
    %4214 = vmatpush2.xpose.msra.mxu0 0.0
    %4215 = vmatprep.subr.mxu0 0.0
    %4216 = vmatpush2.xpose.msra.mxu0 0.0
    %4217 = vmatprep.subr.mxu0 0.0
    %4218 = vmatpush2.xpose.msra.mxu0 0.0
    %4219 = vmatprep.subr.mxu0 0.0
    %4220 = vmatpush2.xpose.msra.mxu0 0.0
    %4221 = vmatprep.subr.mxu0 0.0
    %4222 = vmatpush2.xpose.msra.mxu0 0.0
    %4223 = vmatprep.mubr.f32.mxu0 0.0
    %4224 = vmatmul.mubr.f32.gmra.mxu0 %v4155
    %v4225 = vpop.f32.mrf.mxu0
    %v4226 = vadd.f32 0.0, %v4225
    %v4227 = vpop.f32.mrf.mxu0
    %4228 = vdwg.mxu0
    %v4229 = vmul.f32 %v4226, 0.35355338
    %v4230 = vsel %vm216, %v4229, -inf
    %4231 = vmax.xlane.f32.xlu0 %v4230
    %v4232 = vpop.xlane.xlu0 %4231
    %v4233 = vsub.f32 %v4229, %v4232
    %v4234 = vmul.f32 %v4233, 1.442695
    %v4235 = vpow.pop %v4234
    %v4236 = vsel %vm216, %v4235, 0.0
    %4237 = vadd.xlane.f32.xlu0 %v4236
    %v4238 = vpop.xlane.xlu0 %4237
    %v4239 = vrcp.pop %v4238
    %v4240 = vmul.f32 %v4235, %v4239
    %4241 = vrot.lane.b32.xlu0 %v3303, 56
    %v4242 = vpop.permute.xlu0 %4241
    %v4245 = vsel %vm216, %v4240, 0
    %4247 = vmatprep.subr.mxu0 0.0
    %4248 = vmatpush1.msra.mxu0 0.0
    %4249 = vmatprep.subr.mxu0 0.0
    %4250 = vmatpush1.msra.mxu0 0.0
    %4251 = vmatprep.subr.mxu0 0.0
    %4252 = vmatpush1.msra.mxu0 0.0
    %4253 = vmatprep.subr.mxu0 0.0
    %4254 = vmatpush1.msra.mxu0 0.0
    %4255 = vmatprep.subr.mxu0 0.0
    %4256 = vmatpush1.msra.mxu0 0.0
    %4257 = vmatprep.subr.mxu0 0.0
    %4258 = vmatpush1.msra.mxu0 0.0
    %4259 = vmatprep.subr.mxu0 0.0
    %4260 = vmatpush1.msra.mxu0 0.0
    %4261 = vmatprep.subr.mxu0 0.0
    %4262 = vmatpush1.msra.mxu0 0.0
    %4263 = vmatprep.subr.mxu0 0.0
    %4264 = vmatpush1.msra.mxu0 0.0
    %4265 = vmatprep.subr.mxu0 0.0
    %4266 = vmatpush1.msra.mxu0 0.0
    %4267 = vmatprep.subr.mxu0 0.0
    %4268 = vmatpush1.msra.mxu0 0.0
    %4269 = vmatprep.subr.mxu0 0.0
    %4270 = vmatpush1.msra.mxu0 0.0
    %4271 = vmatprep.subr.mxu0 0.0
    %4272 = vmatpush1.msra.mxu0 0.0
    %4273 = vmatprep.subr.mxu0 0.0
    %4274 = vmatpush1.msra.mxu0 0.0
    %4275 = vmatprep.subr.mxu0 0.0
    %4276 = vmatpush1.msra.mxu0 0.0
    %4277 = vmatprep.subr.mxu0 0.0
    %4278 = vmatpush1.msra.mxu0 %v4242
    %4279 = vmatprep.subr.mxu0 0.0
    %4280 = vmatpush2.msra.mxu0 0.0
    %4281 = vmatprep.subr.mxu0 0.0
    %4282 = vmatpush2.msra.mxu0 0.0
    %4283 = vmatprep.subr.mxu0 0.0
    %4284 = vmatpush2.msra.mxu0 0.0
    %4285 = vmatprep.subr.mxu0 0.0
    %4286 = vmatpush2.msra.mxu0 0.0
    %4287 = vmatprep.subr.mxu0 0.0
    %4288 = vmatpush2.msra.mxu0 0.0
    %4289 = vmatprep.subr.mxu0 0.0
    %4290 = vmatpush2.msra.mxu0 0.0
    %4291 = vmatprep.subr.mxu0 0.0
    %4292 = vmatpush2.msra.mxu0 0.0
    %4293 = vmatprep.subr.mxu0 0.0
    %4294 = vmatpush2.msra.mxu0 0.0
    %4295 = vmatprep.subr.mxu0 0.0
    %4296 = vmatpush2.msra.mxu0 0.0
    %4297 = vmatprep.subr.mxu0 0.0
    %4298 = vmatpush2.msra.mxu0 0.0
    %4299 = vmatprep.subr.mxu0 0.0
    %4300 = vmatpush2.msra.mxu0 0.0
    %4301 = vmatprep.subr.mxu0 0.0
    %4302 = vmatpush2.msra.mxu0 0.0
    %4303 = vmatprep.subr.mxu0 0.0
    %4304 = vmatpush2.msra.mxu0 0.0
    %4305 = vmatprep.subr.mxu0 0.0
    %4306 = vmatpush2.msra.mxu0 0.0
    %4307 = vmatprep.subr.mxu0 0.0
    %4308 = vmatpush2.msra.mxu0 0.0
    %4309 = vmatprep.subr.mxu0 0.0
    %4310 = vmatpush2.msra.mxu0 0.0
    %4311 = vmatprep.mubr.f32.mxu0 0.0
    %4312 = vmatmul.mubr.f32.gmra.mxu0 %v4245
    %v4313 = vpop.f32.mrf.mxu0
    %v4314 = vadd.f32 0.0, %v4313
    %v4315 = vpop.f32.mrf.mxu0
    %4316 = vdwg.mxu0
    %4317 = vrot.lane.b32.xlu0 %v3303, 112
    %v4318 = vpop.permute.xlu0 %4317
    %4319 = vrot.lane.b32.xlu0 %v3303, 80
    %v4320 = vpop.permute.xlu0 %4319
    %v4321 = vsel %vm216, %v4318, 0
    %v4323 = vsel %vm216, %v4320, 0
    %4325 = vmatprep.subr.mxu0 0.0
    %4326 = vmatpush1.xpose.msra.mxu0 0.0
    %4327 = vmatprep.subr.mxu0 0.0
    %4328 = vmatpush1.xpose.msra.mxu0 0.0
    %4329 = vmatprep.subr.mxu0 0.0
    %4330 = vmatpush1.xpose.msra.mxu0 0.0
    %4331 = vmatprep.subr.mxu0 0.0
    %4332 = vmatpush1.xpose.msra.mxu0 0.0
    %4333 = vmatprep.subr.mxu0 0.0
    %4334 = vmatpush1.xpose.msra.mxu0 0.0
    %4335 = vmatprep.subr.mxu0 0.0
    %4336 = vmatpush1.xpose.msra.mxu0 0.0
    %4337 = vmatprep.subr.mxu0 0.0
    %4338 = vmatpush1.xpose.msra.mxu0 0.0
    %4339 = vmatprep.subr.mxu0 0.0
    %4340 = vmatpush1.xpose.msra.mxu0 0.0
    %4341 = vmatprep.subr.mxu0 0.0
    %4342 = vmatpush1.xpose.msra.mxu0 0.0
    %4343 = vmatprep.subr.mxu0 0.0
    %4344 = vmatpush1.xpose.msra.mxu0 0.0
    %4345 = vmatprep.subr.mxu0 0.0
    %4346 = vmatpush1.xpose.msra.mxu0 0.0
    %4347 = vmatprep.subr.mxu0 0.0
    %4348 = vmatpush1.xpose.msra.mxu0 0.0
    %4349 = vmatprep.subr.mxu0 0.0
    %4350 = vmatpush1.xpose.msra.mxu0 0.0
    %4351 = vmatprep.subr.mxu0 0.0
    %4352 = vmatpush1.xpose.msra.mxu0 0.0
    %4353 = vmatprep.subr.mxu0 0.0
    %4354 = vmatpush1.xpose.msra.mxu0 0.0
    %4355 = vmatprep.subr.mxu0 0.0
    %4356 = vmatpush1.xpose.msra.mxu0 %v4323
    %4357 = vmatprep.subr.mxu0 0.0
    %4358 = vmatpush2.xpose.msra.mxu0 0.0
    %4359 = vmatprep.subr.mxu0 0.0
    %4360 = vmatpush2.xpose.msra.mxu0 0.0
    %4361 = vmatprep.subr.mxu0 0.0
    %4362 = vmatpush2.xpose.msra.mxu0 0.0
    %4363 = vmatprep.subr.mxu0 0.0
    %4364 = vmatpush2.xpose.msra.mxu0 0.0
    %4365 = vmatprep.subr.mxu0 0.0
    %4366 = vmatpush2.xpose.msra.mxu0 0.0
    %4367 = vmatprep.subr.mxu0 0.0
    %4368 = vmatpush2.xpose.msra.mxu0 0.0
    %4369 = vmatprep.subr.mxu0 0.0
    %4370 = vmatpush2.xpose.msra.mxu0 0.0
    %4371 = vmatprep.subr.mxu0 0.0
    %4372 = vmatpush2.xpose.msra.mxu0 0.0
    %4373 = vmatprep.subr.mxu0 0.0
    %4374 = vmatpush2.xpose.msra.mxu0 0.0
    %4375 = vmatprep.subr.mxu0 0.0
    %4376 = vmatpush2.xpose.msra.mxu0 0.0
    %4377 = vmatprep.subr.mxu0 0.0
    %4378 = vmatpush2.xpose.msra.mxu0 0.0
    %4379 = vmatprep.subr.mxu0 0.0
    %4380 = vmatpush2.xpose.msra.mxu0 0.0
    %4381 = vmatprep.subr.mxu0 0.0
    %4382 = vmatpush2.xpose.msra.mxu0 0.0
    %4383 = vmatprep.subr.mxu0 0.0
    %4384 = vmatpush2.xpose.msra.mxu0 0.0
    %4385 = vmatprep.subr.mxu0 0.0
    %4386 = vmatpush2.xpose.msra.mxu0 0.0
    %4387 = vmatprep.subr.mxu0 0.0
    %4388 = vmatpush2.xpose.msra.mxu0 0.0
    %4389 = vmatprep.mubr.f32.mxu0 0.0
    %4390 = vmatmul.mubr.f32.gmra.mxu0 %v4321
    %v4391 = vpop.f32.mrf.mxu0
    %v4392 = vadd.f32 0.0, %v4391
    %v4393 = vpop.f32.mrf.mxu0
    %4394 = vdwg.mxu0
    %v4395 = vmul.f32 %v4392, 0.35355338
    %v4396 = vsel %vm216, %v4395, -inf
    %4397 = vmax.xlane.f32.xlu0 %v4396
    %v4398 = vpop.xlane.xlu0 %4397
    %v4399 = vsub.f32 %v4395, %v4398
    %v4400 = vmul.f32 %v4399, 1.442695
    %v4401 = vpow.pop %v4400
    %v4402 = vsel %vm216, %v4401, 0.0
    %4403 = vadd.xlane.f32.xlu0 %v4402
    %v4404 = vpop.xlane.xlu0 %4403
    %v4405 = vrcp.pop %v4404
    %v4406 = vmul.f32 %v4401, %v4405
    %4407 = vrot.lane.b32.xlu0 %v3303, 48
    %v4408 = vpop.permute.xlu0 %4407
    %v4411 = vsel %vm216, %v4406, 0
    %4413 = vmatprep.subr.mxu0 0.0
    %4414 = vmatpush1.msra.mxu0 0.0
    %4415 = vmatprep.subr.mxu0 0.0
    %4416 = vmatpush1.msra.mxu0 0.0
    %4417 = vmatprep.subr.mxu0 0.0
    %4418 = vmatpush1.msra.mxu0 0.0
    %4419 = vmatprep.subr.mxu0 0.0
    %4420 = vmatpush1.msra.mxu0 0.0
    %4421 = vmatprep.subr.mxu0 0.0
    %4422 = vmatpush1.msra.mxu0 0.0
    %4423 = vmatprep.subr.mxu0 0.0
    %4424 = vmatpush1.msra.mxu0 0.0
    %4425 = vmatprep.subr.mxu0 0.0
    %4426 = vmatpush1.msra.mxu0 0.0
    %4427 = vmatprep.subr.mxu0 0.0
    %4428 = vmatpush1.msra.mxu0 0.0
    %4429 = vmatprep.subr.mxu0 0.0
    %4430 = vmatpush1.msra.mxu0 0.0
    %4431 = vmatprep.subr.mxu0 0.0
    %4432 = vmatpush1.msra.mxu0 0.0
    %4433 = vmatprep.subr.mxu0 0.0
    %4434 = vmatpush1.msra.mxu0 0.0
    %4435 = vmatprep.subr.mxu0 0.0
    %4436 = vmatpush1.msra.mxu0 0.0
    %4437 = vmatprep.subr.mxu0 0.0
    %4438 = vmatpush1.msra.mxu0 0.0
    %4439 = vmatprep.subr.mxu0 0.0
    %4440 = vmatpush1.msra.mxu0 0.0
    %4441 = vmatprep.subr.mxu0 0.0
    %4442 = vmatpush1.msra.mxu0 0.0
    %4443 = vmatprep.subr.mxu0 0.0
    %4444 = vmatpush1.msra.mxu0 %v4408
    %4445 = vmatprep.subr.mxu0 0.0
    %4446 = vmatpush2.msra.mxu0 0.0
    %4447 = vmatprep.subr.mxu0 0.0
    %4448 = vmatpush2.msra.mxu0 0.0
    %4449 = vmatprep.subr.mxu0 0.0
    %4450 = vmatpush2.msra.mxu0 0.0
    %4451 = vmatprep.subr.mxu0 0.0
    %4452 = vmatpush2.msra.mxu0 0.0
    %4453 = vmatprep.subr.mxu0 0.0
    %4454 = vmatpush2.msra.mxu0 0.0
    %4455 = vmatprep.subr.mxu0 0.0
    %4456 = vmatpush2.msra.mxu0 0.0
    %4457 = vmatprep.subr.mxu0 0.0
    %4458 = vmatpush2.msra.mxu0 0.0
    %4459 = vmatprep.subr.mxu0 0.0
    %4460 = vmatpush2.msra.mxu0 0.0
    %4461 = vmatprep.subr.mxu0 0.0
    %4462 = vmatpush2.msra.mxu0 0.0
    %4463 = vmatprep.subr.mxu0 0.0
    %4464 = vmatpush2.msra.mxu0 0.0
    %4465 = vmatprep.subr.mxu0 0.0
    %4466 = vmatpush2.msra.mxu0 0.0
    %4467 = vmatprep.subr.mxu0 0.0
    %4468 = vmatpush2.msra.mxu0 0.0
    %4469 = vmatprep.subr.mxu0 0.0
    %4470 = vmatpush2.msra.mxu0 0.0
    %4471 = vmatprep.subr.mxu0 0.0
    %4472 = vmatpush2.msra.mxu0 0.0
    %4473 = vmatprep.subr.mxu0 0.0
    %4474 = vmatpush2.msra.mxu0 0.0
    %4475 = vmatprep.subr.mxu0 0.0
    %4476 = vmatpush2.msra.mxu0 0.0
    %4477 = vmatprep.mubr.f32.mxu0 0.0
    %4478 = vmatmul.mubr.f32.gmra.mxu0 %v4411
    %v4479 = vpop.f32.mrf.mxu0
    %v4480 = vadd.f32 0.0, %v4479
    %v4481 = vpop.f32.mrf.mxu0
    %4482 = vdwg.mxu0
    %4483 = vrot.lane.b32.xlu0 %v3303, 104
    %v4484 = vpop.permute.xlu0 %4483
    %4485 = vrot.lane.b32.xlu0 %v3303, 72
    %v4486 = vpop.permute.xlu0 %4485
    %v4487 = vsel %vm216, %v4484, 0
    %v4489 = vsel %vm216, %v4486, 0
    %4491 = vmatprep.subr.mxu0 0.0
    %4492 = vmatpush1.xpose.msra.mxu0 0.0
    %4493 = vmatprep.subr.mxu0 0.0
    %4494 = vmatpush1.xpose.msra.mxu0 0.0
    %4495 = vmatprep.subr.mxu0 0.0
    %4496 = vmatpush1.xpose.msra.mxu0 0.0
    %4497 = vmatprep.subr.mxu0 0.0
    %4498 = vmatpush1.xpose.msra.mxu0 0.0
    %4499 = vmatprep.subr.mxu0 0.0
    %4500 = vmatpush1.xpose.msra.mxu0 0.0
    %4501 = vmatprep.subr.mxu0 0.0
    %4502 = vmatpush1.xpose.msra.mxu0 0.0
    %4503 = vmatprep.subr.mxu0 0.0
    %4504 = vmatpush1.xpose.msra.mxu0 0.0
    %4505 = vmatprep.subr.mxu0 0.0
    %4506 = vmatpush1.xpose.msra.mxu0 0.0
    %4507 = vmatprep.subr.mxu0 0.0
    %4508 = vmatpush1.xpose.msra.mxu0 0.0
    %4509 = vmatprep.subr.mxu0 0.0
    %4510 = vmatpush1.xpose.msra.mxu0 0.0
    %4511 = vmatprep.subr.mxu0 0.0
    %4512 = vmatpush1.xpose.msra.mxu0 0.0
    %4513 = vmatprep.subr.mxu0 0.0
    %4514 = vmatpush1.xpose.msra.mxu0 0.0
    %4515 = vmatprep.subr.mxu0 0.0
    %4516 = vmatpush1.xpose.msra.mxu0 0.0
    %4517 = vmatprep.subr.mxu0 0.0
    %4518 = vmatpush1.xpose.msra.mxu0 0.0
    %4519 = vmatprep.subr.mxu0 0.0
    %4520 = vmatpush1.xpose.msra.mxu0 0.0
    %4521 = vmatprep.subr.mxu0 0.0
    %4522 = vmatpush1.xpose.msra.mxu0 %v4489
    %4523 = vmatprep.subr.mxu0 0.0
    %4524 = vmatpush2.xpose.msra.mxu0 0.0
    %4525 = vmatprep.subr.mxu0 0.0
    %4526 = vmatpush2.xpose.msra.mxu0 0.0
    %4527 = vmatprep.subr.mxu0 0.0
    %4528 = vmatpush2.xpose.msra.mxu0 0.0
    %4529 = vmatprep.subr.mxu0 0.0
    %4530 = vmatpush2.xpose.msra.mxu0 0.0
    %4531 = vmatprep.subr.mxu0 0.0
    %4532 = vmatpush2.xpose.msra.mxu0 0.0
    %4533 = vmatprep.subr.mxu0 0.0
    %4534 = vmatpush2.xpose.msra.mxu0 0.0
    %4535 = vmatprep.subr.mxu0 0.0
    %4536 = vmatpush2.xpose.msra.mxu0 0.0
    %4537 = vmatprep.subr.mxu0 0.0
    %4538 = vmatpush2.xpose.msra.mxu0 0.0
    %4539 = vmatprep.subr.mxu0 0.0
    %4540 = vmatpush2.xpose.msra.mxu0 0.0
    %4541 = vmatprep.subr.mxu0 0.0
    %4542 = vmatpush2.xpose.msra.mxu0 0.0
    %4543 = vmatprep.subr.mxu0 0.0
    %4544 = vmatpush2.xpose.msra.mxu0 0.0
    %4545 = vmatprep.subr.mxu0 0.0
    %4546 = vmatpush2.xpose.msra.mxu0 0.0
    %4547 = vmatprep.subr.mxu0 0.0
    %4548 = vmatpush2.xpose.msra.mxu0 0.0
    %4549 = vmatprep.subr.mxu0 0.0
    %4550 = vmatpush2.xpose.msra.mxu0 0.0
    %4551 = vmatprep.subr.mxu0 0.0
    %4552 = vmatpush2.xpose.msra.mxu0 0.0
    %4553 = vmatprep.subr.mxu0 0.0
    %4554 = vmatpush2.xpose.msra.mxu0 0.0
    %4555 = vmatprep.mubr.f32.mxu0 0.0
    %4556 = vmatmul.mubr.f32.gmra.mxu0 %v4487
    %v4557 = vpop.f32.mrf.mxu0
    %v4558 = vadd.f32 0.0, %v4557
    %v4559 = vpop.f32.mrf.mxu0
    %4560 = vdwg.mxu0
    %v4561 = vmul.f32 %v4558, 0.35355338
    %v4562 = vsel %vm216, %v4561, -inf
    %4563 = vmax.xlane.f32.xlu0 %v4562
    %v4564 = vpop.xlane.xlu0 %4563
    %v4565 = vsub.f32 %v4561, %v4564
    %v4566 = vmul.f32 %v4565, 1.442695
    %v4567 = vpow.pop %v4566
    %v4568 = vsel %vm216, %v4567, 0.0
    %4569 = vadd.xlane.f32.xlu0 %v4568
    %v4570 = vpop.xlane.xlu0 %4569
    %v4571 = vrcp.pop %v4570
    %v4572 = vmul.f32 %v4567, %v4571
    %4573 = vrot.lane.b32.xlu0 %v3303, 40
    %v4574 = vpop.permute.xlu0 %4573
    %v4577 = vsel %vm216, %v4572, 0
    %4579 = vmatprep.subr.mxu0 0.0
    %4580 = vmatpush1.msra.mxu0 0.0
    %4581 = vmatprep.subr.mxu0 0.0
    %4582 = vmatpush1.msra.mxu0 0.0
    %4583 = vmatprep.subr.mxu0 0.0
    %4584 = vmatpush1.msra.mxu0 0.0
    %4585 = vmatprep.subr.mxu0 0.0
    %4586 = vmatpush1.msra.mxu0 0.0
    %4587 = vmatprep.subr.mxu0 0.0
    %4588 = vmatpush1.msra.mxu0 0.0
    %4589 = vmatprep.subr.mxu0 0.0
    %4590 = vmatpush1.msra.mxu0 0.0
    %4591 = vmatprep.subr.mxu0 0.0
    %4592 = vmatpush1.msra.mxu0 0.0
    %4593 = vmatprep.subr.mxu0 0.0
    %4594 = vmatpush1.msra.mxu0 0.0
    %4595 = vmatprep.subr.mxu0 0.0
    %4596 = vmatpush1.msra.mxu0 0.0
    %4597 = vmatprep.subr.mxu0 0.0
    %4598 = vmatpush1.msra.mxu0 0.0
    %4599 = vmatprep.subr.mxu0 0.0
    %4600 = vmatpush1.msra.mxu0 0.0
    %4601 = vmatprep.subr.mxu0 0.0
    %4602 = vmatpush1.msra.mxu0 0.0
    %4603 = vmatprep.subr.mxu0 0.0
    %4604 = vmatpush1.msra.mxu0 0.0
    %4605 = vmatprep.subr.mxu0 0.0
    %4606 = vmatpush1.msra.mxu0 0.0
    %4607 = vmatprep.subr.mxu0 0.0
    %4608 = vmatpush1.msra.mxu0 0.0
    %4609 = vmatprep.subr.mxu0 0.0
    %4610 = vmatpush1.msra.mxu0 %v4574
    %4611 = vmatprep.subr.mxu0 0.0
    %4612 = vmatpush2.msra.mxu0 0.0
    %4613 = vmatprep.subr.mxu0 0.0
    %4614 = vmatpush2.msra.mxu0 0.0
    %4615 = vmatprep.subr.mxu0 0.0
    %4616 = vmatpush2.msra.mxu0 0.0
    %4617 = vmatprep.subr.mxu0 0.0
    %4618 = vmatpush2.msra.mxu0 0.0
    %4619 = vmatprep.subr.mxu0 0.0
    %4620 = vmatpush2.msra.mxu0 0.0
    %4621 = vmatprep.subr.mxu0 0.0
    %4622 = vmatpush2.msra.mxu0 0.0
    %4623 = vmatprep.subr.mxu0 0.0
    %4624 = vmatpush2.msra.mxu0 0.0
    %4625 = vmatprep.subr.mxu0 0.0
    %4626 = vmatpush2.msra.mxu0 0.0
    %4627 = vmatprep.subr.mxu0 0.0
    %4628 = vmatpush2.msra.mxu0 0.0
    %4629 = vmatprep.subr.mxu0 0.0
    %4630 = vmatpush2.msra.mxu0 0.0
    %4631 = vmatprep.subr.mxu0 0.0
    %4632 = vmatpush2.msra.mxu0 0.0
    %4633 = vmatprep.subr.mxu0 0.0
    %4634 = vmatpush2.msra.mxu0 0.0
    %4635 = vmatprep.subr.mxu0 0.0
    %4636 = vmatpush2.msra.mxu0 0.0
    %4637 = vmatprep.subr.mxu0 0.0
    %4638 = vmatpush2.msra.mxu0 0.0
    %4639 = vmatprep.subr.mxu0 0.0
    %4640 = vmatpush2.msra.mxu0 0.0
    %4641 = vmatprep.subr.mxu0 0.0
    %4642 = vmatpush2.msra.mxu0 0.0
    %4643 = vmatprep.mubr.f32.mxu0 0.0
    %4644 = vmatmul.mubr.f32.gmra.mxu0 %v4577
    %v4645 = vpop.f32.mrf.mxu0
    %v4646 = vadd.f32 0.0, %v4645
    %v4647 = vpop.f32.mrf.mxu0
    %4648 = vdwg.mxu0
    %4650 = vrot.lane.b32.xlu0 %v4314, 8
    %v4651 = vpop.permute.xlu0 %4650
    %4654 = vrot.lane.b32.xlu0 %v4480, 16
    %v4655 = vpop.permute.xlu0 %4654
    %4658 = vrot.lane.b32.xlu0 %v4646, 24
    %v4659 = vpop.permute.xlu0 %4658
    %v4661 = vsel %vm216, %v4148, %v4651
    %v4662 = vsel %vm890, %v4661, %v4655
    %v4663 = vsel %vm892, %v4662, %v4659
    %s4664 = scalar_lea.vmem [#allocation4], 32
    %v4665 = vld [vmem:[%s4664] sm:$0xff]
    %v4666 = vld [vmem:[%s4664 + $0x8] sm:$0xff]
    %v4667 = vld [vmem:[%s4664 + $0x10] sm:$0xff]
    %v4668 = vld [vmem:[%s4664 + $0x18] sm:$0xff]
    %v4669 = vlaneseq
    %v4670 = vshrl.u32 %v4669, 7
    %v4671 = vsub.s32 0, %v4670
    %v4672 = vrot.slane %v3307, %v4671
    %v4674 = vsel %vm130, %v3985, 0
    %v4677 = vsel %vm130, %v4663, 0
    %4679 = vmatprep.subr.mxu0 0.0
    %4680 = vmatpush1.msra.mxu0 0.0
    %4681 = vmatprep.subr.mxu0 0.0
    %4682 = vmatpush1.msra.mxu0 0.0
    %4683 = vmatprep.subr.mxu0 0.0
    %4684 = vmatpush1.msra.mxu0 0.0
    %4685 = vmatprep.subr.mxu0 0.0
    %4686 = vmatpush1.msra.mxu0 0.0
    %4687 = vmatprep.subr.mxu0 0.0
    %4688 = vmatpush1.msra.mxu0 0.0
    %4689 = vmatprep.subr.mxu0 0.0
    %4690 = vmatpush1.msra.mxu0 0.0
    %4691 = vmatprep.subr.mxu0 0.0
    %4692 = vmatpush1.msra.mxu0 0.0
    %4693 = vmatprep.subr.mxu0 0.0
    %4694 = vmatpush1.msra.mxu0 0.0
    %4695 = vmatprep.subr.mxu0 0.0
    %4696 = vmatpush1.msra.mxu0 0.0
    %4697 = vmatprep.subr.mxu0 0.0
    %4698 = vmatpush1.msra.mxu0 0.0
    %4699 = vmatprep.subr.mxu0 0.0
    %4700 = vmatpush1.msra.mxu0 0.0
    %4701 = vmatprep.subr.mxu0 0.0
    %4702 = vmatpush1.msra.mxu0 0.0
    %4703 = vmatprep.subr.mxu0 0.0
    %4704 = vmatpush1.msra.mxu0 %v4668
    %4705 = vmatprep.subr.mxu0 0.0
    %4706 = vmatpush1.msra.mxu0 %v4667
    %4707 = vmatprep.subr.mxu0 0.0
    %4708 = vmatpush1.msra.mxu0 %v4666
    %4709 = vmatprep.subr.mxu0 0.0
    %4710 = vmatpush1.msra.mxu0 %v4665
    %4711 = vmatprep.subr.mxu0 0.0
    %4712 = vmatpush2.msra.mxu0 0.0
    %4713 = vmatprep.subr.mxu0 0.0
    %4714 = vmatpush2.msra.mxu0 0.0
    %4715 = vmatprep.subr.mxu0 0.0
    %4716 = vmatpush2.msra.mxu0 0.0
    %4717 = vmatprep.subr.mxu0 0.0
    %4718 = vmatpush2.msra.mxu0 0.0
    %4719 = vmatprep.subr.mxu0 0.0
    %4720 = vmatpush2.msra.mxu0 0.0
    %4721 = vmatprep.subr.mxu0 0.0
    %4722 = vmatpush2.msra.mxu0 0.0
    %4723 = vmatprep.subr.mxu0 0.0
    %4724 = vmatpush2.msra.mxu0 0.0
    %4725 = vmatprep.subr.mxu0 0.0
    %4726 = vmatpush2.msra.mxu0 0.0
    %4727 = vmatprep.subr.mxu0 0.0
    %4728 = vmatpush2.msra.mxu0 0.0
    %4729 = vmatprep.subr.mxu0 0.0
    %4730 = vmatpush2.msra.mxu0 0.0
    %4731 = vmatprep.subr.mxu0 0.0
    %4732 = vmatpush2.msra.mxu0 0.0
    %4733 = vmatprep.subr.mxu0 0.0
    %4734 = vmatpush2.msra.mxu0 0.0
    %4735 = vmatprep.subr.mxu0 0.0
    %4736 = vmatpush2.msra.mxu0 0.0
    %4737 = vmatprep.subr.mxu0 0.0
    %4738 = vmatpush2.msra.mxu0 0.0
    %4739 = vmatprep.subr.mxu0 0.0
    %4740 = vmatpush2.msra.mxu0 0.0
    %4741 = vmatprep.subr.mxu0 0.0
    %4742 = vmatpush2.msra.mxu0 0.0
    %4743 = vmatprep.mubr.f32.mxu0 0.0
    %4744 = vmatmul.mubr.f32.gmra.mxu0 %v4674
    %v4745 = vpop.f32.mrf.mxu0
    %v4746 = vadd.f32 %v4672, %v4745
    %v4747 = vpop.f32.mrf.mxu0
    %4748 = vmatprep.mubr.f32.mxu0 0.0
    %4749 = vmatmul.mubr.f32.gmra.mxu0 %v4677
    %v4750 = vpop.f32.mrf.mxu0
    %v4751 = vadd.f32 %v4672, %v4750
    %v4752 = vpop.f32.mrf.mxu0
    %4753 = vdwg.mxu0
    %v4754 = vadd.f32 %v3210, %v4746
    %v4755 = vadd.f32 %v3211, %v4751
    %v4756 = vsel %vm130, %v4754, 0.0
    %4757 = vadd.xlane.f32.xlu0 %v4756
    %v4758 = vpop.xlane.xlu0 %4757
    %v4759 = vsel %vm130, %v4755, 0.0
    %4760 = vadd.xlane.f32.xlu0 %v4759
    %v4761 = vpop.xlane.xlu0 %4760
    %v4762 = vmul.f32 %v4758, %v1669
    %v4763 = vmul.f32 %v4761, %v1669
    %v4764 = vsub.f32 %v4754, %v4762
    %v4765 = vsub.f32 %v4755, %v4763
    %v4766 = vmul.f32 %v4764, %v4764
    %v4767 = vmul.f32 %v4765, %v4765
    %v4768 = vsel %vm130, %v4766, 0.0
    %4769 = vadd.xlane.f32.xlu0 %v4768
    %v4770 = vpop.xlane.xlu0 %4769
    %v4771 = vsel %vm130, %v4767, 0.0
    %4772 = vadd.xlane.f32.xlu0 %v4771
    %v4773 = vpop.xlane.xlu0 %4772
    %v4774 = vmul.f32 %v4770, %v1669
    %v4775 = vmul.f32 %v4773, %v1669
    %v4776 = vadd.f32 %v4774, 1e-05
    %v4777 = vadd.f32 %v4775, 1e-05
    %v4778 = vrsqrt.pop %v4776
    %v4779 = vrsqrt.pop %v4777
    %v4780 = vmul.f32 %v4764, %v4778
    %v4781 = vmul.f32 %v4765, %v4779
    %v4782 = vlaneseq
    %v4783 = vshrl.u32 %v4782, 7
    %v4784 = vsub.s32 1, %v4783
    %v4785 = vrot.slane %v3307, %v4784
    %v4786 = vmul.f32 %v4780, %v4785
    %v4787 = vmul.f32 %v4781, %v4785
    %v4788 = vlaneseq
    %v4789 = vshrl.u32 %v4788, 7
    %v4790 = vsub.s32 2, %v4789
    %v4791 = vrot.slane %v3307, %v4790
    %v4792 = vadd.f32 %v4786, %v4791
    %v4793 = vadd.f32 %v4787, %v4791
    %s4794 = scalar_lea.vmem [#allocation7], 512
    %v4795 = vld [vmem:[%s4794] sm:$0xff]
    %v4796 = vld [vmem:[%s4794 + $0x8] sm:$0xff]
    %v4797 = vld [vmem:[%s4794 + $0x10] sm:$0xff]
    %v4798 = vld [vmem:[%s4794 + $0x18] sm:$0xff]
    %v4799 = vld [vmem:[%s4794 + $0x20] sm:$0xff]
    %v4800 = vld [vmem:[%s4794 + $0x28] sm:$0xff]
    %v4801 = vld [vmem:[%s4794 + $0x30] sm:$0xff]
    %v4802 = vld [vmem:[%s4794 + $0x38] sm:$0xff]
    %v4803 = vld [vmem:[%s4794 + $0x40] sm:$0xff]
    %v4804 = vld [vmem:[%s4794 + $0x48] sm:$0xff]
    %v4805 = vld [vmem:[%s4794 + $0x50] sm:$0xff]
    %v4806 = vld [vmem:[%s4794 + $0x58] sm:$0xff]
    %v4807 = vld [vmem:[%s4794 + $0x60] sm:$0xff]
    %v4808 = vld [vmem:[%s4794 + $0x68] sm:$0xff]
    %v4809 = vld [vmem:[%s4794 + $0x70] sm:$0xff]
    %v4810 = vld [vmem:[%s4794 + $0x78] sm:$0xff]
    %v4811 = vld [vmem:[%s4794 + $0x80] sm:$0xff]
    %v4812 = vld [vmem:[%s4794 + $0x88] sm:$0xff]
    %v4813 = vld [vmem:[%s4794 + $0x90] sm:$0xff]
    %v4814 = vld [vmem:[%s4794 + $0x98] sm:$0xff]
    %v4815 = vld [vmem:[%s4794 + $0xa0] sm:$0xff]
    %v4816 = vld [vmem:[%s4794 + $0xa8] sm:$0xff]
    %v4817 = vld [vmem:[%s4794 + $0xb0] sm:$0xff]
    %v4818 = vld [vmem:[%s4794 + $0xb8] sm:$0xff]
    %v4819 = vld [vmem:[%s4794 + $0xc0] sm:$0xff]
    %v4820 = vld [vmem:[%s4794 + $0xc8] sm:$0xff]
    %v4821 = vld [vmem:[%s4794 + $0xd0] sm:$0xff]
    %v4822 = vld [vmem:[%s4794 + $0xd8] sm:$0xff]
    %v4823 = vld [vmem:[%s4794 + $0xe0] sm:$0xff]
    %v4824 = vld [vmem:[%s4794 + $0xe8] sm:$0xff]
    %v4825 = vld [vmem:[%s4794 + $0xf0] sm:$0xff]
    %v4826 = vld [vmem:[%s4794 + $0xf8] sm:$0xff]
    %v4827 = vld [vmem:[%s4794 + $0x100] sm:$0xff]
    %v4828 = vld [vmem:[%s4794 + $0x108] sm:$0xff]
    %v4829 = vld [vmem:[%s4794 + $0x110] sm:$0xff]
    %v4830 = vld [vmem:[%s4794 + $0x118] sm:$0xff]
    %v4831 = vld [vmem:[%s4794 + $0x120] sm:$0xff]
    %v4832 = vld [vmem:[%s4794 + $0x128] sm:$0xff]
    %v4833 = vld [vmem:[%s4794 + $0x130] sm:$0xff]
    %v4834 = vld [vmem:[%s4794 + $0x138] sm:$0xff]
    %v4835 = vld [vmem:[%s4794 + $0x140] sm:$0xff]
    %v4836 = vld [vmem:[%s4794 + $0x148] sm:$0xff]
    %v4837 = vld [vmem:[%s4794 + $0x150] sm:$0xff]
    %v4838 = vld [vmem:[%s4794 + $0x158] sm:$0xff]
    %v4839 = vld [vmem:[%s4794 + $0x160] sm:$0xff]
    %v4840 = vld [vmem:[%s4794 + $0x168] sm:$0xff]
    %v4841 = vld [vmem:[%s4794 + $0x170] sm:$0xff]
    %v4842 = vld [vmem:[%s4794 + $0x178] sm:$0xff]
    %v4843 = vld [vmem:[%s4794 + $0x180] sm:$0xff]
    %v4844 = vld [vmem:[%s4794 + $0x188] sm:$0xff]
    %v4845 = vld [vmem:[%s4794 + $0x190] sm:$0xff]
    %v4846 = vld [vmem:[%s4794 + $0x198] sm:$0xff]
    %v4847 = vld [vmem:[%s4794 + $0x1a0] sm:$0xff]
    %v4848 = vld [vmem:[%s4794 + $0x1a8] sm:$0xff]
    %v4849 = vld [vmem:[%s4794 + $0x1b0] sm:$0xff]
    %v4850 = vld [vmem:[%s4794 + $0x1b8] sm:$0xff]
    %v4851 = vld [vmem:[%s4794 + $0x1c0] sm:$0xff]
    %v4852 = vld [vmem:[%s4794 + $0x1c8] sm:$0xff]
    %v4853 = vld [vmem:[%s4794 + $0x1d0] sm:$0xff]
    %v4854 = vld [vmem:[%s4794 + $0x1d8] sm:$0xff]
    %v4855 = vld [vmem:[%s4794 + $0x1e0] sm:$0xff]
    %v4856 = vld [vmem:[%s4794 + $0x1e8] sm:$0xff]
    %v4857 = vld [vmem:[%s4794 + $0x1f0] sm:$0xff]
    %v4858 = vld [vmem:[%s4794 + $0x1f8] sm:$0xff]
    %s4859 = scalar_lea.vmem %s6, 16
    %v4860 = vld [vmem:[%s4859] sm:$0xff]
    %v4861 = vld [vmem:[%s4859 + $0x8] sm:$0xff]
    %v4864 = vlaneseq
    %v4865 = vshrl.u32 %v4864, 7
    %v4866 = vsub.s32 0, %v4865
    %v4867 = vrot.slane %v4860, %v4866
    %v4868 = vlaneseq
    %v4869 = vshrl.u32 %v4868, 7
    %v4870 = vsub.s32 1, %v4869
    %v4871 = vrot.slane %v4860, %v4870
    %v4872 = vlaneseq
    %v4873 = vshrl.u32 %v4872, 7
    %v4874 = vsub.s32 2, %v4873
    %v4875 = vrot.slane %v4860, %v4874
    %v4876 = vlaneseq
    %v4877 = vshrl.u32 %v4876, 7
    %v4878 = vsub.s32 3, %v4877
    %v4879 = vrot.slane %v4860, %v4878
    %v4880 = vlaneseq
    %v4881 = vshrl.u32 %v4880, 7
    %v4882 = vsub.s32 4, %v4881
    %v4883 = vrot.slane %v4860, %v4882
    %v4884 = vlaneseq
    %v4885 = vshrl.u32 %v4884, 7
    %v4886 = vsub.s32 5, %v4885
    %v4887 = vrot.slane %v4860, %v4886
    %v4888 = vlaneseq
    %v4889 = vshrl.u32 %v4888, 7
    %v4890 = vsub.s32 6, %v4889
    %v4891 = vrot.slane %v4860, %v4890
    %v4892 = vlaneseq
    %v4893 = vshrl.u32 %v4892, 7
    %v4894 = vsub.s32 7, %v4893
    %v4895 = vrot.slane %v4860, %v4894
    %v4896 = vlaneseq
    %v4897 = vshrl.u32 %v4896, 7
    %v4898 = vsub.s32 0, %v4897
    %v4899 = vrot.slane %v4861, %v4898
    %v4900 = vlaneseq
    %v4901 = vshrl.u32 %v4900, 7
    %v4902 = vsub.s32 1, %v4901
    %v4903 = vrot.slane %v4861, %v4902
    %v4904 = vlaneseq
    %v4905 = vshrl.u32 %v4904, 7
    %v4906 = vsub.s32 2, %v4905
    %v4907 = vrot.slane %v4861, %v4906
    %v4908 = vlaneseq
    %v4909 = vshrl.u32 %v4908, 7
    %v4910 = vsub.s32 3, %v4909
    %v4911 = vrot.slane %v4861, %v4910
    %v4912 = vlaneseq
    %v4913 = vshrl.u32 %v4912, 7
    %v4914 = vsub.s32 4, %v4913
    %v4915 = vrot.slane %v4861, %v4914
    %v4916 = vlaneseq
    %v4917 = vshrl.u32 %v4916, 7
    %v4918 = vsub.s32 5, %v4917
    %v4919 = vrot.slane %v4861, %v4918
    %v4920 = vlaneseq
    %v4921 = vshrl.u32 %v4920, 7
    %v4922 = vsub.s32 6, %v4921
    %v4923 = vrot.slane %v4861, %v4922
    %v4924 = vlaneseq
    %v4925 = vshrl.u32 %v4924, 7
    %v4926 = vsub.s32 7, %v4925
    %v4927 = vrot.slane %v4861, %v4926
    %v4945 = vsel %vm130, %v4792, 0
    %v4948 = vsel %vm130, %v4793, 0
    %4950 = vmatprep.subr.mxu0 0.0
    %4951 = vmatpush1.msra.mxu0 0.0
    %4952 = vmatprep.subr.mxu0 0.0
    %4953 = vmatpush1.msra.mxu0 0.0
    %4954 = vmatprep.subr.mxu0 0.0
    %4955 = vmatpush1.msra.mxu0 0.0
    %4956 = vmatprep.subr.mxu0 0.0
    %4957 = vmatpush1.msra.mxu0 0.0
    %4958 = vmatprep.subr.mxu0 0.0
    %4959 = vmatpush1.msra.mxu0 0.0
    %4960 = vmatprep.subr.mxu0 0.0
    %4961 = vmatpush1.msra.mxu0 0.0
    %4962 = vmatprep.subr.mxu0 0.0
    %4963 = vmatpush1.msra.mxu0 0.0
    %4964 = vmatprep.subr.mxu0 0.0
    %4965 = vmatpush1.msra.mxu0 0.0
    %4966 = vmatprep.subr.mxu0 0.0
    %4967 = vmatpush1.msra.mxu0 0.0
    %4968 = vmatprep.subr.mxu0 0.0
    %4969 = vmatpush1.msra.mxu0 0.0
    %4970 = vmatprep.subr.mxu0 0.0
    %4971 = vmatpush1.msra.mxu0 0.0
    %4972 = vmatprep.subr.mxu0 0.0
    %4973 = vmatpush1.msra.mxu0 0.0
    %4974 = vmatprep.subr.mxu0 %v4844
    %4975 = vmatpush1.msra.mxu0 %v4843
    %4976 = vmatprep.subr.mxu0 %v4828
    %4977 = vmatpush1.msra.mxu0 %v4827
    %4978 = vmatprep.subr.mxu0 %v4812
    %4979 = vmatpush1.msra.mxu0 %v4811
    %4980 = vmatprep.subr.mxu0 %v4796
    %4981 = vmatpush1.msra.mxu0 %v4795
    %4982 = vmatprep.subr.mxu0 0.0
    %4983 = vmatpush2.msra.mxu0 0.0
    %4984 = vmatprep.subr.mxu0 0.0
    %4985 = vmatpush2.msra.mxu0 0.0
    %4986 = vmatprep.subr.mxu0 0.0
    %4987 = vmatpush2.msra.mxu0 0.0
    %4988 = vmatprep.subr.mxu0 0.0
    %4989 = vmatpush2.msra.mxu0 0.0
    %4990 = vmatprep.subr.mxu0 0.0
    %4991 = vmatpush2.msra.mxu0 0.0
    %4992 = vmatprep.subr.mxu0 0.0
    %4993 = vmatpush2.msra.mxu0 0.0
    %4994 = vmatprep.subr.mxu0 0.0
    %4995 = vmatpush2.msra.mxu0 0.0
    %4996 = vmatprep.subr.mxu0 0.0
    %4997 = vmatpush2.msra.mxu0 0.0
    %4998 = vmatprep.subr.mxu0 0.0
    %4999 = vmatpush2.msra.mxu0 0.0
    %5000 = vmatprep.subr.mxu0 0.0
    %5001 = vmatpush2.msra.mxu0 0.0
    %5002 = vmatprep.subr.mxu0 0.0
    %5003 = vmatpush2.msra.mxu0 0.0
    %5004 = vmatprep.subr.mxu0 0.0
    %5005 = vmatpush2.msra.mxu0 0.0
    %5006 = vmatprep.subr.mxu0 0.0
    %5007 = vmatpush2.msra.mxu0 0.0
    %5008 = vmatprep.subr.mxu0 0.0
    %5009 = vmatpush2.msra.mxu0 0.0
    %5010 = vmatprep.subr.mxu0 0.0
    %5011 = vmatpush2.msra.mxu0 0.0
    %5012 = vmatprep.subr.mxu0 0.0
    %5013 = vmatpush2.msra.mxu0 0.0
    %5014 = vmatprep.mubr.f32.mxu0 0.0
    %5015 = vmatmul.mubr.f32.gmra.mxu0 %v4945
    %v5016 = vpop.f32.mrf.mxu0
    %v5017 = vadd.f32 %v4867, %v5016
    %v5018 = vpop.f32.mrf.mxu0
    %v5019 = vadd.f32 %v4871, %v5018
    %5020 = vmatprep.mubr.f32.mxu0 0.0
    %5021 = vmatmul.mubr.f32.gmra.mxu0 %v4948
    %v5022 = vpop.f32.mrf.mxu0
    %v5023 = vadd.f32 %v4867, %v5022
    %v5024 = vpop.f32.mrf.mxu0
    %v5025 = vadd.f32 %v4871, %v5024
    %5026 = vdwg.mxu0
    %5027 = vmatprep.subr.mxu0 0.0
    %5028 = vmatpush1.msra.mxu0 0.0
    %5029 = vmatprep.subr.mxu0 0.0
    %5030 = vmatpush1.msra.mxu0 0.0
    %5031 = vmatprep.subr.mxu0 0.0
    %5032 = vmatpush1.msra.mxu0 0.0
    %5033 = vmatprep.subr.mxu0 0.0
    %5034 = vmatpush1.msra.mxu0 0.0
    %5035 = vmatprep.subr.mxu0 0.0
    %5036 = vmatpush1.msra.mxu0 0.0
    %5037 = vmatprep.subr.mxu0 0.0
    %5038 = vmatpush1.msra.mxu0 0.0
    %5039 = vmatprep.subr.mxu0 0.0
    %5040 = vmatpush1.msra.mxu0 0.0
    %5041 = vmatprep.subr.mxu0 0.0
    %5042 = vmatpush1.msra.mxu0 0.0
    %5043 = vmatprep.subr.mxu0 0.0
    %5044 = vmatpush1.msra.mxu0 0.0
    %5045 = vmatprep.subr.mxu0 0.0
    %5046 = vmatpush1.msra.mxu0 0.0
    %5047 = vmatprep.subr.mxu0 0.0
    %5048 = vmatpush1.msra.mxu0 0.0
    %5049 = vmatprep.subr.mxu0 0.0
    %5050 = vmatpush1.msra.mxu0 0.0
    %5051 = vmatprep.subr.mxu0 %v4846
    %5052 = vmatpush1.msra.mxu0 %v4845
    %5053 = vmatprep.subr.mxu0 %v4830
    %5054 = vmatpush1.msra.mxu0 %v4829
    %5055 = vmatprep.subr.mxu0 %v4814
    %5056 = vmatpush1.msra.mxu0 %v4813
    %5057 = vmatprep.subr.mxu0 %v4798
    %5058 = vmatpush1.msra.mxu0 %v4797
    %5059 = vmatprep.subr.mxu0 0.0
    %5060 = vmatpush2.msra.mxu0 0.0
    %5061 = vmatprep.subr.mxu0 0.0
    %5062 = vmatpush2.msra.mxu0 0.0
    %5063 = vmatprep.subr.mxu0 0.0
    %5064 = vmatpush2.msra.mxu0 0.0
    %5065 = vmatprep.subr.mxu0 0.0
    %5066 = vmatpush2.msra.mxu0 0.0
    %5067 = vmatprep.subr.mxu0 0.0
    %5068 = vmatpush2.msra.mxu0 0.0
    %5069 = vmatprep.subr.mxu0 0.0
    %5070 = vmatpush2.msra.mxu0 0.0
    %5071 = vmatprep.subr.mxu0 0.0
    %5072 = vmatpush2.msra.mxu0 0.0
    %5073 = vmatprep.subr.mxu0 0.0
    %5074 = vmatpush2.msra.mxu0 0.0
    %5075 = vmatprep.subr.mxu0 0.0
    %5076 = vmatpush2.msra.mxu0 0.0
    %5077 = vmatprep.subr.mxu0 0.0
    %5078 = vmatpush2.msra.mxu0 0.0
    %5079 = vmatprep.subr.mxu0 0.0
    %5080 = vmatpush2.msra.mxu0 0.0
    %5081 = vmatprep.subr.mxu0 0.0
    %5082 = vmatpush2.msra.mxu0 0.0
    %5083 = vmatprep.subr.mxu0 0.0
    %5084 = vmatpush2.msra.mxu0 0.0
    %5085 = vmatprep.subr.mxu0 0.0
    %5086 = vmatpush2.msra.mxu0 0.0
    %5087 = vmatprep.subr.mxu0 0.0
    %5088 = vmatpush2.msra.mxu0 0.0
    %5089 = vmatprep.subr.mxu0 0.0
    %5090 = vmatpush2.msra.mxu0 0.0
    %5091 = vmatprep.mubr.f32.mxu0 0.0
    %5092 = vmatmul.mubr.f32.gmra.mxu0 %v4945
    %v5093 = vpop.f32.mrf.mxu0
    %v5094 = vadd.f32 %v4875, %v5093
    %v5095 = vpop.f32.mrf.mxu0
    %v5096 = vadd.f32 %v4879, %v5095
    %5097 = vmatprep.mubr.f32.mxu0 0.0
    %5098 = vmatmul.mubr.f32.gmra.mxu0 %v4948
    %v5099 = vpop.f32.mrf.mxu0
    %v5100 = vadd.f32 %v4875, %v5099
    %v5101 = vpop.f32.mrf.mxu0
    %v5102 = vadd.f32 %v4879, %v5101
    %5103 = vdwg.mxu0
    %5104 = vmatprep.subr.mxu0 0.0
    %5105 = vmatpush1.msra.mxu0 0.0
    %5106 = vmatprep.subr.mxu0 0.0
    %5107 = vmatpush1.msra.mxu0 0.0
    %5108 = vmatprep.subr.mxu0 0.0
    %5109 = vmatpush1.msra.mxu0 0.0
    %5110 = vmatprep.subr.mxu0 0.0
    %5111 = vmatpush1.msra.mxu0 0.0
    %5112 = vmatprep.subr.mxu0 0.0
    %5113 = vmatpush1.msra.mxu0 0.0
    %5114 = vmatprep.subr.mxu0 0.0
    %5115 = vmatpush1.msra.mxu0 0.0
    %5116 = vmatprep.subr.mxu0 0.0
    %5117 = vmatpush1.msra.mxu0 0.0
    %5118 = vmatprep.subr.mxu0 0.0
    %5119 = vmatpush1.msra.mxu0 0.0
    %5120 = vmatprep.subr.mxu0 0.0
    %5121 = vmatpush1.msra.mxu0 0.0
    %5122 = vmatprep.subr.mxu0 0.0
    %5123 = vmatpush1.msra.mxu0 0.0
    %5124 = vmatprep.subr.mxu0 0.0
    %5125 = vmatpush1.msra.mxu0 0.0
    %5126 = vmatprep.subr.mxu0 0.0
    %5127 = vmatpush1.msra.mxu0 0.0
    %5128 = vmatprep.subr.mxu0 %v4848
    %5129 = vmatpush1.msra.mxu0 %v4847
    %5130 = vmatprep.subr.mxu0 %v4832
    %5131 = vmatpush1.msra.mxu0 %v4831
    %5132 = vmatprep.subr.mxu0 %v4816
    %5133 = vmatpush1.msra.mxu0 %v4815
    %5134 = vmatprep.subr.mxu0 %v4800
    %5135 = vmatpush1.msra.mxu0 %v4799
    %5136 = vmatprep.subr.mxu0 0.0
    %5137 = vmatpush2.msra.mxu0 0.0
    %5138 = vmatprep.subr.mxu0 0.0
    %5139 = vmatpush2.msra.mxu0 0.0
    %5140 = vmatprep.subr.mxu0 0.0
    %5141 = vmatpush2.msra.mxu0 0.0
    %5142 = vmatprep.subr.mxu0 0.0
    %5143 = vmatpush2.msra.mxu0 0.0
    %5144 = vmatprep.subr.mxu0 0.0
    %5145 = vmatpush2.msra.mxu0 0.0
    %5146 = vmatprep.subr.mxu0 0.0
    %5147 = vmatpush2.msra.mxu0 0.0
    %5148 = vmatprep.subr.mxu0 0.0
    %5149 = vmatpush2.msra.mxu0 0.0
    %5150 = vmatprep.subr.mxu0 0.0
    %5151 = vmatpush2.msra.mxu0 0.0
    %5152 = vmatprep.subr.mxu0 0.0
    %5153 = vmatpush2.msra.mxu0 0.0
    %5154 = vmatprep.subr.mxu0 0.0
    %5155 = vmatpush2.msra.mxu0 0.0
    %5156 = vmatprep.subr.mxu0 0.0
    %5157 = vmatpush2.msra.mxu0 0.0
    %5158 = vmatprep.subr.mxu0 0.0
    %5159 = vmatpush2.msra.mxu0 0.0
    %5160 = vmatprep.subr.mxu0 0.0
    %5161 = vmatpush2.msra.mxu0 0.0
    %5162 = vmatprep.subr.mxu0 0.0
    %5163 = vmatpush2.msra.mxu0 0.0
    %5164 = vmatprep.subr.mxu0 0.0
    %5165 = vmatpush2.msra.mxu0 0.0
    %5166 = vmatprep.subr.mxu0 0.0
    %5167 = vmatpush2.msra.mxu0 0.0
    %5168 = vmatprep.mubr.f32.mxu0 0.0
    %5169 = vmatmul.mubr.f32.gmra.mxu0 %v4945
    %v5170 = vpop.f32.mrf.mxu0
    %v5171 = vadd.f32 %v4883, %v5170
    %v5172 = vpop.f32.mrf.mxu0
    %v5173 = vadd.f32 %v4887, %v5172
    %5174 = vmatprep.mubr.f32.mxu0 0.0
    %5175 = vmatmul.mubr.f32.gmra.mxu0 %v4948
    %v5176 = vpop.f32.mrf.mxu0
    %v5177 = vadd.f32 %v4883, %v5176
    %v5178 = vpop.f32.mrf.mxu0
    %v5179 = vadd.f32 %v4887, %v5178
    %5180 = vdwg.mxu0
    %5181 = vmatprep.subr.mxu0 0.0
    %5182 = vmatpush1.msra.mxu0 0.0
    %5183 = vmatprep.subr.mxu0 0.0
    %5184 = vmatpush1.msra.mxu0 0.0
    %5185 = vmatprep.subr.mxu0 0.0
    %5186 = vmatpush1.msra.mxu0 0.0
    %5187 = vmatprep.subr.mxu0 0.0
    %5188 = vmatpush1.msra.mxu0 0.0
    %5189 = vmatprep.subr.mxu0 0.0
    %5190 = vmatpush1.msra.mxu0 0.0
    %5191 = vmatprep.subr.mxu0 0.0
    %5192 = vmatpush1.msra.mxu0 0.0
    %5193 = vmatprep.subr.mxu0 0.0
    %5194 = vmatpush1.msra.mxu0 0.0
    %5195 = vmatprep.subr.mxu0 0.0
    %5196 = vmatpush1.msra.mxu0 0.0
    %5197 = vmatprep.subr.mxu0 0.0
    %5198 = vmatpush1.msra.mxu0 0.0
    %5199 = vmatprep.subr.mxu0 0.0
    %5200 = vmatpush1.msra.mxu0 0.0
    %5201 = vmatprep.subr.mxu0 0.0
    %5202 = vmatpush1.msra.mxu0 0.0
    %5203 = vmatprep.subr.mxu0 0.0
    %5204 = vmatpush1.msra.mxu0 0.0
    %5205 = vmatprep.subr.mxu0 %v4850
    %5206 = vmatpush1.msra.mxu0 %v4849
    %5207 = vmatprep.subr.mxu0 %v4834
    %5208 = vmatpush1.msra.mxu0 %v4833
    %5209 = vmatprep.subr.mxu0 %v4818
    %5210 = vmatpush1.msra.mxu0 %v4817
    %5211 = vmatprep.subr.mxu0 %v4802
    %5212 = vmatpush1.msra.mxu0 %v4801
    %5213 = vmatprep.subr.mxu0 0.0
    %5214 = vmatpush2.msra.mxu0 0.0
    %5215 = vmatprep.subr.mxu0 0.0
    %5216 = vmatpush2.msra.mxu0 0.0
    %5217 = vmatprep.subr.mxu0 0.0
    %5218 = vmatpush2.msra.mxu0 0.0
    %5219 = vmatprep.subr.mxu0 0.0
    %5220 = vmatpush2.msra.mxu0 0.0
    %5221 = vmatprep.subr.mxu0 0.0
    %5222 = vmatpush2.msra.mxu0 0.0
    %5223 = vmatprep.subr.mxu0 0.0
    %5224 = vmatpush2.msra.mxu0 0.0
    %5225 = vmatprep.subr.mxu0 0.0
    %5226 = vmatpush2.msra.mxu0 0.0
    %5227 = vmatprep.subr.mxu0 0.0
    %5228 = vmatpush2.msra.mxu0 0.0
    %5229 = vmatprep.subr.mxu0 0.0
    %5230 = vmatpush2.msra.mxu0 0.0
    %5231 = vmatprep.subr.mxu0 0.0
    %5232 = vmatpush2.msra.mxu0 0.0
    %5233 = vmatprep.subr.mxu0 0.0
    %5234 = vmatpush2.msra.mxu0 0.0
    %5235 = vmatprep.subr.mxu0 0.0
    %5236 = vmatpush2.msra.mxu0 0.0
    %5237 = vmatprep.subr.mxu0 0.0
    %5238 = vmatpush2.msra.mxu0 0.0
    %5239 = vmatprep.subr.mxu0 0.0
    %5240 = vmatpush2.msra.mxu0 0.0
    %5241 = vmatprep.subr.mxu0 0.0
    %5242 = vmatpush2.msra.mxu0 0.0
    %5243 = vmatprep.subr.mxu0 0.0
    %5244 = vmatpush2.msra.mxu0 0.0
    %5245 = vmatprep.mubr.f32.mxu0 0.0
    %5246 = vmatmul.mubr.f32.gmra.mxu0 %v4945
    %v5247 = vpop.f32.mrf.mxu0
    %v5248 = vadd.f32 %v4891, %v5247
    %v5249 = vpop.f32.mrf.mxu0
    %v5250 = vadd.f32 %v4895, %v5249
    %5251 = vmatprep.mubr.f32.mxu0 0.0
    %5252 = vmatmul.mubr.f32.gmra.mxu0 %v4948
    %v5253 = vpop.f32.mrf.mxu0
    %v5254 = vadd.f32 %v4891, %v5253
    %v5255 = vpop.f32.mrf.mxu0
    %v5256 = vadd.f32 %v4895, %v5255
    %5257 = vdwg.mxu0
    %5258 = vmatprep.subr.mxu0 0.0
    %5259 = vmatpush1.msra.mxu0 0.0
    %5260 = vmatprep.subr.mxu0 0.0
    %5261 = vmatpush1.msra.mxu0 0.0
    %5262 = vmatprep.subr.mxu0 0.0
    %5263 = vmatpush1.msra.mxu0 0.0
    %5264 = vmatprep.subr.mxu0 0.0
    %5265 = vmatpush1.msra.mxu0 0.0
    %5266 = vmatprep.subr.mxu0 0.0
    %5267 = vmatpush1.msra.mxu0 0.0
    %5268 = vmatprep.subr.mxu0 0.0
    %5269 = vmatpush1.msra.mxu0 0.0
    %5270 = vmatprep.subr.mxu0 0.0
    %5271 = vmatpush1.msra.mxu0 0.0
    %5272 = vmatprep.subr.mxu0 0.0
    %5273 = vmatpush1.msra.mxu0 0.0
    %5274 = vmatprep.subr.mxu0 0.0
    %5275 = vmatpush1.msra.mxu0 0.0
    %5276 = vmatprep.subr.mxu0 0.0
    %5277 = vmatpush1.msra.mxu0 0.0
    %5278 = vmatprep.subr.mxu0 0.0
    %5279 = vmatpush1.msra.mxu0 0.0
    %5280 = vmatprep.subr.mxu0 0.0
    %5281 = vmatpush1.msra.mxu0 0.0
    %5282 = vmatprep.subr.mxu0 %v4852
    %5283 = vmatpush1.msra.mxu0 %v4851
    %5284 = vmatprep.subr.mxu0 %v4836
    %5285 = vmatpush1.msra.mxu0 %v4835
    %5286 = vmatprep.subr.mxu0 %v4820
    %5287 = vmatpush1.msra.mxu0 %v4819
    %5288 = vmatprep.subr.mxu0 %v4804
    %5289 = vmatpush1.msra.mxu0 %v4803
    %5290 = vmatprep.subr.mxu0 0.0
    %5291 = vmatpush2.msra.mxu0 0.0
    %5292 = vmatprep.subr.mxu0 0.0
    %5293 = vmatpush2.msra.mxu0 0.0
    %5294 = vmatprep.subr.mxu0 0.0
    %5295 = vmatpush2.msra.mxu0 0.0
    %5296 = vmatprep.subr.mxu0 0.0
    %5297 = vmatpush2.msra.mxu0 0.0
    %5298 = vmatprep.subr.mxu0 0.0
    %5299 = vmatpush2.msra.mxu0 0.0
    %5300 = vmatprep.subr.mxu0 0.0
    %5301 = vmatpush2.msra.mxu0 0.0
    %5302 = vmatprep.subr.mxu0 0.0
    %5303 = vmatpush2.msra.mxu0 0.0
    %5304 = vmatprep.subr.mxu0 0.0
    %5305 = vmatpush2.msra.mxu0 0.0
    %5306 = vmatprep.subr.mxu0 0.0
    %5307 = vmatpush2.msra.mxu0 0.0
    %5308 = vmatprep.subr.mxu0 0.0
    %5309 = vmatpush2.msra.mxu0 0.0
    %5310 = vmatprep.subr.mxu0 0.0
    %5311 = vmatpush2.msra.mxu0 0.0
    %5312 = vmatprep.subr.mxu0 0.0
    %5313 = vmatpush2.msra.mxu0 0.0
    %5314 = vmatprep.subr.mxu0 0.0
    %5315 = vmatpush2.msra.mxu0 0.0
    %5316 = vmatprep.subr.mxu0 0.0
    %5317 = vmatpush2.msra.mxu0 0.0
    %5318 = vmatprep.subr.mxu0 0.0
    %5319 = vmatpush2.msra.mxu0 0.0
    %5320 = vmatprep.subr.mxu0 0.0
    %5321 = vmatpush2.msra.mxu0 0.0
    %5322 = vmatprep.mubr.f32.mxu0 0.0
    %5323 = vmatmul.mubr.f32.gmra.mxu0 %v4945
    %v5324 = vpop.f32.mrf.mxu0
    %v5325 = vadd.f32 %v4899, %v5324
    %v5326 = vpop.f32.mrf.mxu0
    %v5327 = vadd.f32 %v4903, %v5326
    %5328 = vmatprep.mubr.f32.mxu0 0.0
    %5329 = vmatmul.mubr.f32.gmra.mxu0 %v4948
    %v5330 = vpop.f32.mrf.mxu0
    %v5331 = vadd.f32 %v4899, %v5330
    %v5332 = vpop.f32.mrf.mxu0
    %v5333 = vadd.f32 %v4903, %v5332
    %5334 = vdwg.mxu0
    %5335 = vmatprep.subr.mxu0 0.0
    %5336 = vmatpush1.msra.mxu0 0.0
    %5337 = vmatprep.subr.mxu0 0.0
    %5338 = vmatpush1.msra.mxu0 0.0
    %5339 = vmatprep.subr.mxu0 0.0
    %5340 = vmatpush1.msra.mxu0 0.0
    %5341 = vmatprep.subr.mxu0 0.0
    %5342 = vmatpush1.msra.mxu0 0.0
    %5343 = vmatprep.subr.mxu0 0.0
    %5344 = vmatpush1.msra.mxu0 0.0
    %5345 = vmatprep.subr.mxu0 0.0
    %5346 = vmatpush1.msra.mxu0 0.0
    %5347 = vmatprep.subr.mxu0 0.0
    %5348 = vmatpush1.msra.mxu0 0.0
    %5349 = vmatprep.subr.mxu0 0.0
    %5350 = vmatpush1.msra.mxu0 0.0
    %5351 = vmatprep.subr.mxu0 0.0
    %5352 = vmatpush1.msra.mxu0 0.0
    %5353 = vmatprep.subr.mxu0 0.0
    %5354 = vmatpush1.msra.mxu0 0.0
    %5355 = vmatprep.subr.mxu0 0.0
    %5356 = vmatpush1.msra.mxu0 0.0
    %5357 = vmatprep.subr.mxu0 0.0
    %5358 = vmatpush1.msra.mxu0 0.0
    %5359 = vmatprep.subr.mxu0 %v4854
    %5360 = vmatpush1.msra.mxu0 %v4853
    %5361 = vmatprep.subr.mxu0 %v4838
    %5362 = vmatpush1.msra.mxu0 %v4837
    %5363 = vmatprep.subr.mxu0 %v4822
    %5364 = vmatpush1.msra.mxu0 %v4821
    %5365 = vmatprep.subr.mxu0 %v4806
    %5366 = vmatpush1.msra.mxu0 %v4805
    %5367 = vmatprep.subr.mxu0 0.0
    %5368 = vmatpush2.msra.mxu0 0.0
    %5369 = vmatprep.subr.mxu0 0.0
    %5370 = vmatpush2.msra.mxu0 0.0
    %5371 = vmatprep.subr.mxu0 0.0
    %5372 = vmatpush2.msra.mxu0 0.0
    %5373 = vmatprep.subr.mxu0 0.0
    %5374 = vmatpush2.msra.mxu0 0.0
    %5375 = vmatprep.subr.mxu0 0.0
    %5376 = vmatpush2.msra.mxu0 0.0
    %5377 = vmatprep.subr.mxu0 0.0
    %5378 = vmatpush2.msra.mxu0 0.0
    %5379 = vmatprep.subr.mxu0 0.0
    %5380 = vmatpush2.msra.mxu0 0.0
    %5381 = vmatprep.subr.mxu0 0.0
    %5382 = vmatpush2.msra.mxu0 0.0
    %5383 = vmatprep.subr.mxu0 0.0
    %5384 = vmatpush2.msra.mxu0 0.0
    %5385 = vmatprep.subr.mxu0 0.0
    %5386 = vmatpush2.msra.mxu0 0.0
    %5387 = vmatprep.subr.mxu0 0.0
    %5388 = vmatpush2.msra.mxu0 0.0
    %5389 = vmatprep.subr.mxu0 0.0
    %5390 = vmatpush2.msra.mxu0 0.0
    %5391 = vmatprep.subr.mxu0 0.0
    %5392 = vmatpush2.msra.mxu0 0.0
    %5393 = vmatprep.subr.mxu0 0.0
    %5394 = vmatpush2.msra.mxu0 0.0
    %5395 = vmatprep.subr.mxu0 0.0
    %5396 = vmatpush2.msra.mxu0 0.0
    %5397 = vmatprep.subr.mxu0 0.0
    %5398 = vmatpush2.msra.mxu0 0.0
    %5399 = vmatprep.mubr.f32.mxu0 0.0
    %5400 = vmatmul.mubr.f32.gmra.mxu0 %v4945
    %v5401 = vpop.f32.mrf.mxu0
    %v5402 = vadd.f32 %v4907, %v5401
    %v5403 = vpop.f32.mrf.mxu0
    %v5404 = vadd.f32 %v4911, %v5403
    %5405 = vmatprep.mubr.f32.mxu0 0.0
    %5406 = vmatmul.mubr.f32.gmra.mxu0 %v4948
    %v5407 = vpop.f32.mrf.mxu0
    %v5408 = vadd.f32 %v4907, %v5407
    %v5409 = vpop.f32.mrf.mxu0
    %v5410 = vadd.f32 %v4911, %v5409
    %5411 = vdwg.mxu0
    %5412 = vmatprep.subr.mxu0 0.0
    %5413 = vmatpush1.msra.mxu0 0.0
    %5414 = vmatprep.subr.mxu0 0.0
    %5415 = vmatpush1.msra.mxu0 0.0
    %5416 = vmatprep.subr.mxu0 0.0
    %5417 = vmatpush1.msra.mxu0 0.0
    %5418 = vmatprep.subr.mxu0 0.0
    %5419 = vmatpush1.msra.mxu0 0.0
    %5420 = vmatprep.subr.mxu0 0.0
    %5421 = vmatpush1.msra.mxu0 0.0
    %5422 = vmatprep.subr.mxu0 0.0
    %5423 = vmatpush1.msra.mxu0 0.0
    %5424 = vmatprep.subr.mxu0 0.0
    %5425 = vmatpush1.msra.mxu0 0.0
    %5426 = vmatprep.subr.mxu0 0.0
    %5427 = vmatpush1.msra.mxu0 0.0
    %5428 = vmatprep.subr.mxu0 0.0
    %5429 = vmatpush1.msra.mxu0 0.0
    %5430 = vmatprep.subr.mxu0 0.0
    %5431 = vmatpush1.msra.mxu0 0.0
    %5432 = vmatprep.subr.mxu0 0.0
    %5433 = vmatpush1.msra.mxu0 0.0
    %5434 = vmatprep.subr.mxu0 0.0
    %5435 = vmatpush1.msra.mxu0 0.0
    %5436 = vmatprep.subr.mxu0 %v4856
    %5437 = vmatpush1.msra.mxu0 %v4855
    %5438 = vmatprep.subr.mxu0 %v4840
    %5439 = vmatpush1.msra.mxu0 %v4839
    %5440 = vmatprep.subr.mxu0 %v4824
    %5441 = vmatpush1.msra.mxu0 %v4823
    %5442 = vmatprep.subr.mxu0 %v4808
    %5443 = vmatpush1.msra.mxu0 %v4807
    %5444 = vmatprep.subr.mxu0 0.0
    %5445 = vmatpush2.msra.mxu0 0.0
    %5446 = vmatprep.subr.mxu0 0.0
    %5447 = vmatpush2.msra.mxu0 0.0
    %5448 = vmatprep.subr.mxu0 0.0
    %5449 = vmatpush2.msra.mxu0 0.0
    %5450 = vmatprep.subr.mxu0 0.0
    %5451 = vmatpush2.msra.mxu0 0.0
    %5452 = vmatprep.subr.mxu0 0.0
    %5453 = vmatpush2.msra.mxu0 0.0
    %5454 = vmatprep.subr.mxu0 0.0
    %5455 = vmatpush2.msra.mxu0 0.0
    %5456 = vmatprep.subr.mxu0 0.0
    %5457 = vmatpush2.msra.mxu0 0.0
    %5458 = vmatprep.subr.mxu0 0.0
    %5459 = vmatpush2.msra.mxu0 0.0
    %5460 = vmatprep.subr.mxu0 0.0
    %5461 = vmatpush2.msra.mxu0 0.0
    %5462 = vmatprep.subr.mxu0 0.0
    %5463 = vmatpush2.msra.mxu0 0.0
    %5464 = vmatprep.subr.mxu0 0.0
    %5465 = vmatpush2.msra.mxu0 0.0
    %5466 = vmatprep.subr.mxu0 0.0
    %5467 = vmatpush2.msra.mxu0 0.0
    %5468 = vmatprep.subr.mxu0 0.0
    %5469 = vmatpush2.msra.mxu0 0.0
    %5470 = vmatprep.subr.mxu0 0.0
    %5471 = vmatpush2.msra.mxu0 0.0
    %5472 = vmatprep.subr.mxu0 0.0
    %5473 = vmatpush2.msra.mxu0 0.0
    %5474 = vmatprep.subr.mxu0 0.0
    %5475 = vmatpush2.msra.mxu0 0.0
    %5476 = vmatprep.mubr.f32.mxu0 0.0
    %5477 = vmatmul.mubr.f32.gmra.mxu0 %v4945
    %v5478 = vpop.f32.mrf.mxu0
    %v5479 = vadd.f32 %v4915, %v5478
    %v5480 = vpop.f32.mrf.mxu0
    %v5481 = vadd.f32 %v4919, %v5480
    %5482 = vmatprep.mubr.f32.mxu0 0.0
    %5483 = vmatmul.mubr.f32.gmra.mxu0 %v4948
    %v5484 = vpop.f32.mrf.mxu0
    %v5485 = vadd.f32 %v4915, %v5484
    %v5486 = vpop.f32.mrf.mxu0
    %v5487 = vadd.f32 %v4919, %v5486
    %5488 = vdwg.mxu0
    %5489 = vmatprep.subr.mxu0 0.0
    %5490 = vmatpush1.msra.mxu0 0.0
    %5491 = vmatprep.subr.mxu0 0.0
    %5492 = vmatpush1.msra.mxu0 0.0
    %5493 = vmatprep.subr.mxu0 0.0
    %5494 = vmatpush1.msra.mxu0 0.0
    %5495 = vmatprep.subr.mxu0 0.0
    %5496 = vmatpush1.msra.mxu0 0.0
    %5497 = vmatprep.subr.mxu0 0.0
    %5498 = vmatpush1.msra.mxu0 0.0
    %5499 = vmatprep.subr.mxu0 0.0
    %5500 = vmatpush1.msra.mxu0 0.0
    %5501 = vmatprep.subr.mxu0 0.0
    %5502 = vmatpush1.msra.mxu0 0.0
    %5503 = vmatprep.subr.mxu0 0.0
    %5504 = vmatpush1.msra.mxu0 0.0
    %5505 = vmatprep.subr.mxu0 0.0
    %5506 = vmatpush1.msra.mxu0 0.0
    %5507 = vmatprep.subr.mxu0 0.0
    %5508 = vmatpush1.msra.mxu0 0.0
    %5509 = vmatprep.subr.mxu0 0.0
    %5510 = vmatpush1.msra.mxu0 0.0
    %5511 = vmatprep.subr.mxu0 0.0
    %5512 = vmatpush1.msra.mxu0 0.0
    %5513 = vmatprep.subr.mxu0 %v4858
    %5514 = vmatpush1.msra.mxu0 %v4857
    %5515 = vmatprep.subr.mxu0 %v4842
    %5516 = vmatpush1.msra.mxu0 %v4841
    %5517 = vmatprep.subr.mxu0 %v4826
    %5518 = vmatpush1.msra.mxu0 %v4825
    %5519 = vmatprep.subr.mxu0 %v4810
    %5520 = vmatpush1.msra.mxu0 %v4809
    %5521 = vmatprep.subr.mxu0 0.0
    %5522 = vmatpush2.msra.mxu0 0.0
    %5523 = vmatprep.subr.mxu0 0.0
    %5524 = vmatpush2.msra.mxu0 0.0
    %5525 = vmatprep.subr.mxu0 0.0
    %5526 = vmatpush2.msra.mxu0 0.0
    %5527 = vmatprep.subr.mxu0 0.0
    %5528 = vmatpush2.msra.mxu0 0.0
    %5529 = vmatprep.subr.mxu0 0.0
    %5530 = vmatpush2.msra.mxu0 0.0
    %5531 = vmatprep.subr.mxu0 0.0
    %5532 = vmatpush2.msra.mxu0 0.0
    %5533 = vmatprep.subr.mxu0 0.0
    %5534 = vmatpush2.msra.mxu0 0.0
    %5535 = vmatprep.subr.mxu0 0.0
    %5536 = vmatpush2.msra.mxu0 0.0
    %5537 = vmatprep.subr.mxu0 0.0
    %5538 = vmatpush2.msra.mxu0 0.0
    %5539 = vmatprep.subr.mxu0 0.0
    %5540 = vmatpush2.msra.mxu0 0.0
    %5541 = vmatprep.subr.mxu0 0.0
    %5542 = vmatpush2.msra.mxu0 0.0
    %5543 = vmatprep.subr.mxu0 0.0
    %5544 = vmatpush2.msra.mxu0 0.0
    %5545 = vmatprep.subr.mxu0 0.0
    %5546 = vmatpush2.msra.mxu0 0.0
    %5547 = vmatprep.subr.mxu0 0.0
    %5548 = vmatpush2.msra.mxu0 0.0
    %5549 = vmatprep.subr.mxu0 0.0
    %5550 = vmatpush2.msra.mxu0 0.0
    %5551 = vmatprep.subr.mxu0 0.0
    %5552 = vmatpush2.msra.mxu0 0.0
    %5553 = vmatprep.mubr.f32.mxu0 0.0
    %5554 = vmatmul.mubr.f32.gmra.mxu0 %v4945
    %v5555 = vpop.f32.mrf.mxu0
    %v5556 = vadd.f32 %v4923, %v5555
    %v5557 = vpop.f32.mrf.mxu0
    %v5558 = vadd.f32 %v4927, %v5557
    %5559 = vmatprep.mubr.f32.mxu0 0.0
    %5560 = vmatmul.mubr.f32.gmra.mxu0 %v4948
    %v5561 = vpop.f32.mrf.mxu0
    %v5562 = vadd.f32 %v4923, %v5561
    %v5563 = vpop.f32.mrf.mxu0
    %v5564 = vadd.f32 %v4927, %v5563
    %5565 = vdwg.mxu0
    %v5566 = vmax.f32 %v5017, 0.0
    %v5567 = vmax.f32 %v5019, 0.0
    %v5568 = vmax.f32 %v5094, 0.0
    %v5569 = vmax.f32 %v5096, 0.0
    %v5570 = vmax.f32 %v5171, 0.0
    %v5571 = vmax.f32 %v5173, 0.0
    %v5572 = vmax.f32 %v5248, 0.0
    %v5573 = vmax.f32 %v5250, 0.0
    %v5574 = vmax.f32 %v5325, 0.0
    %v5575 = vmax.f32 %v5327, 0.0
    %v5576 = vmax.f32 %v5402, 0.0
    %v5577 = vmax.f32 %v5404, 0.0
    %v5578 = vmax.f32 %v5479, 0.0
    %v5579 = vmax.f32 %v5481, 0.0
    %v5580 = vmax.f32 %v5556, 0.0
    %v5581 = vmax.f32 %v5558, 0.0
    %v5582 = vmax.f32 %v5023, 0.0
    %v5583 = vmax.f32 %v5025, 0.0
    %v5584 = vmax.f32 %v5100, 0.0
    %v5585 = vmax.f32 %v5102, 0.0
    %v5586 = vmax.f32 %v5177, 0.0
    %v5587 = vmax.f32 %v5179, 0.0
    %v5588 = vmax.f32 %v5254, 0.0
    %v5589 = vmax.f32 %v5256, 0.0
    %v5590 = vmax.f32 %v5331, 0.0
    %v5591 = vmax.f32 %v5333, 0.0
    %v5592 = vmax.f32 %v5408, 0.0
    %v5593 = vmax.f32 %v5410, 0.0
    %v5594 = vmax.f32 %v5485, 0.0
    %v5595 = vmax.f32 %v5487, 0.0
    %v5596 = vmax.f32 %v5562, 0.0
    %v5597 = vmax.f32 %v5564, 0.0
    %s5598 = scalar_lea.vmem [#allocation9], 512
    %v5599 = vld [vmem:[%s5598] sm:$0xff]
    %v5600 = vld [vmem:[%s5598 + $0x8] sm:$0xff]
    %v5601 = vld [vmem:[%s5598 + $0x10] sm:$0xff]
    %v5602 = vld [vmem:[%s5598 + $0x18] sm:$0xff]
    %v5603 = vld [vmem:[%s5598 + $0x20] sm:$0xff]
    %v5604 = vld [vmem:[%s5598 + $0x28] sm:$0xff]
    %v5605 = vld [vmem:[%s5598 + $0x30] sm:$0xff]
    %v5606 = vld [vmem:[%s5598 + $0x38] sm:$0xff]
    %v5607 = vld [vmem:[%s5598 + $0x40] sm:$0xff]
    %v5608 = vld [vmem:[%s5598 + $0x48] sm:$0xff]
    %v5609 = vld [vmem:[%s5598 + $0x50] sm:$0xff]
    %v5610 = vld [vmem:[%s5598 + $0x58] sm:$0xff]
    %v5611 = vld [vmem:[%s5598 + $0x60] sm:$0xff]
    %v5612 = vld [vmem:[%s5598 + $0x68] sm:$0xff]
    %v5613 = vld [vmem:[%s5598 + $0x70] sm:$0xff]
    %v5614 = vld [vmem:[%s5598 + $0x78] sm:$0xff]
    %v5615 = vld [vmem:[%s5598 + $0x80] sm:$0xff]
    %v5616 = vld [vmem:[%s5598 + $0x88] sm:$0xff]
    %v5617 = vld [vmem:[%s5598 + $0x90] sm:$0xff]
    %v5618 = vld [vmem:[%s5598 + $0x98] sm:$0xff]
    %v5619 = vld [vmem:[%s5598 + $0xa0] sm:$0xff]
    %v5620 = vld [vmem:[%s5598 + $0xa8] sm:$0xff]
    %v5621 = vld [vmem:[%s5598 + $0xb0] sm:$0xff]
    %v5622 = vld [vmem:[%s5598 + $0xb8] sm:$0xff]
    %v5623 = vld [vmem:[%s5598 + $0xc0] sm:$0xff]
    %v5624 = vld [vmem:[%s5598 + $0xc8] sm:$0xff]
    %v5625 = vld [vmem:[%s5598 + $0xd0] sm:$0xff]
    %v5626 = vld [vmem:[%s5598 + $0xd8] sm:$0xff]
    %v5627 = vld [vmem:[%s5598 + $0xe0] sm:$0xff]
    %v5628 = vld [vmem:[%s5598 + $0xe8] sm:$0xff]
    %v5629 = vld [vmem:[%s5598 + $0xf0] sm:$0xff]
    %v5630 = vld [vmem:[%s5598 + $0xf8] sm:$0xff]
    %v5631 = vld [vmem:[%s5598 + $0x100] sm:$0xff]
    %v5632 = vld [vmem:[%s5598 + $0x108] sm:$0xff]
    %v5633 = vld [vmem:[%s5598 + $0x110] sm:$0xff]
    %v5634 = vld [vmem:[%s5598 + $0x118] sm:$0xff]
    %v5635 = vld [vmem:[%s5598 + $0x120] sm:$0xff]
    %v5636 = vld [vmem:[%s5598 + $0x128] sm:$0xff]
    %v5637 = vld [vmem:[%s5598 + $0x130] sm:$0xff]
    %v5638 = vld [vmem:[%s5598 + $0x138] sm:$0xff]
    %v5639 = vld [vmem:[%s5598 + $0x140] sm:$0xff]
    %v5640 = vld [vmem:[%s5598 + $0x148] sm:$0xff]
    %v5641 = vld [vmem:[%s5598 + $0x150] sm:$0xff]
    %v5642 = vld [vmem:[%s5598 + $0x158] sm:$0xff]
    %v5643 = vld [vmem:[%s5598 + $0x160] sm:$0xff]
    %v5644 = vld [vmem:[%s5598 + $0x168] sm:$0xff]
    %v5645 = vld [vmem:[%s5598 + $0x170] sm:$0xff]
    %v5646 = vld [vmem:[%s5598 + $0x178] sm:$0xff]
    %v5647 = vld [vmem:[%s5598 + $0x180] sm:$0xff]
    %v5648 = vld [vmem:[%s5598 + $0x188] sm:$0xff]
    %v5649 = vld [vmem:[%s5598 + $0x190] sm:$0xff]
    %v5650 = vld [vmem:[%s5598 + $0x198] sm:$0xff]
    %v5651 = vld [vmem:[%s5598 + $0x1a0] sm:$0xff]
    %v5652 = vld [vmem:[%s5598 + $0x1a8] sm:$0xff]
    %v5653 = vld [vmem:[%s5598 + $0x1b0] sm:$0xff]
    %v5654 = vld [vmem:[%s5598 + $0x1b8] sm:$0xff]
    %v5655 = vld [vmem:[%s5598 + $0x1c0] sm:$0xff]
    %v5656 = vld [vmem:[%s5598 + $0x1c8] sm:$0xff]
    %v5657 = vld [vmem:[%s5598 + $0x1d0] sm:$0xff]
    %v5658 = vld [vmem:[%s5598 + $0x1d8] sm:$0xff]
    %v5659 = vld [vmem:[%s5598 + $0x1e0] sm:$0xff]
    %v5660 = vld [vmem:[%s5598 + $0x1e8] sm:$0xff]
    %v5661 = vld [vmem:[%s5598 + $0x1f0] sm:$0xff]
    %v5662 = vld [vmem:[%s5598 + $0x1f8] sm:$0xff]
    %v5663 = vlaneseq
    %v5664 = vshrl.u32 %v5663, 7
    %v5665 = vsub.s32 3, %v5664
    %v5666 = vrot.slane %v3307, %v5665
    %5667 = vmatprep.subr.mxu0 0.0
    %5668 = vmatpush1.xpose.msra.mxu0 0.0
    %5669 = vmatprep.subr.mxu0 0.0
    %5670 = vmatpush1.xpose.msra.mxu0 0.0
    %5671 = vmatprep.subr.mxu0 0.0
    %5672 = vmatpush1.xpose.msra.mxu0 0.0
    %5673 = vmatprep.subr.mxu0 0.0
    %5674 = vmatpush1.xpose.msra.mxu0 0.0
    %5675 = vmatprep.subr.mxu0 0.0
    %5676 = vmatpush1.xpose.msra.mxu0 0.0
    %5677 = vmatprep.subr.mxu0 0.0
    %5678 = vmatpush1.xpose.msra.mxu0 0.0
    %5679 = vmatprep.subr.mxu0 0.0
    %5680 = vmatpush1.xpose.msra.mxu0 0.0
    %5681 = vmatprep.subr.mxu0 0.0
    %5682 = vmatpush1.xpose.msra.mxu0 0.0
    %5683 = vmatprep.subr.mxu0 0.0
    %5684 = vmatpush1.xpose.msra.mxu0 0.0
    %5685 = vmatprep.subr.mxu0 0.0
    %5686 = vmatpush1.xpose.msra.mxu0 0.0
    %5687 = vmatprep.subr.mxu0 0.0
    %5688 = vmatpush1.xpose.msra.mxu0 0.0
    %5689 = vmatprep.subr.mxu0 0.0
    %5690 = vmatpush1.xpose.msra.mxu0 0.0
    %5691 = vmatprep.subr.mxu0 %v5648
    %5692 = vmatpush1.xpose.msra.mxu0 %v5647
    %5693 = vmatprep.subr.mxu0 %v5632
    %5694 = vmatpush1.xpose.msra.mxu0 %v5631
    %5695 = vmatprep.subr.mxu0 %v5616
    %5696 = vmatpush1.xpose.msra.mxu0 %v5615
    %5697 = vmatprep.subr.mxu0 %v5600
    %5698 = vmatpush1.xpose.msra.mxu0 %v5599
    %5699 = vmatprep.subr.mxu0 0.0
    %5700 = vmatpush2.xpose.msra.mxu0 0.0
    %5701 = vmatprep.subr.mxu0 0.0
    %5702 = vmatpush2.xpose.msra.mxu0 0.0
    %5703 = vmatprep.subr.mxu0 0.0
    %5704 = vmatpush2.xpose.msra.mxu0 0.0
    %5705 = vmatprep.subr.mxu0 0.0
    %5706 = vmatpush2.xpose.msra.mxu0 0.0
    %5707 = vmatprep.subr.mxu0 0.0
    %5708 = vmatpush2.xpose.msra.mxu0 0.0
    %5709 = vmatprep.subr.mxu0 0.0
    %5710 = vmatpush2.xpose.msra.mxu0 0.0
    %5711 = vmatprep.subr.mxu0 0.0
    %5712 = vmatpush2.xpose.msra.mxu0 0.0
    %5713 = vmatprep.subr.mxu0 0.0
    %5714 = vmatpush2.xpose.msra.mxu0 0.0
    %5715 = vmatprep.subr.mxu0 0.0
    %5716 = vmatpush2.xpose.msra.mxu0 0.0
    %5717 = vmatprep.subr.mxu0 0.0
    %5718 = vmatpush2.xpose.msra.mxu0 0.0
    %5719 = vmatprep.subr.mxu0 0.0
    %5720 = vmatpush2.xpose.msra.mxu0 0.0
    %5721 = vmatprep.subr.mxu0 0.0
    %5722 = vmatpush2.xpose.msra.mxu0 0.0
    %5723 = vmatprep.subr.mxu0 0.0
    %5724 = vmatpush2.xpose.msra.mxu0 0.0
    %5725 = vmatprep.subr.mxu0 0.0
    %5726 = vmatpush2.xpose.msra.mxu0 0.0
    %5727 = vmatprep.subr.mxu0 0.0
    %5728 = vmatpush2.xpose.msra.mxu0 0.0
    %5729 = vmatprep.subr.mxu0 0.0
    %5730 = vmatpush2.xpose.msra.mxu0 0.0
    %5731 = vmatprep.mubr.f32.mxu0 %v5567
    %5732 = vmatmul.mubr.f32.gmra.mxu0 %v5566
    %v5733 = vpop.f32.mrf.mxu0
    %v5734 = vadd.f32 %v5666, %v5733
    %v5735 = vpop.f32.mrf.mxu0
    %5736 = vmatprep.mubr.f32.mxu0 %v5583
    %5737 = vmatmul.mubr.f32.gmra.mxu0 %v5582
    %v5738 = vpop.f32.mrf.mxu0
    %v5739 = vadd.f32 %v5666, %v5738
    %v5740 = vpop.f32.mrf.mxu0
    %5741 = vdwg.mxu0
    %5742 = vmatprep.subr.mxu0 0.0
    %5743 = vmatpush1.xpose.msra.mxu0 0.0
    %5744 = vmatprep.subr.mxu0 0.0
    %5745 = vmatpush1.xpose.msra.mxu0 0.0
    %5746 = vmatprep.subr.mxu0 0.0
    %5747 = vmatpush1.xpose.msra.mxu0 0.0
    %5748 = vmatprep.subr.mxu0 0.0
    %5749 = vmatpush1.xpose.msra.mxu0 0.0
    %5750 = vmatprep.subr.mxu0 0.0
    %5751 = vmatpush1.xpose.msra.mxu0 0.0
    %5752 = vmatprep.subr.mxu0 0.0
    %5753 = vmatpush1.xpose.msra.mxu0 0.0
    %5754 = vmatprep.subr.mxu0 0.0
    %5755 = vmatpush1.xpose.msra.mxu0 0.0
    %5756 = vmatprep.subr.mxu0 0.0
    %5757 = vmatpush1.xpose.msra.mxu0 0.0
    %5758 = vmatprep.subr.mxu0 0.0
    %5759 = vmatpush1.xpose.msra.mxu0 0.0
    %5760 = vmatprep.subr.mxu0 0.0
    %5761 = vmatpush1.xpose.msra.mxu0 0.0
    %5762 = vmatprep.subr.mxu0 0.0
    %5763 = vmatpush1.xpose.msra.mxu0 0.0
    %5764 = vmatprep.subr.mxu0 0.0
    %5765 = vmatpush1.xpose.msra.mxu0 0.0
    %5766 = vmatprep.subr.mxu0 %v5650
    %5767 = vmatpush1.xpose.msra.mxu0 %v5649
    %5768 = vmatprep.subr.mxu0 %v5634
    %5769 = vmatpush1.xpose.msra.mxu0 %v5633
    %5770 = vmatprep.subr.mxu0 %v5618
    %5771 = vmatpush1.xpose.msra.mxu0 %v5617
    %5772 = vmatprep.subr.mxu0 %v5602
    %5773 = vmatpush1.xpose.msra.mxu0 %v5601
    %5774 = vmatprep.subr.mxu0 0.0
    %5775 = vmatpush2.xpose.msra.mxu0 0.0
    %5776 = vmatprep.subr.mxu0 0.0
    %5777 = vmatpush2.xpose.msra.mxu0 0.0
    %5778 = vmatprep.subr.mxu0 0.0
    %5779 = vmatpush2.xpose.msra.mxu0 0.0
    %5780 = vmatprep.subr.mxu0 0.0
    %5781 = vmatpush2.xpose.msra.mxu0 0.0
    %5782 = vmatprep.subr.mxu0 0.0
    %5783 = vmatpush2.xpose.msra.mxu0 0.0
    %5784 = vmatprep.subr.mxu0 0.0
    %5785 = vmatpush2.xpose.msra.mxu0 0.0
    %5786 = vmatprep.subr.mxu0 0.0
    %5787 = vmatpush2.xpose.msra.mxu0 0.0
    %5788 = vmatprep.subr.mxu0 0.0
    %5789 = vmatpush2.xpose.msra.mxu0 0.0
    %5790 = vmatprep.subr.mxu0 0.0
    %5791 = vmatpush2.xpose.msra.mxu0 0.0
    %5792 = vmatprep.subr.mxu0 0.0
    %5793 = vmatpush2.xpose.msra.mxu0 0.0
    %5794 = vmatprep.subr.mxu0 0.0
    %5795 = vmatpush2.xpose.msra.mxu0 0.0
    %5796 = vmatprep.subr.mxu0 0.0
    %5797 = vmatpush2.xpose.msra.mxu0 0.0
    %5798 = vmatprep.subr.mxu0 0.0
    %5799 = vmatpush2.xpose.msra.mxu0 0.0
    %5800 = vmatprep.subr.mxu0 0.0
    %5801 = vmatpush2.xpose.msra.mxu0 0.0
    %5802 = vmatprep.subr.mxu0 0.0
    %5803 = vmatpush2.xpose.msra.mxu0 0.0
    %5804 = vmatprep.subr.mxu0 0.0
    %5805 = vmatpush2.xpose.msra.mxu0 0.0
    %5806 = vmatprep.mubr.f32.mxu0 %v5569
    %5807 = vmatmul.mubr.f32.gmra.mxu0 %v5568
    %v5808 = vpop.f32.mrf.mxu0
    %v5809 = vadd.f32 %v5734, %v5808
    %v5810 = vpop.f32.mrf.mxu0
    %5811 = vmatprep.mubr.f32.mxu0 %v5585
    %5812 = vmatmul.mubr.f32.gmra.mxu0 %v5584
    %v5813 = vpop.f32.mrf.mxu0
    %v5814 = vadd.f32 %v5739, %v5813
    %v5815 = vpop.f32.mrf.mxu0
    %5816 = vdwg.mxu0
    %5817 = vmatprep.subr.mxu0 0.0
    %5818 = vmatpush1.xpose.msra.mxu0 0.0
    %5819 = vmatprep.subr.mxu0 0.0
    %5820 = vmatpush1.xpose.msra.mxu0 0.0
    %5821 = vmatprep.subr.mxu0 0.0
    %5822 = vmatpush1.xpose.msra.mxu0 0.0
    %5823 = vmatprep.subr.mxu0 0.0
    %5824 = vmatpush1.xpose.msra.mxu0 0.0
    %5825 = vmatprep.subr.mxu0 0.0
    %5826 = vmatpush1.xpose.msra.mxu0 0.0
    %5827 = vmatprep.subr.mxu0 0.0
    %5828 = vmatpush1.xpose.msra.mxu0 0.0
    %5829 = vmatprep.subr.mxu0 0.0
    %5830 = vmatpush1.xpose.msra.mxu0 0.0
    %5831 = vmatprep.subr.mxu0 0.0
    %5832 = vmatpush1.xpose.msra.mxu0 0.0
    %5833 = vmatprep.subr.mxu0 0.0
    %5834 = vmatpush1.xpose.msra.mxu0 0.0
    %5835 = vmatprep.subr.mxu0 0.0
    %5836 = vmatpush1.xpose.msra.mxu0 0.0
    %5837 = vmatprep.subr.mxu0 0.0
    %5838 = vmatpush1.xpose.msra.mxu0 0.0
    %5839 = vmatprep.subr.mxu0 0.0
    %5840 = vmatpush1.xpose.msra.mxu0 0.0
    %5841 = vmatprep.subr.mxu0 %v5652
    %5842 = vmatpush1.xpose.msra.mxu0 %v5651
    %5843 = vmatprep.subr.mxu0 %v5636
    %5844 = vmatpush1.xpose.msra.mxu0 %v5635
    %5845 = vmatprep.subr.mxu0 %v5620
    %5846 = vmatpush1.xpose.msra.mxu0 %v5619
    %5847 = vmatprep.subr.mxu0 %v5604
    %5848 = vmatpush1.xpose.msra.mxu0 %v5603
    %5849 = vmatprep.subr.mxu0 0.0
    %5850 = vmatpush2.xpose.msra.mxu0 0.0
    %5851 = vmatprep.subr.mxu0 0.0
    %5852 = vmatpush2.xpose.msra.mxu0 0.0
    %5853 = vmatprep.subr.mxu0 0.0
    %5854 = vmatpush2.xpose.msra.mxu0 0.0
    %5855 = vmatprep.subr.mxu0 0.0
    %5856 = vmatpush2.xpose.msra.mxu0 0.0
    %5857 = vmatprep.subr.mxu0 0.0
    %5858 = vmatpush2.xpose.msra.mxu0 0.0
    %5859 = vmatprep.subr.mxu0 0.0
    %5860 = vmatpush2.xpose.msra.mxu0 0.0
    %5861 = vmatprep.subr.mxu0 0.0
    %5862 = vmatpush2.xpose.msra.mxu0 0.0
    %5863 = vmatprep.subr.mxu0 0.0
    %5864 = vmatpush2.xpose.msra.mxu0 0.0
    %5865 = vmatprep.subr.mxu0 0.0
    %5866 = vmatpush2.xpose.msra.mxu0 0.0
    %5867 = vmatprep.subr.mxu0 0.0
    %5868 = vmatpush2.xpose.msra.mxu0 0.0
    %5869 = vmatprep.subr.mxu0 0.0
    %5870 = vmatpush2.xpose.msra.mxu0 0.0
    %5871 = vmatprep.subr.mxu0 0.0
    %5872 = vmatpush2.xpose.msra.mxu0 0.0
    %5873 = vmatprep.subr.mxu0 0.0
    %5874 = vmatpush2.xpose.msra.mxu0 0.0
    %5875 = vmatprep.subr.mxu0 0.0
    %5876 = vmatpush2.xpose.msra.mxu0 0.0
    %5877 = vmatprep.subr.mxu0 0.0
    %5878 = vmatpush2.xpose.msra.mxu0 0.0
    %5879 = vmatprep.subr.mxu0 0.0
    %5880 = vmatpush2.xpose.msra.mxu0 0.0
    %5881 = vmatprep.mubr.f32.mxu0 %v5571
    %5882 = vmatmul.mubr.f32.gmra.mxu0 %v5570
    %v5883 = vpop.f32.mrf.mxu0
    %v5884 = vadd.f32 %v5809, %v5883
    %v5885 = vpop.f32.mrf.mxu0
    %5886 = vmatprep.mubr.f32.mxu0 %v5587
    %5887 = vmatmul.mubr.f32.gmra.mxu0 %v5586
    %v5888 = vpop.f32.mrf.mxu0
    %v5889 = vadd.f32 %v5814, %v5888
    %v5890 = vpop.f32.mrf.mxu0
    %5891 = vdwg.mxu0
    %5892 = vmatprep.subr.mxu0 0.0
    %5893 = vmatpush1.xpose.msra.mxu0 0.0
    %5894 = vmatprep.subr.mxu0 0.0
    %5895 = vmatpush1.xpose.msra.mxu0 0.0
    %5896 = vmatprep.subr.mxu0 0.0
    %5897 = vmatpush1.xpose.msra.mxu0 0.0
    %5898 = vmatprep.subr.mxu0 0.0
    %5899 = vmatpush1.xpose.msra.mxu0 0.0
    %5900 = vmatprep.subr.mxu0 0.0
    %5901 = vmatpush1.xpose.msra.mxu0 0.0
    %5902 = vmatprep.subr.mxu0 0.0
    %5903 = vmatpush1.xpose.msra.mxu0 0.0
    %5904 = vmatprep.subr.mxu0 0.0
    %5905 = vmatpush1.xpose.msra.mxu0 0.0
    %5906 = vmatprep.subr.mxu0 0.0
    %5907 = vmatpush1.xpose.msra.mxu0 0.0
    %5908 = vmatprep.subr.mxu0 0.0
    %5909 = vmatpush1.xpose.msra.mxu0 0.0
    %5910 = vmatprep.subr.mxu0 0.0
    %5911 = vmatpush1.xpose.msra.mxu0 0.0
    %5912 = vmatprep.subr.mxu0 0.0
    %5913 = vmatpush1.xpose.msra.mxu0 0.0
    %5914 = vmatprep.subr.mxu0 0.0
    %5915 = vmatpush1.xpose.msra.mxu0 0.0
    %5916 = vmatprep.subr.mxu0 %v5654
    %5917 = vmatpush1.xpose.msra.mxu0 %v5653
    %5918 = vmatprep.subr.mxu0 %v5638
    %5919 = vmatpush1.xpose.msra.mxu0 %v5637
    %5920 = vmatprep.subr.mxu0 %v5622
    %5921 = vmatpush1.xpose.msra.mxu0 %v5621
    %5922 = vmatprep.subr.mxu0 %v5606
    %5923 = vmatpush1.xpose.msra.mxu0 %v5605
    %5924 = vmatprep.subr.mxu0 0.0
    %5925 = vmatpush2.xpose.msra.mxu0 0.0
    %5926 = vmatprep.subr.mxu0 0.0
    %5927 = vmatpush2.xpose.msra.mxu0 0.0
    %5928 = vmatprep.subr.mxu0 0.0
    %5929 = vmatpush2.xpose.msra.mxu0 0.0
    %5930 = vmatprep.subr.mxu0 0.0
    %5931 = vmatpush2.xpose.msra.mxu0 0.0
    %5932 = vmatprep.subr.mxu0 0.0
    %5933 = vmatpush2.xpose.msra.mxu0 0.0
    %5934 = vmatprep.subr.mxu0 0.0
    %5935 = vmatpush2.xpose.msra.mxu0 0.0
    %5936 = vmatprep.subr.mxu0 0.0
    %5937 = vmatpush2.xpose.msra.mxu0 0.0
    %5938 = vmatprep.subr.mxu0 0.0
    %5939 = vmatpush2.xpose.msra.mxu0 0.0
    %5940 = vmatprep.subr.mxu0 0.0
    %5941 = vmatpush2.xpose.msra.mxu0 0.0
    %5942 = vmatprep.subr.mxu0 0.0
    %5943 = vmatpush2.xpose.msra.mxu0 0.0
    %5944 = vmatprep.subr.mxu0 0.0
    %5945 = vmatpush2.xpose.msra.mxu0 0.0
    %5946 = vmatprep.subr.mxu0 0.0
    %5947 = vmatpush2.xpose.msra.mxu0 0.0
    %5948 = vmatprep.subr.mxu0 0.0
    %5949 = vmatpush2.xpose.msra.mxu0 0.0
    %5950 = vmatprep.subr.mxu0 0.0
    %5951 = vmatpush2.xpose.msra.mxu0 0.0
    %5952 = vmatprep.subr.mxu0 0.0
    %5953 = vmatpush2.xpose.msra.mxu0 0.0
    %5954 = vmatprep.subr.mxu0 0.0
    %5955 = vmatpush2.xpose.msra.mxu0 0.0
    %5956 = vmatprep.mubr.f32.mxu0 %v5573
    %5957 = vmatmul.mubr.f32.gmra.mxu0 %v5572
    %v5958 = vpop.f32.mrf.mxu0
    %v5959 = vadd.f32 %v5884, %v5958
    %v5960 = vpop.f32.mrf.mxu0
    %5961 = vmatprep.mubr.f32.mxu0 %v5589
    %5962 = vmatmul.mubr.f32.gmra.mxu0 %v5588
    %v5963 = vpop.f32.mrf.mxu0
    %v5964 = vadd.f32 %v5889, %v5963
    %v5965 = vpop.f32.mrf.mxu0
    %5966 = vdwg.mxu0
    %5967 = vmatprep.subr.mxu0 0.0
    %5968 = vmatpush1.xpose.msra.mxu0 0.0
    %5969 = vmatprep.subr.mxu0 0.0
    %5970 = vmatpush1.xpose.msra.mxu0 0.0
    %5971 = vmatprep.subr.mxu0 0.0
    %5972 = vmatpush1.xpose.msra.mxu0 0.0
    %5973 = vmatprep.subr.mxu0 0.0
    %5974 = vmatpush1.xpose.msra.mxu0 0.0
    %5975 = vmatprep.subr.mxu0 0.0
    %5976 = vmatpush1.xpose.msra.mxu0 0.0
    %5977 = vmatprep.subr.mxu0 0.0
    %5978 = vmatpush1.xpose.msra.mxu0 0.0
    %5979 = vmatprep.subr.mxu0 0.0
    %5980 = vmatpush1.xpose.msra.mxu0 0.0
    %5981 = vmatprep.subr.mxu0 0.0
    %5982 = vmatpush1.xpose.msra.mxu0 0.0
    %5983 = vmatprep.subr.mxu0 0.0
    %5984 = vmatpush1.xpose.msra.mxu0 0.0
    %5985 = vmatprep.subr.mxu0 0.0
    %5986 = vmatpush1.xpose.msra.mxu0 0.0
    %5987 = vmatprep.subr.mxu0 0.0
    %5988 = vmatpush1.xpose.msra.mxu0 0.0
    %5989 = vmatprep.subr.mxu0 0.0
    %5990 = vmatpush1.xpose.msra.mxu0 0.0
    %5991 = vmatprep.subr.mxu0 %v5656
    %5992 = vmatpush1.xpose.msra.mxu0 %v5655
    %5993 = vmatprep.subr.mxu0 %v5640
    %5994 = vmatpush1.xpose.msra.mxu0 %v5639
    %5995 = vmatprep.subr.mxu0 %v5624
    %5996 = vmatpush1.xpose.msra.mxu0 %v5623
    %5997 = vmatprep.subr.mxu0 %v5608
    %5998 = vmatpush1.xpose.msra.mxu0 %v5607
    %5999 = vmatprep.subr.mxu0 0.0
    %6000 = vmatpush2.xpose.msra.mxu0 0.0
    %6001 = vmatprep.subr.mxu0 0.0
    %6002 = vmatpush2.xpose.msra.mxu0 0.0
    %6003 = vmatprep.subr.mxu0 0.0
    %6004 = vmatpush2.xpose.msra.mxu0 0.0
    %6005 = vmatprep.subr.mxu0 0.0
    %6006 = vmatpush2.xpose.msra.mxu0 0.0
    %6007 = vmatprep.subr.mxu0 0.0
    %6008 = vmatpush2.xpose.msra.mxu0 0.0
    %6009 = vmatprep.subr.mxu0 0.0
    %6010 = vmatpush2.xpose.msra.mxu0 0.0
    %6011 = vmatprep.subr.mxu0 0.0
    %6012 = vmatpush2.xpose.msra.mxu0 0.0
    %6013 = vmatprep.subr.mxu0 0.0
    %6014 = vmatpush2.xpose.msra.mxu0 0.0
    %6015 = vmatprep.subr.mxu0 0.0
    %6016 = vmatpush2.xpose.msra.mxu0 0.0
    %6017 = vmatprep.subr.mxu0 0.0
    %6018 = vmatpush2.xpose.msra.mxu0 0.0
    %6019 = vmatprep.subr.mxu0 0.0
    %6020 = vmatpush2.xpose.msra.mxu0 0.0
    %6021 = vmatprep.subr.mxu0 0.0
    %6022 = vmatpush2.xpose.msra.mxu0 0.0
    %6023 = vmatprep.subr.mxu0 0.0
    %6024 = vmatpush2.xpose.msra.mxu0 0.0
    %6025 = vmatprep.subr.mxu0 0.0
    %6026 = vmatpush2.xpose.msra.mxu0 0.0
    %6027 = vmatprep.subr.mxu0 0.0
    %6028 = vmatpush2.xpose.msra.mxu0 0.0
    %6029 = vmatprep.subr.mxu0 0.0
    %6030 = vmatpush2.xpose.msra.mxu0 0.0
    %6031 = vmatprep.mubr.f32.mxu0 %v5575
    %6032 = vmatmul.mubr.f32.gmra.mxu0 %v5574
    %v6033 = vpop.f32.mrf.mxu0
    %v6034 = vadd.f32 %v5959, %v6033
    %v6035 = vpop.f32.mrf.mxu0
    %6036 = vmatprep.mubr.f32.mxu0 %v5591
    %6037 = vmatmul.mubr.f32.gmra.mxu0 %v5590
    %v6038 = vpop.f32.mrf.mxu0
    %v6039 = vadd.f32 %v5964, %v6038
    %v6040 = vpop.f32.mrf.mxu0
    %6041 = vdwg.mxu0
    %6042 = vmatprep.subr.mxu0 0.0
    %6043 = vmatpush1.xpose.msra.mxu0 0.0
    %6044 = vmatprep.subr.mxu0 0.0
    %6045 = vmatpush1.xpose.msra.mxu0 0.0
    %6046 = vmatprep.subr.mxu0 0.0
    %6047 = vmatpush1.xpose.msra.mxu0 0.0
    %6048 = vmatprep.subr.mxu0 0.0
    %6049 = vmatpush1.xpose.msra.mxu0 0.0
    %6050 = vmatprep.subr.mxu0 0.0
    %6051 = vmatpush1.xpose.msra.mxu0 0.0
    %6052 = vmatprep.subr.mxu0 0.0
    %6053 = vmatpush1.xpose.msra.mxu0 0.0
    %6054 = vmatprep.subr.mxu0 0.0
    %6055 = vmatpush1.xpose.msra.mxu0 0.0
    %6056 = vmatprep.subr.mxu0 0.0
    %6057 = vmatpush1.xpose.msra.mxu0 0.0
    %6058 = vmatprep.subr.mxu0 0.0
    %6059 = vmatpush1.xpose.msra.mxu0 0.0
    %6060 = vmatprep.subr.mxu0 0.0
    %6061 = vmatpush1.xpose.msra.mxu0 0.0
    %6062 = vmatprep.subr.mxu0 0.0
    %6063 = vmatpush1.xpose.msra.mxu0 0.0
    %6064 = vmatprep.subr.mxu0 0.0
    %6065 = vmatpush1.xpose.msra.mxu0 0.0
    %6066 = vmatprep.subr.mxu0 %v5658
    %6067 = vmatpush1.xpose.msra.mxu0 %v5657
    %6068 = vmatprep.subr.mxu0 %v5642
    %6069 = vmatpush1.xpose.msra.mxu0 %v5641
    %6070 = vmatprep.subr.mxu0 %v5626
    %6071 = vmatpush1.xpose.msra.mxu0 %v5625
    %6072 = vmatprep.subr.mxu0 %v5610
    %6073 = vmatpush1.xpose.msra.mxu0 %v5609
    %6074 = vmatprep.subr.mxu0 0.0
    %6075 = vmatpush2.xpose.msra.mxu0 0.0
    %6076 = vmatprep.subr.mxu0 0.0
    %6077 = vmatpush2.xpose.msra.mxu0 0.0
    %6078 = vmatprep.subr.mxu0 0.0
    %6079 = vmatpush2.xpose.msra.mxu0 0.0
    %6080 = vmatprep.subr.mxu0 0.0
    %6081 = vmatpush2.xpose.msra.mxu0 0.0
    %6082 = vmatprep.subr.mxu0 0.0
    %6083 = vmatpush2.xpose.msra.mxu0 0.0
    %6084 = vmatprep.subr.mxu0 0.0
    %6085 = vmatpush2.xpose.msra.mxu0 0.0
    %6086 = vmatprep.subr.mxu0 0.0
    %6087 = vmatpush2.xpose.msra.mxu0 0.0
    %6088 = vmatprep.subr.mxu0 0.0
    %6089 = vmatpush2.xpose.msra.mxu0 0.0
    %6090 = vmatprep.subr.mxu0 0.0
    %6091 = vmatpush2.xpose.msra.mxu0 0.0
    %6092 = vmatprep.subr.mxu0 0.0
    %6093 = vmatpush2.xpose.msra.mxu0 0.0
    %6094 = vmatprep.subr.mxu0 0.0
    %6095 = vmatpush2.xpose.msra.mxu0 0.0
    %6096 = vmatprep.subr.mxu0 0.0
    %6097 = vmatpush2.xpose.msra.mxu0 0.0
    %6098 = vmatprep.subr.mxu0 0.0
    %6099 = vmatpush2.xpose.msra.mxu0 0.0
    %6100 = vmatprep.subr.mxu0 0.0
    %6101 = vmatpush2.xpose.msra.mxu0 0.0
    %6102 = vmatprep.subr.mxu0 0.0
    %6103 = vmatpush2.xpose.msra.mxu0 0.0
    %6104 = vmatprep.subr.mxu0 0.0
    %6105 = vmatpush2.xpose.msra.mxu0 0.0
    %6106 = vmatprep.mubr.f32.mxu0 %v5577
    %6107 = vmatmul.mubr.f32.gmra.mxu0 %v5576
    %v6108 = vpop.f32.mrf.mxu0
    %v6109 = vadd.f32 %v6034, %v6108
    %v6110 = vpop.f32.mrf.mxu0
    %6111 = vmatprep.mubr.f32.mxu0 %v5593
    %6112 = vmatmul.mubr.f32.gmra.mxu0 %v5592
    %v6113 = vpop.f32.mrf.mxu0
    %v6114 = vadd.f32 %v6039, %v6113
    %v6115 = vpop.f32.mrf.mxu0
    %6116 = vdwg.mxu0
    %6117 = vmatprep.subr.mxu0 0.0
    %6118 = vmatpush1.xpose.msra.mxu0 0.0
    %6119 = vmatprep.subr.mxu0 0.0
    %6120 = vmatpush1.xpose.msra.mxu0 0.0
    %6121 = vmatprep.subr.mxu0 0.0
    %6122 = vmatpush1.xpose.msra.mxu0 0.0
    %6123 = vmatprep.subr.mxu0 0.0
    %6124 = vmatpush1.xpose.msra.mxu0 0.0
    %6125 = vmatprep.subr.mxu0 0.0
    %6126 = vmatpush1.xpose.msra.mxu0 0.0
    %6127 = vmatprep.subr.mxu0 0.0
    %6128 = vmatpush1.xpose.msra.mxu0 0.0
    %6129 = vmatprep.subr.mxu0 0.0
    %6130 = vmatpush1.xpose.msra.mxu0 0.0
    %6131 = vmatprep.subr.mxu0 0.0
    %6132 = vmatpush1.xpose.msra.mxu0 0.0
    %6133 = vmatprep.subr.mxu0 0.0
    %6134 = vmatpush1.xpose.msra.mxu0 0.0
    %6135 = vmatprep.subr.mxu0 0.0
    %6136 = vmatpush1.xpose.msra.mxu0 0.0
    %6137 = vmatprep.subr.mxu0 0.0
    %6138 = vmatpush1.xpose.msra.mxu0 0.0
    %6139 = vmatprep.subr.mxu0 0.0
    %6140 = vmatpush1.xpose.msra.mxu0 0.0
    %6141 = vmatprep.subr.mxu0 %v5660
    %6142 = vmatpush1.xpose.msra.mxu0 %v5659
    %6143 = vmatprep.subr.mxu0 %v5644
    %6144 = vmatpush1.xpose.msra.mxu0 %v5643
    %6145 = vmatprep.subr.mxu0 %v5628
    %6146 = vmatpush1.xpose.msra.mxu0 %v5627
    %6147 = vmatprep.subr.mxu0 %v5612
    %6148 = vmatpush1.xpose.msra.mxu0 %v5611
    %6149 = vmatprep.subr.mxu0 0.0
    %6150 = vmatpush2.xpose.msra.mxu0 0.0
    %6151 = vmatprep.subr.mxu0 0.0
    %6152 = vmatpush2.xpose.msra.mxu0 0.0
    %6153 = vmatprep.subr.mxu0 0.0
    %6154 = vmatpush2.xpose.msra.mxu0 0.0
    %6155 = vmatprep.subr.mxu0 0.0
    %6156 = vmatpush2.xpose.msra.mxu0 0.0
    %6157 = vmatprep.subr.mxu0 0.0
    %6158 = vmatpush2.xpose.msra.mxu0 0.0
    %6159 = vmatprep.subr.mxu0 0.0
    %6160 = vmatpush2.xpose.msra.mxu0 0.0
    %6161 = vmatprep.subr.mxu0 0.0
    %6162 = vmatpush2.xpose.msra.mxu0 0.0
    %6163 = vmatprep.subr.mxu0 0.0
    %6164 = vmatpush2.xpose.msra.mxu0 0.0
    %6165 = vmatprep.subr.mxu0 0.0
    %6166 = vmatpush2.xpose.msra.mxu0 0.0
    %6167 = vmatprep.subr.mxu0 0.0
    %6168 = vmatpush2.xpose.msra.mxu0 0.0
    %6169 = vmatprep.subr.mxu0 0.0
    %6170 = vmatpush2.xpose.msra.mxu0 0.0
    %6171 = vmatprep.subr.mxu0 0.0
    %6172 = vmatpush2.xpose.msra.mxu0 0.0
    %6173 = vmatprep.subr.mxu0 0.0
    %6174 = vmatpush2.xpose.msra.mxu0 0.0
    %6175 = vmatprep.subr.mxu0 0.0
    %6176 = vmatpush2.xpose.msra.mxu0 0.0
    %6177 = vmatprep.subr.mxu0 0.0
    %6178 = vmatpush2.xpose.msra.mxu0 0.0
    %6179 = vmatprep.subr.mxu0 0.0
    %6180 = vmatpush2.xpose.msra.mxu0 0.0
    %6181 = vmatprep.mubr.f32.mxu0 %v5579
    %6182 = vmatmul.mubr.f32.gmra.mxu0 %v5578
    %v6183 = vpop.f32.mrf.mxu0
    %v6184 = vadd.f32 %v6109, %v6183
    %v6185 = vpop.f32.mrf.mxu0
    %6186 = vmatprep.mubr.f32.mxu0 %v5595
    %6187 = vmatmul.mubr.f32.gmra.mxu0 %v5594
    %v6188 = vpop.f32.mrf.mxu0
    %v6189 = vadd.f32 %v6114, %v6188
    %v6190 = vpop.f32.mrf.mxu0
    %6191 = vdwg.mxu0
    %6192 = vmatprep.subr.mxu0 0.0
    %6193 = vmatpush1.xpose.msra.mxu0 0.0
    %6194 = vmatprep.subr.mxu0 0.0
    %6195 = vmatpush1.xpose.msra.mxu0 0.0
    %6196 = vmatprep.subr.mxu0 0.0
    %6197 = vmatpush1.xpose.msra.mxu0 0.0
    %6198 = vmatprep.subr.mxu0 0.0
    %6199 = vmatpush1.xpose.msra.mxu0 0.0
    %6200 = vmatprep.subr.mxu0 0.0
    %6201 = vmatpush1.xpose.msra.mxu0 0.0
    %6202 = vmatprep.subr.mxu0 0.0
    %6203 = vmatpush1.xpose.msra.mxu0 0.0
    %6204 = vmatprep.subr.mxu0 0.0
    %6205 = vmatpush1.xpose.msra.mxu0 0.0
    %6206 = vmatprep.subr.mxu0 0.0
    %6207 = vmatpush1.xpose.msra.mxu0 0.0
    %6208 = vmatprep.subr.mxu0 0.0
    %6209 = vmatpush1.xpose.msra.mxu0 0.0
    %6210 = vmatprep.subr.mxu0 0.0
    %6211 = vmatpush1.xpose.msra.mxu0 0.0
    %6212 = vmatprep.subr.mxu0 0.0
    %6213 = vmatpush1.xpose.msra.mxu0 0.0
    %6214 = vmatprep.subr.mxu0 0.0
    %6215 = vmatpush1.xpose.msra.mxu0 0.0
    %6216 = vmatprep.subr.mxu0 %v5662
    %6217 = vmatpush1.xpose.msra.mxu0 %v5661
    %6218 = vmatprep.subr.mxu0 %v5646
    %6219 = vmatpush1.xpose.msra.mxu0 %v5645
    %6220 = vmatprep.subr.mxu0 %v5630
    %6221 = vmatpush1.xpose.msra.mxu0 %v5629
    %6222 = vmatprep.subr.mxu0 %v5614
    %6223 = vmatpush1.xpose.msra.mxu0 %v5613
    %6224 = vmatprep.subr.mxu0 0.0
    %6225 = vmatpush2.xpose.msra.mxu0 0.0
    %6226 = vmatprep.subr.mxu0 0.0
    %6227 = vmatpush2.xpose.msra.mxu0 0.0
    %6228 = vmatprep.subr.mxu0 0.0
    %6229 = vmatpush2.xpose.msra.mxu0 0.0
    %6230 = vmatprep.subr.mxu0 0.0
    %6231 = vmatpush2.xpose.msra.mxu0 0.0
    %6232 = vmatprep.subr.mxu0 0.0
    %6233 = vmatpush2.xpose.msra.mxu0 0.0
    %6234 = vmatprep.subr.mxu0 0.0
    %6235 = vmatpush2.xpose.msra.mxu0 0.0
    %6236 = vmatprep.subr.mxu0 0.0
    %6237 = vmatpush2.xpose.msra.mxu0 0.0
    %6238 = vmatprep.subr.mxu0 0.0
    %6239 = vmatpush2.xpose.msra.mxu0 0.0
    %6240 = vmatprep.subr.mxu0 0.0
    %6241 = vmatpush2.xpose.msra.mxu0 0.0
    %6242 = vmatprep.subr.mxu0 0.0
    %6243 = vmatpush2.xpose.msra.mxu0 0.0
    %6244 = vmatprep.subr.mxu0 0.0
    %6245 = vmatpush2.xpose.msra.mxu0 0.0
    %6246 = vmatprep.subr.mxu0 0.0
    %6247 = vmatpush2.xpose.msra.mxu0 0.0
    %6248 = vmatprep.subr.mxu0 0.0
    %6249 = vmatpush2.xpose.msra.mxu0 0.0
    %6250 = vmatprep.subr.mxu0 0.0
    %6251 = vmatpush2.xpose.msra.mxu0 0.0
    %6252 = vmatprep.subr.mxu0 0.0
    %6253 = vmatpush2.xpose.msra.mxu0 0.0
    %6254 = vmatprep.subr.mxu0 0.0
    %6255 = vmatpush2.xpose.msra.mxu0 0.0
    %6256 = vmatprep.mubr.f32.mxu0 %v5581
    %6257 = vmatmul.mubr.f32.gmra.mxu0 %v5580
    %v6258 = vpop.f32.mrf.mxu0
    %v6259 = vadd.f32 %v6184, %v6258
    %v6260 = vpop.f32.mrf.mxu0
    %6261 = vmatprep.mubr.f32.mxu0 %v5597
    %6262 = vmatmul.mubr.f32.gmra.mxu0 %v5596
    %v6263 = vpop.f32.mrf.mxu0
    %v6264 = vadd.f32 %v6189, %v6263
    %v6265 = vpop.f32.mrf.mxu0
    %6266 = vdwg.mxu0
    %v6267 = vadd.f32 %v4792, %v6259
    %v6268 = vadd.f32 %v4793, %v6264
    %v6269 = vsel %vm130, %v6267, 0.0
    %6270 = vadd.xlane.f32.xlu0 %v6269
    %v6271 = vpop.xlane.xlu0 %6270
    %v6272 = vsel %vm130, %v6268, 0.0
    %6273 = vadd.xlane.f32.xlu0 %v6272
    %v6274 = vpop.xlane.xlu0 %6273
    %v6275 = vmul.f32 %v6271, %v1669
    %v6276 = vmul.f32 %v6274, %v1669
    %v6277 = vsub.f32 %v6267, %v6275
    %v6278 = vsub.f32 %v6268, %v6276
    %v6279 = vmul.f32 %v6277, %v6277
    %v6280 = vmul.f32 %v6278, %v6278
    %v6281 = vsel %vm130, %v6279, 0.0
    %6282 = vadd.xlane.f32.xlu0 %v6281
    %v6283 = vpop.xlane.xlu0 %6282
    %v6284 = vsel %vm130, %v6280, 0.0
    %6285 = vadd.xlane.f32.xlu0 %v6284
    %v6286 = vpop.xlane.xlu0 %6285
    %v6287 = vmul.f32 %v6283, %v1669
    %v6288 = vmul.f32 %v6286, %v1669
    %v6289 = vadd.f32 %v6287, 1e-05
    %v6290 = vadd.f32 %v6288, 1e-05
    %v6291 = vrsqrt.pop %v6289
    %v6292 = vrsqrt.pop %v6290
    %v6293 = vmul.f32 %v6277, %v6291
    %v6294 = vmul.f32 %v6278, %v6292
    %v6295 = vlaneseq
    %v6296 = vshrl.u32 %v6295, 7
    %v6297 = vsub.s32 4, %v6296
    %v6298 = vrot.slane %v3307, %v6297
    %v6299 = vmul.f32 %v6293, %v6298
    %v6300 = vmul.f32 %v6294, %v6298
    %v6301 = vlaneseq
    %v6302 = vshrl.u32 %v6301, 7
    %v6303 = vsub.s32 5, %v6302
    %v6304 = vrot.slane %v3307, %v6303
    %v6305 = vadd.f32 %v6299, %v6304
    %v6306 = vadd.f32 %v6300, %v6304
    %v6307 = vld [vmem:[#allocation10] sm:$0xff]
    %v6308 = vld [vmem:[#allocation10 + $0x8] sm:$0xff]
    %v6309 = vld [vmem:[#allocation10 + $0x10] sm:$0xff]
    %v6310 = vld [vmem:[#allocation10 + $0x18] sm:$0xff]
    %v6311 = vld [vmem:[%s9] sm:$0x1]
    %v6313 = vlaneseq
    %v6314 = vshrl.u32 %v6313, 7
    %v6315 = vsub.s32 0, %v6314
    %v6316 = vrot.slane %v6311, %v6315
    %v6319 = vsel %vm130, %v6305, 0
    %v6322 = vsel %vm130, %v6306, 0
    %6324 = vmatprep.subr.mxu0 0.0
    %6325 = vmatpush1.msra.mxu0 0.0
    %6326 = vmatprep.subr.mxu0 0.0
    %6327 = vmatpush1.msra.mxu0 0.0
    %6328 = vmatprep.subr.mxu0 0.0
    %6329 = vmatpush1.msra.mxu0 0.0
    %6330 = vmatprep.subr.mxu0 0.0
    %6331 = vmatpush1.msra.mxu0 0.0
    %6332 = vmatprep.subr.mxu0 0.0
    %6333 = vmatpush1.msra.mxu0 0.0
    %6334 = vmatprep.subr.mxu0 0.0
    %6335 = vmatpush1.msra.mxu0 0.0
    %6336 = vmatprep.subr.mxu0 0.0
    %6337 = vmatpush1.msra.mxu0 0.0
    %6338 = vmatprep.subr.mxu0 0.0
    %6339 = vmatpush1.msra.mxu0 0.0
    %6340 = vmatprep.subr.mxu0 0.0
    %6341 = vmatpush1.msra.mxu0 0.0
    %6342 = vmatprep.subr.mxu0 0.0
    %6343 = vmatpush1.msra.mxu0 0.0
    %6344 = vmatprep.subr.mxu0 0.0
    %6345 = vmatpush1.msra.mxu0 0.0
    %6346 = vmatprep.subr.mxu0 0.0
    %6347 = vmatpush1.msra.mxu0 0.0
    %6348 = vmatprep.subr.mxu0 0.0
    %6349 = vmatpush1.msra.mxu0 %v6310
    %6350 = vmatprep.subr.mxu0 0.0
    %6351 = vmatpush1.msra.mxu0 %v6309
    %6352 = vmatprep.subr.mxu0 0.0
    %6353 = vmatpush1.msra.mxu0 %v6308
    %6354 = vmatprep.subr.mxu0 0.0
    %6355 = vmatpush1.msra.mxu0 %v6307
    %6356 = vmatprep.subr.mxu0 0.0
    %6357 = vmatpush2.msra.mxu0 0.0
    %6358 = vmatprep.subr.mxu0 0.0
    %6359 = vmatpush2.msra.mxu0 0.0
    %6360 = vmatprep.subr.mxu0 0.0
    %6361 = vmatpush2.msra.mxu0 0.0
    %6362 = vmatprep.subr.mxu0 0.0
    %6363 = vmatpush2.msra.mxu0 0.0
    %6364 = vmatprep.subr.mxu0 0.0
    %6365 = vmatpush2.msra.mxu0 0.0
    %6366 = vmatprep.subr.mxu0 0.0
    %6367 = vmatpush2.msra.mxu0 0.0
    %6368 = vmatprep.subr.mxu0 0.0
    %6369 = vmatpush2.msra.mxu0 0.0
    %6370 = vmatprep.subr.mxu0 0.0
    %6371 = vmatpush2.msra.mxu0 0.0
    %6372 = vmatprep.subr.mxu0 0.0
    %6373 = vmatpush2.msra.mxu0 0.0
    %6374 = vmatprep.subr.mxu0 0.0
    %6375 = vmatpush2.msra.mxu0 0.0
    %6376 = vmatprep.subr.mxu0 0.0
    %6377 = vmatpush2.msra.mxu0 0.0
    %6378 = vmatprep.subr.mxu0 0.0
    %6379 = vmatpush2.msra.mxu0 0.0
    %6380 = vmatprep.subr.mxu0 0.0
    %6381 = vmatpush2.msra.mxu0 0.0
    %6382 = vmatprep.subr.mxu0 0.0
    %6383 = vmatpush2.msra.mxu0 0.0
    %6384 = vmatprep.subr.mxu0 0.0
    %6385 = vmatpush2.msra.mxu0 0.0
    %6386 = vmatprep.subr.mxu0 0.0
    %6387 = vmatpush2.msra.mxu0 0.0
    %6388 = vmatprep.mubr.f32.mxu0 0.0
    %6389 = vmatmul.mubr.f32.gmra.mxu0 %v6319
    %v6390 = vpop.f32.mrf.mxu0
    %v6391 = vadd.f32 %v6316, %v6390
    %v6392 = vpop.f32.mrf.mxu0
    %6393 = vmatprep.mubr.f32.mxu0 0.0
    %6394 = vmatmul.mubr.f32.gmra.mxu0 %v6322
    %v6395 = vpop.f32.mrf.mxu0
    %v6396 = vadd.f32 %v6316, %v6395
    %v6397 = vpop.f32.mrf.mxu0
    %6398 = vdwg.mxu0
    %6399 = vst [vmem:[%s10] sm:$0xff] %v6391
    %6400 = vst [vmem:[%s10 + $0x8] sm:$0xff] %v6396
    // Predicated region
    $region66: #{voice_conversion_forward.1} parent=1 // pred_check
      _
    $region67: #{voice_conversion_forward.1} parent=1 // pred_check_branch
      %6402 = sbr.rel (0) target = $region69
    $region68: #{voice_conversion_forward.1} parent=1 // pred_region
      _
    $region69: #{voice_conversion_forward.1} parent=1 // pred_fallthru
      _
    // Predicated region
    $region70: #{voice_conversion_forward.1} parent=1 // pred_check
      _
    $region71: #{voice_conversion_forward.1} parent=1 // pred_check_branch
      %6404 = sbr.rel (0) target = $region73
    $region72: #{voice_conversion_forward.1} parent=1 // pred_region
      _
    $region73: #{voice_conversion_forward.1} parent=1 // pred_fallthru
      _
    %6405 = vsyncpa [#allocation3], 1
    %6406 = vsyncpa [#allocation5], 1
    %6407 = vsyncpa [#allocation8], 1
    %6408 = vsyncpa [#allocation11], 1

</llo_original>
